<compile_context>
chip_gen: v7x
topology: tpu7x:2x2x1
jax: 0.10.0
libtpu: 0.0.40
codegen_flags: <defaults>
</compile_context>

<pallas_src>
from functools import partial

import jax
import jax.numpy as jnp
from jax.experimental import pallas as pl
from jax.experimental.pallas import tpu as pltpu

KSIZE = 3
PAD = KSIZE // 2  # = 1


def _toeplitz_weights(w_oidhw, W, dtype):
    """Pack Conv3d weights (Cout, Cin, 3, 3, 3) into 9 block-Toeplitz matrices.

    Returns (9, W*Cin, W*Cout) with
      B[kd*3+kh, w_in*Cin + ci, w*Cout + co] = w[co, ci, kd, kh, w_in - w + 1]
    for 0 <= w_in - w + 1 < 3 and 0 otherwise.  The band is truncated at the W
    edges, which *is* the kw zero-padding -- so the input needs no W halo and
    each (kd, kh) tap is a single lane-dense MXU matmul
    (Nb*D*H, W*Cin) @ (W*Cin, W*Cout) with K = W*Cin = 128 here.
    """
    Cout, Cin, KD, KH, KW = w_oidhw.shape
    wk = jnp.transpose(w_oidhw.astype(jnp.float32), (2, 3, 4, 1, 0))  # (kd,kh,kw,Ci,Co)
    wk = wk.reshape(KD * KH, KW, Cin, Cout)
    B = jnp.zeros((KD * KH, W, Cin, W, Cout), jnp.float32)
    for kw in range(KW):
        # band[w_in, w] = 1 iff w_in == w + kw - 1 (edge-truncated automatically)
        band = jnp.eye(W, W, k=1 - kw, dtype=jnp.float32)
        B = B + band[None, :, None, :, None] * wk[:, kw][:, None, :, None, :]
    return B.reshape(KD * KH, W * Cin, W * Cout).astype(dtype)


def fused_resblock_kernel(xpad_ref, w1_ref, w2_ref, b1_ref, b2_ref, o_ref,
                          hpad_ref, *, Nb, D, H, W, C):
    WC = W * C
    Hp = H + 2 * PAD
    M = Nb * D * H

    def conv_taps(src_ref, w_ref):
        # 9 lane-dense MXU matmuls (one per (kd, kh)); kw and Cin are already
        # folded into the K = W*C contraction by the Toeplitz packing.
        # Partial sums accumulate in registers (f32); slabs are loaded from the
        # ref per tap and cast to bf16 for the MXU.
        acc = None
        for kd in range(KSIZE):
            for kh in range(KSIZE):
                slab = src_ref[:, kd:kd + D, kh:kh + H, :]          # (Nb, D, H, WC)
                slab = slab.astype(jnp.bfloat16).reshape(M, WC)     # layout-free reshape
                part = jnp.dot(slab, w_ref[kd * KSIZE + kh],
                               preferred_element_type=jnp.float32)
                acc = part if acc is None else acc + part
        return acc                                                  # (M, WC) f32

    # ---- conv1 + bias + ReLU -------------------------------------------------
    h1 = jnp.maximum(conv_taps(xpad_ref, w1_ref) + b1_ref[...], 0.0)

    # ---- stash conv1 output into the zero-ringed scratch.  The ring is conv2's
    #      D/H zero padding (the W padding is folded into the weights already).
    #      Only the faces are zeroed; the interior is fully overwritten.
    hpad_ref[:, 0:1, :, :] = jnp.zeros((Nb, 1, Hp, WC), jnp.float32)
    hpad_ref[:, D + 1:D + 2, :, :] = jnp.zeros((Nb, 1, Hp, WC), jnp.float32)
    hpad_ref[:, 1:D + 1, 0:1, :] = jnp.zeros((Nb, D, 1, WC), jnp.float32)
    hpad_ref[:, 1:D + 1, H + 1:H + 2, :] = jnp.zeros((Nb, D, 1, WC), jnp.float32)
    hpad_ref[:, 1:D + 1, 1:H + 1, :] = h1.reshape(Nb, D, H, WC)

    # ---- conv2 + bias + residual (residual from the resident exact-f32 input) -
    y = conv_taps(hpad_ref, w2_ref) + b2_ref[...]
    x_res = xpad_ref[:, 1:D + 1, 1:H + 1, :].reshape(M, WC)
    o_ref[...] = (y + x_res).reshape(Nb, D * H, WC).astype(o_ref.dtype)


def _pick_block_n(N, DH, m_target=256):
    """Largest Nb dividing N with Nb*DH <= ~m_target MXU rows, while keeping the
    parallel grid length >= 2 so both v7x TensorCores stay busy."""
    best = 1
    for nb in range(1, N + 1):
        if N % nb:
            continue
        if N >= 2 and N // nb < 2:
            continue
        if nb * DH <= max(m_target, DH):
            best = nb
    return best


def _vmem_limit_bytes():
    """~75% of physical VMEM: ~96 MiB on v5e/v6e (128 MiB), ~48 MiB on v7x (64 MiB)."""
    cap = None
    try:
        cap = int(pltpu.get_tpu_info().vmem_capacity_bytes)
    except Exception:
        cap = None
    if not cap or cap <= 0:
        cap = 64 * 1024 * 1024  # conservative fallback = v7x physical VMEM
    return min(cap * 3 // 4, 96 * 1024 * 1024)


def resblock3d_pallas(x_ncdhw, w1, b1, w2, b2):
    """x_ncdhw: (N, C, D, H, W); w*: (Cout, Cin, 3, 3, 3); b*: (C,). Returns NCDHW."""
    N, C, D, H, W = x_ncdhw.shape
    Dp, Hp = D + 2 * PAD, H + 2 * PAD
    DH, WC = D * H, W * C

    Nb = _pick_block_n(N, DH)

    # ---- layout glue (plain JAX): NCDHW -> NDHWC, flatten (W, C) onto the lane
    #      axis; pad only D and H (the W padding lives in the Toeplitz bands).
    x = jnp.transpose(x_ncdhw, (0, 2, 3, 4, 1)).astype(jnp.float32)          # (N,D,H,W,C)
    xpad = jnp.pad(x, ((0, 0), (PAD, PAD), (PAD, PAD), (0, 0), (0, 0)))
    xpad = xpad.reshape(N, Dp, Hp, WC)                                       # lane dim = W*C

    w1t = _toeplitz_weights(w1, W, jnp.bfloat16)                             # (9, W*C, W*C)
    w2t = _toeplitz_weights(w2, W, jnp.bfloat16)
    b1r = jnp.tile(b1.astype(jnp.float32), W).reshape(1, WC)                 # b1r[w*C+c] = b1[c]
    b2r = jnp.tile(b2.astype(jnp.float32), W).reshape(1, WC)

    out = pl.pallas_call(
        partial(fused_resblock_kernel, Nb=Nb, D=D, H=H, W=W, C=C),
        out_shape=jax.ShapeDtypeStruct((N, DH, WC), jnp.float32),
        grid=(N // Nb,),
        in_specs=[
            pl.BlockSpec((Nb, Dp, Hp, WC), lambda n: (n, 0, 0, 0)),          # Nb-sample tile
            pl.BlockSpec((KSIZE * KSIZE, WC, WC), lambda n: (0, 0, 0)),      # weights stay resident
            pl.BlockSpec((KSIZE * KSIZE, WC, WC), lambda n: (0, 0, 0)),
            pl.BlockSpec((1, WC), lambda n: (0, 0)),
            pl.BlockSpec((1, WC), lambda n: (0, 0)),
        ],
        out_specs=pl.BlockSpec((Nb, DH, WC), lambda n: (n, 0, 0)),           # lane-dense store
        scratch_shapes=[
            pltpu.VMEM((Nb, Dp, Hp, WC), jnp.float32),                       # zero-ringed conv1 act
        ],
        compiler_params=pltpu.CompilerParams(
            dimension_semantics=("parallel",),      # batch-block axis shards across TCs (v7x)
            vmem_limit_bytes=_vmem_limit_bytes(),   # per-generation VMEM budget
        ),
    )(xpad, w1t, w2t, b1r, b2r)

    # ---- back to PyTorch NCDHW layout
    out = out.reshape(N, D, H, W, C)
    return jnp.transpose(out, (0, 4, 1, 2, 3)).astype(x_ncdhw.dtype)


def resblock3d_reference(x, w1, b1, w2, b2):
    """Pure-JAX reference (XLA conv) mirroring the PyTorch forward."""
    dn = ("NCDHW", "OIDHW", "NCDHW")
    p = ((1, 1), (1, 1), (1, 1))
    y = jax.lax.conv_general_dilated(x, w1, (1, 1, 1), p, dimension_numbers=dn)
    y = y + b1[None, :, None, None, None]
    y = jnp.maximum(y, 0.0)
    y = jax.lax.conv_general_dilated(y, w2, (1, 1, 1), p, dimension_numbers=dn)
    y = y + b2[None, :, None, None, None]
    return y + x


if __name__ == "__main__":
    # Small deterministic setup: W*C = 128 so every load/store is a full-lane op,
    # and N is large enough to block Nb=8 samples per grid step (M = Nb*D*H = 256)
    # while keeping 2 parallel grid steps for v7x's two TensorCores.
    N, C, D, H, W = 16, 16, 4, 8, 8
    key = jax.random.PRNGKey(0)
    kx, kw1, kb1, kw2, kb2 = jax.random.split(key, 5)

    fan_in = C * KSIZE ** 3
    bound = 1.0 / (fan_in ** 0.5)  # PyTorch-style uniform init bound

    x = jax.random.normal(kx, (N, C, D, H, W), jnp.float32)
    w1 = jax.random.uniform(kw1, (C, C, KSIZE, KSIZE, KSIZE), jnp.float32, -bound, bound)
    b1 = jax.random.uniform(kb1, (C,), jnp.float32, -bound, bound)
    w2 = jax.random.uniform(kw2, (C, C, KSIZE, KSIZE, KSIZE), jnp.float32, -bound, bound)
    b2 = jax.random.uniform(kb2, (C,), jnp.float32, -bound, bound)

    out = jax.block_until_ready(resblock3d_pallas(x, w1, b1, w2, b2))
    ref = resblock3d_reference(x, w1, b1, w2, b2)

    assert out.shape == (N, C, D, H, W), out.shape
    max_err = float(jnp.max(jnp.abs(out - ref)))
    # bf16 MXU operands with f32 accumulation (residual taken from exact f32 input).
    assert max_err < 5e-2, f"mismatch vs reference, max abs err = {max_err}"

    print("KERNEL_OK")
</pallas_src>

<mosaic_0001>
module attributes {stable_mosaic.version = 11 : i64} {
  func.func @fused_resblock_kernel(%arg0: i32, %arg1: memref<8x6x10x128xf32, #tpu.memory_space<vmem>>, %arg2: memref<9x128x128xbf16, #tpu.memory_space<vmem>>, %arg3: memref<9x128x128xbf16, #tpu.memory_space<vmem>>, %arg4: memref<1x128xf32, #tpu.memory_space<vmem>>, %arg5: memref<1x128xf32, #tpu.memory_space<vmem>>, %arg6: memref<8x32x128xf32, #tpu.memory_space<vmem>>, %arg7: memref<8x6x10x128xf32, #tpu.memory_space<vmem>>) attributes {dimension_semantics = [#tpu.dimension_semantics<parallel>], iteration_bounds = array<i64: 2>, scalar_prefetch = 0 : i64, scratch_operands = 1 : i64, tpu.core_type = #tpu.core_type<tc>, window_params = [{transform_indices = @transform_0, window_bounds = array<i64: 8, 6, 10, 128>}, {pipeline_mode = #tpu.pipeline_mode<synchronous>, transform_indices = @transform_1, window_bounds = array<i64: 9, 128, 128>}, {pipeline_mode = #tpu.pipeline_mode<synchronous>, transform_indices = @transform_2, window_bounds = array<i64: 9, 128, 128>}, {pipeline_mode = #tpu.pipeline_mode<synchronous>, transform_indices = @transform_3, window_bounds = array<i64: 1, 128>}, {pipeline_mode = #tpu.pipeline_mode<synchronous>, transform_indices = @transform_4, window_bounds = array<i64: 1, 128>}, {transform_indices = @transform_5, window_bounds = array<i64: 8, 32, 128>}]} {
    %c0 = arith.constant 0 : index
    %c0_0 = arith.constant 0 : index
    %c0_1 = arith.constant 0 : index
    %c0_2 = arith.constant 0 : index
    %0 = vector.load %arg1[%c0, %c0_0, %c0_1, %c0_2] : memref<8x6x10x128xf32, #tpu.memory_space<vmem>>, vector<8x4x8x128xf32>
    %1 = arith.truncf %0 : vector<8x4x8x128xf32> to vector<8x4x8x128xbf16>
    %2 = vector.shape_cast %1 : vector<8x4x8x128xbf16> to vector<256x128xbf16>
    %c0_3 = arith.constant 0 : index
    %c0_4 = arith.constant 0 : index
    %c0_5 = arith.constant 0 : index
    %3 = vector.load %arg2[%c0_3, %c0_4, %c0_5] : memref<9x128x128xbf16, #tpu.memory_space<vmem>>, vector<1x128x128xbf16>
    %4 = vector.shape_cast %3 : vector<1x128x128xbf16> to vector<128x128xbf16>
    %cst = arith.constant dense<0.000000e+00> : vector<256x128xf32>
    %5 = tpu.matmul %2, %4, %cst {dimension_numbers = #tpu.dot_dimension_numbers<[1], [0], [0], [1], [0, 0, 1, 1], [], []>} : vector<256x128xbf16>, vector<128x128xbf16>, vector<256x128xf32> -> vector<256x128xf32>
    %c0_6 = arith.constant 0 : index
    %c0_7 = arith.constant 0 : index
    %c1 = arith.constant 1 : index
    %c0_8 = arith.constant 0 : index
    %6 = vector.load %arg1[%c0_6, %c0_7, %c1, %c0_8] : memref<8x6x10x128xf32, #tpu.memory_space<vmem>>, vector<8x4x8x128xf32>
    %7 = arith.truncf %6 : vector<8x4x8x128xf32> to vector<8x4x8x128xbf16>
    %8 = vector.shape_cast %7 : vector<8x4x8x128xbf16> to vector<256x128xbf16>
    %c1_9 = arith.constant 1 : index
    %c0_10 = arith.constant 0 : index
    %c0_11 = arith.constant 0 : index
    %9 = vector.load %arg2[%c1_9, %c0_10, %c0_11] : memref<9x128x128xbf16, #tpu.memory_space<vmem>>, vector<1x128x128xbf16>
    %10 = vector.shape_cast %9 : vector<1x128x128xbf16> to vector<128x128xbf16>
    %cst_12 = arith.constant dense<0.000000e+00> : vector<256x128xf32>
    %11 = tpu.matmul %8, %10, %cst_12 {dimension_numbers = #tpu.dot_dimension_numbers<[1], [0], [0], [1], [0, 0, 1, 1], [], []>} : vector<256x128xbf16>, vector<128x128xbf16>, vector<256x128xf32> -> vector<256x128xf32>
    %12 = arith.addf %5, %11 : vector<256x128xf32>
    %c0_13 = arith.constant 0 : index
    %c0_14 = arith.constant 0 : index
    %c2 = arith.constant 2 : index
    %c0_15 = arith.constant 0 : index
    %13 = vector.load %arg1[%c0_13, %c0_14, %c2, %c0_15] : memref<8x6x10x128xf32, #tpu.memory_space<vmem>>, vector<8x4x8x128xf32>
    %14 = arith.truncf %13 : vector<8x4x8x128xf32> to vector<8x4x8x128xbf16>
    %15 = vector.shape_cast %14 : vector<8x4x8x128xbf16> to vector<256x128xbf16>
    %c2_16 = arith.constant 2 : index
    %c0_17 = arith.constant 0 : index
    %c0_18 = arith.constant 0 : index
    %16 = vector.load %arg2[%c2_16, %c0_17, %c0_18] : memref<9x128x128xbf16, #tpu.memory_space<vmem>>, vector<1x128x128xbf16>
    %17 = vector.shape_cast %16 : vector<1x128x128xbf16> to vector<128x128xbf16>
    %cst_19 = arith.constant dense<0.000000e+00> : vector<256x128xf32>
    %18 = tpu.matmul %15, %17, %cst_19 {dimension_numbers = #tpu.dot_dimension_numbers<[1], [0], [0], [1], [0, 0, 1, 1], [], []>} : vector<256x128xbf16>, vector<128x128xbf16>, vector<256x128xf32> -> vector<256x128xf32>
    %19 = arith.addf %12, %18 : vector<256x128xf32>
    %c0_20 = arith.constant 0 : index
    %c1_21 = arith.constant 1 : index
    %c0_22 = arith.constant 0 : index
    %c0_23 = arith.constant 0 : index
    %20 = vector.load %arg1[%c0_20, %c1_21, %c0_22, %c0_23] : memref<8x6x10x128xf32, #tpu.memory_space<vmem>>, vector<8x4x8x128xf32>
    %21 = arith.truncf %20 : vector<8x4x8x128xf32> to vector<8x4x8x128xbf16>
    %22 = vector.shape_cast %21 : vector<8x4x8x128xbf16> to vector<256x128xbf16>
    %c3 = arith.constant 3 : index
    %c0_24 = arith.constant 0 : index
    %c0_25 = arith.constant 0 : index
    %23 = vector.load %arg2[%c3, %c0_24, %c0_25] : memref<9x128x128xbf16, #tpu.memory_space<vmem>>, vector<1x128x128xbf16>
    %24 = vector.shape_cast %23 : vector<1x128x128xbf16> to vector<128x128xbf16>
    %cst_26 = arith.constant dense<0.000000e+00> : vector<256x128xf32>
    %25 = tpu.matmul %22, %24, %cst_26 {dimension_numbers = #tpu.dot_dimension_numbers<[1], [0], [0], [1], [0, 0, 1, 1], [], []>} : vector<256x128xbf16>, vector<128x128xbf16>, vector<256x128xf32> -> vector<256x128xf32>
    %26 = arith.addf %19, %25 : vector<256x128xf32>
    %c0_27 = arith.constant 0 : index
    %c1_28 = arith.constant 1 : index
    %c1_29 = arith.constant 1 : index
    %c0_30 = arith.constant 0 : index
    %27 = vector.load %arg1[%c0_27, %c1_28, %c1_29, %c0_30] : memref<8x6x10x128xf32, #tpu.memory_space<vmem>>, vector<8x4x8x128xf32>
    %28 = arith.truncf %27 : vector<8x4x8x128xf32> to vector<8x4x8x128xbf16>
    %29 = vector.shape_cast %28 : vector<8x4x8x128xbf16> to vector<256x128xbf16>
    %c4 = arith.constant 4 : index
    %c0_31 = arith.constant 0 : index
    %c0_32 = arith.constant 0 : index
    %30 = vector.load %arg2[%c4, %c0_31, %c0_32] : memref<9x128x128xbf16, #tpu.memory_space<vmem>>, vector<1x128x128xbf16>
    %31 = vector.shape_cast %30 : vector<1x128x128xbf16> to vector<128x128xbf16>
    %cst_33 = arith.constant dense<0.000000e+00> : vector<256x128xf32>
    %32 = tpu.matmul %29, %31, %cst_33 {dimension_numbers = #tpu.dot_dimension_numbers<[1], [0], [0], [1], [0, 0, 1, 1], [], []>} : vector<256x128xbf16>, vector<128x128xbf16>, vector<256x128xf32> -> vector<256x128xf32>
    %33 = arith.addf %26, %32 : vector<256x128xf32>
    %c0_34 = arith.constant 0 : index
    %c1_35 = arith.constant 1 : index
    %c2_36 = arith.constant 2 : index
    %c0_37 = arith.constant 0 : index
    %34 = vector.load %arg1[%c0_34, %c1_35, %c2_36, %c0_37] : memref<8x6x10x128xf32, #tpu.memory_space<vmem>>, vector<8x4x8x128xf32>
    %35 = arith.truncf %34 : vector<8x4x8x128xf32> to vector<8x4x8x128xbf16>
    %36 = vector.shape_cast %35 : vector<8x4x8x128xbf16> to vector<256x128xbf16>
    %c5 = arith.constant 5 : index
    %c0_38 = arith.constant 0 : index
    %c0_39 = arith.constant 0 : index
    %37 = vector.load %arg2[%c5, %c0_38, %c0_39] : memref<9x128x128xbf16, #tpu.memory_space<vmem>>, vector<1x128x128xbf16>
    %38 = vector.shape_cast %37 : vector<1x128x128xbf16> to vector<128x128xbf16>
    %cst_40 = arith.constant dense<0.000000e+00> : vector<256x128xf32>
    %39 = tpu.matmul %36, %38, %cst_40 {dimension_numbers = #tpu.dot_dimension_numbers<[1], [0], [0], [1], [0, 0, 1, 1], [], []>} : vector<256x128xbf16>, vector<128x128xbf16>, vector<256x128xf32> -> vector<256x128xf32>
    %40 = arith.addf %33, %39 : vector<256x128xf32>
    %c0_41 = arith.constant 0 : index
    %c2_42 = arith.constant 2 : index
    %c0_43 = arith.constant 0 : index
    %c0_44 = arith.constant 0 : index
    %41 = vector.load %arg1[%c0_41, %c2_42, %c0_43, %c0_44] : memref<8x6x10x128xf32, #tpu.memory_space<vmem>>, vector<8x4x8x128xf32>
    %42 = arith.truncf %41 : vector<8x4x8x128xf32> to vector<8x4x8x128xbf16>
    %43 = vector.shape_cast %42 : vector<8x4x8x128xbf16> to vector<256x128xbf16>
    %c6 = arith.constant 6 : index
    %c0_45 = arith.constant 0 : index
    %c0_46 = arith.constant 0 : index
    %44 = vector.load %arg2[%c6, %c0_45, %c0_46] : memref<9x128x128xbf16, #tpu.memory_space<vmem>>, vector<1x128x128xbf16>
    %45 = vector.shape_cast %44 : vector<1x128x128xbf16> to vector<128x128xbf16>
    %cst_47 = arith.constant dense<0.000000e+00> : vector<256x128xf32>
    %46 = tpu.matmul %43, %45, %cst_47 {dimension_numbers = #tpu.dot_dimension_numbers<[1], [0], [0], [1], [0, 0, 1, 1], [], []>} : vector<256x128xbf16>, vector<128x128xbf16>, vector<256x128xf32> -> vector<256x128xf32>
    %47 = arith.addf %40, %46 : vector<256x128xf32>
    %c0_48 = arith.constant 0 : index
    %c2_49 = arith.constant 2 : index
    %c1_50 = arith.constant 1 : index
    %c0_51 = arith.constant 0 : index
    %48 = vector.load %arg1[%c0_48, %c2_49, %c1_50, %c0_51] : memref<8x6x10x128xf32, #tpu.memory_space<vmem>>, vector<8x4x8x128xf32>
    %49 = arith.truncf %48 : vector<8x4x8x128xf32> to vector<8x4x8x128xbf16>
    %50 = vector.shape_cast %49 : vector<8x4x8x128xbf16> to vector<256x128xbf16>
    %c7 = arith.constant 7 : index
    %c0_52 = arith.constant 0 : index
    %c0_53 = arith.constant 0 : index
    %51 = vector.load %arg2[%c7, %c0_52, %c0_53] : memref<9x128x128xbf16, #tpu.memory_space<vmem>>, vector<1x128x128xbf16>
    %52 = vector.shape_cast %51 : vector<1x128x128xbf16> to vector<128x128xbf16>
    %cst_54 = arith.constant dense<0.000000e+00> : vector<256x128xf32>
    %53 = tpu.matmul %50, %52, %cst_54 {dimension_numbers = #tpu.dot_dimension_numbers<[1], [0], [0], [1], [0, 0, 1, 1], [], []>} : vector<256x128xbf16>, vector<128x128xbf16>, vector<256x128xf32> -> vector<256x128xf32>
    %54 = arith.addf %47, %53 : vector<256x128xf32>
    %c0_55 = arith.constant 0 : index
    %c2_56 = arith.constant 2 : index
    %c2_57 = arith.constant 2 : index
    %c0_58 = arith.constant 0 : index
    %55 = vector.load %arg1[%c0_55, %c2_56, %c2_57, %c0_58] : memref<8x6x10x128xf32, #tpu.memory_space<vmem>>, vector<8x4x8x128xf32>
    %56 = arith.truncf %55 : vector<8x4x8x128xf32> to vector<8x4x8x128xbf16>
    %57 = vector.shape_cast %56 : vector<8x4x8x128xbf16> to vector<256x128xbf16>
    %c8 = arith.constant 8 : index
    %c0_59 = arith.constant 0 : index
    %c0_60 = arith.constant 0 : index
    %58 = vector.load %arg2[%c8, %c0_59, %c0_60] : memref<9x128x128xbf16, #tpu.memory_space<vmem>>, vector<1x128x128xbf16>
    %59 = vector.shape_cast %58 : vector<1x128x128xbf16> to vector<128x128xbf16>
    %cst_61 = arith.constant dense<0.000000e+00> : vector<256x128xf32>
    %60 = tpu.matmul %57, %59, %cst_61 {dimension_numbers = #tpu.dot_dimension_numbers<[1], [0], [0], [1], [0, 0, 1, 1], [], []>} : vector<256x128xbf16>, vector<128x128xbf16>, vector<256x128xf32> -> vector<256x128xf32>
    %61 = arith.addf %54, %60 : vector<256x128xf32>
    %c0_62 = arith.constant 0 : index
    %c0_63 = arith.constant 0 : index
    %62 = vector.load %arg4[%c0_62, %c0_63] : memref<1x128xf32, #tpu.memory_space<vmem>>, vector<1x128xf32>
    %63 = vector.broadcast %62 : vector<1x128xf32> to vector<256x128xf32>
    %64 = arith.addf %61, %63 : vector<256x128xf32>
    %cst_64 = arith.constant 0.000000e+00 : f32
    %65 = vector.broadcast %cst_64 : f32 to vector<256x128xf32>
    %66 = arith.maximumf %64, %65 : vector<256x128xf32>
    %cst_65 = arith.constant 0.000000e+00 : f32
    %67 = vector.broadcast %cst_65 : f32 to vector<8x1x10x128xf32>
    %c0_66 = arith.constant 0 : index
    %c0_67 = arith.constant 0 : index
    %c0_68 = arith.constant 0 : index
    %c0_69 = arith.constant 0 : index
    %68 = vector.load %arg7[%c0_66, %c0_67, %c0_68, %c0_69] : memref<8x6x10x128xf32, #tpu.memory_space<vmem>>, vector<8x1x10x128xf32>
    tpu.vector_store %arg7[%c0_66, %c0_67, %c0_68, %c0_69], %67 {strides = array<i32>} : memref<8x6x10x128xf32, #tpu.memory_space<vmem>>, vector<8x1x10x128xf32>,
    %cst_70 = arith.constant 0.000000e+00 : f32
    %69 = vector.broadcast %cst_70 : f32 to vector<8x1x10x128xf32>
    %c0_71 = arith.constant 0 : index
    %c5_72 = arith.constant 5 : index
    %c0_73 = arith.constant 0 : index
    %c0_74 = arith.constant 0 : index
    %70 = vector.load %arg7[%c0_71, %c5_72, %c0_73, %c0_74] : memref<8x6x10x128xf32, #tpu.memory_space<vmem>>, vector<8x1x10x128xf32>
    tpu.vector_store %arg7[%c0_71, %c5_72, %c0_73, %c0_74], %69 {strides = array<i32>} : memref<8x6x10x128xf32, #tpu.memory_space<vmem>>, vector<8x1x10x128xf32>,
    %cst_75 = arith.constant 0.000000e+00 : f32
    %71 = vector.broadcast %cst_75 : f32 to vector<8x4x1x128xf32>
    %c0_76 = arith.constant 0 : index
    %c1_77 = arith.constant 1 : index
    %c0_78 = arith.constant 0 : index
    %c0_79 = arith.constant 0 : index
    %72 = vector.load %arg7[%c0_76, %c1_77, %c0_78, %c0_79] : memref<8x6x10x128xf32, #tpu.memory_space<vmem>>, vector<8x4x1x128xf32>
    tpu.vector_store %arg7[%c0_76, %c1_77, %c0_78, %c0_79], %71 {strides = array<i32>} : memref<8x6x10x128xf32, #tpu.memory_space<vmem>>, vector<8x4x1x128xf32>,
    %cst_80 = arith.constant 0.000000e+00 : f32
    %73 = vector.broadcast %cst_80 : f32 to vector<8x4x1x128xf32>
    %c0_81 = arith.constant 0 : index
    %c1_82 = arith.constant 1 : index
    %c9 = arith.constant 9 : index
    %c0_83 = arith.constant 0 : index
    %74 = vector.load %arg7[%c0_81, %c1_82, %c9, %c0_83] : memref<8x6x10x128xf32, #tpu.memory_space<vmem>>, vector<8x4x1x128xf32>
    tpu.vector_store %arg7[%c0_81, %c1_82, %c9, %c0_83], %73 {strides = array<i32>} : memref<8x6x10x128xf32, #tpu.memory_space<vmem>>, vector<8x4x1x128xf32>,
    %75 = vector.shape_cast %66 : vector<256x128xf32> to vector<8x4x8x128xf32>
    %c0_84 = arith.constant 0 : index
    %c1_85 = arith.constant 1 : index
    %c1_86 = arith.constant 1 : index
    %c0_87 = arith.constant 0 : index
    %76 = vector.load %arg7[%c0_84, %c1_85, %c1_86, %c0_87] : memref<8x6x10x128xf32, #tpu.memory_space<vmem>>, vector<8x4x8x128xf32>
    tpu.vector_store %arg7[%c0_84, %c1_85, %c1_86, %c0_87], %75 {strides = array<i32>} : memref<8x6x10x128xf32, #tpu.memory_space<vmem>>, vector<8x4x8x128xf32>,
    %c0_88 = arith.constant 0 : index
    %c0_89 = arith.constant 0 : index
    %c0_90 = arith.constant 0 : index
    %c0_91 = arith.constant 0 : index
    %77 = vector.load %arg7[%c0_88, %c0_89, %c0_90, %c0_91] : memref<8x6x10x128xf32, #tpu.memory_space<vmem>>, vector<8x4x8x128xf32>
    %78 = arith.truncf %77 : vector<8x4x8x128xf32> to vector<8x4x8x128xbf16>
    %79 = vector.shape_cast %78 : vector<8x4x8x128xbf16> to vector<256x128xbf16>
    %c0_92 = arith.constant 0 : index
    %c0_93 = arith.constant 0 : index
    %c0_94 = arith.constant 0 : index
    %80 = vector.load %arg3[%c0_92, %c0_93, %c0_94] : memref<9x128x128xbf16, #tpu.memory_space<vmem>>, vector<1x128x128xbf16>
    %81 = vector.shape_cast %80 : vector<1x128x128xbf16> to vector<128x128xbf16>
    %cst_95 = arith.constant dense<0.000000e+00> : vector<256x128xf32>
    %82 = tpu.matmul %79, %81, %cst_95 {dimension_numbers = #tpu.dot_dimension_numbers<[1], [0], [0], [1], [0, 0, 1, 1], [], []>} : vector<256x128xbf16>, vector<128x128xbf16>, vector<256x128xf32> -> vector<256x128xf32>
    %c0_96 = arith.constant 0 : index
    %c0_97 = arith.constant 0 : index
    %c1_98 = arith.constant 1 : index
    %c0_99 = arith.constant 0 : index
    %83 = vector.load %arg7[%c0_96, %c0_97, %c1_98, %c0_99] : memref<8x6x10x128xf32, #tpu.memory_space<vmem>>, vector<8x4x8x128xf32>
    %84 = arith.truncf %83 : vector<8x4x8x128xf32> to vector<8x4x8x128xbf16>
    %85 = vector.shape_cast %84 : vector<8x4x8x128xbf16> to vector<256x128xbf16>
    %c1_100 = arith.constant 1 : index
    %c0_101 = arith.constant 0 : index
    %c0_102 = arith.constant 0 : index
    %86 = vector.load %arg3[%c1_100, %c0_101, %c0_102] : memref<9x128x128xbf16, #tpu.memory_space<vmem>>, vector<1x128x128xbf16>
    %87 = vector.shape_cast %86 : vector<1x128x128xbf16> to vector<128x128xbf16>
    %cst_103 = arith.constant dense<0.000000e+00> : vector<256x128xf32>
    %88 = tpu.matmul %85, %87, %cst_103 {dimension_numbers = #tpu.dot_dimension_numbers<[1], [0], [0], [1], [0, 0, 1, 1], [], []>} : vector<256x128xbf16>, vector<128x128xbf16>, vector<256x128xf32> -> vector<256x128xf32>
    %89 = arith.addf %82, %88 : vector<256x128xf32>
    %c0_104 = arith.constant 0 : index
    %c0_105 = arith.constant 0 : index
    %c2_106 = arith.constant 2 : index
    %c0_107 = arith.constant 0 : index
    %90 = vector.load %arg7[%c0_104, %c0_105, %c2_106, %c0_107] : memref<8x6x10x128xf32, #tpu.memory_space<vmem>>, vector<8x4x8x128xf32>
    %91 = arith.truncf %90 : vector<8x4x8x128xf32> to vector<8x4x8x128xbf16>
    %92 = vector.shape_cast %91 : vector<8x4x8x128xbf16> to vector<256x128xbf16>
    %c2_108 = arith.constant 2 : index
    %c0_109 = arith.constant 0 : index
    %c0_110 = arith.constant 0 : index
    %93 = vector.load %arg3[%c2_108, %c0_109, %c0_110] : memref<9x128x128xbf16, #tpu.memory_space<vmem>>, vector<1x128x128xbf16>
    %94 = vector.shape_cast %93 : vector<1x128x128xbf16> to vector<128x128xbf16>
    %cst_111 = arith.constant dense<0.000000e+00> : vector<256x128xf32>
    %95 = tpu.matmul %92, %94, %cst_111 {dimension_numbers = #tpu.dot_dimension_numbers<[1], [0], [0], [1], [0, 0, 1, 1], [], []>} : vector<256x128xbf16>, vector<128x128xbf16>, vector<256x128xf32> -> vector<256x128xf32>
    %96 = arith.addf %89, %95 : vector<256x128xf32>
    %c0_112 = arith.constant 0 : index
    %c1_113 = arith.constant 1 : index
    %c0_114 = arith.constant 0 : index
    %c0_115 = arith.constant 0 : index
    %97 = vector.load %arg7[%c0_112, %c1_113, %c0_114, %c0_115] : memref<8x6x10x128xf32, #tpu.memory_space<vmem>>, vector<8x4x8x128xf32>
    %98 = arith.truncf %97 : vector<8x4x8x128xf32> to vector<8x4x8x128xbf16>
    %99 = vector.shape_cast %98 : vector<8x4x8x128xbf16> to vector<256x128xbf16>
    %c3_116 = arith.constant 3 : index
    %c0_117 = arith.constant 0 : index
    %c0_118 = arith.constant 0 : index
    %100 = vector.load %arg3[%c3_116, %c0_117, %c0_118] : memref<9x128x128xbf16, #tpu.memory_space<vmem>>, vector<1x128x128xbf16>
    %101 = vector.shape_cast %100 : vector<1x128x128xbf16> to vector<128x128xbf16>
    %cst_119 = arith.constant dense<0.000000e+00> : vector<256x128xf32>
    %102 = tpu.matmul %99, %101, %cst_119 {dimension_numbers = #tpu.dot_dimension_numbers<[1], [0], [0], [1], [0, 0, 1, 1], [], []>} : vector<256x128xbf16>, vector<128x128xbf16>, vector<256x128xf32> -> vector<256x128xf32>
    %103 = arith.addf %96, %102 : vector<256x128xf32>
    %c0_120 = arith.constant 0 : index
    %c1_121 = arith.constant 1 : index
    %c1_122 = arith.constant 1 : index
    %c0_123 = arith.constant 0 : index
    %104 = vector.load %arg7[%c0_120, %c1_121, %c1_122, %c0_123] : memref<8x6x10x128xf32, #tpu.memory_space<vmem>>, vector<8x4x8x128xf32>
    %105 = arith.truncf %104 : vector<8x4x8x128xf32> to vector<8x4x8x128xbf16>
    %106 = vector.shape_cast %105 : vector<8x4x8x128xbf16> to vector<256x128xbf16>
    %c4_124 = arith.constant 4 : index
    %c0_125 = arith.constant 0 : index
    %c0_126 = arith.constant 0 : index
    %107 = vector.load %arg3[%c4_124, %c0_125, %c0_126] : memref<9x128x128xbf16, #tpu.memory_space<vmem>>, vector<1x128x128xbf16>
    %108 = vector.shape_cast %107 : vector<1x128x128xbf16> to vector<128x128xbf16>
    %cst_127 = arith.constant dense<0.000000e+00> : vector<256x128xf32>
    %109 = tpu.matmul %106, %108, %cst_127 {dimension_numbers = #tpu.dot_dimension_numbers<[1], [0], [0], [1], [0, 0, 1, 1], [], []>} : vector<256x128xbf16>, vector<128x128xbf16>, vector<256x128xf32> -> vector<256x128xf32>
    %110 = arith.addf %103, %109 : vector<256x128xf32>
    %c0_128 = arith.constant 0 : index
    %c1_129 = arith.constant 1 : index
    %c2_130 = arith.constant 2 : index
    %c0_131 = arith.constant 0 : index
    %111 = vector.load %arg7[%c0_128, %c1_129, %c2_130, %c0_131] : memref<8x6x10x128xf32, #tpu.memory_space<vmem>>, vector<8x4x8x128xf32>
    %112 = arith.truncf %111 : vector<8x4x8x128xf32> to vector<8x4x8x128xbf16>
    %113 = vector.shape_cast %112 : vector<8x4x8x128xbf16> to vector<256x128xbf16>
    %c5_132 = arith.constant 5 : index
    %c0_133 = arith.constant 0 : index
    %c0_134 = arith.constant 0 : index
    %114 = vector.load %arg3[%c5_132, %c0_133, %c0_134] : memref<9x128x128xbf16, #tpu.memory_space<vmem>>, vector<1x128x128xbf16>
    %115 = vector.shape_cast %114 : vector<1x128x128xbf16> to vector<128x128xbf16>
    %cst_135 = arith.constant dense<0.000000e+00> : vector<256x128xf32>
    %116 = tpu.matmul %113, %115, %cst_135 {dimension_numbers = #tpu.dot_dimension_numbers<[1], [0], [0], [1], [0, 0, 1, 1], [], []>} : vector<256x128xbf16>, vector<128x128xbf16>, vector<256x128xf32> -> vector<256x128xf32>
    %117 = arith.addf %110, %116 : vector<256x128xf32>
    %c0_136 = arith.constant 0 : index
    %c2_137 = arith.constant 2 : index
    %c0_138 = arith.constant 0 : index
    %c0_139 = arith.constant 0 : index
    %118 = vector.load %arg7[%c0_136, %c2_137, %c0_138, %c0_139] : memref<8x6x10x128xf32, #tpu.memory_space<vmem>>, vector<8x4x8x128xf32>
    %119 = arith.truncf %118 : vector<8x4x8x128xf32> to vector<8x4x8x128xbf16>
    %120 = vector.shape_cast %119 : vector<8x4x8x128xbf16> to vector<256x128xbf16>
    %c6_140 = arith.constant 6 : index
    %c0_141 = arith.constant 0 : index
    %c0_142 = arith.constant 0 : index
    %121 = vector.load %arg3[%c6_140, %c0_141, %c0_142] : memref<9x128x128xbf16, #tpu.memory_space<vmem>>, vector<1x128x128xbf16>
    %122 = vector.shape_cast %121 : vector<1x128x128xbf16> to vector<128x128xbf16>
    %cst_143 = arith.constant dense<0.000000e+00> : vector<256x128xf32>
    %123 = tpu.matmul %120, %122, %cst_143 {dimension_numbers = #tpu.dot_dimension_numbers<[1], [0], [0], [1], [0, 0, 1, 1], [], []>} : vector<256x128xbf16>, vector<128x128xbf16>, vector<256x128xf32> -> vector<256x128xf32>
    %124 = arith.addf %117, %123 : vector<256x128xf32>
    %c0_144 = arith.constant 0 : index
    %c2_145 = arith.constant 2 : index
    %c1_146 = arith.constant 1 : index
    %c0_147 = arith.constant 0 : index
    %125 = vector.load %arg7[%c0_144, %c2_145, %c1_146, %c0_147] : memref<8x6x10x128xf32, #tpu.memory_space<vmem>>, vector<8x4x8x128xf32>
    %126 = arith.truncf %125 : vector<8x4x8x128xf32> to vector<8x4x8x128xbf16>
    %127 = vector.shape_cast %126 : vector<8x4x8x128xbf16> to vector<256x128xbf16>
    %c7_148 = arith.constant 7 : index
    %c0_149 = arith.constant 0 : index
    %c0_150 = arith.constant 0 : index
    %128 = vector.load %arg3[%c7_148, %c0_149, %c0_150] : memref<9x128x128xbf16, #tpu.memory_space<vmem>>, vector<1x128x128xbf16>
    %129 = vector.shape_cast %128 : vector<1x128x128xbf16> to vector<128x128xbf16>
    %cst_151 = arith.constant dense<0.000000e+00> : vector<256x128xf32>
    %130 = tpu.matmul %127, %129, %cst_151 {dimension_numbers = #tpu.dot_dimension_numbers<[1], [0], [0], [1], [0, 0, 1, 1], [], []>} : vector<256x128xbf16>, vector<128x128xbf16>, vector<256x128xf32> -> vector<256x128xf32>
    %131 = arith.addf %124, %130 : vector<256x128xf32>
    %c0_152 = arith.constant 0 : index
    %c2_153 = arith.constant 2 : index
    %c2_154 = arith.constant 2 : index
    %c0_155 = arith.constant 0 : index
    %132 = vector.load %arg7[%c0_152, %c2_153, %c2_154, %c0_155] : memref<8x6x10x128xf32, #tpu.memory_space<vmem>>, vector<8x4x8x128xf32>
    %133 = arith.truncf %132 : vector<8x4x8x128xf32> to vector<8x4x8x128xbf16>
    %134 = vector.shape_cast %133 : vector<8x4x8x128xbf16> to vector<256x128xbf16>
    %c8_156 = arith.constant 8 : index
    %c0_157 = arith.constant 0 : index
    %c0_158 = arith.constant 0 : index
    %135 = vector.load %arg3[%c8_156, %c0_157, %c0_158] : memref<9x128x128xbf16, #tpu.memory_space<vmem>>, vector<1x128x128xbf16>
    %136 = vector.shape_cast %135 : vector<1x128x128xbf16> to vector<128x128xbf16>
    %cst_159 = arith.constant dense<0.000000e+00> : vector<256x128xf32>
    %137 = tpu.matmul %134, %136, %cst_159 {dimension_numbers = #tpu.dot_dimension_numbers<[1], [0], [0], [1], [0, 0, 1, 1], [], []>} : vector<256x128xbf16>, vector<128x128xbf16>, vector<256x128xf32> -> vector<256x128xf32>
    %138 = arith.addf %131, %137 : vector<256x128xf32>
    %c0_160 = arith.constant 0 : index
    %c0_161 = arith.constant 0 : index
    %139 = vector.load %arg5[%c0_160, %c0_161] : memref<1x128xf32, #tpu.memory_space<vmem>>, vector<1x128xf32>
    %140 = vector.broadcast %139 : vector<1x128xf32> to vector<256x128xf32>
    %141 = arith.addf %138, %140 : vector<256x128xf32>
    %c0_162 = arith.constant 0 : index
    %c1_163 = arith.constant 1 : index
    %c1_164 = arith.constant 1 : index
    %c0_165 = arith.constant 0 : index
    %142 = vector.load %arg1[%c0_162, %c1_163, %c1_164, %c0_165] : memref<8x6x10x128xf32, #tpu.memory_space<vmem>>, vector<8x4x8x128xf32>
    %143 = vector.shape_cast %142 : vector<8x4x8x128xf32> to vector<256x128xf32>
    %144 = arith.addf %141, %143 : vector<256x128xf32>
    %145 = vector.shape_cast %144 : vector<256x128xf32> to vector<8x32x128xf32>
    %c0_166 = arith.constant 0 : index
    %c0_167 = arith.constant 0 : index
    %c0_168 = arith.constant 0 : index
    %146 = vector.load %arg6[%c0_166, %c0_167, %c0_168] : memref<8x32x128xf32, #tpu.memory_space<vmem>>, vector<8x32x128xf32>
    tpu.vector_store %arg6[%c0_166, %c0_167, %c0_168], %145 {strides = array<i32>} : memref<8x32x128xf32, #tpu.memory_space<vmem>>, vector<8x32x128xf32>,
    return
  }
  func.func @transform_0(%arg0: i32) -> (i32, i32, i32, i32) {
    %c0_i32 = arith.constant 0 : i32
    %c0_i32_0 = arith.constant 0 : i32
    %c0_i32_1 = arith.constant 0 : i32
    %c0_i32_2 = arith.constant 0 : i32
    return %arg0, %c0_i32, %c0_i32_0, %c0_i32_1 : i32, i32, i32, i32
  }
  func.func @transform_1(%arg0: i32) -> (i32, i32, i32) {
    %c0_i32 = arith.constant 0 : i32
    %c0_i32_0 = arith.constant 0 : i32
    %c0_i32_1 = arith.constant 0 : i32
    %c0_i32_2 = arith.constant 0 : i32
    return %c0_i32, %c0_i32_0, %c0_i32_1 : i32, i32, i32
  }
  func.func @transform_2(%arg0: i32) -> (i32, i32, i32) {
    %c0_i32 = arith.constant 0 : i32
    %c0_i32_0 = arith.constant 0 : i32
    %c0_i32_1 = arith.constant 0 : i32
    %c0_i32_2 = arith.constant 0 : i32
    return %c0_i32, %c0_i32_0, %c0_i32_1 : i32, i32, i32
  }
  func.func @transform_3(%arg0: i32) -> (i32, i32) {
    %c0_i32 = arith.constant 0 : i32
    %c0_i32_0 = arith.constant 0 : i32
    %c0_i32_1 = arith.constant 0 : i32
    return %c0_i32, %c0_i32_0 : i32, i32
  }
  func.func @transform_4(%arg0: i32) -> (i32, i32) {
    %c0_i32 = arith.constant 0 : i32
    %c0_i32_0 = arith.constant 0 : i32
    %c0_i32_1 = arith.constant 0 : i32
    return %c0_i32, %c0_i32_0 : i32, i32
  }
  func.func @transform_5(%arg0: i32) -> (i32, i32, i32) {
    %c0_i32 = arith.constant 0 : i32
    %c0_i32_0 = arith.constant 0 : i32
    %c0_i32_1 = arith.constant 0 : i32
    return %arg0, %c0_i32, %c0_i32_0 : i32, i32, i32
  }
}

</mosaic_0001>

<llo_original>
// kernel: tpu_custom_call.1
$region0: #{tpu_custom_call.1}
  #allocation0 [shape = 'u32[]', space=smem, size = 0x4, offset = 0x4, fixed_abs, tag = 'smem constant byte address 0x4 - core index']
  #allocation1 [shape = 'u32[144,128]{1,0:T(1,128)}', space=vmem, size = 0x12000, scoped, tag = 'internal scratch']
  #allocation2 [shape = 'f32[8,6,10,128]{3,2,1,0:T(8,128)}', space=vmem, size = 0x60000, scoped, tag = 'scratch operand']
  %s0 = inlined_call_operand.vmem [shape: f32[16,6,10,128], index: 0, kind: input, shape index: {}]
  %s1 = inlined_call_operand.vmem [shape: bf16[9,128,128], index: 1, kind: input, shape index: {}]
  %s2 = inlined_call_operand.vmem [shape: bf16[9,128,128], index: 2, kind: input, shape index: {}]
  %s3 = inlined_call_operand.vmem [shape: f32[1,128], index: 3, kind: input, shape index: {}]
  %s4 = inlined_call_operand.vmem [shape: f32[1,128], index: 4, kind: input, shape index: {}]
  %s5 = inlined_call_operand.hbm [shape: f32[16,32,128], index: 5, kind: output, shape index: {}]
  %s6 = sld [smem:[#allocation0]]
  $region53: #{tpu_custom_call.1} parent=0
    _
  %s8 = ssub.s32 1, %s6
  %s9 = scalar_select 0, %s8, %s6
  $region1: #{tpu_custom_call.1} parent=0
    #allocation3 [shape = 'u8[262144]{0}', space=vmem, size = 0x40000, scoped, tag = 'output window, operand 0']
    #allocation4 [shape = 's32[2]{0}', space=sflag, size = 0x8, scoped, tag = 'scoped memory for tpu_custom_call.1']
    %10 = vsyncpa [#allocation4], 0
    %s11 = scalar_lea.sflag [#allocation4], 1
    %12 = vsyncpa %s11, 0
    loop: start=0, step=1, limit=4
    $region2: #{tpu_custom_call.1} parent=1 // loop_pre_header
      _
    $region3: #{tpu_custom_call.1} parent=1 // loop_header
      %s14 = sphi 0, %s18
      %p15 = scmp.ge.s32.totalorder %s14, 4
      %s24 = sphi 0, %s26
      %s27 = sphi 0, %s24
      %s28 = sphi 0, %s27
      %s44 = sphi 0, %s28
      %s48 = sphi 0, %s48
      %s50 = sphi 0, %s48
      %s51 = sphi 0, %s50
      %s65 = sphi 0, %s51
      %s69 = sphi 0, %s69
      %s71 = sphi 0, %s69
      %s72 = sphi 0, %s71
      %s86 = sphi 0, %s72
      %s90 = sphi 0, %s90
      %s92 = sphi 0, %s90
      %s93 = sphi 0, %s92
      %s107 = sphi 0, %s93
      %s111 = sphi 0, %s111
      %s113 = sphi 0, %s111
      %s114 = sphi 0, %s113
      %s128 = sphi 0, %s114
      %s134 = sphi 0, %s136
      %s137 = sphi 0, %s134
      %s138 = sphi 0, %s137
      %s154 = sphi 0, %s138
    $region4: #{tpu_custom_call.1} parent=1 // loop_header_branch
      %17 = sbr.rel (%p15) target = $region8
    $region5: #{tpu_custom_call.1} parent=1 // loop_body
      %s19 = ssub.s32 %s14, 1
      %s20 = ssub.s32 %s14, 2
      %s21 = sadd.s32 %s14, 1
      %s22 = ssub.s32 %s14, %s21
      %p23 = scmp.eq.s32.totalorder %s22, 0
      %s25 = sadd.s32 %s24, 1
      %s26 = scalar_select %p23, %s24, %s25
      %p29 = pneg %p23
      %p30 = scmp.eq.s32.totalorder %s14, 1
      %p31 = por %p29, %p30
      %p32 = scmp.ne.s32.totalorder %s24, %s27
      %p33 = scmp.eq.s32.totalorder %s14, 0
      %p34 = por %p32, %p33
      %p35 = scmp.ne.s32.totalorder %s24, %s27
      %p36 = scmp.eq.s32.totalorder %s19, 1
      %p37 = por %p35, %p36
      %p38 = scmp.ne.s32.totalorder %s27, %s28
      %p39 = scmp.eq.s32.totalorder %s19, 0
      %p40 = por %p38, %p39
      %p41 = scmp.ne.s32.totalorder %s27, %s28
      %p42 = scmp.eq.s32.totalorder %s20, 1
      %p43 = por %p41, %p42
      %p45 = scmp.ne.s32.totalorder %s28, %s44
      %p46 = scmp.eq.s32.totalorder %s20, 0
      %p47 = por %p45, %p46
      %s49 = sadd.s32 %s48, 1
      %p52 = scmp.eq.s32.totalorder %s14, 1
      %p53 = scmp.ne.s32.totalorder %s48, %s50
      %p54 = scmp.eq.s32.totalorder %s14, 0
      %p55 = por %p53, %p54
      %p56 = scmp.ne.s32.totalorder %s48, %s50
      %p57 = scmp.eq.s32.totalorder %s19, 1
      %p58 = por %p56, %p57
      %p59 = scmp.ne.s32.totalorder %s50, %s51
      %p60 = scmp.eq.s32.totalorder %s19, 0
      %p61 = por %p59, %p60
      %p62 = scmp.ne.s32.totalorder %s50, %s51
      %p63 = scmp.eq.s32.totalorder %s20, 1
      %p64 = por %p62, %p63
      %p66 = scmp.ne.s32.totalorder %s51, %s65
      %p67 = scmp.eq.s32.totalorder %s20, 0
      %p68 = por %p66, %p67
      %s70 = sadd.s32 %s69, 1
      %p73 = scmp.eq.s32.totalorder %s14, 1
      %p74 = scmp.ne.s32.totalorder %s69, %s71
      %p75 = scmp.eq.s32.totalorder %s14, 0
      %p76 = por %p74, %p75
      %p77 = scmp.ne.s32.totalorder %s69, %s71
      %p78 = scmp.eq.s32.totalorder %s19, 1
      %p79 = por %p77, %p78
      %p80 = scmp.ne.s32.totalorder %s71, %s72
      %p81 = scmp.eq.s32.totalorder %s19, 0
      %p82 = por %p80, %p81
      %p83 = scmp.ne.s32.totalorder %s71, %s72
      %p84 = scmp.eq.s32.totalorder %s20, 1
      %p85 = por %p83, %p84
      %p87 = scmp.ne.s32.totalorder %s72, %s86
      %p88 = scmp.eq.s32.totalorder %s20, 0
      %p89 = por %p87, %p88
      %s91 = sadd.s32 %s90, 1
      %p94 = scmp.eq.s32.totalorder %s14, 1
      %p95 = scmp.ne.s32.totalorder %s90, %s92
      %p96 = scmp.eq.s32.totalorder %s14, 0
      %p97 = por %p95, %p96
      %p98 = scmp.ne.s32.totalorder %s90, %s92
      %p99 = scmp.eq.s32.totalorder %s19, 1
      %p100 = por %p98, %p99
      %p101 = scmp.ne.s32.totalorder %s92, %s93
      %p102 = scmp.eq.s32.totalorder %s19, 0
      %p103 = por %p101, %p102
      %p104 = scmp.ne.s32.totalorder %s92, %s93
      %p105 = scmp.eq.s32.totalorder %s20, 1
      %p106 = por %p104, %p105
      %p108 = scmp.ne.s32.totalorder %s93, %s107
      %p109 = scmp.eq.s32.totalorder %s20, 0
      %p110 = por %p108, %p109
      %s112 = sadd.s32 %s111, 1
      %p115 = scmp.eq.s32.totalorder %s14, 1
      %p116 = scmp.ne.s32.totalorder %s111, %s113
      %p117 = scmp.eq.s32.totalorder %s14, 0
      %p118 = por %p116, %p117
      %p119 = scmp.ne.s32.totalorder %s111, %s113
      %p120 = scmp.eq.s32.totalorder %s19, 1
      %p121 = por %p119, %p120
      %p122 = scmp.ne.s32.totalorder %s113, %s114
      %p123 = scmp.eq.s32.totalorder %s19, 0
      %p124 = por %p122, %p123
      %p125 = scmp.ne.s32.totalorder %s113, %s114
      %p126 = scmp.eq.s32.totalorder %s20, 1
      %p127 = por %p125, %p126
      %p129 = scmp.ne.s32.totalorder %s114, %s128
      %p130 = scmp.eq.s32.totalorder %s20, 0
      %p131 = por %p129, %p130
      %s132 = ssub.s32 %s14, %s21
      %p133 = scmp.eq.s32.totalorder %s132, 0
      %s135 = sadd.s32 %s134, 1
      %s136 = scalar_select %p133, %s134, %s135
      %p139 = pneg %p133
      %p140 = scmp.eq.s32.totalorder %s14, 1
      %p141 = por %p139, %p140
      %p142 = scmp.ne.s32.totalorder %s134, %s137
      %p143 = scmp.eq.s32.totalorder %s14, 0
      %p144 = por %p142, %p143
      %p145 = scmp.ne.s32.totalorder %s134, %s137
      %p146 = scmp.eq.s32.totalorder %s19, 1
      %p147 = por %p145, %p146
      %p148 = scmp.ne.s32.totalorder %s137, %s138
      %p149 = scmp.eq.s32.totalorder %s19, 0
      %p150 = por %p148, %p149
      %p151 = scmp.ne.s32.totalorder %s137, %s138
      %p152 = scmp.eq.s32.totalorder %s20, 1
      %p153 = por %p151, %p152
      %p155 = scmp.ne.s32.totalorder %s138, %s154
      %p156 = scmp.eq.s32.totalorder %s20, 0
      %p157 = por %p155, %p156
      %p158 = scmp.le.s32.totalorder 1, %s14
      %p159 = scmp.lt.s32.totalorder %s14, 3
      %p160 = pnand %p158, %p159
      %p161 = pneg %p160
      // Predicated region
      $region9: #{tpu_custom_call.1} parent=5 // pred_check
        _
      $region10: #{tpu_custom_call.1} parent=5 // pred_check_branch
        %163 = sbr.rel (%p160) target = $region12
      $region11: #{tpu_custom_call.1} parent=5 // pred_region
        %s164 = ssub.s32 %s14, 1
        // Predicated region
        $region13: #{tpu_custom_call.1} parent=11 // pred_check
          %p165 = pneg %p61
        $region14: #{tpu_custom_call.1} parent=11 // pred_check_branch
          %167 = sbr.rel (%p165) target = $region16
        $region15: #{tpu_custom_call.1} parent=11 // pred_region
          _
        $region16: #{tpu_custom_call.1} parent=11 // pred_fallthru
          _
        // Predicated region
        $region17: #{tpu_custom_call.1} parent=11 // pred_check
          %p168 = pneg %p82
        $region18: #{tpu_custom_call.1} parent=11 // pred_check_branch
          %170 = sbr.rel (%p168) target = $region20
        $region19: #{tpu_custom_call.1} parent=11 // pred_region
          _
        $region20: #{tpu_custom_call.1} parent=11 // pred_fallthru
          _
        // Predicated region
        $region21: #{tpu_custom_call.1} parent=11 // pred_check
          %p171 = pneg %p103
        $region22: #{tpu_custom_call.1} parent=11 // pred_check_branch
          %173 = sbr.rel (%p171) target = $region24
        $region23: #{tpu_custom_call.1} parent=11 // pred_region
          _
        $region24: #{tpu_custom_call.1} parent=11 // pred_fallthru
          _
        // Predicated region
        $region25: #{tpu_custom_call.1} parent=11 // pred_check
          %p174 = pneg %p124
        $region26: #{tpu_custom_call.1} parent=11 // pred_check_branch
          %176 = sbr.rel (%p174) target = $region28
        $region27: #{tpu_custom_call.1} parent=11 // pred_region
          _
        $region28: #{tpu_custom_call.1} parent=11 // pred_fallthru
          _
      $region12: #{tpu_custom_call.1} parent=5 // pred_fallthru
        _
      %p177 = scmp.lt.s32.totalorder %s14, 2
      // Predicated region
      $region29: #{tpu_custom_call.1} parent=5 // pred_check
        %p178 = pneg %p177
      $region30: #{tpu_custom_call.1} parent=5 // pred_check_branch
        %180 = sbr.rel (%p178) target = $region32
      $region31: #{tpu_custom_call.1} parent=5 // pred_region
        // Predicated region
        $region33: #{tpu_custom_call.1} parent=31 // pred_check
          %p181 = pneg %p34
        $region34: #{tpu_custom_call.1} parent=31 // pred_check_branch
          %183 = sbr.rel (%p181) target = $region36
        $region35: #{tpu_custom_call.1} parent=31 // pred_region
          %s184 = smul.u32 8, %s14
          %p185 = scmp.lt.s32.totalorder %s184, 15
          %s186 = scalar_select %p185, %s184, 15
          %s187 = smul.addr %s186, 12
          %s188 = smul.addr %s187, 8
          %s189 = scalar_lea.vmem %s0, %s188
          %s190 = smul.u32 8, %s14
        $region36: #{tpu_custom_call.1} parent=31 // pred_fallthru
          _
      $region32: #{tpu_custom_call.1} parent=5 // pred_fallthru
        _
      %p191 = scmp.le.s32.totalorder 1, %s14
      %p192 = scmp.lt.s32.totalorder %s14, 3
      %p193 = pnand %p191, %p192
      %p194 = pneg %p193
      // Predicated region
      $region37: #{tpu_custom_call.1} parent=5 // pred_check
        _
      $region38: #{tpu_custom_call.1} parent=5 // pred_check_branch
        %196 = sbr.rel (%p193) target = $region40
      $region39: #{tpu_custom_call.1} parent=5 // pred_region
        %s197 = ssub.s32 %s14, 1
        %s198 = smul.u32 8, %s19
        %p199 = scmp.lt.s32.totalorder %s198, 15
        %s200 = scalar_select %p199, %s198, 15
        %s201 = smul.addr %s200, 12
        %s202 = smul.addr %s201, 8
        %s203 = scalar_lea.vmem %s0, %s202
        %p204 = pneg %p40
        %p205 = pneg %p37
        %p206 = pneg %p61
        %p207 = pneg %p58
        %p208 = pneg %p82
        %p209 = pneg %p79
        %p210 = pneg %p103
        %p211 = pneg %p100
        %p212 = pneg %p124
        %p213 = pneg %p121
        %p214 = pneg %p150
        %p215 = pneg %p147
        %s216 = sand.u32 %s137, 1
        %s217 = scalar_lea.sflag [#allocation4], %s216
        %s218 = sand.u32 %s137, 1
        %s219 = smul.addr %s218, 256
        %s220 = scalar_lea.vmem [#allocation3], %s219
        %s221 = smul.u32 8, %s19
        %p222 = scmp.lt.s32.totalorder %s221, 15
        %s223 = scalar_select %p222, %s221, 15
        %s224 = smul.addr %s223, 12
        %s225 = smul.addr %s224, 8
        %s226 = scalar_lea.vmem %s0, %s225
        %s227 = smul.u32 8, %s19
        %s228 = smul.u32 8, %s19
        %v230 = vld [vmem:[%s226] sm:$0xff]
        %v231 = vld [vmem:[%s226 + $0x10] sm:$0xff]
        %v232 = vld [vmem:[%s226 + $0x20] sm:$0xff]
        %v233 = vld [vmem:[%s226 + $0x30] sm:$0xff]
        %v234 = vld [vmem:[%s226 + $0x60] sm:$0xff]
        %v235 = vld [vmem:[%s226 + $0x70] sm:$0xff]
        %v236 = vld [vmem:[%s226 + $0x80] sm:$0xff]
        %v237 = vld [vmem:[%s226 + $0x90] sm:$0xff]
        %v238 = vld [vmem:[%s226 + $0xc0] sm:$0xff]
        %v239 = vld [vmem:[%s226 + $0xd0] sm:$0xff]
        %v240 = vld [vmem:[%s226 + $0xe0] sm:$0xff]
        %v241 = vld [vmem:[%s226 + $0xf0] sm:$0xff]
        %v242 = vld [vmem:[%s226 + $0x120] sm:$0xff]
        %v243 = vld [vmem:[%s226 + $0x130] sm:$0xff]
        %v244 = vld [vmem:[%s226 + $0x140] sm:$0xff]
        %v245 = vld [vmem:[%s226 + $0x150] sm:$0xff]
        %v246 = vld [vmem:[%s226 + $0x180] sm:$0xff]
        %v247 = vld [vmem:[%s226 + $0x190] sm:$0xff]
        %v248 = vld [vmem:[%s226 + $0x1a0] sm:$0xff]
        %v249 = vld [vmem:[%s226 + $0x1b0] sm:$0xff]
        %v250 = vld [vmem:[%s226 + $0x1e0] sm:$0xff]
        %v251 = vld [vmem:[%s226 + $0x1f0] sm:$0xff]
        %v252 = vld [vmem:[%s226 + $0x200] sm:$0xff]
        %v253 = vld [vmem:[%s226 + $0x210] sm:$0xff]
        %v254 = vld [vmem:[%s226 + $0x240] sm:$0xff]
        %v255 = vld [vmem:[%s226 + $0x250] sm:$0xff]
        %v256 = vld [vmem:[%s226 + $0x260] sm:$0xff]
        %v257 = vld [vmem:[%s226 + $0x270] sm:$0xff]
        %v258 = vld [vmem:[%s226 + $0x2a0] sm:$0xff]
        %v259 = vld [vmem:[%s226 + $0x2b0] sm:$0xff]
        %v260 = vld [vmem:[%s226 + $0x2c0] sm:$0xff]
        %v261 = vld [vmem:[%s226 + $0x2d0] sm:$0xff]
        %v262 = vpack.c.bf16 %v230, %v230
        %v263 = vpack.c.bf16 %v231, %v231
        %v264 = vpack.c.bf16 %v232, %v232
        %v265 = vpack.c.bf16 %v233, %v233
        %v266 = vpack.c.bf16 %v234, %v234
        %v267 = vpack.c.bf16 %v235, %v235
        %v268 = vpack.c.bf16 %v236, %v236
        %v269 = vpack.c.bf16 %v237, %v237
        %v270 = vpack.c.bf16 %v238, %v238
        %v271 = vpack.c.bf16 %v239, %v239
        %v272 = vpack.c.bf16 %v240, %v240
        %v273 = vpack.c.bf16 %v241, %v241
        %v274 = vpack.c.bf16 %v242, %v242
        %v275 = vpack.c.bf16 %v243, %v243
        %v276 = vpack.c.bf16 %v244, %v244
        %v277 = vpack.c.bf16 %v245, %v245
        %v278 = vpack.c.bf16 %v246, %v246
        %v279 = vpack.c.bf16 %v247, %v247
        %v280 = vpack.c.bf16 %v248, %v248
        %v281 = vpack.c.bf16 %v249, %v249
        %v282 = vpack.c.bf16 %v250, %v250
        %v283 = vpack.c.bf16 %v251, %v251
        %v284 = vpack.c.bf16 %v252, %v252
        %v285 = vpack.c.bf16 %v253, %v253
        %v286 = vpack.c.bf16 %v254, %v254
        %v287 = vpack.c.bf16 %v255, %v255
        %v288 = vpack.c.bf16 %v256, %v256
        %v289 = vpack.c.bf16 %v257, %v257
        %v290 = vpack.c.bf16 %v258, %v258
        %v291 = vpack.c.bf16 %v259, %v259
        %v292 = vpack.c.bf16 %v260, %v260
        %v293 = vpack.c.bf16 %v261, %v261
        %v294 = vld [vmem:[%s1] sm:$0xf]
        %v295 = vld [vmem:[%s1 + $0x4] sm:$0xf]
        %v296 = vld [vmem:[%s1 + $0x8] sm:$0xf]
        %v297 = vld [vmem:[%s1 + $0xc] sm:$0xf]
        %v298 = vld [vmem:[%s1 + $0x10] sm:$0xf]
        %v299 = vld [vmem:[%s1 + $0x14] sm:$0xf]
        %v300 = vld [vmem:[%s1 + $0x18] sm:$0xf]
        %v301 = vld [vmem:[%s1 + $0x1c] sm:$0xf]
        %v302 = vld [vmem:[%s1 + $0x20] sm:$0xf]
        %v303 = vld [vmem:[%s1 + $0x24] sm:$0xf]
        %v304 = vld [vmem:[%s1 + $0x28] sm:$0xf]
        %v305 = vld [vmem:[%s1 + $0x2c] sm:$0xf]
        %v306 = vld [vmem:[%s1 + $0x30] sm:$0xf]
        %v307 = vld [vmem:[%s1 + $0x34] sm:$0xf]
        %v308 = vld [vmem:[%s1 + $0x38] sm:$0xf]
        %v309 = vld [vmem:[%s1 + $0x3c] sm:$0xf]
        %v310 = vld [vmem:[%s226 + $0x1] sm:$0xff]
        %v311 = vld [vmem:[%s226 + $0x11] sm:$0xff]
        %v312 = vld [vmem:[%s226 + $0x21] sm:$0xff]
        %v313 = vld [vmem:[%s226 + $0x31] sm:$0xff]
        %v314 = vld [vmem:[%s226 + $0x61] sm:$0xff]
        %v315 = vld [vmem:[%s226 + $0x71] sm:$0xff]
        %v316 = vld [vmem:[%s226 + $0x81] sm:$0xff]
        %v317 = vld [vmem:[%s226 + $0x91] sm:$0xff]
        %v318 = vld [vmem:[%s226 + $0xc1] sm:$0xff]
        %v319 = vld [vmem:[%s226 + $0xd1] sm:$0xff]
        %v320 = vld [vmem:[%s226 + $0xe1] sm:$0xff]
        %v321 = vld [vmem:[%s226 + $0xf1] sm:$0xff]
        %v322 = vld [vmem:[%s226 + $0x121] sm:$0xff]
        %v323 = vld [vmem:[%s226 + $0x131] sm:$0xff]
        %v324 = vld [vmem:[%s226 + $0x141] sm:$0xff]
        %v325 = vld [vmem:[%s226 + $0x151] sm:$0xff]
        %v326 = vld [vmem:[%s226 + $0x181] sm:$0xff]
        %v327 = vld [vmem:[%s226 + $0x191] sm:$0xff]
        %v328 = vld [vmem:[%s226 + $0x1a1] sm:$0xff]
        %v329 = vld [vmem:[%s226 + $0x1b1] sm:$0xff]
        %v330 = vld [vmem:[%s226 + $0x1e1] sm:$0xff]
        %v331 = vld [vmem:[%s226 + $0x1f1] sm:$0xff]
        %v332 = vld [vmem:[%s226 + $0x201] sm:$0xff]
        %v333 = vld [vmem:[%s226 + $0x211] sm:$0xff]
        %v334 = vld [vmem:[%s226 + $0x241] sm:$0xff]
        %v335 = vld [vmem:[%s226 + $0x251] sm:$0xff]
        %v336 = vld [vmem:[%s226 + $0x261] sm:$0xff]
        %v337 = vld [vmem:[%s226 + $0x271] sm:$0xff]
        %v338 = vld [vmem:[%s226 + $0x2a1] sm:$0xff]
        %v339 = vld [vmem:[%s226 + $0x2b1] sm:$0xff]
        %v340 = vld [vmem:[%s226 + $0x2c1] sm:$0xff]
        %v341 = vld [vmem:[%s226 + $0x2d1] sm:$0xff]
        %v342 = vpack.c.bf16 %v310, %v310
        %v343 = vpack.c.bf16 %v311, %v311
        %v344 = vpack.c.bf16 %v312, %v312
        %v345 = vpack.c.bf16 %v313, %v313
        %v346 = vpack.c.bf16 %v314, %v314
        %v347 = vpack.c.bf16 %v315, %v315
        %v348 = vpack.c.bf16 %v316, %v316
        %v349 = vpack.c.bf16 %v317, %v317
        %v350 = vpack.c.bf16 %v318, %v318
        %v351 = vpack.c.bf16 %v319, %v319
        %v352 = vpack.c.bf16 %v320, %v320
        %v353 = vpack.c.bf16 %v321, %v321
        %v354 = vpack.c.bf16 %v322, %v322
        %v355 = vpack.c.bf16 %v323, %v323
        %v356 = vpack.c.bf16 %v324, %v324
        %v357 = vpack.c.bf16 %v325, %v325
        %v358 = vpack.c.bf16 %v326, %v326
        %v359 = vpack.c.bf16 %v327, %v327
        %v360 = vpack.c.bf16 %v328, %v328
        %v361 = vpack.c.bf16 %v329, %v329
        %v362 = vpack.c.bf16 %v330, %v330
        %v363 = vpack.c.bf16 %v331, %v331
        %v364 = vpack.c.bf16 %v332, %v332
        %v365 = vpack.c.bf16 %v333, %v333
        %v366 = vpack.c.bf16 %v334, %v334
        %v367 = vpack.c.bf16 %v335, %v335
        %v368 = vpack.c.bf16 %v336, %v336
        %v369 = vpack.c.bf16 %v337, %v337
        %v370 = vpack.c.bf16 %v338, %v338
        %v371 = vpack.c.bf16 %v339, %v339
        %v372 = vpack.c.bf16 %v340, %v340
        %v373 = vpack.c.bf16 %v341, %v341
        %s374 = scalar_lea.vmem %s1, 64
        %v375 = vld [vmem:[%s374] sm:$0xf]
        %v376 = vld [vmem:[%s374 + $0x4] sm:$0xf]
        %v377 = vld [vmem:[%s374 + $0x8] sm:$0xf]
        %v378 = vld [vmem:[%s374 + $0xc] sm:$0xf]
        %v379 = vld [vmem:[%s374 + $0x10] sm:$0xf]
        %v380 = vld [vmem:[%s374 + $0x14] sm:$0xf]
        %v381 = vld [vmem:[%s374 + $0x18] sm:$0xf]
        %v382 = vld [vmem:[%s374 + $0x1c] sm:$0xf]
        %v383 = vld [vmem:[%s374 + $0x20] sm:$0xf]
        %v384 = vld [vmem:[%s374 + $0x24] sm:$0xf]
        %v385 = vld [vmem:[%s374 + $0x28] sm:$0xf]
        %v386 = vld [vmem:[%s374 + $0x2c] sm:$0xf]
        %v387 = vld [vmem:[%s374 + $0x30] sm:$0xf]
        %v388 = vld [vmem:[%s374 + $0x34] sm:$0xf]
        %v389 = vld [vmem:[%s374 + $0x38] sm:$0xf]
        %v390 = vld [vmem:[%s374 + $0x3c] sm:$0xf]
        %v423 = vunpack.c.l.b16 %v342
        %v424 = vunpack.c.l.b16 %v343
        %v425 = vunpack.c.l.b16 %v344
        %v426 = vunpack.c.l.b16 %v345
        %v427 = vunpack.c.l.b16 %v346
        %v428 = vunpack.c.l.b16 %v347
        %v429 = vunpack.c.l.b16 %v348
        %v430 = vunpack.c.l.b16 %v349
        %v431 = vunpack.c.l.b16 %v350
        %v432 = vunpack.c.l.b16 %v351
        %v433 = vunpack.c.l.b16 %v352
        %v434 = vunpack.c.l.b16 %v353
        %v435 = vunpack.c.l.b16 %v354
        %v436 = vunpack.c.l.b16 %v355
        %v437 = vunpack.c.l.b16 %v356
        %v438 = vunpack.c.l.b16 %v357
        %v439 = vunpack.c.l.b16 %v358
        %v440 = vunpack.c.l.b16 %v359
        %v441 = vunpack.c.l.b16 %v360
        %v442 = vunpack.c.l.b16 %v361
        %v443 = vunpack.c.l.b16 %v362
        %v444 = vunpack.c.l.b16 %v363
        %v445 = vunpack.c.l.b16 %v364
        %v446 = vunpack.c.l.b16 %v365
        %v447 = vunpack.c.l.b16 %v366
        %v448 = vunpack.c.l.b16 %v367
        %v449 = vunpack.c.l.b16 %v368
        %v450 = vunpack.c.l.b16 %v369
        %v451 = vunpack.c.l.b16 %v370
        %v452 = vunpack.c.l.b16 %v371
        %v453 = vunpack.c.l.b16 %v372
        %v454 = vunpack.c.l.b16 %v373
        %v455 = vpack.c.b16 %v424, %v423
        %v456 = vpack.c.b16 %v426, %v425
        %v457 = vpack.c.b16 %v428, %v427
        %v458 = vpack.c.b16 %v430, %v429
        %v459 = vpack.c.b16 %v432, %v431
        %v460 = vpack.c.b16 %v434, %v433
        %v461 = vpack.c.b16 %v436, %v435
        %v462 = vpack.c.b16 %v438, %v437
        %v463 = vpack.c.b16 %v440, %v439
        %v464 = vpack.c.b16 %v442, %v441
        %v465 = vpack.c.b16 %v444, %v443
        %v466 = vpack.c.b16 %v446, %v445
        %v467 = vpack.c.b16 %v448, %v447
        %v468 = vpack.c.b16 %v450, %v449
        %v469 = vpack.c.b16 %v452, %v451
        %v470 = vpack.c.b16 %v454, %v453
        %v503 = vunpack.c.l.b16 %v375
        %v504 = vunpack.c.l.b16 %v376
        %v505 = vunpack.c.l.b16 %v377
        %v506 = vunpack.c.l.b16 %v378
        %v507 = vunpack.c.l.b16 %v379
        %v508 = vunpack.c.l.b16 %v380
        %v509 = vunpack.c.l.b16 %v381
        %v510 = vunpack.c.l.b16 %v382
        %v511 = vunpack.c.l.b16 %v383
        %v512 = vunpack.c.l.b16 %v384
        %v513 = vunpack.c.l.b16 %v385
        %v514 = vunpack.c.l.b16 %v386
        %v515 = vunpack.c.l.b16 %v387
        %v516 = vunpack.c.l.b16 %v388
        %v517 = vunpack.c.l.b16 %v389
        %v518 = vunpack.c.l.b16 %v390
        %v519 = vpack.c.b16 %v504, %v503
        %v520 = vpack.c.b16 %v506, %v505
        %v521 = vpack.c.b16 %v508, %v507
        %v522 = vpack.c.b16 %v510, %v509
        %v523 = vpack.c.b16 %v512, %v511
        %v524 = vpack.c.b16 %v514, %v513
        %v525 = vpack.c.b16 %v516, %v515
        %v526 = vpack.c.b16 %v518, %v517
        %535 = vmatprep.subr.bf16.mxu0 0
        %536 = vmatpush1.bf16.msra.mxu0 %v519
        %537 = vmatprep.subr.bf16.mxu0 0
        %538 = vmatpush1.bf16.msra.mxu0 %v520
        %539 = vmatprep.subr.bf16.mxu0 0
        %540 = vmatpush1.bf16.msra.mxu0 %v521
        %541 = vmatprep.subr.bf16.mxu0 0
        %542 = vmatpush1.bf16.msra.mxu0 %v522
        %543 = vmatprep.subr.bf16.mxu0 0
        %544 = vmatpush1.bf16.msra.mxu0 %v523
        %545 = vmatprep.subr.bf16.mxu0 0
        %546 = vmatpush1.bf16.msra.mxu0 %v524
        %547 = vmatprep.subr.bf16.mxu0 0
        %548 = vmatpush1.bf16.msra.mxu0 %v525
        %549 = vmatprep.subr.bf16.mxu0 0
        %550 = vmatpush1.bf16.msra.mxu0 %v526
        %551 = vmatprep.subr.bf16.mxu0 0
        %552 = vmatpush1.bf16.msra.mxu0 0
        %553 = vmatprep.subr.bf16.mxu0 0
        %554 = vmatpush1.bf16.msra.mxu0 0
        %555 = vmatprep.subr.bf16.mxu0 0
        %556 = vmatpush1.bf16.msra.mxu0 0
        %557 = vmatprep.subr.bf16.mxu0 0
        %558 = vmatpush1.bf16.msra.mxu0 0
        %559 = vmatprep.subr.bf16.mxu0 0
        %560 = vmatpush1.bf16.msra.mxu0 0
        %561 = vmatprep.subr.bf16.mxu0 0
        %562 = vmatpush1.bf16.msra.mxu0 0
        %563 = vmatprep.subr.bf16.mxu0 0
        %564 = vmatpush1.bf16.msra.mxu0 0
        %565 = vmatprep.subr.bf16.mxu0 0
        %566 = vmatpush1.bf16.msra.mxu0 0
        %567 = vmatprep.mubr.bf16.mxu0 0
        %568 = vmatmul.mubr.bf16.gmra.mrb[0].mxu0 %v455
        %v569 = vpop.f32.mrb[0].mxu0
        %v570 = vadd.f32 0.0, %v569
        %v571 = vpop.f32.mrb[0].mxu0
        %v572 = vpop.f32.mrb[0].mxu0
        %v573 = vadd.f32 0.0, %v572
        %v574 = vpop.f32.mrb[0].mxu0
        %575 = vmatprep.mubr.bf16.mxu0 0
        %576 = vmatmul.mubr.bf16.gmra.mrb[0].mxu0 %v456
        %v577 = vpop.f32.mrb[0].mxu0
        %v578 = vadd.f32 0.0, %v577
        %v579 = vpop.f32.mrb[0].mxu0
        %v580 = vpop.f32.mrb[0].mxu0
        %v581 = vadd.f32 0.0, %v580
        %v582 = vpop.f32.mrb[0].mxu0
        %583 = vmatprep.mubr.bf16.mxu0 0
        %584 = vmatmul.mubr.bf16.gmra.mrb[0].mxu0 %v457
        %v585 = vpop.f32.mrb[0].mxu0
        %v586 = vadd.f32 0.0, %v585
        %v587 = vpop.f32.mrb[0].mxu0
        %v588 = vpop.f32.mrb[0].mxu0
        %v589 = vadd.f32 0.0, %v588
        %v590 = vpop.f32.mrb[0].mxu0
        %591 = vmatprep.mubr.bf16.mxu0 0
        %592 = vmatmul.mubr.bf16.gmra.mrb[0].mxu0 %v458
        %v593 = vpop.f32.mrb[0].mxu0
        %v594 = vadd.f32 0.0, %v593
        %v595 = vpop.f32.mrb[0].mxu0
        %v596 = vpop.f32.mrb[0].mxu0
        %v597 = vadd.f32 0.0, %v596
        %v598 = vpop.f32.mrb[0].mxu0
        %599 = vmatprep.mubr.bf16.mxu0 0
        %600 = vmatmul.mubr.bf16.gmra.mrb[0].mxu0 %v459
        %v601 = vpop.f32.mrb[0].mxu0
        %v602 = vadd.f32 0.0, %v601
        %v603 = vpop.f32.mrb[0].mxu0
        %v604 = vpop.f32.mrb[0].mxu0
        %v605 = vadd.f32 0.0, %v604
        %v606 = vpop.f32.mrb[0].mxu0
        %607 = vmatprep.mubr.bf16.mxu0 0
        %608 = vmatmul.mubr.bf16.gmra.mrb[0].mxu0 %v460
        %v609 = vpop.f32.mrb[0].mxu0
        %v610 = vadd.f32 0.0, %v609
        %v611 = vpop.f32.mrb[0].mxu0
        %v612 = vpop.f32.mrb[0].mxu0
        %v613 = vadd.f32 0.0, %v612
        %v614 = vpop.f32.mrb[0].mxu0
        %615 = vmatprep.mubr.bf16.mxu0 0
        %616 = vmatmul.mubr.bf16.gmra.mrb[0].mxu0 %v461
        %v617 = vpop.f32.mrb[0].mxu0
        %v618 = vadd.f32 0.0, %v617
        %v619 = vpop.f32.mrb[0].mxu0
        %v620 = vpop.f32.mrb[0].mxu0
        %v621 = vadd.f32 0.0, %v620
        %v622 = vpop.f32.mrb[0].mxu0
        %623 = vmatprep.mubr.bf16.mxu0 0
        %624 = vmatmul.mubr.bf16.gmra.mrb[0].mxu0 %v462
        %v625 = vpop.f32.mrb[0].mxu0
        %v626 = vadd.f32 0.0, %v625
        %v627 = vpop.f32.mrb[0].mxu0
        %v628 = vpop.f32.mrb[0].mxu0
        %v629 = vadd.f32 0.0, %v628
        %v630 = vpop.f32.mrb[0].mxu0
        %631 = vmatprep.mubr.bf16.mxu0 0
        %632 = vmatmul.mubr.bf16.gmra.mrb[0].mxu0 %v463
        %v633 = vpop.f32.mrb[0].mxu0
        %v634 = vadd.f32 0.0, %v633
        %v635 = vpop.f32.mrb[0].mxu0
        %v636 = vpop.f32.mrb[0].mxu0
        %v637 = vadd.f32 0.0, %v636
        %v638 = vpop.f32.mrb[0].mxu0
        %639 = vmatprep.mubr.bf16.mxu0 0
        %640 = vmatmul.mubr.bf16.gmra.mrb[0].mxu0 %v464
        %v641 = vpop.f32.mrb[0].mxu0
        %v642 = vadd.f32 0.0, %v641
        %v643 = vpop.f32.mrb[0].mxu0
        %v644 = vpop.f32.mrb[0].mxu0
        %v645 = vadd.f32 0.0, %v644
        %v646 = vpop.f32.mrb[0].mxu0
        %647 = vmatprep.mubr.bf16.mxu0 0
        %648 = vmatmul.mubr.bf16.gmra.mrb[0].mxu0 %v465
        %v649 = vpop.f32.mrb[0].mxu0
        %v650 = vadd.f32 0.0, %v649
        %v651 = vpop.f32.mrb[0].mxu0
        %v652 = vpop.f32.mrb[0].mxu0
        %v653 = vadd.f32 0.0, %v652
        %v654 = vpop.f32.mrb[0].mxu0
        %655 = vmatprep.mubr.bf16.mxu0 0
        %656 = vmatmul.mubr.bf16.gmra.mrb[0].mxu0 %v466
        %v657 = vpop.f32.mrb[0].mxu0
        %v658 = vadd.f32 0.0, %v657
        %v659 = vpop.f32.mrb[0].mxu0
        %v660 = vpop.f32.mrb[0].mxu0
        %v661 = vadd.f32 0.0, %v660
        %v662 = vpop.f32.mrb[0].mxu0
        %663 = vmatprep.mubr.bf16.mxu0 0
        %664 = vmatmul.mubr.bf16.gmra.mrb[0].mxu0 %v467
        %v665 = vpop.f32.mrb[0].mxu0
        %v666 = vadd.f32 0.0, %v665
        %v667 = vpop.f32.mrb[0].mxu0
        %v668 = vpop.f32.mrb[0].mxu0
        %v669 = vadd.f32 0.0, %v668
        %v670 = vpop.f32.mrb[0].mxu0
        %671 = vmatprep.mubr.bf16.mxu0 0
        %672 = vmatmul.mubr.bf16.gmra.mrb[0].mxu0 %v468
        %v673 = vpop.f32.mrb[0].mxu0
        %v674 = vadd.f32 0.0, %v673
        %v675 = vpop.f32.mrb[0].mxu0
        %v676 = vpop.f32.mrb[0].mxu0
        %v677 = vadd.f32 0.0, %v676
        %v678 = vpop.f32.mrb[0].mxu0
        %679 = vmatprep.mubr.bf16.mxu0 0
        %680 = vmatmul.mubr.bf16.gmra.mrb[0].mxu0 %v469
        %v681 = vpop.f32.mrb[0].mxu0
        %v682 = vadd.f32 0.0, %v681
        %v683 = vpop.f32.mrb[0].mxu0
        %v684 = vpop.f32.mrb[0].mxu0
        %v685 = vadd.f32 0.0, %v684
        %v686 = vpop.f32.mrb[0].mxu0
        %687 = vmatprep.mubr.bf16.mxu0 0
        %688 = vmatmul.mubr.bf16.gmra.mrb[0].mxu0 %v470
        %v689 = vpop.f32.mrb[0].mxu0
        %v690 = vadd.f32 0.0, %v689
        %v691 = vpop.f32.mrb[0].mxu0
        %v692 = vpop.f32.mrb[0].mxu0
        %v693 = vadd.f32 0.0, %v692
        %v694 = vpop.f32.mrb[0].mxu0
        %695 = vdwg.mxu0
        %v728 = vunpack.c.l.b16 %v262
        %v729 = vunpack.c.l.b16 %v263
        %v730 = vunpack.c.l.b16 %v264
        %v731 = vunpack.c.l.b16 %v265
        %v732 = vunpack.c.l.b16 %v266
        %v733 = vunpack.c.l.b16 %v267
        %v734 = vunpack.c.l.b16 %v268
        %v735 = vunpack.c.l.b16 %v269
        %v736 = vunpack.c.l.b16 %v270
        %v737 = vunpack.c.l.b16 %v271
        %v738 = vunpack.c.l.b16 %v272
        %v739 = vunpack.c.l.b16 %v273
        %v740 = vunpack.c.l.b16 %v274
        %v741 = vunpack.c.l.b16 %v275
        %v742 = vunpack.c.l.b16 %v276
        %v743 = vunpack.c.l.b16 %v277
        %v744 = vunpack.c.l.b16 %v278
        %v745 = vunpack.c.l.b16 %v279
        %v746 = vunpack.c.l.b16 %v280
        %v747 = vunpack.c.l.b16 %v281
        %v748 = vunpack.c.l.b16 %v282
        %v749 = vunpack.c.l.b16 %v283
        %v750 = vunpack.c.l.b16 %v284
        %v751 = vunpack.c.l.b16 %v285
        %v752 = vunpack.c.l.b16 %v286
        %v753 = vunpack.c.l.b16 %v287
        %v754 = vunpack.c.l.b16 %v288
        %v755 = vunpack.c.l.b16 %v289
        %v756 = vunpack.c.l.b16 %v290
        %v757 = vunpack.c.l.b16 %v291
        %v758 = vunpack.c.l.b16 %v292
        %v759 = vunpack.c.l.b16 %v293
        %v760 = vpack.c.b16 %v729, %v728
        %v761 = vpack.c.b16 %v731, %v730
        %v762 = vpack.c.b16 %v733, %v732
        %v763 = vpack.c.b16 %v735, %v734
        %v764 = vpack.c.b16 %v737, %v736
        %v765 = vpack.c.b16 %v739, %v738
        %v766 = vpack.c.b16 %v741, %v740
        %v767 = vpack.c.b16 %v743, %v742
        %v768 = vpack.c.b16 %v745, %v744
        %v769 = vpack.c.b16 %v747, %v746
        %v770 = vpack.c.b16 %v749, %v748
        %v771 = vpack.c.b16 %v751, %v750
        %v772 = vpack.c.b16 %v753, %v752
        %v773 = vpack.c.b16 %v755, %v754
        %v774 = vpack.c.b16 %v757, %v756
        %v775 = vpack.c.b16 %v759, %v758
        %v808 = vunpack.c.l.b16 %v294
        %v809 = vunpack.c.l.b16 %v295
        %v810 = vunpack.c.l.b16 %v296
        %v811 = vunpack.c.l.b16 %v297
        %v812 = vunpack.c.l.b16 %v298
        %v813 = vunpack.c.l.b16 %v299
        %v814 = vunpack.c.l.b16 %v300
        %v815 = vunpack.c.l.b16 %v301
        %v816 = vunpack.c.l.b16 %v302
        %v817 = vunpack.c.l.b16 %v303
        %v818 = vunpack.c.l.b16 %v304
        %v819 = vunpack.c.l.b16 %v305
        %v820 = vunpack.c.l.b16 %v306
        %v821 = vunpack.c.l.b16 %v307
        %v822 = vunpack.c.l.b16 %v308
        %v823 = vunpack.c.l.b16 %v309
        %v824 = vpack.c.b16 %v809, %v808
        %v825 = vpack.c.b16 %v811, %v810
        %v826 = vpack.c.b16 %v813, %v812
        %v827 = vpack.c.b16 %v815, %v814
        %v828 = vpack.c.b16 %v817, %v816
        %v829 = vpack.c.b16 %v819, %v818
        %v830 = vpack.c.b16 %v821, %v820
        %v831 = vpack.c.b16 %v823, %v822
        %840 = vmatprep.subr.bf16.mxu0 0
        %841 = vmatpush1.bf16.msra.mxu0 %v824
        %842 = vmatprep.subr.bf16.mxu0 0
        %843 = vmatpush1.bf16.msra.mxu0 %v825
        %844 = vmatprep.subr.bf16.mxu0 0
        %845 = vmatpush1.bf16.msra.mxu0 %v826
        %846 = vmatprep.subr.bf16.mxu0 0
        %847 = vmatpush1.bf16.msra.mxu0 %v827
        %848 = vmatprep.subr.bf16.mxu0 0
        %849 = vmatpush1.bf16.msra.mxu0 %v828
        %850 = vmatprep.subr.bf16.mxu0 0
        %851 = vmatpush1.bf16.msra.mxu0 %v829
        %852 = vmatprep.subr.bf16.mxu0 0
        %853 = vmatpush1.bf16.msra.mxu0 %v830
        %854 = vmatprep.subr.bf16.mxu0 0
        %855 = vmatpush1.bf16.msra.mxu0 %v831
        %856 = vmatprep.subr.bf16.mxu0 0
        %857 = vmatpush1.bf16.msra.mxu0 0
        %858 = vmatprep.subr.bf16.mxu0 0
        %859 = vmatpush1.bf16.msra.mxu0 0
        %860 = vmatprep.subr.bf16.mxu0 0
        %861 = vmatpush1.bf16.msra.mxu0 0
        %862 = vmatprep.subr.bf16.mxu0 0
        %863 = vmatpush1.bf16.msra.mxu0 0
        %864 = vmatprep.subr.bf16.mxu0 0
        %865 = vmatpush1.bf16.msra.mxu0 0
        %866 = vmatprep.subr.bf16.mxu0 0
        %867 = vmatpush1.bf16.msra.mxu0 0
        %868 = vmatprep.subr.bf16.mxu0 0
        %869 = vmatpush1.bf16.msra.mxu0 0
        %870 = vmatprep.subr.bf16.mxu0 0
        %871 = vmatpush1.bf16.msra.mxu0 0
        %872 = vmatprep.mubr.bf16.mxu0 0
        %873 = vmatmul.mubr.bf16.gmra.mrb[0].mxu0 %v760
        %v874 = vpop.f32.mrb[0].mxu0
        %v875 = vadd.f32 %v570, %v874
        %v876 = vpop.f32.mrb[0].mxu0
        %v877 = vpop.f32.mrb[0].mxu0
        %v878 = vadd.f32 %v573, %v877
        %v879 = vpop.f32.mrb[0].mxu0
        %880 = vmatprep.mubr.bf16.mxu0 0
        %881 = vmatmul.mubr.bf16.gmra.mrb[0].mxu0 %v761
        %v882 = vpop.f32.mrb[0].mxu0
        %v883 = vadd.f32 %v578, %v882
        %v884 = vpop.f32.mrb[0].mxu0
        %v885 = vpop.f32.mrb[0].mxu0
        %v886 = vadd.f32 %v581, %v885
        %v887 = vpop.f32.mrb[0].mxu0
        %888 = vmatprep.mubr.bf16.mxu0 0
        %889 = vmatmul.mubr.bf16.gmra.mrb[0].mxu0 %v762
        %v890 = vpop.f32.mrb[0].mxu0
        %v891 = vadd.f32 %v586, %v890
        %v892 = vpop.f32.mrb[0].mxu0
        %v893 = vpop.f32.mrb[0].mxu0
        %v894 = vadd.f32 %v589, %v893
        %v895 = vpop.f32.mrb[0].mxu0
        %896 = vmatprep.mubr.bf16.mxu0 0
        %897 = vmatmul.mubr.bf16.gmra.mrb[0].mxu0 %v763
        %v898 = vpop.f32.mrb[0].mxu0
        %v899 = vadd.f32 %v594, %v898
        %v900 = vpop.f32.mrb[0].mxu0
        %v901 = vpop.f32.mrb[0].mxu0
        %v902 = vadd.f32 %v597, %v901
        %v903 = vpop.f32.mrb[0].mxu0
        %904 = vmatprep.mubr.bf16.mxu0 0
        %905 = vmatmul.mubr.bf16.gmra.mrb[0].mxu0 %v764
        %v906 = vpop.f32.mrb[0].mxu0
        %v907 = vadd.f32 %v602, %v906
        %v908 = vpop.f32.mrb[0].mxu0
        %v909 = vpop.f32.mrb[0].mxu0
        %v910 = vadd.f32 %v605, %v909
        %v911 = vpop.f32.mrb[0].mxu0
        %912 = vmatprep.mubr.bf16.mxu0 0
        %913 = vmatmul.mubr.bf16.gmra.mrb[0].mxu0 %v765
        %v914 = vpop.f32.mrb[0].mxu0
        %v915 = vadd.f32 %v610, %v914
        %v916 = vpop.f32.mrb[0].mxu0
        %v917 = vpop.f32.mrb[0].mxu0
        %v918 = vadd.f32 %v613, %v917
        %v919 = vpop.f32.mrb[0].mxu0
        %920 = vmatprep.mubr.bf16.mxu0 0
        %921 = vmatmul.mubr.bf16.gmra.mrb[0].mxu0 %v766
        %v922 = vpop.f32.mrb[0].mxu0
        %v923 = vadd.f32 %v618, %v922
        %v924 = vpop.f32.mrb[0].mxu0
        %v925 = vpop.f32.mrb[0].mxu0
        %v926 = vadd.f32 %v621, %v925
        %v927 = vpop.f32.mrb[0].mxu0
        %928 = vmatprep.mubr.bf16.mxu0 0
        %929 = vmatmul.mubr.bf16.gmra.mrb[0].mxu0 %v767
        %v930 = vpop.f32.mrb[0].mxu0
        %v931 = vadd.f32 %v626, %v930
        %v932 = vpop.f32.mrb[0].mxu0
        %v933 = vpop.f32.mrb[0].mxu0
        %v934 = vadd.f32 %v629, %v933
        %v935 = vpop.f32.mrb[0].mxu0
        %936 = vmatprep.mubr.bf16.mxu0 0
        %937 = vmatmul.mubr.bf16.gmra.mrb[0].mxu0 %v768
        %v938 = vpop.f32.mrb[0].mxu0
        %v939 = vadd.f32 %v634, %v938
        %v940 = vpop.f32.mrb[0].mxu0
        %v941 = vpop.f32.mrb[0].mxu0
        %v942 = vadd.f32 %v637, %v941
        %v943 = vpop.f32.mrb[0].mxu0
        %944 = vmatprep.mubr.bf16.mxu0 0
        %945 = vmatmul.mubr.bf16.gmra.mrb[0].mxu0 %v769
        %v946 = vpop.f32.mrb[0].mxu0
        %v947 = vadd.f32 %v642, %v946
        %v948 = vpop.f32.mrb[0].mxu0
        %v949 = vpop.f32.mrb[0].mxu0
        %v950 = vadd.f32 %v645, %v949
        %v951 = vpop.f32.mrb[0].mxu0
        %952 = vmatprep.mubr.bf16.mxu0 0
        %953 = vmatmul.mubr.bf16.gmra.mrb[0].mxu0 %v770
        %v954 = vpop.f32.mrb[0].mxu0
        %v955 = vadd.f32 %v650, %v954
        %v956 = vpop.f32.mrb[0].mxu0
        %v957 = vpop.f32.mrb[0].mxu0
        %v958 = vadd.f32 %v653, %v957
        %v959 = vpop.f32.mrb[0].mxu0
        %960 = vmatprep.mubr.bf16.mxu0 0
        %961 = vmatmul.mubr.bf16.gmra.mrb[0].mxu0 %v771
        %v962 = vpop.f32.mrb[0].mxu0
        %v963 = vadd.f32 %v658, %v962
        %v964 = vpop.f32.mrb[0].mxu0
        %v965 = vpop.f32.mrb[0].mxu0
        %v966 = vadd.f32 %v661, %v965
        %v967 = vpop.f32.mrb[0].mxu0
        %968 = vmatprep.mubr.bf16.mxu0 0
        %969 = vmatmul.mubr.bf16.gmra.mrb[0].mxu0 %v772
        %v970 = vpop.f32.mrb[0].mxu0
        %v971 = vadd.f32 %v666, %v970
        %v972 = vpop.f32.mrb[0].mxu0
        %v973 = vpop.f32.mrb[0].mxu0
        %v974 = vadd.f32 %v669, %v973
        %v975 = vpop.f32.mrb[0].mxu0
        %976 = vmatprep.mubr.bf16.mxu0 0
        %977 = vmatmul.mubr.bf16.gmra.mrb[0].mxu0 %v773
        %v978 = vpop.f32.mrb[0].mxu0
        %v979 = vadd.f32 %v674, %v978
        %v980 = vpop.f32.mrb[0].mxu0
        %v981 = vpop.f32.mrb[0].mxu0
        %v982 = vadd.f32 %v677, %v981
        %v983 = vpop.f32.mrb[0].mxu0
        %984 = vmatprep.mubr.bf16.mxu0 0
        %985 = vmatmul.mubr.bf16.gmra.mrb[0].mxu0 %v774
        %v986 = vpop.f32.mrb[0].mxu0
        %v987 = vadd.f32 %v682, %v986
        %v988 = vpop.f32.mrb[0].mxu0
        %v989 = vpop.f32.mrb[0].mxu0
        %v990 = vadd.f32 %v685, %v989
        %v991 = vpop.f32.mrb[0].mxu0
        %992 = vmatprep.mubr.bf16.mxu0 0
        %993 = vmatmul.mubr.bf16.gmra.mrb[0].mxu0 %v775
        %v994 = vpop.f32.mrb[0].mxu0
        %v995 = vadd.f32 %v690, %v994
        %v996 = vpop.f32.mrb[0].mxu0
        %v997 = vpop.f32.mrb[0].mxu0
        %v998 = vadd.f32 %v693, %v997
        %v999 = vpop.f32.mrb[0].mxu0
        %1000 = vdwg.mxu0
        %v1001 = vld [vmem:[%s226 + $0x2] sm:$0xff]
        %v1002 = vld [vmem:[%s226 + $0x12] sm:$0xff]
        %v1003 = vld [vmem:[%s226 + $0x22] sm:$0xff]
        %v1004 = vld [vmem:[%s226 + $0x32] sm:$0xff]
        %v1005 = vld [vmem:[%s226 + $0x62] sm:$0xff]
        %v1006 = vld [vmem:[%s226 + $0x72] sm:$0xff]
        %v1007 = vld [vmem:[%s226 + $0x82] sm:$0xff]
        %v1008 = vld [vmem:[%s226 + $0x92] sm:$0xff]
        %v1009 = vld [vmem:[%s226 + $0xc2] sm:$0xff]
        %v1010 = vld [vmem:[%s226 + $0xd2] sm:$0xff]
        %v1011 = vld [vmem:[%s226 + $0xe2] sm:$0xff]
        %v1012 = vld [vmem:[%s226 + $0xf2] sm:$0xff]
        %v1013 = vld [vmem:[%s226 + $0x122] sm:$0xff]
        %v1014 = vld [vmem:[%s226 + $0x132] sm:$0xff]
        %v1015 = vld [vmem:[%s226 + $0x142] sm:$0xff]
        %v1016 = vld [vmem:[%s226 + $0x152] sm:$0xff]
        %v1017 = vld [vmem:[%s226 + $0x182] sm:$0xff]
        %v1018 = vld [vmem:[%s226 + $0x192] sm:$0xff]
        %v1019 = vld [vmem:[%s226 + $0x1a2] sm:$0xff]
        %v1020 = vld [vmem:[%s226 + $0x1b2] sm:$0xff]
        %v1021 = vld [vmem:[%s226 + $0x1e2] sm:$0xff]
        %v1022 = vld [vmem:[%s226 + $0x1f2] sm:$0xff]
        %v1023 = vld [vmem:[%s226 + $0x202] sm:$0xff]
        %v1024 = vld [vmem:[%s226 + $0x212] sm:$0xff]
        %v1025 = vld [vmem:[%s226 + $0x242] sm:$0xff]
        %v1026 = vld [vmem:[%s226 + $0x252] sm:$0xff]
        %v1027 = vld [vmem:[%s226 + $0x262] sm:$0xff]
        %v1028 = vld [vmem:[%s226 + $0x272] sm:$0xff]
        %v1029 = vld [vmem:[%s226 + $0x2a2] sm:$0xff]
        %v1030 = vld [vmem:[%s226 + $0x2b2] sm:$0xff]
        %v1031 = vld [vmem:[%s226 + $0x2c2] sm:$0xff]
        %v1032 = vld [vmem:[%s226 + $0x2d2] sm:$0xff]
        %v1033 = vpack.c.bf16 %v1001, %v1001
        %v1034 = vpack.c.bf16 %v1002, %v1002
        %v1035 = vpack.c.bf16 %v1003, %v1003
        %v1036 = vpack.c.bf16 %v1004, %v1004
        %v1037 = vpack.c.bf16 %v1005, %v1005
        %v1038 = vpack.c.bf16 %v1006, %v1006
        %v1039 = vpack.c.bf16 %v1007, %v1007
        %v1040 = vpack.c.bf16 %v1008, %v1008
        %v1041 = vpack.c.bf16 %v1009, %v1009
        %v1042 = vpack.c.bf16 %v1010, %v1010
        %v1043 = vpack.c.bf16 %v1011, %v1011
        %v1044 = vpack.c.bf16 %v1012, %v1012
        %v1045 = vpack.c.bf16 %v1013, %v1013
        %v1046 = vpack.c.bf16 %v1014, %v1014
        %v1047 = vpack.c.bf16 %v1015, %v1015
        %v1048 = vpack.c.bf16 %v1016, %v1016
        %v1049 = vpack.c.bf16 %v1017, %v1017
        %v1050 = vpack.c.bf16 %v1018, %v1018
        %v1051 = vpack.c.bf16 %v1019, %v1019
        %v1052 = vpack.c.bf16 %v1020, %v1020
        %v1053 = vpack.c.bf16 %v1021, %v1021
        %v1054 = vpack.c.bf16 %v1022, %v1022
        %v1055 = vpack.c.bf16 %v1023, %v1023
        %v1056 = vpack.c.bf16 %v1024, %v1024
        %v1057 = vpack.c.bf16 %v1025, %v1025
        %v1058 = vpack.c.bf16 %v1026, %v1026
        %v1059 = vpack.c.bf16 %v1027, %v1027
        %v1060 = vpack.c.bf16 %v1028, %v1028
        %v1061 = vpack.c.bf16 %v1029, %v1029
        %v1062 = vpack.c.bf16 %v1030, %v1030
        %v1063 = vpack.c.bf16 %v1031, %v1031
        %v1064 = vpack.c.bf16 %v1032, %v1032
        %s1065 = scalar_lea.vmem %s1, 128
        %v1066 = vld [vmem:[%s1065] sm:$0xf]
        %v1067 = vld [vmem:[%s1065 + $0x4] sm:$0xf]
        %v1068 = vld [vmem:[%s1065 + $0x8] sm:$0xf]
        %v1069 = vld [vmem:[%s1065 + $0xc] sm:$0xf]
        %v1070 = vld [vmem:[%s1065 + $0x10] sm:$0xf]
        %v1071 = vld [vmem:[%s1065 + $0x14] sm:$0xf]
        %v1072 = vld [vmem:[%s1065 + $0x18] sm:$0xf]
        %v1073 = vld [vmem:[%s1065 + $0x1c] sm:$0xf]
        %v1074 = vld [vmem:[%s1065 + $0x20] sm:$0xf]
        %v1075 = vld [vmem:[%s1065 + $0x24] sm:$0xf]
        %v1076 = vld [vmem:[%s1065 + $0x28] sm:$0xf]
        %v1077 = vld [vmem:[%s1065 + $0x2c] sm:$0xf]
        %v1078 = vld [vmem:[%s1065 + $0x30] sm:$0xf]
        %v1079 = vld [vmem:[%s1065 + $0x34] sm:$0xf]
        %v1080 = vld [vmem:[%s1065 + $0x38] sm:$0xf]
        %v1081 = vld [vmem:[%s1065 + $0x3c] sm:$0xf]
        %v1114 = vunpack.c.l.b16 %v1033
        %v1115 = vunpack.c.l.b16 %v1034
        %v1116 = vunpack.c.l.b16 %v1035
        %v1117 = vunpack.c.l.b16 %v1036
        %v1118 = vunpack.c.l.b16 %v1037
        %v1119 = vunpack.c.l.b16 %v1038
        %v1120 = vunpack.c.l.b16 %v1039
        %v1121 = vunpack.c.l.b16 %v1040
        %v1122 = vunpack.c.l.b16 %v1041
        %v1123 = vunpack.c.l.b16 %v1042
        %v1124 = vunpack.c.l.b16 %v1043
        %v1125 = vunpack.c.l.b16 %v1044
        %v1126 = vunpack.c.l.b16 %v1045
        %v1127 = vunpack.c.l.b16 %v1046
        %v1128 = vunpack.c.l.b16 %v1047
        %v1129 = vunpack.c.l.b16 %v1048
        %v1130 = vunpack.c.l.b16 %v1049
        %v1131 = vunpack.c.l.b16 %v1050
        %v1132 = vunpack.c.l.b16 %v1051
        %v1133 = vunpack.c.l.b16 %v1052
        %v1134 = vunpack.c.l.b16 %v1053
        %v1135 = vunpack.c.l.b16 %v1054
        %v1136 = vunpack.c.l.b16 %v1055
        %v1137 = vunpack.c.l.b16 %v1056
        %v1138 = vunpack.c.l.b16 %v1057
        %v1139 = vunpack.c.l.b16 %v1058
        %v1140 = vunpack.c.l.b16 %v1059
        %v1141 = vunpack.c.l.b16 %v1060
        %v1142 = vunpack.c.l.b16 %v1061
        %v1143 = vunpack.c.l.b16 %v1062
        %v1144 = vunpack.c.l.b16 %v1063
        %v1145 = vunpack.c.l.b16 %v1064
        %v1146 = vpack.c.b16 %v1115, %v1114
        %v1147 = vpack.c.b16 %v1117, %v1116
        %v1148 = vpack.c.b16 %v1119, %v1118
        %v1149 = vpack.c.b16 %v1121, %v1120
        %v1150 = vpack.c.b16 %v1123, %v1122
        %v1151 = vpack.c.b16 %v1125, %v1124
        %v1152 = vpack.c.b16 %v1127, %v1126
        %v1153 = vpack.c.b16 %v1129, %v1128
        %v1154 = vpack.c.b16 %v1131, %v1130
        %v1155 = vpack.c.b16 %v1133, %v1132
        %v1156 = vpack.c.b16 %v1135, %v1134
        %v1157 = vpack.c.b16 %v1137, %v1136
        %v1158 = vpack.c.b16 %v1139, %v1138
        %v1159 = vpack.c.b16 %v1141, %v1140
        %v1160 = vpack.c.b16 %v1143, %v1142
        %v1161 = vpack.c.b16 %v1145, %v1144
        %v1194 = vunpack.c.l.b16 %v1066
        %v1195 = vunpack.c.l.b16 %v1067
        %v1196 = vunpack.c.l.b16 %v1068
        %v1197 = vunpack.c.l.b16 %v1069
        %v1198 = vunpack.c.l.b16 %v1070
        %v1199 = vunpack.c.l.b16 %v1071
        %v1200 = vunpack.c.l.b16 %v1072
        %v1201 = vunpack.c.l.b16 %v1073
        %v1202 = vunpack.c.l.b16 %v1074
        %v1203 = vunpack.c.l.b16 %v1075
        %v1204 = vunpack.c.l.b16 %v1076
        %v1205 = vunpack.c.l.b16 %v1077
        %v1206 = vunpack.c.l.b16 %v1078
        %v1207 = vunpack.c.l.b16 %v1079
        %v1208 = vunpack.c.l.b16 %v1080
        %v1209 = vunpack.c.l.b16 %v1081
        %v1210 = vpack.c.b16 %v1195, %v1194
        %v1211 = vpack.c.b16 %v1197, %v1196
        %v1212 = vpack.c.b16 %v1199, %v1198
        %v1213 = vpack.c.b16 %v1201, %v1200
        %v1214 = vpack.c.b16 %v1203, %v1202
        %v1215 = vpack.c.b16 %v1205, %v1204
        %v1216 = vpack.c.b16 %v1207, %v1206
        %v1217 = vpack.c.b16 %v1209, %v1208
        %1226 = vmatprep.subr.bf16.mxu0 0
        %1227 = vmatpush1.bf16.msra.mxu0 %v1210
        %1228 = vmatprep.subr.bf16.mxu0 0
        %1229 = vmatpush1.bf16.msra.mxu0 %v1211
        %1230 = vmatprep.subr.bf16.mxu0 0
        %1231 = vmatpush1.bf16.msra.mxu0 %v1212
        %1232 = vmatprep.subr.bf16.mxu0 0
        %1233 = vmatpush1.bf16.msra.mxu0 %v1213
        %1234 = vmatprep.subr.bf16.mxu0 0
        %1235 = vmatpush1.bf16.msra.mxu0 %v1214
        %1236 = vmatprep.subr.bf16.mxu0 0
        %1237 = vmatpush1.bf16.msra.mxu0 %v1215
        %1238 = vmatprep.subr.bf16.mxu0 0
        %1239 = vmatpush1.bf16.msra.mxu0 %v1216
        %1240 = vmatprep.subr.bf16.mxu0 0
        %1241 = vmatpush1.bf16.msra.mxu0 %v1217
        %1242 = vmatprep.subr.bf16.mxu0 0
        %1243 = vmatpush1.bf16.msra.mxu0 0
        %1244 = vmatprep.subr.bf16.mxu0 0
        %1245 = vmatpush1.bf16.msra.mxu0 0
        %1246 = vmatprep.subr.bf16.mxu0 0
        %1247 = vmatpush1.bf16.msra.mxu0 0
        %1248 = vmatprep.subr.bf16.mxu0 0
        %1249 = vmatpush1.bf16.msra.mxu0 0
        %1250 = vmatprep.subr.bf16.mxu0 0
        %1251 = vmatpush1.bf16.msra.mxu0 0
        %1252 = vmatprep.subr.bf16.mxu0 0
        %1253 = vmatpush1.bf16.msra.mxu0 0
        %1254 = vmatprep.subr.bf16.mxu0 0
        %1255 = vmatpush1.bf16.msra.mxu0 0
        %1256 = vmatprep.subr.bf16.mxu0 0
        %1257 = vmatpush1.bf16.msra.mxu0 0
        %1258 = vmatprep.mubr.bf16.mxu0 0
        %1259 = vmatmul.mubr.bf16.gmra.mrb[0].mxu0 %v1146
        %v1260 = vpop.f32.mrb[0].mxu0
        %v1261 = vadd.f32 0.0, %v1260
        %v1262 = vpop.f32.mrb[0].mxu0
        %v1263 = vpop.f32.mrb[0].mxu0
        %v1264 = vadd.f32 0.0, %v1263
        %v1265 = vpop.f32.mrb[0].mxu0
        %1266 = vmatprep.mubr.bf16.mxu0 0
        %1267 = vmatmul.mubr.bf16.gmra.mrb[0].mxu0 %v1147
        %v1268 = vpop.f32.mrb[0].mxu0
        %v1269 = vadd.f32 0.0, %v1268
        %v1270 = vpop.f32.mrb[0].mxu0
        %v1271 = vpop.f32.mrb[0].mxu0
        %v1272 = vadd.f32 0.0, %v1271
        %v1273 = vpop.f32.mrb[0].mxu0
        %1274 = vmatprep.mubr.bf16.mxu0 0
        %1275 = vmatmul.mubr.bf16.gmra.mrb[0].mxu0 %v1148
        %v1276 = vpop.f32.mrb[0].mxu0
        %v1277 = vadd.f32 0.0, %v1276
        %v1278 = vpop.f32.mrb[0].mxu0
        %v1279 = vpop.f32.mrb[0].mxu0
        %v1280 = vadd.f32 0.0, %v1279
        %v1281 = vpop.f32.mrb[0].mxu0
        %1282 = vmatprep.mubr.bf16.mxu0 0
        %1283 = vmatmul.mubr.bf16.gmra.mrb[0].mxu0 %v1149
        %v1284 = vpop.f32.mrb[0].mxu0
        %v1285 = vadd.f32 0.0, %v1284
        %v1286 = vpop.f32.mrb[0].mxu0
        %v1287 = vpop.f32.mrb[0].mxu0
        %v1288 = vadd.f32 0.0, %v1287
        %v1289 = vpop.f32.mrb[0].mxu0
        %1290 = vmatprep.mubr.bf16.mxu0 0
        %1291 = vmatmul.mubr.bf16.gmra.mrb[0].mxu0 %v1150
        %v1292 = vpop.f32.mrb[0].mxu0
        %v1293 = vadd.f32 0.0, %v1292
        %v1294 = vpop.f32.mrb[0].mxu0
        %v1295 = vpop.f32.mrb[0].mxu0
        %v1296 = vadd.f32 0.0, %v1295
        %v1297 = vpop.f32.mrb[0].mxu0
        %1298 = vmatprep.mubr.bf16.mxu0 0
        %1299 = vmatmul.mubr.bf16.gmra.mrb[0].mxu0 %v1151
        %v1300 = vpop.f32.mrb[0].mxu0
        %v1301 = vadd.f32 0.0, %v1300
        %v1302 = vpop.f32.mrb[0].mxu0
        %v1303 = vpop.f32.mrb[0].mxu0
        %v1304 = vadd.f32 0.0, %v1303
        %v1305 = vpop.f32.mrb[0].mxu0
        %1306 = vmatprep.mubr.bf16.mxu0 0
        %1307 = vmatmul.mubr.bf16.gmra.mrb[0].mxu0 %v1152
        %v1308 = vpop.f32.mrb[0].mxu0
        %v1309 = vadd.f32 0.0, %v1308
        %v1310 = vpop.f32.mrb[0].mxu0
        %v1311 = vpop.f32.mrb[0].mxu0
        %v1312 = vadd.f32 0.0, %v1311
        %v1313 = vpop.f32.mrb[0].mxu0
        %1314 = vmatprep.mubr.bf16.mxu0 0
        %1315 = vmatmul.mubr.bf16.gmra.mrb[0].mxu0 %v1153
        %v1316 = vpop.f32.mrb[0].mxu0
        %v1317 = vadd.f32 0.0, %v1316
        %v1318 = vpop.f32.mrb[0].mxu0
        %v1319 = vpop.f32.mrb[0].mxu0
        %v1320 = vadd.f32 0.0, %v1319
        %v1321 = vpop.f32.mrb[0].mxu0
        %1322 = vmatprep.mubr.bf16.mxu0 0
        %1323 = vmatmul.mubr.bf16.gmra.mrb[0].mxu0 %v1154
        %v1324 = vpop.f32.mrb[0].mxu0
        %v1325 = vadd.f32 0.0, %v1324
        %v1326 = vpop.f32.mrb[0].mxu0
        %v1327 = vpop.f32.mrb[0].mxu0
        %v1328 = vadd.f32 0.0, %v1327
        %v1329 = vpop.f32.mrb[0].mxu0
        %1330 = vmatprep.mubr.bf16.mxu0 0
        %1331 = vmatmul.mubr.bf16.gmra.mrb[0].mxu0 %v1155
        %v1332 = vpop.f32.mrb[0].mxu0
        %v1333 = vadd.f32 0.0, %v1332
        %v1334 = vpop.f32.mrb[0].mxu0
        %v1335 = vpop.f32.mrb[0].mxu0
        %v1336 = vadd.f32 0.0, %v1335
        %v1337 = vpop.f32.mrb[0].mxu0
        %1338 = vmatprep.mubr.bf16.mxu0 0
        %1339 = vmatmul.mubr.bf16.gmra.mrb[0].mxu0 %v1156
        %v1340 = vpop.f32.mrb[0].mxu0
        %v1341 = vadd.f32 0.0, %v1340
        %v1342 = vpop.f32.mrb[0].mxu0
        %v1343 = vpop.f32.mrb[0].mxu0
        %v1344 = vadd.f32 0.0, %v1343
        %v1345 = vpop.f32.mrb[0].mxu0
        %1346 = vmatprep.mubr.bf16.mxu0 0
        %1347 = vmatmul.mubr.bf16.gmra.mrb[0].mxu0 %v1157
        %v1348 = vpop.f32.mrb[0].mxu0
        %v1349 = vadd.f32 0.0, %v1348
        %v1350 = vpop.f32.mrb[0].mxu0
        %v1351 = vpop.f32.mrb[0].mxu0
        %v1352 = vadd.f32 0.0, %v1351
        %v1353 = vpop.f32.mrb[0].mxu0
        %1354 = vmatprep.mubr.bf16.mxu0 0
        %1355 = vmatmul.mubr.bf16.gmra.mrb[0].mxu0 %v1158
        %v1356 = vpop.f32.mrb[0].mxu0
        %v1357 = vadd.f32 0.0, %v1356
        %v1358 = vpop.f32.mrb[0].mxu0
        %v1359 = vpop.f32.mrb[0].mxu0
        %v1360 = vadd.f32 0.0, %v1359
        %v1361 = vpop.f32.mrb[0].mxu0
        %1362 = vmatprep.mubr.bf16.mxu0 0
        %1363 = vmatmul.mubr.bf16.gmra.mrb[0].mxu0 %v1159
        %v1364 = vpop.f32.mrb[0].mxu0
        %v1365 = vadd.f32 0.0, %v1364
        %v1366 = vpop.f32.mrb[0].mxu0
        %v1367 = vpop.f32.mrb[0].mxu0
        %v1368 = vadd.f32 0.0, %v1367
        %v1369 = vpop.f32.mrb[0].mxu0
        %1370 = vmatprep.mubr.bf16.mxu0 0
        %1371 = vmatmul.mubr.bf16.gmra.mrb[0].mxu0 %v1160
        %v1372 = vpop.f32.mrb[0].mxu0
        %v1373 = vadd.f32 0.0, %v1372
        %v1374 = vpop.f32.mrb[0].mxu0
        %v1375 = vpop.f32.mrb[0].mxu0
        %v1376 = vadd.f32 0.0, %v1375
        %v1377 = vpop.f32.mrb[0].mxu0
        %1378 = vmatprep.mubr.bf16.mxu0 0
        %1379 = vmatmul.mubr.bf16.gmra.mrb[0].mxu0 %v1161
        %v1380 = vpop.f32.mrb[0].mxu0
        %v1381 = vadd.f32 0.0, %v1380
        %v1382 = vpop.f32.mrb[0].mxu0
        %v1383 = vpop.f32.mrb[0].mxu0
        %v1384 = vadd.f32 0.0, %v1383
        %v1385 = vpop.f32.mrb[0].mxu0
        %1386 = vdwg.mxu0
        %v1387 = vadd.f32 %v875, %v1261
        %v1388 = vadd.f32 %v878, %v1264
        %v1389 = vadd.f32 %v883, %v1269
        %v1390 = vadd.f32 %v886, %v1272
        %v1391 = vadd.f32 %v891, %v1277
        %v1392 = vadd.f32 %v894, %v1280
        %v1393 = vadd.f32 %v899, %v1285
        %v1394 = vadd.f32 %v902, %v1288
        %v1395 = vadd.f32 %v907, %v1293
        %v1396 = vadd.f32 %v910, %v1296
        %v1397 = vadd.f32 %v915, %v1301
        %v1398 = vadd.f32 %v918, %v1304
        %v1399 = vadd.f32 %v923, %v1309
        %v1400 = vadd.f32 %v926, %v1312
        %v1401 = vadd.f32 %v931, %v1317
        %v1402 = vadd.f32 %v934, %v1320
        %v1403 = vadd.f32 %v939, %v1325
        %v1404 = vadd.f32 %v942, %v1328
        %v1405 = vadd.f32 %v947, %v1333
        %v1406 = vadd.f32 %v950, %v1336
        %v1407 = vadd.f32 %v955, %v1341
        %v1408 = vadd.f32 %v958, %v1344
        %v1409 = vadd.f32 %v963, %v1349
        %v1410 = vadd.f32 %v966, %v1352
        %v1411 = vadd.f32 %v971, %v1357
        %v1412 = vadd.f32 %v974, %v1360
        %v1413 = vadd.f32 %v979, %v1365
        %v1414 = vadd.f32 %v982, %v1368
        %v1415 = vadd.f32 %v987, %v1373
        %v1416 = vadd.f32 %v990, %v1376
        %v1417 = vadd.f32 %v995, %v1381
        %v1418 = vadd.f32 %v998, %v1384
        %s1419 = scalar_lea.vmem %s226, 16
        %v1420 = vld [vmem:[%s1419] sm:$0xff]
        %v1421 = vld [vmem:[%s1419 + $0x10] sm:$0xff]
        %v1422 = vld [vmem:[%s1419 + $0x20] sm:$0xff]
        %v1423 = vld [vmem:[%s1419 + $0x30] sm:$0xff]
        %v1424 = vld [vmem:[%s1419 + $0x60] sm:$0xff]
        %v1425 = vld [vmem:[%s1419 + $0x70] sm:$0xff]
        %v1426 = vld [vmem:[%s1419 + $0x80] sm:$0xff]
        %v1427 = vld [vmem:[%s1419 + $0x90] sm:$0xff]
        %v1428 = vld [vmem:[%s1419 + $0xc0] sm:$0xff]
        %v1429 = vld [vmem:[%s1419 + $0xd0] sm:$0xff]
        %v1430 = vld [vmem:[%s1419 + $0xe0] sm:$0xff]
        %v1431 = vld [vmem:[%s1419 + $0xf0] sm:$0xff]
        %v1432 = vld [vmem:[%s1419 + $0x120] sm:$0xff]
        %v1433 = vld [vmem:[%s1419 + $0x130] sm:$0xff]
        %v1434 = vld [vmem:[%s1419 + $0x140] sm:$0xff]
        %v1435 = vld [vmem:[%s1419 + $0x150] sm:$0xff]
        %v1436 = vld [vmem:[%s1419 + $0x180] sm:$0xff]
        %v1437 = vld [vmem:[%s1419 + $0x190] sm:$0xff]
        %v1438 = vld [vmem:[%s1419 + $0x1a0] sm:$0xff]
        %v1439 = vld [vmem:[%s1419 + $0x1b0] sm:$0xff]
        %v1440 = vld [vmem:[%s1419 + $0x1e0] sm:$0xff]
        %v1441 = vld [vmem:[%s1419 + $0x1f0] sm:$0xff]
        %v1442 = vld [vmem:[%s1419 + $0x200] sm:$0xff]
        %v1443 = vld [vmem:[%s1419 + $0x210] sm:$0xff]
        %v1444 = vld [vmem:[%s1419 + $0x240] sm:$0xff]
        %v1445 = vld [vmem:[%s1419 + $0x250] sm:$0xff]
        %v1446 = vld [vmem:[%s1419 + $0x260] sm:$0xff]
        %v1447 = vld [vmem:[%s1419 + $0x270] sm:$0xff]
        %v1448 = vld [vmem:[%s1419 + $0x2a0] sm:$0xff]
        %v1449 = vld [vmem:[%s1419 + $0x2b0] sm:$0xff]
        %v1450 = vld [vmem:[%s1419 + $0x2c0] sm:$0xff]
        %v1451 = vld [vmem:[%s1419 + $0x2d0] sm:$0xff]
        %v1452 = vpack.c.bf16 %v1420, %v1420
        %v1453 = vpack.c.bf16 %v1421, %v1421
        %v1454 = vpack.c.bf16 %v1422, %v1422
        %v1455 = vpack.c.bf16 %v1423, %v1423
        %v1456 = vpack.c.bf16 %v1424, %v1424
        %v1457 = vpack.c.bf16 %v1425, %v1425
        %v1458 = vpack.c.bf16 %v1426, %v1426
        %v1459 = vpack.c.bf16 %v1427, %v1427
        %v1460 = vpack.c.bf16 %v1428, %v1428
        %v1461 = vpack.c.bf16 %v1429, %v1429
        %v1462 = vpack.c.bf16 %v1430, %v1430
        %v1463 = vpack.c.bf16 %v1431, %v1431
        %v1464 = vpack.c.bf16 %v1432, %v1432
        %v1465 = vpack.c.bf16 %v1433, %v1433
        %v1466 = vpack.c.bf16 %v1434, %v1434
        %v1467 = vpack.c.bf16 %v1435, %v1435
        %v1468 = vpack.c.bf16 %v1436, %v1436
        %v1469 = vpack.c.bf16 %v1437, %v1437
        %v1470 = vpack.c.bf16 %v1438, %v1438
        %v1471 = vpack.c.bf16 %v1439, %v1439
        %v1472 = vpack.c.bf16 %v1440, %v1440
        %v1473 = vpack.c.bf16 %v1441, %v1441
        %v1474 = vpack.c.bf16 %v1442, %v1442
        %v1475 = vpack.c.bf16 %v1443, %v1443
        %v1476 = vpack.c.bf16 %v1444, %v1444
        %v1477 = vpack.c.bf16 %v1445, %v1445
        %v1478 = vpack.c.bf16 %v1446, %v1446
        %v1479 = vpack.c.bf16 %v1447, %v1447
        %v1480 = vpack.c.bf16 %v1448, %v1448
        %v1481 = vpack.c.bf16 %v1449, %v1449
        %v1482 = vpack.c.bf16 %v1450, %v1450
        %v1483 = vpack.c.bf16 %v1451, %v1451
        %s1484 = scalar_lea.vmem %s1, 192
        %v1485 = vld [vmem:[%s1484] sm:$0xf]
        %v1486 = vld [vmem:[%s1484 + $0x4] sm:$0xf]
        %v1487 = vld [vmem:[%s1484 + $0x8] sm:$0xf]
        %v1488 = vld [vmem:[%s1484 + $0xc] sm:$0xf]
        %v1489 = vld [vmem:[%s1484 + $0x10] sm:$0xf]
        %v1490 = vld [vmem:[%s1484 + $0x14] sm:$0xf]
        %v1491 = vld [vmem:[%s1484 + $0x18] sm:$0xf]
        %v1492 = vld [vmem:[%s1484 + $0x1c] sm:$0xf]
        %v1493 = vld [vmem:[%s1484 + $0x20] sm:$0xf]
        %v1494 = vld [vmem:[%s1484 + $0x24] sm:$0xf]
        %v1495 = vld [vmem:[%s1484 + $0x28] sm:$0xf]
        %v1496 = vld [vmem:[%s1484 + $0x2c] sm:$0xf]
        %v1497 = vld [vmem:[%s1484 + $0x30] sm:$0xf]
        %v1498 = vld [vmem:[%s1484 + $0x34] sm:$0xf]
        %v1499 = vld [vmem:[%s1484 + $0x38] sm:$0xf]
        %v1500 = vld [vmem:[%s1484 + $0x3c] sm:$0xf]
        %v1533 = vunpack.c.l.b16 %v1452
        %v1534 = vunpack.c.l.b16 %v1453
        %v1535 = vunpack.c.l.b16 %v1454
        %v1536 = vunpack.c.l.b16 %v1455
        %v1537 = vunpack.c.l.b16 %v1456
        %v1538 = vunpack.c.l.b16 %v1457
        %v1539 = vunpack.c.l.b16 %v1458
        %v1540 = vunpack.c.l.b16 %v1459
        %v1541 = vunpack.c.l.b16 %v1460
        %v1542 = vunpack.c.l.b16 %v1461
        %v1543 = vunpack.c.l.b16 %v1462
        %v1544 = vunpack.c.l.b16 %v1463
        %v1545 = vunpack.c.l.b16 %v1464
        %v1546 = vunpack.c.l.b16 %v1465
        %v1547 = vunpack.c.l.b16 %v1466
        %v1548 = vunpack.c.l.b16 %v1467
        %v1549 = vunpack.c.l.b16 %v1468
        %v1550 = vunpack.c.l.b16 %v1469
        %v1551 = vunpack.c.l.b16 %v1470
        %v1552 = vunpack.c.l.b16 %v1471
        %v1553 = vunpack.c.l.b16 %v1472
        %v1554 = vunpack.c.l.b16 %v1473
        %v1555 = vunpack.c.l.b16 %v1474
        %v1556 = vunpack.c.l.b16 %v1475
        %v1557 = vunpack.c.l.b16 %v1476
        %v1558 = vunpack.c.l.b16 %v1477
        %v1559 = vunpack.c.l.b16 %v1478
        %v1560 = vunpack.c.l.b16 %v1479
        %v1561 = vunpack.c.l.b16 %v1480
        %v1562 = vunpack.c.l.b16 %v1481
        %v1563 = vunpack.c.l.b16 %v1482
        %v1564 = vunpack.c.l.b16 %v1483
        %v1565 = vpack.c.b16 %v1534, %v1533
        %v1566 = vpack.c.b16 %v1536, %v1535
        %v1567 = vpack.c.b16 %v1538, %v1537
        %v1568 = vpack.c.b16 %v1540, %v1539
        %v1569 = vpack.c.b16 %v1542, %v1541
        %v1570 = vpack.c.b16 %v1544, %v1543
        %v1571 = vpack.c.b16 %v1546, %v1545
        %v1572 = vpack.c.b16 %v1548, %v1547
        %v1573 = vpack.c.b16 %v1550, %v1549
        %v1574 = vpack.c.b16 %v1552, %v1551
        %v1575 = vpack.c.b16 %v1554, %v1553
        %v1576 = vpack.c.b16 %v1556, %v1555
        %v1577 = vpack.c.b16 %v1558, %v1557
        %v1578 = vpack.c.b16 %v1560, %v1559
        %v1579 = vpack.c.b16 %v1562, %v1561
        %v1580 = vpack.c.b16 %v1564, %v1563
        %v1613 = vunpack.c.l.b16 %v1485
        %v1614 = vunpack.c.l.b16 %v1486
        %v1615 = vunpack.c.l.b16 %v1487
        %v1616 = vunpack.c.l.b16 %v1488
        %v1617 = vunpack.c.l.b16 %v1489
        %v1618 = vunpack.c.l.b16 %v1490
        %v1619 = vunpack.c.l.b16 %v1491
        %v1620 = vunpack.c.l.b16 %v1492
        %v1621 = vunpack.c.l.b16 %v1493
        %v1622 = vunpack.c.l.b16 %v1494
        %v1623 = vunpack.c.l.b16 %v1495
        %v1624 = vunpack.c.l.b16 %v1496
        %v1625 = vunpack.c.l.b16 %v1497
        %v1626 = vunpack.c.l.b16 %v1498
        %v1627 = vunpack.c.l.b16 %v1499
        %v1628 = vunpack.c.l.b16 %v1500
        %v1629 = vpack.c.b16 %v1614, %v1613
        %v1630 = vpack.c.b16 %v1616, %v1615
        %v1631 = vpack.c.b16 %v1618, %v1617
        %v1632 = vpack.c.b16 %v1620, %v1619
        %v1633 = vpack.c.b16 %v1622, %v1621
        %v1634 = vpack.c.b16 %v1624, %v1623
        %v1635 = vpack.c.b16 %v1626, %v1625
        %v1636 = vpack.c.b16 %v1628, %v1627
        %1645 = vmatprep.subr.bf16.mxu0 0
        %1646 = vmatpush1.bf16.msra.mxu0 %v1629
        %1647 = vmatprep.subr.bf16.mxu0 0
        %1648 = vmatpush1.bf16.msra.mxu0 %v1630
        %1649 = vmatprep.subr.bf16.mxu0 0
        %1650 = vmatpush1.bf16.msra.mxu0 %v1631
        %1651 = vmatprep.subr.bf16.mxu0 0
        %1652 = vmatpush1.bf16.msra.mxu0 %v1632
        %1653 = vmatprep.subr.bf16.mxu0 0
        %1654 = vmatpush1.bf16.msra.mxu0 %v1633
        %1655 = vmatprep.subr.bf16.mxu0 0
        %1656 = vmatpush1.bf16.msra.mxu0 %v1634
        %1657 = vmatprep.subr.bf16.mxu0 0
        %1658 = vmatpush1.bf16.msra.mxu0 %v1635
        %1659 = vmatprep.subr.bf16.mxu0 0
        %1660 = vmatpush1.bf16.msra.mxu0 %v1636
        %1661 = vmatprep.subr.bf16.mxu0 0
        %1662 = vmatpush1.bf16.msra.mxu0 0
        %1663 = vmatprep.subr.bf16.mxu0 0
        %1664 = vmatpush1.bf16.msra.mxu0 0
        %1665 = vmatprep.subr.bf16.mxu0 0
        %1666 = vmatpush1.bf16.msra.mxu0 0
        %1667 = vmatprep.subr.bf16.mxu0 0
        %1668 = vmatpush1.bf16.msra.mxu0 0
        %1669 = vmatprep.subr.bf16.mxu0 0
        %1670 = vmatpush1.bf16.msra.mxu0 0
        %1671 = vmatprep.subr.bf16.mxu0 0
        %1672 = vmatpush1.bf16.msra.mxu0 0
        %1673 = vmatprep.subr.bf16.mxu0 0
        %1674 = vmatpush1.bf16.msra.mxu0 0
        %1675 = vmatprep.subr.bf16.mxu0 0
        %1676 = vmatpush1.bf16.msra.mxu0 0
        %1677 = vmatprep.mubr.bf16.mxu0 0
        %1678 = vmatmul.mubr.bf16.gmra.mrb[0].mxu0 %v1565
        %v1679 = vpop.f32.mrb[0].mxu0
        %v1680 = vadd.f32 0.0, %v1679
        %v1681 = vpop.f32.mrb[0].mxu0
        %v1682 = vpop.f32.mrb[0].mxu0
        %v1683 = vadd.f32 0.0, %v1682
        %v1684 = vpop.f32.mrb[0].mxu0
        %1685 = vmatprep.mubr.bf16.mxu0 0
        %1686 = vmatmul.mubr.bf16.gmra.mrb[0].mxu0 %v1566
        %v1687 = vpop.f32.mrb[0].mxu0
        %v1688 = vadd.f32 0.0, %v1687
        %v1689 = vpop.f32.mrb[0].mxu0
        %v1690 = vpop.f32.mrb[0].mxu0
        %v1691 = vadd.f32 0.0, %v1690
        %v1692 = vpop.f32.mrb[0].mxu0
        %1693 = vmatprep.mubr.bf16.mxu0 0
        %1694 = vmatmul.mubr.bf16.gmra.mrb[0].mxu0 %v1567
        %v1695 = vpop.f32.mrb[0].mxu0
        %v1696 = vadd.f32 0.0, %v1695
        %v1697 = vpop.f32.mrb[0].mxu0
        %v1698 = vpop.f32.mrb[0].mxu0
        %v1699 = vadd.f32 0.0, %v1698
        %v1700 = vpop.f32.mrb[0].mxu0
        %1701 = vmatprep.mubr.bf16.mxu0 0
        %1702 = vmatmul.mubr.bf16.gmra.mrb[0].mxu0 %v1568
        %v1703 = vpop.f32.mrb[0].mxu0
        %v1704 = vadd.f32 0.0, %v1703
        %v1705 = vpop.f32.mrb[0].mxu0
        %v1706 = vpop.f32.mrb[0].mxu0
        %v1707 = vadd.f32 0.0, %v1706
        %v1708 = vpop.f32.mrb[0].mxu0
        %1709 = vmatprep.mubr.bf16.mxu0 0
        %1710 = vmatmul.mubr.bf16.gmra.mrb[0].mxu0 %v1569
        %v1711 = vpop.f32.mrb[0].mxu0
        %v1712 = vadd.f32 0.0, %v1711
        %v1713 = vpop.f32.mrb[0].mxu0
        %v1714 = vpop.f32.mrb[0].mxu0
        %v1715 = vadd.f32 0.0, %v1714
        %v1716 = vpop.f32.mrb[0].mxu0
        %1717 = vmatprep.mubr.bf16.mxu0 0
        %1718 = vmatmul.mubr.bf16.gmra.mrb[0].mxu0 %v1570
        %v1719 = vpop.f32.mrb[0].mxu0
        %v1720 = vadd.f32 0.0, %v1719
        %v1721 = vpop.f32.mrb[0].mxu0
        %v1722 = vpop.f32.mrb[0].mxu0
        %v1723 = vadd.f32 0.0, %v1722
        %v1724 = vpop.f32.mrb[0].mxu0
        %1725 = vmatprep.mubr.bf16.mxu0 0
        %1726 = vmatmul.mubr.bf16.gmra.mrb[0].mxu0 %v1571
        %v1727 = vpop.f32.mrb[0].mxu0
        %v1728 = vadd.f32 0.0, %v1727
        %v1729 = vpop.f32.mrb[0].mxu0
        %v1730 = vpop.f32.mrb[0].mxu0
        %v1731 = vadd.f32 0.0, %v1730
        %v1732 = vpop.f32.mrb[0].mxu0
        %1733 = vmatprep.mubr.bf16.mxu0 0
        %1734 = vmatmul.mubr.bf16.gmra.mrb[0].mxu0 %v1572
        %v1735 = vpop.f32.mrb[0].mxu0
        %v1736 = vadd.f32 0.0, %v1735
        %v1737 = vpop.f32.mrb[0].mxu0
        %v1738 = vpop.f32.mrb[0].mxu0
        %v1739 = vadd.f32 0.0, %v1738
        %v1740 = vpop.f32.mrb[0].mxu0
        %1741 = vmatprep.mubr.bf16.mxu0 0
        %1742 = vmatmul.mubr.bf16.gmra.mrb[0].mxu0 %v1573
        %v1743 = vpop.f32.mrb[0].mxu0
        %v1744 = vadd.f32 0.0, %v1743
        %v1745 = vpop.f32.mrb[0].mxu0
        %v1746 = vpop.f32.mrb[0].mxu0
        %v1747 = vadd.f32 0.0, %v1746
        %v1748 = vpop.f32.mrb[0].mxu0
        %1749 = vmatprep.mubr.bf16.mxu0 0
        %1750 = vmatmul.mubr.bf16.gmra.mrb[0].mxu0 %v1574
        %v1751 = vpop.f32.mrb[0].mxu0
        %v1752 = vadd.f32 0.0, %v1751
        %v1753 = vpop.f32.mrb[0].mxu0
        %v1754 = vpop.f32.mrb[0].mxu0
        %v1755 = vadd.f32 0.0, %v1754
        %v1756 = vpop.f32.mrb[0].mxu0
        %1757 = vmatprep.mubr.bf16.mxu0 0
        %1758 = vmatmul.mubr.bf16.gmra.mrb[0].mxu0 %v1575
        %v1759 = vpop.f32.mrb[0].mxu0
        %v1760 = vadd.f32 0.0, %v1759
        %v1761 = vpop.f32.mrb[0].mxu0
        %v1762 = vpop.f32.mrb[0].mxu0
        %v1763 = vadd.f32 0.0, %v1762
        %v1764 = vpop.f32.mrb[0].mxu0
        %1765 = vmatprep.mubr.bf16.mxu0 0
        %1766 = vmatmul.mubr.bf16.gmra.mrb[0].mxu0 %v1576
        %v1767 = vpop.f32.mrb[0].mxu0
        %v1768 = vadd.f32 0.0, %v1767
        %v1769 = vpop.f32.mrb[0].mxu0
        %v1770 = vpop.f32.mrb[0].mxu0
        %v1771 = vadd.f32 0.0, %v1770
        %v1772 = vpop.f32.mrb[0].mxu0
        %1773 = vmatprep.mubr.bf16.mxu0 0
        %1774 = vmatmul.mubr.bf16.gmra.mrb[0].mxu0 %v1577
        %v1775 = vpop.f32.mrb[0].mxu0
        %v1776 = vadd.f32 0.0, %v1775
        %v1777 = vpop.f32.mrb[0].mxu0
        %v1778 = vpop.f32.mrb[0].mxu0
        %v1779 = vadd.f32 0.0, %v1778
        %v1780 = vpop.f32.mrb[0].mxu0
        %1781 = vmatprep.mubr.bf16.mxu0 0
        %1782 = vmatmul.mubr.bf16.gmra.mrb[0].mxu0 %v1578
        %v1783 = vpop.f32.mrb[0].mxu0
        %v1784 = vadd.f32 0.0, %v1783
        %v1785 = vpop.f32.mrb[0].mxu0
        %v1786 = vpop.f32.mrb[0].mxu0
        %v1787 = vadd.f32 0.0, %v1786
        %v1788 = vpop.f32.mrb[0].mxu0
        %1789 = vmatprep.mubr.bf16.mxu0 0
        %1790 = vmatmul.mubr.bf16.gmra.mrb[0].mxu0 %v1579
        %v1791 = vpop.f32.mrb[0].mxu0
        %v1792 = vadd.f32 0.0, %v1791
        %v1793 = vpop.f32.mrb[0].mxu0
        %v1794 = vpop.f32.mrb[0].mxu0
        %v1795 = vadd.f32 0.0, %v1794
        %v1796 = vpop.f32.mrb[0].mxu0
        %1797 = vmatprep.mubr.bf16.mxu0 0
        %1798 = vmatmul.mubr.bf16.gmra.mrb[0].mxu0 %v1580
        %v1799 = vpop.f32.mrb[0].mxu0
        %v1800 = vadd.f32 0.0, %v1799
        %v1801 = vpop.f32.mrb[0].mxu0
        %v1802 = vpop.f32.mrb[0].mxu0
        %v1803 = vadd.f32 0.0, %v1802
        %v1804 = vpop.f32.mrb[0].mxu0
        %1805 = vdwg.mxu0
        %v1806 = vadd.f32 %v1387, %v1680
        %v1807 = vadd.f32 %v1388, %v1683
        %v1808 = vadd.f32 %v1389, %v1688
        %v1809 = vadd.f32 %v1390, %v1691
        %v1810 = vadd.f32 %v1391, %v1696
        %v1811 = vadd.f32 %v1392, %v1699
        %v1812 = vadd.f32 %v1393, %v1704
        %v1813 = vadd.f32 %v1394, %v1707
        %v1814 = vadd.f32 %v1395, %v1712
        %v1815 = vadd.f32 %v1396, %v1715
        %v1816 = vadd.f32 %v1397, %v1720
        %v1817 = vadd.f32 %v1398, %v1723
        %v1818 = vadd.f32 %v1399, %v1728
        %v1819 = vadd.f32 %v1400, %v1731
        %v1820 = vadd.f32 %v1401, %v1736
        %v1821 = vadd.f32 %v1402, %v1739
        %v1822 = vadd.f32 %v1403, %v1744
        %v1823 = vadd.f32 %v1404, %v1747
        %v1824 = vadd.f32 %v1405, %v1752
        %v1825 = vadd.f32 %v1406, %v1755
        %v1826 = vadd.f32 %v1407, %v1760
        %v1827 = vadd.f32 %v1408, %v1763
        %v1828 = vadd.f32 %v1409, %v1768
        %v1829 = vadd.f32 %v1410, %v1771
        %v1830 = vadd.f32 %v1411, %v1776
        %v1831 = vadd.f32 %v1412, %v1779
        %v1832 = vadd.f32 %v1413, %v1784
        %v1833 = vadd.f32 %v1414, %v1787
        %v1834 = vadd.f32 %v1415, %v1792
        %v1835 = vadd.f32 %v1416, %v1795
        %v1836 = vadd.f32 %v1417, %v1800
        %v1837 = vadd.f32 %v1418, %v1803
        %v1838 = vld [vmem:[%s1419 + $0x1] sm:$0xff]
        %v1839 = vld [vmem:[%s1419 + $0x11] sm:$0xff]
        %v1840 = vld [vmem:[%s1419 + $0x21] sm:$0xff]
        %v1841 = vld [vmem:[%s1419 + $0x31] sm:$0xff]
        %v1842 = vld [vmem:[%s1419 + $0x61] sm:$0xff]
        %v1843 = vld [vmem:[%s1419 + $0x71] sm:$0xff]
        %v1844 = vld [vmem:[%s1419 + $0x81] sm:$0xff]
        %v1845 = vld [vmem:[%s1419 + $0x91] sm:$0xff]
        %v1846 = vld [vmem:[%s1419 + $0xc1] sm:$0xff]
        %v1847 = vld [vmem:[%s1419 + $0xd1] sm:$0xff]
        %v1848 = vld [vmem:[%s1419 + $0xe1] sm:$0xff]
        %v1849 = vld [vmem:[%s1419 + $0xf1] sm:$0xff]
        %v1850 = vld [vmem:[%s1419 + $0x121] sm:$0xff]
        %v1851 = vld [vmem:[%s1419 + $0x131] sm:$0xff]
        %v1852 = vld [vmem:[%s1419 + $0x141] sm:$0xff]
        %v1853 = vld [vmem:[%s1419 + $0x151] sm:$0xff]
        %v1854 = vld [vmem:[%s1419 + $0x181] sm:$0xff]
        %v1855 = vld [vmem:[%s1419 + $0x191] sm:$0xff]
        %v1856 = vld [vmem:[%s1419 + $0x1a1] sm:$0xff]
        %v1857 = vld [vmem:[%s1419 + $0x1b1] sm:$0xff]
        %v1858 = vld [vmem:[%s1419 + $0x1e1] sm:$0xff]
        %v1859 = vld [vmem:[%s1419 + $0x1f1] sm:$0xff]
        %v1860 = vld [vmem:[%s1419 + $0x201] sm:$0xff]
        %v1861 = vld [vmem:[%s1419 + $0x211] sm:$0xff]
        %v1862 = vld [vmem:[%s1419 + $0x241] sm:$0xff]
        %v1863 = vld [vmem:[%s1419 + $0x251] sm:$0xff]
        %v1864 = vld [vmem:[%s1419 + $0x261] sm:$0xff]
        %v1865 = vld [vmem:[%s1419 + $0x271] sm:$0xff]
        %v1866 = vld [vmem:[%s1419 + $0x2a1] sm:$0xff]
        %v1867 = vld [vmem:[%s1419 + $0x2b1] sm:$0xff]
        %v1868 = vld [vmem:[%s1419 + $0x2c1] sm:$0xff]
        %v1869 = vld [vmem:[%s1419 + $0x2d1] sm:$0xff]
        %v1870 = vpack.c.bf16 %v1838, %v1838
        %v1871 = vpack.c.bf16 %v1839, %v1839
        %v1872 = vpack.c.bf16 %v1840, %v1840
        %v1873 = vpack.c.bf16 %v1841, %v1841
        %v1874 = vpack.c.bf16 %v1842, %v1842
        %v1875 = vpack.c.bf16 %v1843, %v1843
        %v1876 = vpack.c.bf16 %v1844, %v1844
        %v1877 = vpack.c.bf16 %v1845, %v1845
        %v1878 = vpack.c.bf16 %v1846, %v1846
        %v1879 = vpack.c.bf16 %v1847, %v1847
        %v1880 = vpack.c.bf16 %v1848, %v1848
        %v1881 = vpack.c.bf16 %v1849, %v1849
        %v1882 = vpack.c.bf16 %v1850, %v1850
        %v1883 = vpack.c.bf16 %v1851, %v1851
        %v1884 = vpack.c.bf16 %v1852, %v1852
        %v1885 = vpack.c.bf16 %v1853, %v1853
        %v1886 = vpack.c.bf16 %v1854, %v1854
        %v1887 = vpack.c.bf16 %v1855, %v1855
        %v1888 = vpack.c.bf16 %v1856, %v1856
        %v1889 = vpack.c.bf16 %v1857, %v1857
        %v1890 = vpack.c.bf16 %v1858, %v1858
        %v1891 = vpack.c.bf16 %v1859, %v1859
        %v1892 = vpack.c.bf16 %v1860, %v1860
        %v1893 = vpack.c.bf16 %v1861, %v1861
        %v1894 = vpack.c.bf16 %v1862, %v1862
        %v1895 = vpack.c.bf16 %v1863, %v1863
        %v1896 = vpack.c.bf16 %v1864, %v1864
        %v1897 = vpack.c.bf16 %v1865, %v1865
        %v1898 = vpack.c.bf16 %v1866, %v1866
        %v1899 = vpack.c.bf16 %v1867, %v1867
        %v1900 = vpack.c.bf16 %v1868, %v1868
        %v1901 = vpack.c.bf16 %v1869, %v1869
        %s1902 = scalar_lea.vmem %s1, 256
        %v1903 = vld [vmem:[%s1902] sm:$0xf]
        %v1904 = vld [vmem:[%s1902 + $0x4] sm:$0xf]
        %v1905 = vld [vmem:[%s1902 + $0x8] sm:$0xf]
        %v1906 = vld [vmem:[%s1902 + $0xc] sm:$0xf]
        %v1907 = vld [vmem:[%s1902 + $0x10] sm:$0xf]
        %v1908 = vld [vmem:[%s1902 + $0x14] sm:$0xf]
        %v1909 = vld [vmem:[%s1902 + $0x18] sm:$0xf]
        %v1910 = vld [vmem:[%s1902 + $0x1c] sm:$0xf]
        %v1911 = vld [vmem:[%s1902 + $0x20] sm:$0xf]
        %v1912 = vld [vmem:[%s1902 + $0x24] sm:$0xf]
        %v1913 = vld [vmem:[%s1902 + $0x28] sm:$0xf]
        %v1914 = vld [vmem:[%s1902 + $0x2c] sm:$0xf]
        %v1915 = vld [vmem:[%s1902 + $0x30] sm:$0xf]
        %v1916 = vld [vmem:[%s1902 + $0x34] sm:$0xf]
        %v1917 = vld [vmem:[%s1902 + $0x38] sm:$0xf]
        %v1918 = vld [vmem:[%s1902 + $0x3c] sm:$0xf]
        %v1951 = vunpack.c.l.b16 %v1870
        %v1952 = vunpack.c.l.b16 %v1871
        %v1953 = vunpack.c.l.b16 %v1872
        %v1954 = vunpack.c.l.b16 %v1873
        %v1955 = vunpack.c.l.b16 %v1874
        %v1956 = vunpack.c.l.b16 %v1875
        %v1957 = vunpack.c.l.b16 %v1876
        %v1958 = vunpack.c.l.b16 %v1877
        %v1959 = vunpack.c.l.b16 %v1878
        %v1960 = vunpack.c.l.b16 %v1879
        %v1961 = vunpack.c.l.b16 %v1880
        %v1962 = vunpack.c.l.b16 %v1881
        %v1963 = vunpack.c.l.b16 %v1882
        %v1964 = vunpack.c.l.b16 %v1883
        %v1965 = vunpack.c.l.b16 %v1884
        %v1966 = vunpack.c.l.b16 %v1885
        %v1967 = vunpack.c.l.b16 %v1886
        %v1968 = vunpack.c.l.b16 %v1887
        %v1969 = vunpack.c.l.b16 %v1888
        %v1970 = vunpack.c.l.b16 %v1889
        %v1971 = vunpack.c.l.b16 %v1890
        %v1972 = vunpack.c.l.b16 %v1891
        %v1973 = vunpack.c.l.b16 %v1892
        %v1974 = vunpack.c.l.b16 %v1893
        %v1975 = vunpack.c.l.b16 %v1894
        %v1976 = vunpack.c.l.b16 %v1895
        %v1977 = vunpack.c.l.b16 %v1896
        %v1978 = vunpack.c.l.b16 %v1897
        %v1979 = vunpack.c.l.b16 %v1898
        %v1980 = vunpack.c.l.b16 %v1899
        %v1981 = vunpack.c.l.b16 %v1900
        %v1982 = vunpack.c.l.b16 %v1901
        %v1983 = vpack.c.b16 %v1952, %v1951
        %v1984 = vpack.c.b16 %v1954, %v1953
        %v1985 = vpack.c.b16 %v1956, %v1955
        %v1986 = vpack.c.b16 %v1958, %v1957
        %v1987 = vpack.c.b16 %v1960, %v1959
        %v1988 = vpack.c.b16 %v1962, %v1961
        %v1989 = vpack.c.b16 %v1964, %v1963
        %v1990 = vpack.c.b16 %v1966, %v1965
        %v1991 = vpack.c.b16 %v1968, %v1967
        %v1992 = vpack.c.b16 %v1970, %v1969
        %v1993 = vpack.c.b16 %v1972, %v1971
        %v1994 = vpack.c.b16 %v1974, %v1973
        %v1995 = vpack.c.b16 %v1976, %v1975
        %v1996 = vpack.c.b16 %v1978, %v1977
        %v1997 = vpack.c.b16 %v1980, %v1979
        %v1998 = vpack.c.b16 %v1982, %v1981
        %v2031 = vunpack.c.l.b16 %v1903
        %v2032 = vunpack.c.l.b16 %v1904
        %v2033 = vunpack.c.l.b16 %v1905
        %v2034 = vunpack.c.l.b16 %v1906
        %v2035 = vunpack.c.l.b16 %v1907
        %v2036 = vunpack.c.l.b16 %v1908
        %v2037 = vunpack.c.l.b16 %v1909
        %v2038 = vunpack.c.l.b16 %v1910
        %v2039 = vunpack.c.l.b16 %v1911
        %v2040 = vunpack.c.l.b16 %v1912
        %v2041 = vunpack.c.l.b16 %v1913
        %v2042 = vunpack.c.l.b16 %v1914
        %v2043 = vunpack.c.l.b16 %v1915
        %v2044 = vunpack.c.l.b16 %v1916
        %v2045 = vunpack.c.l.b16 %v1917
        %v2046 = vunpack.c.l.b16 %v1918
        %v2047 = vpack.c.b16 %v2032, %v2031
        %v2048 = vpack.c.b16 %v2034, %v2033
        %v2049 = vpack.c.b16 %v2036, %v2035
        %v2050 = vpack.c.b16 %v2038, %v2037
        %v2051 = vpack.c.b16 %v2040, %v2039
        %v2052 = vpack.c.b16 %v2042, %v2041
        %v2053 = vpack.c.b16 %v2044, %v2043
        %v2054 = vpack.c.b16 %v2046, %v2045
        %2063 = vmatprep.subr.bf16.mxu0 0
        %2064 = vmatpush1.bf16.msra.mxu0 %v2047
        %2065 = vmatprep.subr.bf16.mxu0 0
        %2066 = vmatpush1.bf16.msra.mxu0 %v2048
        %2067 = vmatprep.subr.bf16.mxu0 0
        %2068 = vmatpush1.bf16.msra.mxu0 %v2049
        %2069 = vmatprep.subr.bf16.mxu0 0
        %2070 = vmatpush1.bf16.msra.mxu0 %v2050
        %2071 = vmatprep.subr.bf16.mxu0 0
        %2072 = vmatpush1.bf16.msra.mxu0 %v2051
        %2073 = vmatprep.subr.bf16.mxu0 0
        %2074 = vmatpush1.bf16.msra.mxu0 %v2052
        %2075 = vmatprep.subr.bf16.mxu0 0
        %2076 = vmatpush1.bf16.msra.mxu0 %v2053
        %2077 = vmatprep.subr.bf16.mxu0 0
        %2078 = vmatpush1.bf16.msra.mxu0 %v2054
        %2079 = vmatprep.subr.bf16.mxu0 0
        %2080 = vmatpush1.bf16.msra.mxu0 0
        %2081 = vmatprep.subr.bf16.mxu0 0
        %2082 = vmatpush1.bf16.msra.mxu0 0
        %2083 = vmatprep.subr.bf16.mxu0 0
        %2084 = vmatpush1.bf16.msra.mxu0 0
        %2085 = vmatprep.subr.bf16.mxu0 0
        %2086 = vmatpush1.bf16.msra.mxu0 0
        %2087 = vmatprep.subr.bf16.mxu0 0
        %2088 = vmatpush1.bf16.msra.mxu0 0
        %2089 = vmatprep.subr.bf16.mxu0 0
        %2090 = vmatpush1.bf16.msra.mxu0 0
        %2091 = vmatprep.subr.bf16.mxu0 0
        %2092 = vmatpush1.bf16.msra.mxu0 0
        %2093 = vmatprep.subr.bf16.mxu0 0
        %2094 = vmatpush1.bf16.msra.mxu0 0
        %2095 = vmatprep.mubr.bf16.mxu0 0
        %2096 = vmatmul.mubr.bf16.gmra.mrb[0].mxu0 %v1983
        %v2097 = vpop.f32.mrb[0].mxu0
        %v2098 = vadd.f32 0.0, %v2097
        %v2099 = vpop.f32.mrb[0].mxu0
        %v2100 = vpop.f32.mrb[0].mxu0
        %v2101 = vadd.f32 0.0, %v2100
        %v2102 = vpop.f32.mrb[0].mxu0
        %2103 = vmatprep.mubr.bf16.mxu0 0
        %2104 = vmatmul.mubr.bf16.gmra.mrb[0].mxu0 %v1984
        %v2105 = vpop.f32.mrb[0].mxu0
        %v2106 = vadd.f32 0.0, %v2105
        %v2107 = vpop.f32.mrb[0].mxu0
        %v2108 = vpop.f32.mrb[0].mxu0
        %v2109 = vadd.f32 0.0, %v2108
        %v2110 = vpop.f32.mrb[0].mxu0
        %2111 = vmatprep.mubr.bf16.mxu0 0
        %2112 = vmatmul.mubr.bf16.gmra.mrb[0].mxu0 %v1985
        %v2113 = vpop.f32.mrb[0].mxu0
        %v2114 = vadd.f32 0.0, %v2113
        %v2115 = vpop.f32.mrb[0].mxu0
        %v2116 = vpop.f32.mrb[0].mxu0
        %v2117 = vadd.f32 0.0, %v2116
        %v2118 = vpop.f32.mrb[0].mxu0
        %2119 = vmatprep.mubr.bf16.mxu0 0
        %2120 = vmatmul.mubr.bf16.gmra.mrb[0].mxu0 %v1986
        %v2121 = vpop.f32.mrb[0].mxu0
        %v2122 = vadd.f32 0.0, %v2121
        %v2123 = vpop.f32.mrb[0].mxu0
        %v2124 = vpop.f32.mrb[0].mxu0
        %v2125 = vadd.f32 0.0, %v2124
        %v2126 = vpop.f32.mrb[0].mxu0
        %2127 = vmatprep.mubr.bf16.mxu0 0
        %2128 = vmatmul.mubr.bf16.gmra.mrb[0].mxu0 %v1987
        %v2129 = vpop.f32.mrb[0].mxu0
        %v2130 = vadd.f32 0.0, %v2129
        %v2131 = vpop.f32.mrb[0].mxu0
        %v2132 = vpop.f32.mrb[0].mxu0
        %v2133 = vadd.f32 0.0, %v2132
        %v2134 = vpop.f32.mrb[0].mxu0
        %2135 = vmatprep.mubr.bf16.mxu0 0
        %2136 = vmatmul.mubr.bf16.gmra.mrb[0].mxu0 %v1988
        %v2137 = vpop.f32.mrb[0].mxu0
        %v2138 = vadd.f32 0.0, %v2137
        %v2139 = vpop.f32.mrb[0].mxu0
        %v2140 = vpop.f32.mrb[0].mxu0
        %v2141 = vadd.f32 0.0, %v2140
        %v2142 = vpop.f32.mrb[0].mxu0
        %2143 = vmatprep.mubr.bf16.mxu0 0
        %2144 = vmatmul.mubr.bf16.gmra.mrb[0].mxu0 %v1989
        %v2145 = vpop.f32.mrb[0].mxu0
        %v2146 = vadd.f32 0.0, %v2145
        %v2147 = vpop.f32.mrb[0].mxu0
        %v2148 = vpop.f32.mrb[0].mxu0
        %v2149 = vadd.f32 0.0, %v2148
        %v2150 = vpop.f32.mrb[0].mxu0
        %2151 = vmatprep.mubr.bf16.mxu0 0
        %2152 = vmatmul.mubr.bf16.gmra.mrb[0].mxu0 %v1990
        %v2153 = vpop.f32.mrb[0].mxu0
        %v2154 = vadd.f32 0.0, %v2153
        %v2155 = vpop.f32.mrb[0].mxu0
        %v2156 = vpop.f32.mrb[0].mxu0
        %v2157 = vadd.f32 0.0, %v2156
        %v2158 = vpop.f32.mrb[0].mxu0
        %2159 = vmatprep.mubr.bf16.mxu0 0
        %2160 = vmatmul.mubr.bf16.gmra.mrb[0].mxu0 %v1991
        %v2161 = vpop.f32.mrb[0].mxu0
        %v2162 = vadd.f32 0.0, %v2161
        %v2163 = vpop.f32.mrb[0].mxu0
        %v2164 = vpop.f32.mrb[0].mxu0
        %v2165 = vadd.f32 0.0, %v2164
        %v2166 = vpop.f32.mrb[0].mxu0
        %2167 = vmatprep.mubr.bf16.mxu0 0
        %2168 = vmatmul.mubr.bf16.gmra.mrb[0].mxu0 %v1992
        %v2169 = vpop.f32.mrb[0].mxu0
        %v2170 = vadd.f32 0.0, %v2169
        %v2171 = vpop.f32.mrb[0].mxu0
        %v2172 = vpop.f32.mrb[0].mxu0
        %v2173 = vadd.f32 0.0, %v2172
        %v2174 = vpop.f32.mrb[0].mxu0
        %2175 = vmatprep.mubr.bf16.mxu0 0
        %2176 = vmatmul.mubr.bf16.gmra.mrb[0].mxu0 %v1993
        %v2177 = vpop.f32.mrb[0].mxu0
        %v2178 = vadd.f32 0.0, %v2177
        %v2179 = vpop.f32.mrb[0].mxu0
        %v2180 = vpop.f32.mrb[0].mxu0
        %v2181 = vadd.f32 0.0, %v2180
        %v2182 = vpop.f32.mrb[0].mxu0
        %2183 = vmatprep.mubr.bf16.mxu0 0
        %2184 = vmatmul.mubr.bf16.gmra.mrb[0].mxu0 %v1994
        %v2185 = vpop.f32.mrb[0].mxu0
        %v2186 = vadd.f32 0.0, %v2185
        %v2187 = vpop.f32.mrb[0].mxu0
        %v2188 = vpop.f32.mrb[0].mxu0
        %v2189 = vadd.f32 0.0, %v2188
        %v2190 = vpop.f32.mrb[0].mxu0
        %2191 = vmatprep.mubr.bf16.mxu0 0
        %2192 = vmatmul.mubr.bf16.gmra.mrb[0].mxu0 %v1995
        %v2193 = vpop.f32.mrb[0].mxu0
        %v2194 = vadd.f32 0.0, %v2193
        %v2195 = vpop.f32.mrb[0].mxu0
        %v2196 = vpop.f32.mrb[0].mxu0
        %v2197 = vadd.f32 0.0, %v2196
        %v2198 = vpop.f32.mrb[0].mxu0
        %2199 = vmatprep.mubr.bf16.mxu0 0
        %2200 = vmatmul.mubr.bf16.gmra.mrb[0].mxu0 %v1996
        %v2201 = vpop.f32.mrb[0].mxu0
        %v2202 = vadd.f32 0.0, %v2201
        %v2203 = vpop.f32.mrb[0].mxu0
        %v2204 = vpop.f32.mrb[0].mxu0
        %v2205 = vadd.f32 0.0, %v2204
        %v2206 = vpop.f32.mrb[0].mxu0
        %2207 = vmatprep.mubr.bf16.mxu0 0
        %2208 = vmatmul.mubr.bf16.gmra.mrb[0].mxu0 %v1997
        %v2209 = vpop.f32.mrb[0].mxu0
        %v2210 = vadd.f32 0.0, %v2209
        %v2211 = vpop.f32.mrb[0].mxu0
        %v2212 = vpop.f32.mrb[0].mxu0
        %v2213 = vadd.f32 0.0, %v2212
        %v2214 = vpop.f32.mrb[0].mxu0
        %2215 = vmatprep.mubr.bf16.mxu0 0
        %2216 = vmatmul.mubr.bf16.gmra.mrb[0].mxu0 %v1998
        %v2217 = vpop.f32.mrb[0].mxu0
        %v2218 = vadd.f32 0.0, %v2217
        %v2219 = vpop.f32.mrb[0].mxu0
        %v2220 = vpop.f32.mrb[0].mxu0
        %v2221 = vadd.f32 0.0, %v2220
        %v2222 = vpop.f32.mrb[0].mxu0
        %2223 = vdwg.mxu0
        %v2224 = vadd.f32 %v1806, %v2098
        %v2225 = vadd.f32 %v1807, %v2101
        %v2226 = vadd.f32 %v1808, %v2106
        %v2227 = vadd.f32 %v1809, %v2109
        %v2228 = vadd.f32 %v1810, %v2114
        %v2229 = vadd.f32 %v1811, %v2117
        %v2230 = vadd.f32 %v1812, %v2122
        %v2231 = vadd.f32 %v1813, %v2125
        %v2232 = vadd.f32 %v1814, %v2130
        %v2233 = vadd.f32 %v1815, %v2133
        %v2234 = vadd.f32 %v1816, %v2138
        %v2235 = vadd.f32 %v1817, %v2141
        %v2236 = vadd.f32 %v1818, %v2146
        %v2237 = vadd.f32 %v1819, %v2149
        %v2238 = vadd.f32 %v1820, %v2154
        %v2239 = vadd.f32 %v1821, %v2157
        %v2240 = vadd.f32 %v1822, %v2162
        %v2241 = vadd.f32 %v1823, %v2165
        %v2242 = vadd.f32 %v1824, %v2170
        %v2243 = vadd.f32 %v1825, %v2173
        %v2244 = vadd.f32 %v1826, %v2178
        %v2245 = vadd.f32 %v1827, %v2181
        %v2246 = vadd.f32 %v1828, %v2186
        %v2247 = vadd.f32 %v1829, %v2189
        %v2248 = vadd.f32 %v1830, %v2194
        %v2249 = vadd.f32 %v1831, %v2197
        %v2250 = vadd.f32 %v1832, %v2202
        %v2251 = vadd.f32 %v1833, %v2205
        %v2252 = vadd.f32 %v1834, %v2210
        %v2253 = vadd.f32 %v1835, %v2213
        %v2254 = vadd.f32 %v1836, %v2218
        %v2255 = vadd.f32 %v1837, %v2221
        %v2256 = vld [vmem:[%s1419 + $0x2] sm:$0xff]
        %v2257 = vld [vmem:[%s1419 + $0x12] sm:$0xff]
        %v2258 = vld [vmem:[%s1419 + $0x22] sm:$0xff]
        %v2259 = vld [vmem:[%s1419 + $0x32] sm:$0xff]
        %v2260 = vld [vmem:[%s1419 + $0x62] sm:$0xff]
        %v2261 = vld [vmem:[%s1419 + $0x72] sm:$0xff]
        %v2262 = vld [vmem:[%s1419 + $0x82] sm:$0xff]
        %v2263 = vld [vmem:[%s1419 + $0x92] sm:$0xff]
        %v2264 = vld [vmem:[%s1419 + $0xc2] sm:$0xff]
        %v2265 = vld [vmem:[%s1419 + $0xd2] sm:$0xff]
        %v2266 = vld [vmem:[%s1419 + $0xe2] sm:$0xff]
        %v2267 = vld [vmem:[%s1419 + $0xf2] sm:$0xff]
        %v2268 = vld [vmem:[%s1419 + $0x122] sm:$0xff]
        %v2269 = vld [vmem:[%s1419 + $0x132] sm:$0xff]
        %v2270 = vld [vmem:[%s1419 + $0x142] sm:$0xff]
        %v2271 = vld [vmem:[%s1419 + $0x152] sm:$0xff]
        %v2272 = vld [vmem:[%s1419 + $0x182] sm:$0xff]
        %v2273 = vld [vmem:[%s1419 + $0x192] sm:$0xff]
        %v2274 = vld [vmem:[%s1419 + $0x1a2] sm:$0xff]
        %v2275 = vld [vmem:[%s1419 + $0x1b2] sm:$0xff]
        %v2276 = vld [vmem:[%s1419 + $0x1e2] sm:$0xff]
        %v2277 = vld [vmem:[%s1419 + $0x1f2] sm:$0xff]
        %v2278 = vld [vmem:[%s1419 + $0x202] sm:$0xff]
        %v2279 = vld [vmem:[%s1419 + $0x212] sm:$0xff]
        %v2280 = vld [vmem:[%s1419 + $0x242] sm:$0xff]
        %v2281 = vld [vmem:[%s1419 + $0x252] sm:$0xff]
        %v2282 = vld [vmem:[%s1419 + $0x262] sm:$0xff]
        %v2283 = vld [vmem:[%s1419 + $0x272] sm:$0xff]
        %v2284 = vld [vmem:[%s1419 + $0x2a2] sm:$0xff]
        %v2285 = vld [vmem:[%s1419 + $0x2b2] sm:$0xff]
        %v2286 = vld [vmem:[%s1419 + $0x2c2] sm:$0xff]
        %v2287 = vld [vmem:[%s1419 + $0x2d2] sm:$0xff]
        %v2288 = vpack.c.bf16 %v2256, %v2256
        %v2289 = vpack.c.bf16 %v2257, %v2257
        %v2290 = vpack.c.bf16 %v2258, %v2258
        %v2291 = vpack.c.bf16 %v2259, %v2259
        %v2292 = vpack.c.bf16 %v2260, %v2260
        %v2293 = vpack.c.bf16 %v2261, %v2261
        %v2294 = vpack.c.bf16 %v2262, %v2262
        %v2295 = vpack.c.bf16 %v2263, %v2263
        %v2296 = vpack.c.bf16 %v2264, %v2264
        %v2297 = vpack.c.bf16 %v2265, %v2265
        %v2298 = vpack.c.bf16 %v2266, %v2266
        %v2299 = vpack.c.bf16 %v2267, %v2267
        %v2300 = vpack.c.bf16 %v2268, %v2268
        %v2301 = vpack.c.bf16 %v2269, %v2269
        %v2302 = vpack.c.bf16 %v2270, %v2270
        %v2303 = vpack.c.bf16 %v2271, %v2271
        %v2304 = vpack.c.bf16 %v2272, %v2272
        %v2305 = vpack.c.bf16 %v2273, %v2273
        %v2306 = vpack.c.bf16 %v2274, %v2274
        %v2307 = vpack.c.bf16 %v2275, %v2275
        %v2308 = vpack.c.bf16 %v2276, %v2276
        %v2309 = vpack.c.bf16 %v2277, %v2277
        %v2310 = vpack.c.bf16 %v2278, %v2278
        %v2311 = vpack.c.bf16 %v2279, %v2279
        %v2312 = vpack.c.bf16 %v2280, %v2280
        %v2313 = vpack.c.bf16 %v2281, %v2281
        %v2314 = vpack.c.bf16 %v2282, %v2282
        %v2315 = vpack.c.bf16 %v2283, %v2283
        %v2316 = vpack.c.bf16 %v2284, %v2284
        %v2317 = vpack.c.bf16 %v2285, %v2285
        %v2318 = vpack.c.bf16 %v2286, %v2286
        %v2319 = vpack.c.bf16 %v2287, %v2287
        %s2320 = scalar_lea.vmem %s1, 320
        %v2321 = vld [vmem:[%s2320] sm:$0xf]
        %v2322 = vld [vmem:[%s2320 + $0x4] sm:$0xf]
        %v2323 = vld [vmem:[%s2320 + $0x8] sm:$0xf]
        %v2324 = vld [vmem:[%s2320 + $0xc] sm:$0xf]
        %v2325 = vld [vmem:[%s2320 + $0x10] sm:$0xf]
        %v2326 = vld [vmem:[%s2320 + $0x14] sm:$0xf]
        %v2327 = vld [vmem:[%s2320 + $0x18] sm:$0xf]
        %v2328 = vld [vmem:[%s2320 + $0x1c] sm:$0xf]
        %v2329 = vld [vmem:[%s2320 + $0x20] sm:$0xf]
        %v2330 = vld [vmem:[%s2320 + $0x24] sm:$0xf]
        %v2331 = vld [vmem:[%s2320 + $0x28] sm:$0xf]
        %v2332 = vld [vmem:[%s2320 + $0x2c] sm:$0xf]
        %v2333 = vld [vmem:[%s2320 + $0x30] sm:$0xf]
        %v2334 = vld [vmem:[%s2320 + $0x34] sm:$0xf]
        %v2335 = vld [vmem:[%s2320 + $0x38] sm:$0xf]
        %v2336 = vld [vmem:[%s2320 + $0x3c] sm:$0xf]
        %v2369 = vunpack.c.l.b16 %v2288
        %v2370 = vunpack.c.l.b16 %v2289
        %v2371 = vunpack.c.l.b16 %v2290
        %v2372 = vunpack.c.l.b16 %v2291
        %v2373 = vunpack.c.l.b16 %v2292
        %v2374 = vunpack.c.l.b16 %v2293
        %v2375 = vunpack.c.l.b16 %v2294
        %v2376 = vunpack.c.l.b16 %v2295
        %v2377 = vunpack.c.l.b16 %v2296
        %v2378 = vunpack.c.l.b16 %v2297
        %v2379 = vunpack.c.l.b16 %v2298
        %v2380 = vunpack.c.l.b16 %v2299
        %v2381 = vunpack.c.l.b16 %v2300
        %v2382 = vunpack.c.l.b16 %v2301
        %v2383 = vunpack.c.l.b16 %v2302
        %v2384 = vunpack.c.l.b16 %v2303
        %v2385 = vunpack.c.l.b16 %v2304
        %v2386 = vunpack.c.l.b16 %v2305
        %v2387 = vunpack.c.l.b16 %v2306
        %v2388 = vunpack.c.l.b16 %v2307
        %v2389 = vunpack.c.l.b16 %v2308
        %v2390 = vunpack.c.l.b16 %v2309
        %v2391 = vunpack.c.l.b16 %v2310
        %v2392 = vunpack.c.l.b16 %v2311
        %v2393 = vunpack.c.l.b16 %v2312
        %v2394 = vunpack.c.l.b16 %v2313
        %v2395 = vunpack.c.l.b16 %v2314
        %v2396 = vunpack.c.l.b16 %v2315
        %v2397 = vunpack.c.l.b16 %v2316
        %v2398 = vunpack.c.l.b16 %v2317
        %v2399 = vunpack.c.l.b16 %v2318
        %v2400 = vunpack.c.l.b16 %v2319
        %v2401 = vpack.c.b16 %v2370, %v2369
        %v2402 = vpack.c.b16 %v2372, %v2371
        %v2403 = vpack.c.b16 %v2374, %v2373
        %v2404 = vpack.c.b16 %v2376, %v2375
        %v2405 = vpack.c.b16 %v2378, %v2377
        %v2406 = vpack.c.b16 %v2380, %v2379
        %v2407 = vpack.c.b16 %v2382, %v2381
        %v2408 = vpack.c.b16 %v2384, %v2383
        %v2409 = vpack.c.b16 %v2386, %v2385
        %v2410 = vpack.c.b16 %v2388, %v2387
        %v2411 = vpack.c.b16 %v2390, %v2389
        %v2412 = vpack.c.b16 %v2392, %v2391
        %v2413 = vpack.c.b16 %v2394, %v2393
        %v2414 = vpack.c.b16 %v2396, %v2395
        %v2415 = vpack.c.b16 %v2398, %v2397
        %v2416 = vpack.c.b16 %v2400, %v2399
        %v2449 = vunpack.c.l.b16 %v2321
        %v2450 = vunpack.c.l.b16 %v2322
        %v2451 = vunpack.c.l.b16 %v2323
        %v2452 = vunpack.c.l.b16 %v2324
        %v2453 = vunpack.c.l.b16 %v2325
        %v2454 = vunpack.c.l.b16 %v2326
        %v2455 = vunpack.c.l.b16 %v2327
        %v2456 = vunpack.c.l.b16 %v2328
        %v2457 = vunpack.c.l.b16 %v2329
        %v2458 = vunpack.c.l.b16 %v2330
        %v2459 = vunpack.c.l.b16 %v2331
        %v2460 = vunpack.c.l.b16 %v2332
        %v2461 = vunpack.c.l.b16 %v2333
        %v2462 = vunpack.c.l.b16 %v2334
        %v2463 = vunpack.c.l.b16 %v2335
        %v2464 = vunpack.c.l.b16 %v2336
        %v2465 = vpack.c.b16 %v2450, %v2449
        %v2466 = vpack.c.b16 %v2452, %v2451
        %v2467 = vpack.c.b16 %v2454, %v2453
        %v2468 = vpack.c.b16 %v2456, %v2455
        %v2469 = vpack.c.b16 %v2458, %v2457
        %v2470 = vpack.c.b16 %v2460, %v2459
        %v2471 = vpack.c.b16 %v2462, %v2461
        %v2472 = vpack.c.b16 %v2464, %v2463
        %2481 = vmatprep.subr.bf16.mxu0 0
        %2482 = vmatpush1.bf16.msra.mxu0 %v2465
        %2483 = vmatprep.subr.bf16.mxu0 0
        %2484 = vmatpush1.bf16.msra.mxu0 %v2466
        %2485 = vmatprep.subr.bf16.mxu0 0
        %2486 = vmatpush1.bf16.msra.mxu0 %v2467
        %2487 = vmatprep.subr.bf16.mxu0 0
        %2488 = vmatpush1.bf16.msra.mxu0 %v2468
        %2489 = vmatprep.subr.bf16.mxu0 0
        %2490 = vmatpush1.bf16.msra.mxu0 %v2469
        %2491 = vmatprep.subr.bf16.mxu0 0
        %2492 = vmatpush1.bf16.msra.mxu0 %v2470
        %2493 = vmatprep.subr.bf16.mxu0 0
        %2494 = vmatpush1.bf16.msra.mxu0 %v2471
        %2495 = vmatprep.subr.bf16.mxu0 0
        %2496 = vmatpush1.bf16.msra.mxu0 %v2472
        %2497 = vmatprep.subr.bf16.mxu0 0
        %2498 = vmatpush1.bf16.msra.mxu0 0
        %2499 = vmatprep.subr.bf16.mxu0 0
        %2500 = vmatpush1.bf16.msra.mxu0 0
        %2501 = vmatprep.subr.bf16.mxu0 0
        %2502 = vmatpush1.bf16.msra.mxu0 0
        %2503 = vmatprep.subr.bf16.mxu0 0
        %2504 = vmatpush1.bf16.msra.mxu0 0
        %2505 = vmatprep.subr.bf16.mxu0 0
        %2506 = vmatpush1.bf16.msra.mxu0 0
        %2507 = vmatprep.subr.bf16.mxu0 0
        %2508 = vmatpush1.bf16.msra.mxu0 0
        %2509 = vmatprep.subr.bf16.mxu0 0
        %2510 = vmatpush1.bf16.msra.mxu0 0
        %2511 = vmatprep.subr.bf16.mxu0 0
        %2512 = vmatpush1.bf16.msra.mxu0 0
        %2513 = vmatprep.mubr.bf16.mxu0 0
        %2514 = vmatmul.mubr.bf16.gmra.mrb[0].mxu0 %v2401
        %v2515 = vpop.f32.mrb[0].mxu0
        %v2516 = vadd.f32 0.0, %v2515
        %v2517 = vpop.f32.mrb[0].mxu0
        %v2518 = vpop.f32.mrb[0].mxu0
        %v2519 = vadd.f32 0.0, %v2518
        %v2520 = vpop.f32.mrb[0].mxu0
        %2521 = vmatprep.mubr.bf16.mxu0 0
        %2522 = vmatmul.mubr.bf16.gmra.mrb[0].mxu0 %v2402
        %v2523 = vpop.f32.mrb[0].mxu0
        %v2524 = vadd.f32 0.0, %v2523
        %v2525 = vpop.f32.mrb[0].mxu0
        %v2526 = vpop.f32.mrb[0].mxu0
        %v2527 = vadd.f32 0.0, %v2526
        %v2528 = vpop.f32.mrb[0].mxu0
        %2529 = vmatprep.mubr.bf16.mxu0 0
        %2530 = vmatmul.mubr.bf16.gmra.mrb[0].mxu0 %v2403
        %v2531 = vpop.f32.mrb[0].mxu0
        %v2532 = vadd.f32 0.0, %v2531
        %v2533 = vpop.f32.mrb[0].mxu0
        %v2534 = vpop.f32.mrb[0].mxu0
        %v2535 = vadd.f32 0.0, %v2534
        %v2536 = vpop.f32.mrb[0].mxu0
        %2537 = vmatprep.mubr.bf16.mxu0 0
        %2538 = vmatmul.mubr.bf16.gmra.mrb[0].mxu0 %v2404
        %v2539 = vpop.f32.mrb[0].mxu0
        %v2540 = vadd.f32 0.0, %v2539
        %v2541 = vpop.f32.mrb[0].mxu0
        %v2542 = vpop.f32.mrb[0].mxu0
        %v2543 = vadd.f32 0.0, %v2542
        %v2544 = vpop.f32.mrb[0].mxu0
        %2545 = vmatprep.mubr.bf16.mxu0 0
        %2546 = vmatmul.mubr.bf16.gmra.mrb[0].mxu0 %v2405
        %v2547 = vpop.f32.mrb[0].mxu0
        %v2548 = vadd.f32 0.0, %v2547
        %v2549 = vpop.f32.mrb[0].mxu0
        %v2550 = vpop.f32.mrb[0].mxu0
        %v2551 = vadd.f32 0.0, %v2550
        %v2552 = vpop.f32.mrb[0].mxu0
        %2553 = vmatprep.mubr.bf16.mxu0 0
        %2554 = vmatmul.mubr.bf16.gmra.mrb[0].mxu0 %v2406
        %v2555 = vpop.f32.mrb[0].mxu0
        %v2556 = vadd.f32 0.0, %v2555
        %v2557 = vpop.f32.mrb[0].mxu0
        %v2558 = vpop.f32.mrb[0].mxu0
        %v2559 = vadd.f32 0.0, %v2558
        %v2560 = vpop.f32.mrb[0].mxu0
        %2561 = vmatprep.mubr.bf16.mxu0 0
        %2562 = vmatmul.mubr.bf16.gmra.mrb[0].mxu0 %v2407
        %v2563 = vpop.f32.mrb[0].mxu0
        %v2564 = vadd.f32 0.0, %v2563
        %v2565 = vpop.f32.mrb[0].mxu0
        %v2566 = vpop.f32.mrb[0].mxu0
        %v2567 = vadd.f32 0.0, %v2566
        %v2568 = vpop.f32.mrb[0].mxu0
        %2569 = vmatprep.mubr.bf16.mxu0 0
        %2570 = vmatmul.mubr.bf16.gmra.mrb[0].mxu0 %v2408
        %v2571 = vpop.f32.mrb[0].mxu0
        %v2572 = vadd.f32 0.0, %v2571
        %v2573 = vpop.f32.mrb[0].mxu0
        %v2574 = vpop.f32.mrb[0].mxu0
        %v2575 = vadd.f32 0.0, %v2574
        %v2576 = vpop.f32.mrb[0].mxu0
        %2577 = vmatprep.mubr.bf16.mxu0 0
        %2578 = vmatmul.mubr.bf16.gmra.mrb[0].mxu0 %v2409
        %v2579 = vpop.f32.mrb[0].mxu0
        %v2580 = vadd.f32 0.0, %v2579
        %v2581 = vpop.f32.mrb[0].mxu0
        %v2582 = vpop.f32.mrb[0].mxu0
        %v2583 = vadd.f32 0.0, %v2582
        %v2584 = vpop.f32.mrb[0].mxu0
        %2585 = vmatprep.mubr.bf16.mxu0 0
        %2586 = vmatmul.mubr.bf16.gmra.mrb[0].mxu0 %v2410
        %v2587 = vpop.f32.mrb[0].mxu0
        %v2588 = vadd.f32 0.0, %v2587
        %v2589 = vpop.f32.mrb[0].mxu0
        %v2590 = vpop.f32.mrb[0].mxu0
        %v2591 = vadd.f32 0.0, %v2590
        %v2592 = vpop.f32.mrb[0].mxu0
        %2593 = vmatprep.mubr.bf16.mxu0 0
        %2594 = vmatmul.mubr.bf16.gmra.mrb[0].mxu0 %v2411
        %v2595 = vpop.f32.mrb[0].mxu0
        %v2596 = vadd.f32 0.0, %v2595
        %v2597 = vpop.f32.mrb[0].mxu0
        %v2598 = vpop.f32.mrb[0].mxu0
        %v2599 = vadd.f32 0.0, %v2598
        %v2600 = vpop.f32.mrb[0].mxu0
        %2601 = vmatprep.mubr.bf16.mxu0 0
        %2602 = vmatmul.mubr.bf16.gmra.mrb[0].mxu0 %v2412
        %v2603 = vpop.f32.mrb[0].mxu0
        %v2604 = vadd.f32 0.0, %v2603
        %v2605 = vpop.f32.mrb[0].mxu0
        %v2606 = vpop.f32.mrb[0].mxu0
        %v2607 = vadd.f32 0.0, %v2606
        %v2608 = vpop.f32.mrb[0].mxu0
        %2609 = vmatprep.mubr.bf16.mxu0 0
        %2610 = vmatmul.mubr.bf16.gmra.mrb[0].mxu0 %v2413
        %v2611 = vpop.f32.mrb[0].mxu0
        %v2612 = vadd.f32 0.0, %v2611
        %v2613 = vpop.f32.mrb[0].mxu0
        %v2614 = vpop.f32.mrb[0].mxu0
        %v2615 = vadd.f32 0.0, %v2614
        %v2616 = vpop.f32.mrb[0].mxu0
        %2617 = vmatprep.mubr.bf16.mxu0 0
        %2618 = vmatmul.mubr.bf16.gmra.mrb[0].mxu0 %v2414
        %v2619 = vpop.f32.mrb[0].mxu0
        %v2620 = vadd.f32 0.0, %v2619
        %v2621 = vpop.f32.mrb[0].mxu0
        %v2622 = vpop.f32.mrb[0].mxu0
        %v2623 = vadd.f32 0.0, %v2622
        %v2624 = vpop.f32.mrb[0].mxu0
        %2625 = vmatprep.mubr.bf16.mxu0 0
        %2626 = vmatmul.mubr.bf16.gmra.mrb[0].mxu0 %v2415
        %v2627 = vpop.f32.mrb[0].mxu0
        %v2628 = vadd.f32 0.0, %v2627
        %v2629 = vpop.f32.mrb[0].mxu0
        %v2630 = vpop.f32.mrb[0].mxu0
        %v2631 = vadd.f32 0.0, %v2630
        %v2632 = vpop.f32.mrb[0].mxu0
        %2633 = vmatprep.mubr.bf16.mxu0 0
        %2634 = vmatmul.mubr.bf16.gmra.mrb[0].mxu0 %v2416
        %v2635 = vpop.f32.mrb[0].mxu0
        %v2636 = vadd.f32 0.0, %v2635
        %v2637 = vpop.f32.mrb[0].mxu0
        %v2638 = vpop.f32.mrb[0].mxu0
        %v2639 = vadd.f32 0.0, %v2638
        %v2640 = vpop.f32.mrb[0].mxu0
        %2641 = vdwg.mxu0
        %v2642 = vadd.f32 %v2224, %v2516
        %v2643 = vadd.f32 %v2225, %v2519
        %v2644 = vadd.f32 %v2226, %v2524
        %v2645 = vadd.f32 %v2227, %v2527
        %v2646 = vadd.f32 %v2228, %v2532
        %v2647 = vadd.f32 %v2229, %v2535
        %v2648 = vadd.f32 %v2230, %v2540
        %v2649 = vadd.f32 %v2231, %v2543
        %v2650 = vadd.f32 %v2232, %v2548
        %v2651 = vadd.f32 %v2233, %v2551
        %v2652 = vadd.f32 %v2234, %v2556
        %v2653 = vadd.f32 %v2235, %v2559
        %v2654 = vadd.f32 %v2236, %v2564
        %v2655 = vadd.f32 %v2237, %v2567
        %v2656 = vadd.f32 %v2238, %v2572
        %v2657 = vadd.f32 %v2239, %v2575
        %v2658 = vadd.f32 %v2240, %v2580
        %v2659 = vadd.f32 %v2241, %v2583
        %v2660 = vadd.f32 %v2242, %v2588
        %v2661 = vadd.f32 %v2243, %v2591
        %v2662 = vadd.f32 %v2244, %v2596
        %v2663 = vadd.f32 %v2245, %v2599
        %v2664 = vadd.f32 %v2246, %v2604
        %v2665 = vadd.f32 %v2247, %v2607
        %v2666 = vadd.f32 %v2248, %v2612
        %v2667 = vadd.f32 %v2249, %v2615
        %v2668 = vadd.f32 %v2250, %v2620
        %v2669 = vadd.f32 %v2251, %v2623
        %v2670 = vadd.f32 %v2252, %v2628
        %v2671 = vadd.f32 %v2253, %v2631
        %v2672 = vadd.f32 %v2254, %v2636
        %v2673 = vadd.f32 %v2255, %v2639
        %s2674 = scalar_lea.vmem %s226, 32
        %v2675 = vld [vmem:[%s2674] sm:$0xff]
        %v2676 = vld [vmem:[%s2674 + $0x10] sm:$0xff]
        %v2677 = vld [vmem:[%s2674 + $0x20] sm:$0xff]
        %v2678 = vld [vmem:[%s2674 + $0x30] sm:$0xff]
        %v2679 = vld [vmem:[%s2674 + $0x60] sm:$0xff]
        %v2680 = vld [vmem:[%s2674 + $0x70] sm:$0xff]
        %v2681 = vld [vmem:[%s2674 + $0x80] sm:$0xff]
        %v2682 = vld [vmem:[%s2674 + $0x90] sm:$0xff]
        %v2683 = vld [vmem:[%s2674 + $0xc0] sm:$0xff]
        %v2684 = vld [vmem:[%s2674 + $0xd0] sm:$0xff]
        %v2685 = vld [vmem:[%s2674 + $0xe0] sm:$0xff]
        %v2686 = vld [vmem:[%s2674 + $0xf0] sm:$0xff]
        %v2687 = vld [vmem:[%s2674 + $0x120] sm:$0xff]
        %v2688 = vld [vmem:[%s2674 + $0x130] sm:$0xff]
        %v2689 = vld [vmem:[%s2674 + $0x140] sm:$0xff]
        %v2690 = vld [vmem:[%s2674 + $0x150] sm:$0xff]
        %v2691 = vld [vmem:[%s2674 + $0x180] sm:$0xff]
        %v2692 = vld [vmem:[%s2674 + $0x190] sm:$0xff]
        %v2693 = vld [vmem:[%s2674 + $0x1a0] sm:$0xff]
        %v2694 = vld [vmem:[%s2674 + $0x1b0] sm:$0xff]
        %v2695 = vld [vmem:[%s2674 + $0x1e0] sm:$0xff]
        %v2696 = vld [vmem:[%s2674 + $0x1f0] sm:$0xff]
        %v2697 = vld [vmem:[%s2674 + $0x200] sm:$0xff]
        %v2698 = vld [vmem:[%s2674 + $0x210] sm:$0xff]
        %v2699 = vld [vmem:[%s2674 + $0x240] sm:$0xff]
        %v2700 = vld [vmem:[%s2674 + $0x250] sm:$0xff]
        %v2701 = vld [vmem:[%s2674 + $0x260] sm:$0xff]
        %v2702 = vld [vmem:[%s2674 + $0x270] sm:$0xff]
        %v2703 = vld [vmem:[%s2674 + $0x2a0] sm:$0xff]
        %v2704 = vld [vmem:[%s2674 + $0x2b0] sm:$0xff]
        %v2705 = vld [vmem:[%s2674 + $0x2c0] sm:$0xff]
        %v2706 = vld [vmem:[%s2674 + $0x2d0] sm:$0xff]
        %v2707 = vpack.c.bf16 %v2675, %v2675
        %v2708 = vpack.c.bf16 %v2676, %v2676
        %v2709 = vpack.c.bf16 %v2677, %v2677
        %v2710 = vpack.c.bf16 %v2678, %v2678
        %v2711 = vpack.c.bf16 %v2679, %v2679
        %v2712 = vpack.c.bf16 %v2680, %v2680
        %v2713 = vpack.c.bf16 %v2681, %v2681
        %v2714 = vpack.c.bf16 %v2682, %v2682
        %v2715 = vpack.c.bf16 %v2683, %v2683
        %v2716 = vpack.c.bf16 %v2684, %v2684
        %v2717 = vpack.c.bf16 %v2685, %v2685
        %v2718 = vpack.c.bf16 %v2686, %v2686
        %v2719 = vpack.c.bf16 %v2687, %v2687
        %v2720 = vpack.c.bf16 %v2688, %v2688
        %v2721 = vpack.c.bf16 %v2689, %v2689
        %v2722 = vpack.c.bf16 %v2690, %v2690
        %v2723 = vpack.c.bf16 %v2691, %v2691
        %v2724 = vpack.c.bf16 %v2692, %v2692
        %v2725 = vpack.c.bf16 %v2693, %v2693
        %v2726 = vpack.c.bf16 %v2694, %v2694
        %v2727 = vpack.c.bf16 %v2695, %v2695
        %v2728 = vpack.c.bf16 %v2696, %v2696
        %v2729 = vpack.c.bf16 %v2697, %v2697
        %v2730 = vpack.c.bf16 %v2698, %v2698
        %v2731 = vpack.c.bf16 %v2699, %v2699
        %v2732 = vpack.c.bf16 %v2700, %v2700
        %v2733 = vpack.c.bf16 %v2701, %v2701
        %v2734 = vpack.c.bf16 %v2702, %v2702
        %v2735 = vpack.c.bf16 %v2703, %v2703
        %v2736 = vpack.c.bf16 %v2704, %v2704
        %v2737 = vpack.c.bf16 %v2705, %v2705
        %v2738 = vpack.c.bf16 %v2706, %v2706
        %s2739 = scalar_lea.vmem %s1, 384
        %v2740 = vld [vmem:[%s2739] sm:$0xf]
        %v2741 = vld [vmem:[%s2739 + $0x4] sm:$0xf]
        %v2742 = vld [vmem:[%s2739 + $0x8] sm:$0xf]
        %v2743 = vld [vmem:[%s2739 + $0xc] sm:$0xf]
        %v2744 = vld [vmem:[%s2739 + $0x10] sm:$0xf]
        %v2745 = vld [vmem:[%s2739 + $0x14] sm:$0xf]
        %v2746 = vld [vmem:[%s2739 + $0x18] sm:$0xf]
        %v2747 = vld [vmem:[%s2739 + $0x1c] sm:$0xf]
        %v2748 = vld [vmem:[%s2739 + $0x20] sm:$0xf]
        %v2749 = vld [vmem:[%s2739 + $0x24] sm:$0xf]
        %v2750 = vld [vmem:[%s2739 + $0x28] sm:$0xf]
        %v2751 = vld [vmem:[%s2739 + $0x2c] sm:$0xf]
        %v2752 = vld [vmem:[%s2739 + $0x30] sm:$0xf]
        %v2753 = vld [vmem:[%s2739 + $0x34] sm:$0xf]
        %v2754 = vld [vmem:[%s2739 + $0x38] sm:$0xf]
        %v2755 = vld [vmem:[%s2739 + $0x3c] sm:$0xf]
        %v2788 = vunpack.c.l.b16 %v2707
        %v2789 = vunpack.c.l.b16 %v2708
        %v2790 = vunpack.c.l.b16 %v2709
        %v2791 = vunpack.c.l.b16 %v2710
        %v2792 = vunpack.c.l.b16 %v2711
        %v2793 = vunpack.c.l.b16 %v2712
        %v2794 = vunpack.c.l.b16 %v2713
        %v2795 = vunpack.c.l.b16 %v2714
        %v2796 = vunpack.c.l.b16 %v2715
        %v2797 = vunpack.c.l.b16 %v2716
        %v2798 = vunpack.c.l.b16 %v2717
        %v2799 = vunpack.c.l.b16 %v2718
        %v2800 = vunpack.c.l.b16 %v2719
        %v2801 = vunpack.c.l.b16 %v2720
        %v2802 = vunpack.c.l.b16 %v2721
        %v2803 = vunpack.c.l.b16 %v2722
        %v2804 = vunpack.c.l.b16 %v2723
        %v2805 = vunpack.c.l.b16 %v2724
        %v2806 = vunpack.c.l.b16 %v2725
        %v2807 = vunpack.c.l.b16 %v2726
        %v2808 = vunpack.c.l.b16 %v2727
        %v2809 = vunpack.c.l.b16 %v2728
        %v2810 = vunpack.c.l.b16 %v2729
        %v2811 = vunpack.c.l.b16 %v2730
        %v2812 = vunpack.c.l.b16 %v2731
        %v2813 = vunpack.c.l.b16 %v2732
        %v2814 = vunpack.c.l.b16 %v2733
        %v2815 = vunpack.c.l.b16 %v2734
        %v2816 = vunpack.c.l.b16 %v2735
        %v2817 = vunpack.c.l.b16 %v2736
        %v2818 = vunpack.c.l.b16 %v2737
        %v2819 = vunpack.c.l.b16 %v2738
        %v2820 = vpack.c.b16 %v2789, %v2788
        %v2821 = vpack.c.b16 %v2791, %v2790
        %v2822 = vpack.c.b16 %v2793, %v2792
        %v2823 = vpack.c.b16 %v2795, %v2794
        %v2824 = vpack.c.b16 %v2797, %v2796
        %v2825 = vpack.c.b16 %v2799, %v2798
        %v2826 = vpack.c.b16 %v2801, %v2800
        %v2827 = vpack.c.b16 %v2803, %v2802
        %v2828 = vpack.c.b16 %v2805, %v2804
        %v2829 = vpack.c.b16 %v2807, %v2806
        %v2830 = vpack.c.b16 %v2809, %v2808
        %v2831 = vpack.c.b16 %v2811, %v2810
        %v2832 = vpack.c.b16 %v2813, %v2812
        %v2833 = vpack.c.b16 %v2815, %v2814
        %v2834 = vpack.c.b16 %v2817, %v2816
        %v2835 = vpack.c.b16 %v2819, %v2818
        %v2868 = vunpack.c.l.b16 %v2740
        %v2869 = vunpack.c.l.b16 %v2741
        %v2870 = vunpack.c.l.b16 %v2742
        %v2871 = vunpack.c.l.b16 %v2743
        %v2872 = vunpack.c.l.b16 %v2744
        %v2873 = vunpack.c.l.b16 %v2745
        %v2874 = vunpack.c.l.b16 %v2746
        %v2875 = vunpack.c.l.b16 %v2747
        %v2876 = vunpack.c.l.b16 %v2748
        %v2877 = vunpack.c.l.b16 %v2749
        %v2878 = vunpack.c.l.b16 %v2750
        %v2879 = vunpack.c.l.b16 %v2751
        %v2880 = vunpack.c.l.b16 %v2752
        %v2881 = vunpack.c.l.b16 %v2753
        %v2882 = vunpack.c.l.b16 %v2754
        %v2883 = vunpack.c.l.b16 %v2755
        %v2884 = vpack.c.b16 %v2869, %v2868
        %v2885 = vpack.c.b16 %v2871, %v2870
        %v2886 = vpack.c.b16 %v2873, %v2872
        %v2887 = vpack.c.b16 %v2875, %v2874
        %v2888 = vpack.c.b16 %v2877, %v2876
        %v2889 = vpack.c.b16 %v2879, %v2878
        %v2890 = vpack.c.b16 %v2881, %v2880
        %v2891 = vpack.c.b16 %v2883, %v2882
        %2900 = vmatprep.subr.bf16.mxu0 0
        %2901 = vmatpush1.bf16.msra.mxu0 %v2884
        %2902 = vmatprep.subr.bf16.mxu0 0
        %2903 = vmatpush1.bf16.msra.mxu0 %v2885
        %2904 = vmatprep.subr.bf16.mxu0 0
        %2905 = vmatpush1.bf16.msra.mxu0 %v2886
        %2906 = vmatprep.subr.bf16.mxu0 0
        %2907 = vmatpush1.bf16.msra.mxu0 %v2887
        %2908 = vmatprep.subr.bf16.mxu0 0
        %2909 = vmatpush1.bf16.msra.mxu0 %v2888
        %2910 = vmatprep.subr.bf16.mxu0 0
        %2911 = vmatpush1.bf16.msra.mxu0 %v2889
        %2912 = vmatprep.subr.bf16.mxu0 0
        %2913 = vmatpush1.bf16.msra.mxu0 %v2890
        %2914 = vmatprep.subr.bf16.mxu0 0
        %2915 = vmatpush1.bf16.msra.mxu0 %v2891
        %2916 = vmatprep.subr.bf16.mxu0 0
        %2917 = vmatpush1.bf16.msra.mxu0 0
        %2918 = vmatprep.subr.bf16.mxu0 0
        %2919 = vmatpush1.bf16.msra.mxu0 0
        %2920 = vmatprep.subr.bf16.mxu0 0
        %2921 = vmatpush1.bf16.msra.mxu0 0
        %2922 = vmatprep.subr.bf16.mxu0 0
        %2923 = vmatpush1.bf16.msra.mxu0 0
        %2924 = vmatprep.subr.bf16.mxu0 0
        %2925 = vmatpush1.bf16.msra.mxu0 0
        %2926 = vmatprep.subr.bf16.mxu0 0
        %2927 = vmatpush1.bf16.msra.mxu0 0
        %2928 = vmatprep.subr.bf16.mxu0 0
        %2929 = vmatpush1.bf16.msra.mxu0 0
        %2930 = vmatprep.subr.bf16.mxu0 0
        %2931 = vmatpush1.bf16.msra.mxu0 0
        %2932 = vmatprep.mubr.bf16.mxu0 0
        %2933 = vmatmul.mubr.bf16.gmra.mrb[0].mxu0 %v2820
        %v2934 = vpop.f32.mrb[0].mxu0
        %v2935 = vadd.f32 0.0, %v2934
        %v2936 = vpop.f32.mrb[0].mxu0
        %v2937 = vpop.f32.mrb[0].mxu0
        %v2938 = vadd.f32 0.0, %v2937
        %v2939 = vpop.f32.mrb[0].mxu0
        %2940 = vmatprep.mubr.bf16.mxu0 0
        %2941 = vmatmul.mubr.bf16.gmra.mrb[0].mxu0 %v2821
        %v2942 = vpop.f32.mrb[0].mxu0
        %v2943 = vadd.f32 0.0, %v2942
        %v2944 = vpop.f32.mrb[0].mxu0
        %v2945 = vpop.f32.mrb[0].mxu0
        %v2946 = vadd.f32 0.0, %v2945
        %v2947 = vpop.f32.mrb[0].mxu0
        %2948 = vmatprep.mubr.bf16.mxu0 0
        %2949 = vmatmul.mubr.bf16.gmra.mrb[0].mxu0 %v2822
        %v2950 = vpop.f32.mrb[0].mxu0
        %v2951 = vadd.f32 0.0, %v2950
        %v2952 = vpop.f32.mrb[0].mxu0
        %v2953 = vpop.f32.mrb[0].mxu0
        %v2954 = vadd.f32 0.0, %v2953
        %v2955 = vpop.f32.mrb[0].mxu0
        %2956 = vmatprep.mubr.bf16.mxu0 0
        %2957 = vmatmul.mubr.bf16.gmra.mrb[0].mxu0 %v2823
        %v2958 = vpop.f32.mrb[0].mxu0
        %v2959 = vadd.f32 0.0, %v2958
        %v2960 = vpop.f32.mrb[0].mxu0
        %v2961 = vpop.f32.mrb[0].mxu0
        %v2962 = vadd.f32 0.0, %v2961
        %v2963 = vpop.f32.mrb[0].mxu0
        %2964 = vmatprep.mubr.bf16.mxu0 0
        %2965 = vmatmul.mubr.bf16.gmra.mrb[0].mxu0 %v2824
        %v2966 = vpop.f32.mrb[0].mxu0
        %v2967 = vadd.f32 0.0, %v2966
        %v2968 = vpop.f32.mrb[0].mxu0
        %v2969 = vpop.f32.mrb[0].mxu0
        %v2970 = vadd.f32 0.0, %v2969
        %v2971 = vpop.f32.mrb[0].mxu0
        %2972 = vmatprep.mubr.bf16.mxu0 0
        %2973 = vmatmul.mubr.bf16.gmra.mrb[0].mxu0 %v2825
        %v2974 = vpop.f32.mrb[0].mxu0
        %v2975 = vadd.f32 0.0, %v2974
        %v2976 = vpop.f32.mrb[0].mxu0
        %v2977 = vpop.f32.mrb[0].mxu0
        %v2978 = vadd.f32 0.0, %v2977
        %v2979 = vpop.f32.mrb[0].mxu0
        %2980 = vmatprep.mubr.bf16.mxu0 0
        %2981 = vmatmul.mubr.bf16.gmra.mrb[0].mxu0 %v2826
        %v2982 = vpop.f32.mrb[0].mxu0
        %v2983 = vadd.f32 0.0, %v2982
        %v2984 = vpop.f32.mrb[0].mxu0
        %v2985 = vpop.f32.mrb[0].mxu0
        %v2986 = vadd.f32 0.0, %v2985
        %v2987 = vpop.f32.mrb[0].mxu0
        %2988 = vmatprep.mubr.bf16.mxu0 0
        %2989 = vmatmul.mubr.bf16.gmra.mrb[0].mxu0 %v2827
        %v2990 = vpop.f32.mrb[0].mxu0
        %v2991 = vadd.f32 0.0, %v2990
        %v2992 = vpop.f32.mrb[0].mxu0
        %v2993 = vpop.f32.mrb[0].mxu0
        %v2994 = vadd.f32 0.0, %v2993
        %v2995 = vpop.f32.mrb[0].mxu0
        %2996 = vmatprep.mubr.bf16.mxu0 0
        %2997 = vmatmul.mubr.bf16.gmra.mrb[0].mxu0 %v2828
        %v2998 = vpop.f32.mrb[0].mxu0
        %v2999 = vadd.f32 0.0, %v2998
        %v3000 = vpop.f32.mrb[0].mxu0
        %v3001 = vpop.f32.mrb[0].mxu0
        %v3002 = vadd.f32 0.0, %v3001
        %v3003 = vpop.f32.mrb[0].mxu0
        %3004 = vmatprep.mubr.bf16.mxu0 0
        %3005 = vmatmul.mubr.bf16.gmra.mrb[0].mxu0 %v2829
        %v3006 = vpop.f32.mrb[0].mxu0
        %v3007 = vadd.f32 0.0, %v3006
        %v3008 = vpop.f32.mrb[0].mxu0
        %v3009 = vpop.f32.mrb[0].mxu0
        %v3010 = vadd.f32 0.0, %v3009
        %v3011 = vpop.f32.mrb[0].mxu0
        %3012 = vmatprep.mubr.bf16.mxu0 0
        %3013 = vmatmul.mubr.bf16.gmra.mrb[0].mxu0 %v2830
        %v3014 = vpop.f32.mrb[0].mxu0
        %v3015 = vadd.f32 0.0, %v3014
        %v3016 = vpop.f32.mrb[0].mxu0
        %v3017 = vpop.f32.mrb[0].mxu0
        %v3018 = vadd.f32 0.0, %v3017
        %v3019 = vpop.f32.mrb[0].mxu0
        %3020 = vmatprep.mubr.bf16.mxu0 0
        %3021 = vmatmul.mubr.bf16.gmra.mrb[0].mxu0 %v2831
        %v3022 = vpop.f32.mrb[0].mxu0
        %v3023 = vadd.f32 0.0, %v3022
        %v3024 = vpop.f32.mrb[0].mxu0
        %v3025 = vpop.f32.mrb[0].mxu0
        %v3026 = vadd.f32 0.0, %v3025
        %v3027 = vpop.f32.mrb[0].mxu0
        %3028 = vmatprep.mubr.bf16.mxu0 0
        %3029 = vmatmul.mubr.bf16.gmra.mrb[0].mxu0 %v2832
        %v3030 = vpop.f32.mrb[0].mxu0
        %v3031 = vadd.f32 0.0, %v3030
        %v3032 = vpop.f32.mrb[0].mxu0
        %v3033 = vpop.f32.mrb[0].mxu0
        %v3034 = vadd.f32 0.0, %v3033
        %v3035 = vpop.f32.mrb[0].mxu0
        %3036 = vmatprep.mubr.bf16.mxu0 0
        %3037 = vmatmul.mubr.bf16.gmra.mrb[0].mxu0 %v2833
        %v3038 = vpop.f32.mrb[0].mxu0
        %v3039 = vadd.f32 0.0, %v3038
        %v3040 = vpop.f32.mrb[0].mxu0
        %v3041 = vpop.f32.mrb[0].mxu0
        %v3042 = vadd.f32 0.0, %v3041
        %v3043 = vpop.f32.mrb[0].mxu0
        %3044 = vmatprep.mubr.bf16.mxu0 0
        %3045 = vmatmul.mubr.bf16.gmra.mrb[0].mxu0 %v2834
        %v3046 = vpop.f32.mrb[0].mxu0
        %v3047 = vadd.f32 0.0, %v3046
        %v3048 = vpop.f32.mrb[0].mxu0
        %v3049 = vpop.f32.mrb[0].mxu0
        %v3050 = vadd.f32 0.0, %v3049
        %v3051 = vpop.f32.mrb[0].mxu0
        %3052 = vmatprep.mubr.bf16.mxu0 0
        %3053 = vmatmul.mubr.bf16.gmra.mrb[0].mxu0 %v2835
        %v3054 = vpop.f32.mrb[0].mxu0
        %v3055 = vadd.f32 0.0, %v3054
        %v3056 = vpop.f32.mrb[0].mxu0
        %v3057 = vpop.f32.mrb[0].mxu0
        %v3058 = vadd.f32 0.0, %v3057
        %v3059 = vpop.f32.mrb[0].mxu0
        %3060 = vdwg.mxu0
        %v3061 = vadd.f32 %v2642, %v2935
        %v3062 = vadd.f32 %v2643, %v2938
        %v3063 = vadd.f32 %v2644, %v2943
        %v3064 = vadd.f32 %v2645, %v2946
        %v3065 = vadd.f32 %v2646, %v2951
        %v3066 = vadd.f32 %v2647, %v2954
        %v3067 = vadd.f32 %v2648, %v2959
        %v3068 = vadd.f32 %v2649, %v2962
        %v3069 = vadd.f32 %v2650, %v2967
        %v3070 = vadd.f32 %v2651, %v2970
        %v3071 = vadd.f32 %v2652, %v2975
        %v3072 = vadd.f32 %v2653, %v2978
        %v3073 = vadd.f32 %v2654, %v2983
        %v3074 = vadd.f32 %v2655, %v2986
        %v3075 = vadd.f32 %v2656, %v2991
        %v3076 = vadd.f32 %v2657, %v2994
        %v3077 = vadd.f32 %v2658, %v2999
        %v3078 = vadd.f32 %v2659, %v3002
        %v3079 = vadd.f32 %v2660, %v3007
        %v3080 = vadd.f32 %v2661, %v3010
        %v3081 = vadd.f32 %v2662, %v3015
        %v3082 = vadd.f32 %v2663, %v3018
        %v3083 = vadd.f32 %v2664, %v3023
        %v3084 = vadd.f32 %v2665, %v3026
        %v3085 = vadd.f32 %v2666, %v3031
        %v3086 = vadd.f32 %v2667, %v3034
        %v3087 = vadd.f32 %v2668, %v3039
        %v3088 = vadd.f32 %v2669, %v3042
        %v3089 = vadd.f32 %v2670, %v3047
        %v3090 = vadd.f32 %v2671, %v3050
        %v3091 = vadd.f32 %v2672, %v3055
        %v3092 = vadd.f32 %v2673, %v3058
        %v3093 = vld [vmem:[%s2674 + $0x1] sm:$0xff]
        %v3094 = vld [vmem:[%s2674 + $0x11] sm:$0xff]
        %v3095 = vld [vmem:[%s2674 + $0x21] sm:$0xff]
        %v3096 = vld [vmem:[%s2674 + $0x31] sm:$0xff]
        %v3097 = vld [vmem:[%s2674 + $0x61] sm:$0xff]
        %v3098 = vld [vmem:[%s2674 + $0x71] sm:$0xff]
        %v3099 = vld [vmem:[%s2674 + $0x81] sm:$0xff]
        %v3100 = vld [vmem:[%s2674 + $0x91] sm:$0xff]
        %v3101 = vld [vmem:[%s2674 + $0xc1] sm:$0xff]
        %v3102 = vld [vmem:[%s2674 + $0xd1] sm:$0xff]
        %v3103 = vld [vmem:[%s2674 + $0xe1] sm:$0xff]
        %v3104 = vld [vmem:[%s2674 + $0xf1] sm:$0xff]
        %v3105 = vld [vmem:[%s2674 + $0x121] sm:$0xff]
        %v3106 = vld [vmem:[%s2674 + $0x131] sm:$0xff]
        %v3107 = vld [vmem:[%s2674 + $0x141] sm:$0xff]
        %v3108 = vld [vmem:[%s2674 + $0x151] sm:$0xff]
        %v3109 = vld [vmem:[%s2674 + $0x181] sm:$0xff]
        %v3110 = vld [vmem:[%s2674 + $0x191] sm:$0xff]
        %v3111 = vld [vmem:[%s2674 + $0x1a1] sm:$0xff]
        %v3112 = vld [vmem:[%s2674 + $0x1b1] sm:$0xff]
        %v3113 = vld [vmem:[%s2674 + $0x1e1] sm:$0xff]
        %v3114 = vld [vmem:[%s2674 + $0x1f1] sm:$0xff]
        %v3115 = vld [vmem:[%s2674 + $0x201] sm:$0xff]
        %v3116 = vld [vmem:[%s2674 + $0x211] sm:$0xff]
        %v3117 = vld [vmem:[%s2674 + $0x241] sm:$0xff]
        %v3118 = vld [vmem:[%s2674 + $0x251] sm:$0xff]
        %v3119 = vld [vmem:[%s2674 + $0x261] sm:$0xff]
        %v3120 = vld [vmem:[%s2674 + $0x271] sm:$0xff]
        %v3121 = vld [vmem:[%s2674 + $0x2a1] sm:$0xff]
        %v3122 = vld [vmem:[%s2674 + $0x2b1] sm:$0xff]
        %v3123 = vld [vmem:[%s2674 + $0x2c1] sm:$0xff]
        %v3124 = vld [vmem:[%s2674 + $0x2d1] sm:$0xff]
        %v3125 = vpack.c.bf16 %v3093, %v3093
        %v3126 = vpack.c.bf16 %v3094, %v3094
        %v3127 = vpack.c.bf16 %v3095, %v3095
        %v3128 = vpack.c.bf16 %v3096, %v3096
        %v3129 = vpack.c.bf16 %v3097, %v3097
        %v3130 = vpack.c.bf16 %v3098, %v3098
        %v3131 = vpack.c.bf16 %v3099, %v3099
        %v3132 = vpack.c.bf16 %v3100, %v3100
        %v3133 = vpack.c.bf16 %v3101, %v3101
        %v3134 = vpack.c.bf16 %v3102, %v3102
        %v3135 = vpack.c.bf16 %v3103, %v3103
        %v3136 = vpack.c.bf16 %v3104, %v3104
        %v3137 = vpack.c.bf16 %v3105, %v3105
        %v3138 = vpack.c.bf16 %v3106, %v3106
        %v3139 = vpack.c.bf16 %v3107, %v3107
        %v3140 = vpack.c.bf16 %v3108, %v3108
        %v3141 = vpack.c.bf16 %v3109, %v3109
        %v3142 = vpack.c.bf16 %v3110, %v3110
        %v3143 = vpack.c.bf16 %v3111, %v3111
        %v3144 = vpack.c.bf16 %v3112, %v3112
        %v3145 = vpack.c.bf16 %v3113, %v3113
        %v3146 = vpack.c.bf16 %v3114, %v3114
        %v3147 = vpack.c.bf16 %v3115, %v3115
        %v3148 = vpack.c.bf16 %v3116, %v3116
        %v3149 = vpack.c.bf16 %v3117, %v3117
        %v3150 = vpack.c.bf16 %v3118, %v3118
        %v3151 = vpack.c.bf16 %v3119, %v3119
        %v3152 = vpack.c.bf16 %v3120, %v3120
        %v3153 = vpack.c.bf16 %v3121, %v3121
        %v3154 = vpack.c.bf16 %v3122, %v3122
        %v3155 = vpack.c.bf16 %v3123, %v3123
        %v3156 = vpack.c.bf16 %v3124, %v3124
        %s3157 = scalar_lea.vmem %s1, 448
        %v3158 = vld [vmem:[%s3157] sm:$0xf]
        %v3159 = vld [vmem:[%s3157 + $0x4] sm:$0xf]
        %v3160 = vld [vmem:[%s3157 + $0x8] sm:$0xf]
        %v3161 = vld [vmem:[%s3157 + $0xc] sm:$0xf]
        %v3162 = vld [vmem:[%s3157 + $0x10] sm:$0xf]
        %v3163 = vld [vmem:[%s3157 + $0x14] sm:$0xf]
        %v3164 = vld [vmem:[%s3157 + $0x18] sm:$0xf]
        %v3165 = vld [vmem:[%s3157 + $0x1c] sm:$0xf]
        %v3166 = vld [vmem:[%s3157 + $0x20] sm:$0xf]
        %v3167 = vld [vmem:[%s3157 + $0x24] sm:$0xf]
        %v3168 = vld [vmem:[%s3157 + $0x28] sm:$0xf]
        %v3169 = vld [vmem:[%s3157 + $0x2c] sm:$0xf]
        %v3170 = vld [vmem:[%s3157 + $0x30] sm:$0xf]
        %v3171 = vld [vmem:[%s3157 + $0x34] sm:$0xf]
        %v3172 = vld [vmem:[%s3157 + $0x38] sm:$0xf]
        %v3173 = vld [vmem:[%s3157 + $0x3c] sm:$0xf]
        %v3206 = vunpack.c.l.b16 %v3125
        %v3207 = vunpack.c.l.b16 %v3126
        %v3208 = vunpack.c.l.b16 %v3127
        %v3209 = vunpack.c.l.b16 %v3128
        %v3210 = vunpack.c.l.b16 %v3129
        %v3211 = vunpack.c.l.b16 %v3130
        %v3212 = vunpack.c.l.b16 %v3131
        %v3213 = vunpack.c.l.b16 %v3132
        %v3214 = vunpack.c.l.b16 %v3133
        %v3215 = vunpack.c.l.b16 %v3134
        %v3216 = vunpack.c.l.b16 %v3135
        %v3217 = vunpack.c.l.b16 %v3136
        %v3218 = vunpack.c.l.b16 %v3137
        %v3219 = vunpack.c.l.b16 %v3138
        %v3220 = vunpack.c.l.b16 %v3139
        %v3221 = vunpack.c.l.b16 %v3140
        %v3222 = vunpack.c.l.b16 %v3141
        %v3223 = vunpack.c.l.b16 %v3142
        %v3224 = vunpack.c.l.b16 %v3143
        %v3225 = vunpack.c.l.b16 %v3144
        %v3226 = vunpack.c.l.b16 %v3145
        %v3227 = vunpack.c.l.b16 %v3146
        %v3228 = vunpack.c.l.b16 %v3147
        %v3229 = vunpack.c.l.b16 %v3148
        %v3230 = vunpack.c.l.b16 %v3149
        %v3231 = vunpack.c.l.b16 %v3150
        %v3232 = vunpack.c.l.b16 %v3151
        %v3233 = vunpack.c.l.b16 %v3152
        %v3234 = vunpack.c.l.b16 %v3153
        %v3235 = vunpack.c.l.b16 %v3154
        %v3236 = vunpack.c.l.b16 %v3155
        %v3237 = vunpack.c.l.b16 %v3156
        %v3238 = vpack.c.b16 %v3207, %v3206
        %v3239 = vpack.c.b16 %v3209, %v3208
        %v3240 = vpack.c.b16 %v3211, %v3210
        %v3241 = vpack.c.b16 %v3213, %v3212
        %v3242 = vpack.c.b16 %v3215, %v3214
        %v3243 = vpack.c.b16 %v3217, %v3216
        %v3244 = vpack.c.b16 %v3219, %v3218
        %v3245 = vpack.c.b16 %v3221, %v3220
        %v3246 = vpack.c.b16 %v3223, %v3222
        %v3247 = vpack.c.b16 %v3225, %v3224
        %v3248 = vpack.c.b16 %v3227, %v3226
        %v3249 = vpack.c.b16 %v3229, %v3228
        %v3250 = vpack.c.b16 %v3231, %v3230
        %v3251 = vpack.c.b16 %v3233, %v3232
        %v3252 = vpack.c.b16 %v3235, %v3234
        %v3253 = vpack.c.b16 %v3237, %v3236
        %v3286 = vunpack.c.l.b16 %v3158
        %v3287 = vunpack.c.l.b16 %v3159
        %v3288 = vunpack.c.l.b16 %v3160
        %v3289 = vunpack.c.l.b16 %v3161
        %v3290 = vunpack.c.l.b16 %v3162
        %v3291 = vunpack.c.l.b16 %v3163
        %v3292 = vunpack.c.l.b16 %v3164
        %v3293 = vunpack.c.l.b16 %v3165
        %v3294 = vunpack.c.l.b16 %v3166
        %v3295 = vunpack.c.l.b16 %v3167
        %v3296 = vunpack.c.l.b16 %v3168
        %v3297 = vunpack.c.l.b16 %v3169
        %v3298 = vunpack.c.l.b16 %v3170
        %v3299 = vunpack.c.l.b16 %v3171
        %v3300 = vunpack.c.l.b16 %v3172
        %v3301 = vunpack.c.l.b16 %v3173
        %v3302 = vpack.c.b16 %v3287, %v3286
        %v3303 = vpack.c.b16 %v3289, %v3288
        %v3304 = vpack.c.b16 %v3291, %v3290
        %v3305 = vpack.c.b16 %v3293, %v3292
        %v3306 = vpack.c.b16 %v3295, %v3294
        %v3307 = vpack.c.b16 %v3297, %v3296
        %v3308 = vpack.c.b16 %v3299, %v3298
        %v3309 = vpack.c.b16 %v3301, %v3300
        %3318 = vmatprep.subr.bf16.mxu0 0
        %3319 = vmatpush1.bf16.msra.mxu0 %v3302
        %3320 = vmatprep.subr.bf16.mxu0 0
        %3321 = vmatpush1.bf16.msra.mxu0 %v3303
        %3322 = vmatprep.subr.bf16.mxu0 0
        %3323 = vmatpush1.bf16.msra.mxu0 %v3304
        %3324 = vmatprep.subr.bf16.mxu0 0
        %3325 = vmatpush1.bf16.msra.mxu0 %v3305
        %3326 = vmatprep.subr.bf16.mxu0 0
        %3327 = vmatpush1.bf16.msra.mxu0 %v3306
        %3328 = vmatprep.subr.bf16.mxu0 0
        %3329 = vmatpush1.bf16.msra.mxu0 %v3307
        %3330 = vmatprep.subr.bf16.mxu0 0
        %3331 = vmatpush1.bf16.msra.mxu0 %v3308
        %3332 = vmatprep.subr.bf16.mxu0 0
        %3333 = vmatpush1.bf16.msra.mxu0 %v3309
        %3334 = vmatprep.subr.bf16.mxu0 0
        %3335 = vmatpush1.bf16.msra.mxu0 0
        %3336 = vmatprep.subr.bf16.mxu0 0
        %3337 = vmatpush1.bf16.msra.mxu0 0
        %3338 = vmatprep.subr.bf16.mxu0 0
        %3339 = vmatpush1.bf16.msra.mxu0 0
        %3340 = vmatprep.subr.bf16.mxu0 0
        %3341 = vmatpush1.bf16.msra.mxu0 0
        %3342 = vmatprep.subr.bf16.mxu0 0
        %3343 = vmatpush1.bf16.msra.mxu0 0
        %3344 = vmatprep.subr.bf16.mxu0 0
        %3345 = vmatpush1.bf16.msra.mxu0 0
        %3346 = vmatprep.subr.bf16.mxu0 0
        %3347 = vmatpush1.bf16.msra.mxu0 0
        %3348 = vmatprep.subr.bf16.mxu0 0
        %3349 = vmatpush1.bf16.msra.mxu0 0
        %3350 = vmatprep.mubr.bf16.mxu0 0
        %3351 = vmatmul.mubr.bf16.gmra.mrb[0].mxu0 %v3238
        %v3352 = vpop.f32.mrb[0].mxu0
        %v3353 = vadd.f32 0.0, %v3352
        %v3354 = vpop.f32.mrb[0].mxu0
        %v3355 = vpop.f32.mrb[0].mxu0
        %v3356 = vadd.f32 0.0, %v3355
        %v3357 = vpop.f32.mrb[0].mxu0
        %3358 = vmatprep.mubr.bf16.mxu0 0
        %3359 = vmatmul.mubr.bf16.gmra.mrb[0].mxu0 %v3239
        %v3360 = vpop.f32.mrb[0].mxu0
        %v3361 = vadd.f32 0.0, %v3360
        %v3362 = vpop.f32.mrb[0].mxu0
        %v3363 = vpop.f32.mrb[0].mxu0
        %v3364 = vadd.f32 0.0, %v3363
        %v3365 = vpop.f32.mrb[0].mxu0
        %3366 = vmatprep.mubr.bf16.mxu0 0
        %3367 = vmatmul.mubr.bf16.gmra.mrb[0].mxu0 %v3240
        %v3368 = vpop.f32.mrb[0].mxu0
        %v3369 = vadd.f32 0.0, %v3368
        %v3370 = vpop.f32.mrb[0].mxu0
        %v3371 = vpop.f32.mrb[0].mxu0
        %v3372 = vadd.f32 0.0, %v3371
        %v3373 = vpop.f32.mrb[0].mxu0
        %3374 = vmatprep.mubr.bf16.mxu0 0
        %3375 = vmatmul.mubr.bf16.gmra.mrb[0].mxu0 %v3241
        %v3376 = vpop.f32.mrb[0].mxu0
        %v3377 = vadd.f32 0.0, %v3376
        %v3378 = vpop.f32.mrb[0].mxu0
        %v3379 = vpop.f32.mrb[0].mxu0
        %v3380 = vadd.f32 0.0, %v3379
        %v3381 = vpop.f32.mrb[0].mxu0
        %3382 = vmatprep.mubr.bf16.mxu0 0
        %3383 = vmatmul.mubr.bf16.gmra.mrb[0].mxu0 %v3242
        %v3384 = vpop.f32.mrb[0].mxu0
        %v3385 = vadd.f32 0.0, %v3384
        %v3386 = vpop.f32.mrb[0].mxu0
        %v3387 = vpop.f32.mrb[0].mxu0
        %v3388 = vadd.f32 0.0, %v3387
        %v3389 = vpop.f32.mrb[0].mxu0
        %3390 = vmatprep.mubr.bf16.mxu0 0
        %3391 = vmatmul.mubr.bf16.gmra.mrb[0].mxu0 %v3243
        %v3392 = vpop.f32.mrb[0].mxu0
        %v3393 = vadd.f32 0.0, %v3392
        %v3394 = vpop.f32.mrb[0].mxu0
        %v3395 = vpop.f32.mrb[0].mxu0
        %v3396 = vadd.f32 0.0, %v3395
        %v3397 = vpop.f32.mrb[0].mxu0
        %3398 = vmatprep.mubr.bf16.mxu0 0
        %3399 = vmatmul.mubr.bf16.gmra.mrb[0].mxu0 %v3244
        %v3400 = vpop.f32.mrb[0].mxu0
        %v3401 = vadd.f32 0.0, %v3400
        %v3402 = vpop.f32.mrb[0].mxu0
        %v3403 = vpop.f32.mrb[0].mxu0
        %v3404 = vadd.f32 0.0, %v3403
        %v3405 = vpop.f32.mrb[0].mxu0
        %3406 = vmatprep.mubr.bf16.mxu0 0
        %3407 = vmatmul.mubr.bf16.gmra.mrb[0].mxu0 %v3245
        %v3408 = vpop.f32.mrb[0].mxu0
        %v3409 = vadd.f32 0.0, %v3408
        %v3410 = vpop.f32.mrb[0].mxu0
        %v3411 = vpop.f32.mrb[0].mxu0
        %v3412 = vadd.f32 0.0, %v3411
        %v3413 = vpop.f32.mrb[0].mxu0
        %3414 = vmatprep.mubr.bf16.mxu0 0
        %3415 = vmatmul.mubr.bf16.gmra.mrb[0].mxu0 %v3246
        %v3416 = vpop.f32.mrb[0].mxu0
        %v3417 = vadd.f32 0.0, %v3416
        %v3418 = vpop.f32.mrb[0].mxu0
        %v3419 = vpop.f32.mrb[0].mxu0
        %v3420 = vadd.f32 0.0, %v3419
        %v3421 = vpop.f32.mrb[0].mxu0
        %3422 = vmatprep.mubr.bf16.mxu0 0
        %3423 = vmatmul.mubr.bf16.gmra.mrb[0].mxu0 %v3247
        %v3424 = vpop.f32.mrb[0].mxu0
        %v3425 = vadd.f32 0.0, %v3424
        %v3426 = vpop.f32.mrb[0].mxu0
        %v3427 = vpop.f32.mrb[0].mxu0
        %v3428 = vadd.f32 0.0, %v3427
        %v3429 = vpop.f32.mrb[0].mxu0
        %3430 = vmatprep.mubr.bf16.mxu0 0
        %3431 = vmatmul.mubr.bf16.gmra.mrb[0].mxu0 %v3248
        %v3432 = vpop.f32.mrb[0].mxu0
        %v3433 = vadd.f32 0.0, %v3432
        %v3434 = vpop.f32.mrb[0].mxu0
        %v3435 = vpop.f32.mrb[0].mxu0
        %v3436 = vadd.f32 0.0, %v3435
        %v3437 = vpop.f32.mrb[0].mxu0
        %3438 = vmatprep.mubr.bf16.mxu0 0
        %3439 = vmatmul.mubr.bf16.gmra.mrb[0].mxu0 %v3249
        %v3440 = vpop.f32.mrb[0].mxu0
        %v3441 = vadd.f32 0.0, %v3440
        %v3442 = vpop.f32.mrb[0].mxu0
        %v3443 = vpop.f32.mrb[0].mxu0
        %v3444 = vadd.f32 0.0, %v3443
        %v3445 = vpop.f32.mrb[0].mxu0
        %3446 = vmatprep.mubr.bf16.mxu0 0
        %3447 = vmatmul.mubr.bf16.gmra.mrb[0].mxu0 %v3250
        %v3448 = vpop.f32.mrb[0].mxu0
        %v3449 = vadd.f32 0.0, %v3448
        %v3450 = vpop.f32.mrb[0].mxu0
        %v3451 = vpop.f32.mrb[0].mxu0
        %v3452 = vadd.f32 0.0, %v3451
        %v3453 = vpop.f32.mrb[0].mxu0
        %3454 = vmatprep.mubr.bf16.mxu0 0
        %3455 = vmatmul.mubr.bf16.gmra.mrb[0].mxu0 %v3251
        %v3456 = vpop.f32.mrb[0].mxu0
        %v3457 = vadd.f32 0.0, %v3456
        %v3458 = vpop.f32.mrb[0].mxu0
        %v3459 = vpop.f32.mrb[0].mxu0
        %v3460 = vadd.f32 0.0, %v3459
        %v3461 = vpop.f32.mrb[0].mxu0
        %3462 = vmatprep.mubr.bf16.mxu0 0
        %3463 = vmatmul.mubr.bf16.gmra.mrb[0].mxu0 %v3252
        %v3464 = vpop.f32.mrb[0].mxu0
        %v3465 = vadd.f32 0.0, %v3464
        %v3466 = vpop.f32.mrb[0].mxu0
        %v3467 = vpop.f32.mrb[0].mxu0
        %v3468 = vadd.f32 0.0, %v3467
        %v3469 = vpop.f32.mrb[0].mxu0
        %3470 = vmatprep.mubr.bf16.mxu0 0
        %3471 = vmatmul.mubr.bf16.gmra.mrb[0].mxu0 %v3253
        %v3472 = vpop.f32.mrb[0].mxu0
        %v3473 = vadd.f32 0.0, %v3472
        %v3474 = vpop.f32.mrb[0].mxu0
        %v3475 = vpop.f32.mrb[0].mxu0
        %v3476 = vadd.f32 0.0, %v3475
        %v3477 = vpop.f32.mrb[0].mxu0
        %3478 = vdwg.mxu0
        %v3479 = vadd.f32 %v3061, %v3353
        %v3480 = vadd.f32 %v3062, %v3356
        %v3481 = vadd.f32 %v3063, %v3361
        %v3482 = vadd.f32 %v3064, %v3364
        %v3483 = vadd.f32 %v3065, %v3369
        %v3484 = vadd.f32 %v3066, %v3372
        %v3485 = vadd.f32 %v3067, %v3377
        %v3486 = vadd.f32 %v3068, %v3380
        %v3487 = vadd.f32 %v3069, %v3385
        %v3488 = vadd.f32 %v3070, %v3388
        %v3489 = vadd.f32 %v3071, %v3393
        %v3490 = vadd.f32 %v3072, %v3396
        %v3491 = vadd.f32 %v3073, %v3401
        %v3492 = vadd.f32 %v3074, %v3404
        %v3493 = vadd.f32 %v3075, %v3409
        %v3494 = vadd.f32 %v3076, %v3412
        %v3495 = vadd.f32 %v3077, %v3417
        %v3496 = vadd.f32 %v3078, %v3420
        %v3497 = vadd.f32 %v3079, %v3425
        %v3498 = vadd.f32 %v3080, %v3428
        %v3499 = vadd.f32 %v3081, %v3433
        %v3500 = vadd.f32 %v3082, %v3436
        %v3501 = vadd.f32 %v3083, %v3441
        %v3502 = vadd.f32 %v3084, %v3444
        %v3503 = vadd.f32 %v3085, %v3449
        %v3504 = vadd.f32 %v3086, %v3452
        %v3505 = vadd.f32 %v3087, %v3457
        %v3506 = vadd.f32 %v3088, %v3460
        %v3507 = vadd.f32 %v3089, %v3465
        %v3508 = vadd.f32 %v3090, %v3468
        %v3509 = vadd.f32 %v3091, %v3473
        %v3510 = vadd.f32 %v3092, %v3476
        %v3511 = vld [vmem:[%s2674 + $0x2] sm:$0xff]
        %v3512 = vld [vmem:[%s2674 + $0x12] sm:$0xff]
        %v3513 = vld [vmem:[%s2674 + $0x22] sm:$0xff]
        %v3514 = vld [vmem:[%s2674 + $0x32] sm:$0xff]
        %v3515 = vld [vmem:[%s2674 + $0x62] sm:$0xff]
        %v3516 = vld [vmem:[%s2674 + $0x72] sm:$0xff]
        %v3517 = vld [vmem:[%s2674 + $0x82] sm:$0xff]
        %v3518 = vld [vmem:[%s2674 + $0x92] sm:$0xff]
        %v3519 = vld [vmem:[%s2674 + $0xc2] sm:$0xff]
        %v3520 = vld [vmem:[%s2674 + $0xd2] sm:$0xff]
        %v3521 = vld [vmem:[%s2674 + $0xe2] sm:$0xff]
        %v3522 = vld [vmem:[%s2674 + $0xf2] sm:$0xff]
        %v3523 = vld [vmem:[%s2674 + $0x122] sm:$0xff]
        %v3524 = vld [vmem:[%s2674 + $0x132] sm:$0xff]
        %v3525 = vld [vmem:[%s2674 + $0x142] sm:$0xff]
        %v3526 = vld [vmem:[%s2674 + $0x152] sm:$0xff]
        %v3527 = vld [vmem:[%s2674 + $0x182] sm:$0xff]
        %v3528 = vld [vmem:[%s2674 + $0x192] sm:$0xff]
        %v3529 = vld [vmem:[%s2674 + $0x1a2] sm:$0xff]
        %v3530 = vld [vmem:[%s2674 + $0x1b2] sm:$0xff]
        %v3531 = vld [vmem:[%s2674 + $0x1e2] sm:$0xff]
        %v3532 = vld [vmem:[%s2674 + $0x1f2] sm:$0xff]
        %v3533 = vld [vmem:[%s2674 + $0x202] sm:$0xff]
        %v3534 = vld [vmem:[%s2674 + $0x212] sm:$0xff]
        %v3535 = vld [vmem:[%s2674 + $0x242] sm:$0xff]
        %v3536 = vld [vmem:[%s2674 + $0x252] sm:$0xff]
        %v3537 = vld [vmem:[%s2674 + $0x262] sm:$0xff]
        %v3538 = vld [vmem:[%s2674 + $0x272] sm:$0xff]
        %v3539 = vld [vmem:[%s2674 + $0x2a2] sm:$0xff]
        %v3540 = vld [vmem:[%s2674 + $0x2b2] sm:$0xff]
        %v3541 = vld [vmem:[%s2674 + $0x2c2] sm:$0xff]
        %v3542 = vld [vmem:[%s2674 + $0x2d2] sm:$0xff]
        %v3543 = vpack.c.bf16 %v3511, %v3511
        %v3544 = vpack.c.bf16 %v3512, %v3512
        %v3545 = vpack.c.bf16 %v3513, %v3513
        %v3546 = vpack.c.bf16 %v3514, %v3514
        %v3547 = vpack.c.bf16 %v3515, %v3515
        %v3548 = vpack.c.bf16 %v3516, %v3516
        %v3549 = vpack.c.bf16 %v3517, %v3517
        %v3550 = vpack.c.bf16 %v3518, %v3518
        %v3551 = vpack.c.bf16 %v3519, %v3519
        %v3552 = vpack.c.bf16 %v3520, %v3520
        %v3553 = vpack.c.bf16 %v3521, %v3521
        %v3554 = vpack.c.bf16 %v3522, %v3522
        %v3555 = vpack.c.bf16 %v3523, %v3523
        %v3556 = vpack.c.bf16 %v3524, %v3524
        %v3557 = vpack.c.bf16 %v3525, %v3525
        %v3558 = vpack.c.bf16 %v3526, %v3526
        %v3559 = vpack.c.bf16 %v3527, %v3527
        %v3560 = vpack.c.bf16 %v3528, %v3528
        %v3561 = vpack.c.bf16 %v3529, %v3529
        %v3562 = vpack.c.bf16 %v3530, %v3530
        %v3563 = vpack.c.bf16 %v3531, %v3531
        %v3564 = vpack.c.bf16 %v3532, %v3532
        %v3565 = vpack.c.bf16 %v3533, %v3533
        %v3566 = vpack.c.bf16 %v3534, %v3534
        %v3567 = vpack.c.bf16 %v3535, %v3535
        %v3568 = vpack.c.bf16 %v3536, %v3536
        %v3569 = vpack.c.bf16 %v3537, %v3537
        %v3570 = vpack.c.bf16 %v3538, %v3538
        %v3571 = vpack.c.bf16 %v3539, %v3539
        %v3572 = vpack.c.bf16 %v3540, %v3540
        %v3573 = vpack.c.bf16 %v3541, %v3541
        %v3574 = vpack.c.bf16 %v3542, %v3542
        %s3575 = scalar_lea.vmem %s1, 512
        %v3576 = vld [vmem:[%s3575] sm:$0xf]
        %v3577 = vld [vmem:[%s3575 + $0x4] sm:$0xf]
        %v3578 = vld [vmem:[%s3575 + $0x8] sm:$0xf]
        %v3579 = vld [vmem:[%s3575 + $0xc] sm:$0xf]
        %v3580 = vld [vmem:[%s3575 + $0x10] sm:$0xf]
        %v3581 = vld [vmem:[%s3575 + $0x14] sm:$0xf]
        %v3582 = vld [vmem:[%s3575 + $0x18] sm:$0xf]
        %v3583 = vld [vmem:[%s3575 + $0x1c] sm:$0xf]
        %v3584 = vld [vmem:[%s3575 + $0x20] sm:$0xf]
        %v3585 = vld [vmem:[%s3575 + $0x24] sm:$0xf]
        %v3586 = vld [vmem:[%s3575 + $0x28] sm:$0xf]
        %v3587 = vld [vmem:[%s3575 + $0x2c] sm:$0xf]
        %v3588 = vld [vmem:[%s3575 + $0x30] sm:$0xf]
        %v3589 = vld [vmem:[%s3575 + $0x34] sm:$0xf]
        %v3590 = vld [vmem:[%s3575 + $0x38] sm:$0xf]
        %v3591 = vld [vmem:[%s3575 + $0x3c] sm:$0xf]
        %v3624 = vunpack.c.l.b16 %v3543
        %v3625 = vunpack.c.l.b16 %v3544
        %v3626 = vunpack.c.l.b16 %v3545
        %v3627 = vunpack.c.l.b16 %v3546
        %v3628 = vunpack.c.l.b16 %v3547
        %v3629 = vunpack.c.l.b16 %v3548
        %v3630 = vunpack.c.l.b16 %v3549
        %v3631 = vunpack.c.l.b16 %v3550
        %v3632 = vunpack.c.l.b16 %v3551
        %v3633 = vunpack.c.l.b16 %v3552
        %v3634 = vunpack.c.l.b16 %v3553
        %v3635 = vunpack.c.l.b16 %v3554
        %v3636 = vunpack.c.l.b16 %v3555
        %v3637 = vunpack.c.l.b16 %v3556
        %v3638 = vunpack.c.l.b16 %v3557
        %v3639 = vunpack.c.l.b16 %v3558
        %v3640 = vunpack.c.l.b16 %v3559
        %v3641 = vunpack.c.l.b16 %v3560
        %v3642 = vunpack.c.l.b16 %v3561
        %v3643 = vunpack.c.l.b16 %v3562
        %v3644 = vunpack.c.l.b16 %v3563
        %v3645 = vunpack.c.l.b16 %v3564
        %v3646 = vunpack.c.l.b16 %v3565
        %v3647 = vunpack.c.l.b16 %v3566
        %v3648 = vunpack.c.l.b16 %v3567
        %v3649 = vunpack.c.l.b16 %v3568
        %v3650 = vunpack.c.l.b16 %v3569
        %v3651 = vunpack.c.l.b16 %v3570
        %v3652 = vunpack.c.l.b16 %v3571
        %v3653 = vunpack.c.l.b16 %v3572
        %v3654 = vunpack.c.l.b16 %v3573
        %v3655 = vunpack.c.l.b16 %v3574
        %v3656 = vpack.c.b16 %v3625, %v3624
        %v3657 = vpack.c.b16 %v3627, %v3626
        %v3658 = vpack.c.b16 %v3629, %v3628
        %v3659 = vpack.c.b16 %v3631, %v3630
        %v3660 = vpack.c.b16 %v3633, %v3632
        %v3661 = vpack.c.b16 %v3635, %v3634
        %v3662 = vpack.c.b16 %v3637, %v3636
        %v3663 = vpack.c.b16 %v3639, %v3638
        %v3664 = vpack.c.b16 %v3641, %v3640
        %v3665 = vpack.c.b16 %v3643, %v3642
        %v3666 = vpack.c.b16 %v3645, %v3644
        %v3667 = vpack.c.b16 %v3647, %v3646
        %v3668 = vpack.c.b16 %v3649, %v3648
        %v3669 = vpack.c.b16 %v3651, %v3650
        %v3670 = vpack.c.b16 %v3653, %v3652
        %v3671 = vpack.c.b16 %v3655, %v3654
        %v3704 = vunpack.c.l.b16 %v3576
        %v3705 = vunpack.c.l.b16 %v3577
        %v3706 = vunpack.c.l.b16 %v3578
        %v3707 = vunpack.c.l.b16 %v3579
        %v3708 = vunpack.c.l.b16 %v3580
        %v3709 = vunpack.c.l.b16 %v3581
        %v3710 = vunpack.c.l.b16 %v3582
        %v3711 = vunpack.c.l.b16 %v3583
        %v3712 = vunpack.c.l.b16 %v3584
        %v3713 = vunpack.c.l.b16 %v3585
        %v3714 = vunpack.c.l.b16 %v3586
        %v3715 = vunpack.c.l.b16 %v3587
        %v3716 = vunpack.c.l.b16 %v3588
        %v3717 = vunpack.c.l.b16 %v3589
        %v3718 = vunpack.c.l.b16 %v3590
        %v3719 = vunpack.c.l.b16 %v3591
        %v3720 = vpack.c.b16 %v3705, %v3704
        %v3721 = vpack.c.b16 %v3707, %v3706
        %v3722 = vpack.c.b16 %v3709, %v3708
        %v3723 = vpack.c.b16 %v3711, %v3710
        %v3724 = vpack.c.b16 %v3713, %v3712
        %v3725 = vpack.c.b16 %v3715, %v3714
        %v3726 = vpack.c.b16 %v3717, %v3716
        %v3727 = vpack.c.b16 %v3719, %v3718
        %3736 = vmatprep.subr.bf16.mxu0 0
        %3737 = vmatpush1.bf16.msra.mxu0 %v3720
        %3738 = vmatprep.subr.bf16.mxu0 0
        %3739 = vmatpush1.bf16.msra.mxu0 %v3721
        %3740 = vmatprep.subr.bf16.mxu0 0
        %3741 = vmatpush1.bf16.msra.mxu0 %v3722
        %3742 = vmatprep.subr.bf16.mxu0 0
        %3743 = vmatpush1.bf16.msra.mxu0 %v3723
        %3744 = vmatprep.subr.bf16.mxu0 0
        %3745 = vmatpush1.bf16.msra.mxu0 %v3724
        %3746 = vmatprep.subr.bf16.mxu0 0
        %3747 = vmatpush1.bf16.msra.mxu0 %v3725
        %3748 = vmatprep.subr.bf16.mxu0 0
        %3749 = vmatpush1.bf16.msra.mxu0 %v3726
        %3750 = vmatprep.subr.bf16.mxu0 0
        %3751 = vmatpush1.bf16.msra.mxu0 %v3727
        %3752 = vmatprep.subr.bf16.mxu0 0
        %3753 = vmatpush1.bf16.msra.mxu0 0
        %3754 = vmatprep.subr.bf16.mxu0 0
        %3755 = vmatpush1.bf16.msra.mxu0 0
        %3756 = vmatprep.subr.bf16.mxu0 0
        %3757 = vmatpush1.bf16.msra.mxu0 0
        %3758 = vmatprep.subr.bf16.mxu0 0
        %3759 = vmatpush1.bf16.msra.mxu0 0
        %3760 = vmatprep.subr.bf16.mxu0 0
        %3761 = vmatpush1.bf16.msra.mxu0 0
        %3762 = vmatprep.subr.bf16.mxu0 0
        %3763 = vmatpush1.bf16.msra.mxu0 0
        %3764 = vmatprep.subr.bf16.mxu0 0
        %3765 = vmatpush1.bf16.msra.mxu0 0
        %3766 = vmatprep.subr.bf16.mxu0 0
        %3767 = vmatpush1.bf16.msra.mxu0 0
        %3768 = vmatprep.mubr.bf16.mxu0 0
        %3769 = vmatmul.mubr.bf16.gmra.mrb[0].mxu0 %v3656
        %v3770 = vpop.f32.mrb[0].mxu0
        %v3771 = vadd.f32 0.0, %v3770
        %v3772 = vpop.f32.mrb[0].mxu0
        %v3773 = vpop.f32.mrb[0].mxu0
        %v3774 = vadd.f32 0.0, %v3773
        %v3775 = vpop.f32.mrb[0].mxu0
        %3776 = vmatprep.mubr.bf16.mxu0 0
        %3777 = vmatmul.mubr.bf16.gmra.mrb[0].mxu0 %v3657
        %v3778 = vpop.f32.mrb[0].mxu0
        %v3779 = vadd.f32 0.0, %v3778
        %v3780 = vpop.f32.mrb[0].mxu0
        %v3781 = vpop.f32.mrb[0].mxu0
        %v3782 = vadd.f32 0.0, %v3781
        %v3783 = vpop.f32.mrb[0].mxu0
        %3784 = vmatprep.mubr.bf16.mxu0 0
        %3785 = vmatmul.mubr.bf16.gmra.mrb[0].mxu0 %v3658
        %v3786 = vpop.f32.mrb[0].mxu0
        %v3787 = vadd.f32 0.0, %v3786
        %v3788 = vpop.f32.mrb[0].mxu0
        %v3789 = vpop.f32.mrb[0].mxu0
        %v3790 = vadd.f32 0.0, %v3789
        %v3791 = vpop.f32.mrb[0].mxu0
        %3792 = vmatprep.mubr.bf16.mxu0 0
        %3793 = vmatmul.mubr.bf16.gmra.mrb[0].mxu0 %v3659
        %v3794 = vpop.f32.mrb[0].mxu0
        %v3795 = vadd.f32 0.0, %v3794
        %v3796 = vpop.f32.mrb[0].mxu0
        %v3797 = vpop.f32.mrb[0].mxu0
        %v3798 = vadd.f32 0.0, %v3797
        %v3799 = vpop.f32.mrb[0].mxu0
        %3800 = vmatprep.mubr.bf16.mxu0 0
        %3801 = vmatmul.mubr.bf16.gmra.mrb[0].mxu0 %v3660
        %v3802 = vpop.f32.mrb[0].mxu0
        %v3803 = vadd.f32 0.0, %v3802
        %v3804 = vpop.f32.mrb[0].mxu0
        %v3805 = vpop.f32.mrb[0].mxu0
        %v3806 = vadd.f32 0.0, %v3805
        %v3807 = vpop.f32.mrb[0].mxu0
        %3808 = vmatprep.mubr.bf16.mxu0 0
        %3809 = vmatmul.mubr.bf16.gmra.mrb[0].mxu0 %v3661
        %v3810 = vpop.f32.mrb[0].mxu0
        %v3811 = vadd.f32 0.0, %v3810
        %v3812 = vpop.f32.mrb[0].mxu0
        %v3813 = vpop.f32.mrb[0].mxu0
        %v3814 = vadd.f32 0.0, %v3813
        %v3815 = vpop.f32.mrb[0].mxu0
        %3816 = vmatprep.mubr.bf16.mxu0 0
        %3817 = vmatmul.mubr.bf16.gmra.mrb[0].mxu0 %v3662
        %v3818 = vpop.f32.mrb[0].mxu0
        %v3819 = vadd.f32 0.0, %v3818
        %v3820 = vpop.f32.mrb[0].mxu0
        %v3821 = vpop.f32.mrb[0].mxu0
        %v3822 = vadd.f32 0.0, %v3821
        %v3823 = vpop.f32.mrb[0].mxu0
        %3824 = vmatprep.mubr.bf16.mxu0 0
        %3825 = vmatmul.mubr.bf16.gmra.mrb[0].mxu0 %v3663
        %v3826 = vpop.f32.mrb[0].mxu0
        %v3827 = vadd.f32 0.0, %v3826
        %v3828 = vpop.f32.mrb[0].mxu0
        %v3829 = vpop.f32.mrb[0].mxu0
        %v3830 = vadd.f32 0.0, %v3829
        %v3831 = vpop.f32.mrb[0].mxu0
        %3832 = vmatprep.mubr.bf16.mxu0 0
        %3833 = vmatmul.mubr.bf16.gmra.mrb[0].mxu0 %v3664
        %v3834 = vpop.f32.mrb[0].mxu0
        %v3835 = vadd.f32 0.0, %v3834
        %v3836 = vpop.f32.mrb[0].mxu0
        %v3837 = vpop.f32.mrb[0].mxu0
        %v3838 = vadd.f32 0.0, %v3837
        %v3839 = vpop.f32.mrb[0].mxu0
        %3840 = vmatprep.mubr.bf16.mxu0 0
        %3841 = vmatmul.mubr.bf16.gmra.mrb[0].mxu0 %v3665
        %v3842 = vpop.f32.mrb[0].mxu0
        %v3843 = vadd.f32 0.0, %v3842
        %v3844 = vpop.f32.mrb[0].mxu0
        %v3845 = vpop.f32.mrb[0].mxu0
        %v3846 = vadd.f32 0.0, %v3845
        %v3847 = vpop.f32.mrb[0].mxu0
        %3848 = vmatprep.mubr.bf16.mxu0 0
        %3849 = vmatmul.mubr.bf16.gmra.mrb[0].mxu0 %v3666
        %v3850 = vpop.f32.mrb[0].mxu0
        %v3851 = vadd.f32 0.0, %v3850
        %v3852 = vpop.f32.mrb[0].mxu0
        %v3853 = vpop.f32.mrb[0].mxu0
        %v3854 = vadd.f32 0.0, %v3853
        %v3855 = vpop.f32.mrb[0].mxu0
        %3856 = vmatprep.mubr.bf16.mxu0 0
        %3857 = vmatmul.mubr.bf16.gmra.mrb[0].mxu0 %v3667
        %v3858 = vpop.f32.mrb[0].mxu0
        %v3859 = vadd.f32 0.0, %v3858
        %v3860 = vpop.f32.mrb[0].mxu0
        %v3861 = vpop.f32.mrb[0].mxu0
        %v3862 = vadd.f32 0.0, %v3861
        %v3863 = vpop.f32.mrb[0].mxu0
        %3864 = vmatprep.mubr.bf16.mxu0 0
        %3865 = vmatmul.mubr.bf16.gmra.mrb[0].mxu0 %v3668
        %v3866 = vpop.f32.mrb[0].mxu0
        %v3867 = vadd.f32 0.0, %v3866
        %v3868 = vpop.f32.mrb[0].mxu0
        %v3869 = vpop.f32.mrb[0].mxu0
        %v3870 = vadd.f32 0.0, %v3869
        %v3871 = vpop.f32.mrb[0].mxu0
        %3872 = vmatprep.mubr.bf16.mxu0 0
        %3873 = vmatmul.mubr.bf16.gmra.mrb[0].mxu0 %v3669
        %v3874 = vpop.f32.mrb[0].mxu0
        %v3875 = vadd.f32 0.0, %v3874
        %v3876 = vpop.f32.mrb[0].mxu0
        %v3877 = vpop.f32.mrb[0].mxu0
        %v3878 = vadd.f32 0.0, %v3877
        %v3879 = vpop.f32.mrb[0].mxu0
        %3880 = vmatprep.mubr.bf16.mxu0 0
        %3881 = vmatmul.mubr.bf16.gmra.mrb[0].mxu0 %v3670
        %v3882 = vpop.f32.mrb[0].mxu0
        %v3883 = vadd.f32 0.0, %v3882
        %v3884 = vpop.f32.mrb[0].mxu0
        %v3885 = vpop.f32.mrb[0].mxu0
        %v3886 = vadd.f32 0.0, %v3885
        %v3887 = vpop.f32.mrb[0].mxu0
        %3888 = vmatprep.mubr.bf16.mxu0 0
        %3889 = vmatmul.mubr.bf16.gmra.mrb[0].mxu0 %v3671
        %v3890 = vpop.f32.mrb[0].mxu0
        %v3891 = vadd.f32 0.0, %v3890
        %v3892 = vpop.f32.mrb[0].mxu0
        %v3893 = vpop.f32.mrb[0].mxu0
        %v3894 = vadd.f32 0.0, %v3893
        %v3895 = vpop.f32.mrb[0].mxu0
        %3896 = vdwg.mxu0
        %v3897 = vadd.f32 %v3479, %v3771
        %v3898 = vadd.f32 %v3480, %v3774
        %v3899 = vadd.f32 %v3481, %v3779
        %v3900 = vadd.f32 %v3482, %v3782
        %v3901 = vadd.f32 %v3483, %v3787
        %v3902 = vadd.f32 %v3484, %v3790
        %v3903 = vadd.f32 %v3485, %v3795
        %v3904 = vadd.f32 %v3486, %v3798
        %v3905 = vadd.f32 %v3487, %v3803
        %v3906 = vadd.f32 %v3488, %v3806
        %v3907 = vadd.f32 %v3489, %v3811
        %v3908 = vadd.f32 %v3490, %v3814
        %v3909 = vadd.f32 %v3491, %v3819
        %v3910 = vadd.f32 %v3492, %v3822
        %v3911 = vadd.f32 %v3493, %v3827
        %v3912 = vadd.f32 %v3494, %v3830
        %v3913 = vadd.f32 %v3495, %v3835
        %v3914 = vadd.f32 %v3496, %v3838
        %v3915 = vadd.f32 %v3497, %v3843
        %v3916 = vadd.f32 %v3498, %v3846
        %v3917 = vadd.f32 %v3499, %v3851
        %v3918 = vadd.f32 %v3500, %v3854
        %v3919 = vadd.f32 %v3501, %v3859
        %v3920 = vadd.f32 %v3502, %v3862
        %v3921 = vadd.f32 %v3503, %v3867
        %v3922 = vadd.f32 %v3504, %v3870
        %v3923 = vadd.f32 %v3505, %v3875
        %v3924 = vadd.f32 %v3506, %v3878
        %v3925 = vadd.f32 %v3507, %v3883
        %v3926 = vadd.f32 %v3508, %v3886
        %v3927 = vadd.f32 %v3509, %v3891
        %v3928 = vadd.f32 %v3510, %v3894
        %v3929 = vld [vmem:[%s3] sm:$0x1]
        %v3931 = vlaneseq
        %v3932 = vshrl.u32 %v3931, 7
        %v3933 = vsub.s32 0, %v3932
        %v3934 = vrot.slane %v3929, %v3933
        %v3936 = vadd.f32 %v3897, %v3934
        %v3937 = vadd.f32 %v3898, %v3934
        %v3938 = vadd.f32 %v3899, %v3934
        %v3939 = vadd.f32 %v3900, %v3934
        %v3940 = vadd.f32 %v3901, %v3934
        %v3941 = vadd.f32 %v3902, %v3934
        %v3942 = vadd.f32 %v3903, %v3934
        %v3943 = vadd.f32 %v3904, %v3934
        %v3944 = vadd.f32 %v3905, %v3934
        %v3945 = vadd.f32 %v3906, %v3934
        %v3946 = vadd.f32 %v3907, %v3934
        %v3947 = vadd.f32 %v3908, %v3934
        %v3948 = vadd.f32 %v3909, %v3934
        %v3949 = vadd.f32 %v3910, %v3934
        %v3950 = vadd.f32 %v3911, %v3934
        %v3951 = vadd.f32 %v3912, %v3934
        %v3952 = vadd.f32 %v3913, %v3934
        %v3953 = vadd.f32 %v3914, %v3934
        %v3954 = vadd.f32 %v3915, %v3934
        %v3955 = vadd.f32 %v3916, %v3934
        %v3956 = vadd.f32 %v3917, %v3934
        %v3957 = vadd.f32 %v3918, %v3934
        %v3958 = vadd.f32 %v3919, %v3934
        %v3959 = vadd.f32 %v3920, %v3934
        %v3960 = vadd.f32 %v3921, %v3934
        %v3961 = vadd.f32 %v3922, %v3934
        %v3962 = vadd.f32 %v3923, %v3934
        %v3963 = vadd.f32 %v3924, %v3934
        %v3964 = vadd.f32 %v3925, %v3934
        %v3965 = vadd.f32 %v3926, %v3934
        %v3966 = vadd.f32 %v3927, %v3934
        %v3967 = vadd.f32 %v3928, %v3934
        %v3968 = vmax.f32 %v3936, 0.0
        %v3969 = vmax.f32 %v3937, 0.0
        %v3970 = vmax.f32 %v3938, 0.0
        %v3971 = vmax.f32 %v3939, 0.0
        %v3972 = vmax.f32 %v3940, 0.0
        %v3973 = vmax.f32 %v3941, 0.0
        %v3974 = vmax.f32 %v3942, 0.0
        %v3975 = vmax.f32 %v3943, 0.0
        %v3976 = vmax.f32 %v3944, 0.0
        %v3977 = vmax.f32 %v3945, 0.0
        %v3978 = vmax.f32 %v3946, 0.0
        %v3979 = vmax.f32 %v3947, 0.0
        %v3980 = vmax.f32 %v3948, 0.0
        %v3981 = vmax.f32 %v3949, 0.0
        %v3982 = vmax.f32 %v3950, 0.0
        %v3983 = vmax.f32 %v3951, 0.0
        %v3984 = vmax.f32 %v3952, 0.0
        %v3985 = vmax.f32 %v3953, 0.0
        %v3986 = vmax.f32 %v3954, 0.0
        %v3987 = vmax.f32 %v3955, 0.0
        %v3988 = vmax.f32 %v3956, 0.0
        %v3989 = vmax.f32 %v3957, 0.0
        %v3990 = vmax.f32 %v3958, 0.0
        %v3991 = vmax.f32 %v3959, 0.0
        %v3992 = vmax.f32 %v3960, 0.0
        %v3993 = vmax.f32 %v3961, 0.0
        %v3994 = vmax.f32 %v3962, 0.0
        %v3995 = vmax.f32 %v3963, 0.0
        %v3996 = vmax.f32 %v3964, 0.0
        %v3997 = vmax.f32 %v3965, 0.0
        %v3998 = vmax.f32 %v3966, 0.0
        %v3999 = vmax.f32 %v3967, 0.0
        %4000 = vst [vmem:[#allocation2] sm:$0xff] 0.0
        %4001 = vst [vmem:[#allocation2 + $0x8] sm:$0x3] 0.0
        %4002 = vst [vmem:[#allocation2 + $0x60] sm:$0xff] 0.0
        %4003 = vst [vmem:[#allocation2 + $0x68] sm:$0x3] 0.0
        %4004 = vst [vmem:[#allocation2 + $0xc0] sm:$0xff] 0.0
        %4005 = vst [vmem:[#allocation2 + $0xc8] sm:$0x3] 0.0
        %4006 = vst [vmem:[#allocation2 + $0x120] sm:$0xff] 0.0
        %4007 = vst [vmem:[#allocation2 + $0x128] sm:$0x3] 0.0
        %4008 = vst [vmem:[#allocation2 + $0x180] sm:$0xff] 0.0
        %4009 = vst [vmem:[#allocation2 + $0x188] sm:$0x3] 0.0
        %4010 = vst [vmem:[#allocation2 + $0x1e0] sm:$0xff] 0.0
        %4011 = vst [vmem:[#allocation2 + $0x1e8] sm:$0x3] 0.0
        %4012 = vst [vmem:[#allocation2 + $0x240] sm:$0xff] 0.0
        %4013 = vst [vmem:[#allocation2 + $0x248] sm:$0x3] 0.0
        %4014 = vst [vmem:[#allocation2 + $0x2a0] sm:$0xff] 0.0
        %4015 = vst [vmem:[#allocation2 + $0x2a8] sm:$0x3] 0.0
        %s4016 = scalar_lea.vmem [#allocation2], 80
        %4017 = vst [vmem:[%s4016] sm:$0xff] 0.0
        %4018 = vst [vmem:[%s4016 + $0x8] sm:$0x3] 0.0
        %4019 = vst [vmem:[%s4016 + $0x60] sm:$0xff] 0.0
        %4020 = vst [vmem:[%s4016 + $0x68] sm:$0x3] 0.0
        %4021 = vst [vmem:[%s4016 + $0xc0] sm:$0xff] 0.0
        %4022 = vst [vmem:[%s4016 + $0xc8] sm:$0x3] 0.0
        %4023 = vst [vmem:[%s4016 + $0x120] sm:$0xff] 0.0
        %4024 = vst [vmem:[%s4016 + $0x128] sm:$0x3] 0.0
        %4025 = vst [vmem:[%s4016 + $0x180] sm:$0xff] 0.0
        %4026 = vst [vmem:[%s4016 + $0x188] sm:$0x3] 0.0
        %4027 = vst [vmem:[%s4016 + $0x1e0] sm:$0xff] 0.0
        %4028 = vst [vmem:[%s4016 + $0x1e8] sm:$0x3] 0.0
        %4029 = vst [vmem:[%s4016 + $0x240] sm:$0xff] 0.0
        %4030 = vst [vmem:[%s4016 + $0x248] sm:$0x3] 0.0
        %4031 = vst [vmem:[%s4016 + $0x2a0] sm:$0xff] 0.0
        %4032 = vst [vmem:[%s4016 + $0x2a8] sm:$0x3] 0.0
        %s4033 = scalar_lea.vmem [#allocation2], 16
        %4034 = vst [vmem:[%s4033] sm:$0x1] 0.0
        %4035 = vst [vmem:[%s4033 + $0x10] sm:$0x1] 0.0
        %4036 = vst [vmem:[%s4033 + $0x20] sm:$0x1] 0.0
        %4037 = vst [vmem:[%s4033 + $0x30] sm:$0x1] 0.0
        %4038 = vst [vmem:[%s4033 + $0x60] sm:$0x1] 0.0
        %4039 = vst [vmem:[%s4033 + $0x70] sm:$0x1] 0.0
        %4040 = vst [vmem:[%s4033 + $0x80] sm:$0x1] 0.0
        %4041 = vst [vmem:[%s4033 + $0x90] sm:$0x1] 0.0
        %4042 = vst [vmem:[%s4033 + $0xc0] sm:$0x1] 0.0
        %4043 = vst [vmem:[%s4033 + $0xd0] sm:$0x1] 0.0
        %4044 = vst [vmem:[%s4033 + $0xe0] sm:$0x1] 0.0
        %4045 = vst [vmem:[%s4033 + $0xf0] sm:$0x1] 0.0
        %4046 = vst [vmem:[%s4033 + $0x120] sm:$0x1] 0.0
        %4047 = vst [vmem:[%s4033 + $0x130] sm:$0x1] 0.0
        %4048 = vst [vmem:[%s4033 + $0x140] sm:$0x1] 0.0
        %4049 = vst [vmem:[%s4033 + $0x150] sm:$0x1] 0.0
        %4050 = vst [vmem:[%s4033 + $0x180] sm:$0x1] 0.0
        %4051 = vst [vmem:[%s4033 + $0x190] sm:$0x1] 0.0
        %4052 = vst [vmem:[%s4033 + $0x1a0] sm:$0x1] 0.0
        %4053 = vst [vmem:[%s4033 + $0x1b0] sm:$0x1] 0.0
        %4054 = vst [vmem:[%s4033 + $0x1e0] sm:$0x1] 0.0
        %4055 = vst [vmem:[%s4033 + $0x1f0] sm:$0x1] 0.0
        %4056 = vst [vmem:[%s4033 + $0x200] sm:$0x1] 0.0
        %4057 = vst [vmem:[%s4033 + $0x210] sm:$0x1] 0.0
        %4058 = vst [vmem:[%s4033 + $0x240] sm:$0x1] 0.0
        %4059 = vst [vmem:[%s4033 + $0x250] sm:$0x1] 0.0
        %4060 = vst [vmem:[%s4033 + $0x260] sm:$0x1] 0.0
        %4061 = vst [vmem:[%s4033 + $0x270] sm:$0x1] 0.0
        %4062 = vst [vmem:[%s4033 + $0x2a0] sm:$0x1] 0.0
        %4063 = vst [vmem:[%s4033 + $0x2b0] sm:$0x1] 0.0
        %4064 = vst [vmem:[%s4033 + $0x2c0] sm:$0x1] 0.0
        %4065 = vst [vmem:[%s4033 + $0x2d0] sm:$0x1] 0.0
        %4066 = vst [vmem:[%s4033 + $0x9] sm:$0x1] 0.0
        %4067 = vst [vmem:[%s4033 + $0x19] sm:$0x1] 0.0
        %4068 = vst [vmem:[%s4033 + $0x29] sm:$0x1] 0.0
        %4069 = vst [vmem:[%s4033 + $0x39] sm:$0x1] 0.0
        %4070 = vst [vmem:[%s4033 + $0x69] sm:$0x1] 0.0
        %4071 = vst [vmem:[%s4033 + $0x79] sm:$0x1] 0.0
        %4072 = vst [vmem:[%s4033 + $0x89] sm:$0x1] 0.0
        %4073 = vst [vmem:[%s4033 + $0x99] sm:$0x1] 0.0
        %4074 = vst [vmem:[%s4033 + $0xc9] sm:$0x1] 0.0
        %4075 = vst [vmem:[%s4033 + $0xd9] sm:$0x1] 0.0
        %4076 = vst [vmem:[%s4033 + $0xe9] sm:$0x1] 0.0
        %4077 = vst [vmem:[%s4033 + $0xf9] sm:$0x1] 0.0
        %4078 = vst [vmem:[%s4033 + $0x129] sm:$0x1] 0.0
        %4079 = vst [vmem:[%s4033 + $0x139] sm:$0x1] 0.0
        %4080 = vst [vmem:[%s4033 + $0x149] sm:$0x1] 0.0
        %4081 = vst [vmem:[%s4033 + $0x159] sm:$0x1] 0.0
        %4082 = vst [vmem:[%s4033 + $0x189] sm:$0x1] 0.0
        %4083 = vst [vmem:[%s4033 + $0x199] sm:$0x1] 0.0
        %4084 = vst [vmem:[%s4033 + $0x1a9] sm:$0x1] 0.0
        %4085 = vst [vmem:[%s4033 + $0x1b9] sm:$0x1] 0.0
        %4086 = vst [vmem:[%s4033 + $0x1e9] sm:$0x1] 0.0
        %4087 = vst [vmem:[%s4033 + $0x1f9] sm:$0x1] 0.0
        %4088 = vst [vmem:[%s4033 + $0x209] sm:$0x1] 0.0
        %4089 = vst [vmem:[%s4033 + $0x219] sm:$0x1] 0.0
        %4090 = vst [vmem:[%s4033 + $0x249] sm:$0x1] 0.0
        %4091 = vst [vmem:[%s4033 + $0x259] sm:$0x1] 0.0
        %4092 = vst [vmem:[%s4033 + $0x269] sm:$0x1] 0.0
        %4093 = vst [vmem:[%s4033 + $0x279] sm:$0x1] 0.0
        %4094 = vst [vmem:[%s4033 + $0x2a9] sm:$0x1] 0.0
        %4095 = vst [vmem:[%s4033 + $0x2b9] sm:$0x1] 0.0
        %4096 = vst [vmem:[%s4033 + $0x2c9] sm:$0x1] 0.0
        %4097 = vst [vmem:[%s4033 + $0x2d9] sm:$0x1] 0.0
        %4098 = vst [vmem:[%s4033 + $0x1] sm:$0xff] %v3968
        %4099 = vst [vmem:[%s4033 + $0x11] sm:$0xff] %v3969
        %4100 = vst [vmem:[%s4033 + $0x21] sm:$0xff] %v3970
        %4101 = vst [vmem:[%s4033 + $0x31] sm:$0xff] %v3971
        %4102 = vst [vmem:[%s4033 + $0x61] sm:$0xff] %v3972
        %4103 = vst [vmem:[%s4033 + $0x71] sm:$0xff] %v3973
        %4104 = vst [vmem:[%s4033 + $0x81] sm:$0xff] %v3974
        %4105 = vst [vmem:[%s4033 + $0x91] sm:$0xff] %v3975
        %4106 = vst [vmem:[%s4033 + $0xc1] sm:$0xff] %v3976
        %4107 = vst [vmem:[%s4033 + $0xd1] sm:$0xff] %v3977
        %4108 = vst [vmem:[%s4033 + $0xe1] sm:$0xff] %v3978
        %4109 = vst [vmem:[%s4033 + $0xf1] sm:$0xff] %v3979
        %4110 = vst [vmem:[%s4033 + $0x121] sm:$0xff] %v3980
        %4111 = vst [vmem:[%s4033 + $0x131] sm:$0xff] %v3981
        %4112 = vst [vmem:[%s4033 + $0x141] sm:$0xff] %v3982
        %4113 = vst [vmem:[%s4033 + $0x151] sm:$0xff] %v3983
        %4114 = vst [vmem:[%s4033 + $0x181] sm:$0xff] %v3984
        %4115 = vst [vmem:[%s4033 + $0x191] sm:$0xff] %v3985
        %4116 = vst [vmem:[%s4033 + $0x1a1] sm:$0xff] %v3986
        %4117 = vst [vmem:[%s4033 + $0x1b1] sm:$0xff] %v3987
        %4118 = vst [vmem:[%s4033 + $0x1e1] sm:$0xff] %v3988
        %4119 = vst [vmem:[%s4033 + $0x1f1] sm:$0xff] %v3989
        %4120 = vst [vmem:[%s4033 + $0x201] sm:$0xff] %v3990
        %4121 = vst [vmem:[%s4033 + $0x211] sm:$0xff] %v3991
        %4122 = vst [vmem:[%s4033 + $0x241] sm:$0xff] %v3992
        %4123 = vst [vmem:[%s4033 + $0x251] sm:$0xff] %v3993
        %4124 = vst [vmem:[%s4033 + $0x261] sm:$0xff] %v3994
        %4125 = vst [vmem:[%s4033 + $0x271] sm:$0xff] %v3995
        %4126 = vst [vmem:[%s4033 + $0x2a1] sm:$0xff] %v3996
        %4127 = vst [vmem:[%s4033 + $0x2b1] sm:$0xff] %v3997
        %4128 = vst [vmem:[%s4033 + $0x2c1] sm:$0xff] %v3998
        %4129 = vst [vmem:[%s4033 + $0x2d1] sm:$0xff] %v3999
        %v4130 = vld [vmem:[#allocation2] sm:$0xff]
        %v4131 = vld [vmem:[#allocation2 + $0x10] sm:$0xff]
        %v4132 = vld [vmem:[#allocation2 + $0x20] sm:$0xff]
        %v4133 = vld [vmem:[#allocation2 + $0x30] sm:$0xff]
        %v4134 = vld [vmem:[#allocation2 + $0x60] sm:$0xff]
        %v4135 = vld [vmem:[#allocation2 + $0x70] sm:$0xff]
        %v4136 = vld [vmem:[#allocation2 + $0x80] sm:$0xff]
        %v4137 = vld [vmem:[#allocation2 + $0x90] sm:$0xff]
        %v4138 = vld [vmem:[#allocation2 + $0xc0] sm:$0xff]
        %v4139 = vld [vmem:[#allocation2 + $0xd0] sm:$0xff]
        %v4140 = vld [vmem:[#allocation2 + $0xe0] sm:$0xff]
        %v4141 = vld [vmem:[#allocation2 + $0xf0] sm:$0xff]
        %v4142 = vld [vmem:[#allocation2 + $0x120] sm:$0xff]
        %v4143 = vld [vmem:[#allocation2 + $0x130] sm:$0xff]
        %v4144 = vld [vmem:[#allocation2 + $0x140] sm:$0xff]
        %v4145 = vld [vmem:[#allocation2 + $0x150] sm:$0xff]
        %v4146 = vld [vmem:[#allocation2 + $0x180] sm:$0xff]
        %v4147 = vld [vmem:[#allocation2 + $0x190] sm:$0xff]
        %v4148 = vld [vmem:[#allocation2 + $0x1a0] sm:$0xff]
        %v4149 = vld [vmem:[#allocation2 + $0x1b0] sm:$0xff]
        %v4150 = vld [vmem:[#allocation2 + $0x1e0] sm:$0xff]
        %v4151 = vld [vmem:[#allocation2 + $0x1f0] sm:$0xff]
        %v4152 = vld [vmem:[#allocation2 + $0x200] sm:$0xff]
        %v4153 = vld [vmem:[#allocation2 + $0x210] sm:$0xff]
        %v4154 = vld [vmem:[#allocation2 + $0x240] sm:$0xff]
        %v4155 = vld [vmem:[#allocation2 + $0x250] sm:$0xff]
        %v4156 = vld [vmem:[#allocation2 + $0x260] sm:$0xff]
        %v4157 = vld [vmem:[#allocation2 + $0x270] sm:$0xff]
        %v4158 = vld [vmem:[#allocation2 + $0x2a0] sm:$0xff]
        %v4159 = vld [vmem:[#allocation2 + $0x2b0] sm:$0xff]
        %v4160 = vld [vmem:[#allocation2 + $0x2c0] sm:$0xff]
        %v4161 = vld [vmem:[#allocation2 + $0x2d0] sm:$0xff]
        %v4162 = vpack.c.bf16 %v4130, %v4130
        %v4163 = vpack.c.bf16 %v4131, %v4131
        %v4164 = vpack.c.bf16 %v4132, %v4132
        %v4165 = vpack.c.bf16 %v4133, %v4133
        %v4166 = vpack.c.bf16 %v4134, %v4134
        %v4167 = vpack.c.bf16 %v4135, %v4135
        %v4168 = vpack.c.bf16 %v4136, %v4136
        %v4169 = vpack.c.bf16 %v4137, %v4137
        %v4170 = vpack.c.bf16 %v4138, %v4138
        %v4171 = vpack.c.bf16 %v4139, %v4139
        %v4172 = vpack.c.bf16 %v4140, %v4140
        %v4173 = vpack.c.bf16 %v4141, %v4141
        %v4174 = vpack.c.bf16 %v4142, %v4142
        %v4175 = vpack.c.bf16 %v4143, %v4143
        %v4176 = vpack.c.bf16 %v4144, %v4144
        %v4177 = vpack.c.bf16 %v4145, %v4145
        %v4178 = vpack.c.bf16 %v4146, %v4146
        %v4179 = vpack.c.bf16 %v4147, %v4147
        %v4180 = vpack.c.bf16 %v4148, %v4148
        %v4181 = vpack.c.bf16 %v4149, %v4149
        %v4182 = vpack.c.bf16 %v4150, %v4150
        %v4183 = vpack.c.bf16 %v4151, %v4151
        %v4184 = vpack.c.bf16 %v4152, %v4152
        %v4185 = vpack.c.bf16 %v4153, %v4153
        %v4186 = vpack.c.bf16 %v4154, %v4154
        %v4187 = vpack.c.bf16 %v4155, %v4155
        %v4188 = vpack.c.bf16 %v4156, %v4156
        %v4189 = vpack.c.bf16 %v4157, %v4157
        %v4190 = vpack.c.bf16 %v4158, %v4158
        %v4191 = vpack.c.bf16 %v4159, %v4159
        %v4192 = vpack.c.bf16 %v4160, %v4160
        %v4193 = vpack.c.bf16 %v4161, %v4161
        %v4194 = vld [vmem:[%s2] sm:$0xf]
        %v4195 = vld [vmem:[%s2 + $0x4] sm:$0xf]
        %v4196 = vld [vmem:[%s2 + $0x8] sm:$0xf]
        %v4197 = vld [vmem:[%s2 + $0xc] sm:$0xf]
        %v4198 = vld [vmem:[%s2 + $0x10] sm:$0xf]
        %v4199 = vld [vmem:[%s2 + $0x14] sm:$0xf]
        %v4200 = vld [vmem:[%s2 + $0x18] sm:$0xf]
        %v4201 = vld [vmem:[%s2 + $0x1c] sm:$0xf]
        %v4202 = vld [vmem:[%s2 + $0x20] sm:$0xf]
        %v4203 = vld [vmem:[%s2 + $0x24] sm:$0xf]
        %v4204 = vld [vmem:[%s2 + $0x28] sm:$0xf]
        %v4205 = vld [vmem:[%s2 + $0x2c] sm:$0xf]
        %v4206 = vld [vmem:[%s2 + $0x30] sm:$0xf]
        %v4207 = vld [vmem:[%s2 + $0x34] sm:$0xf]
        %v4208 = vld [vmem:[%s2 + $0x38] sm:$0xf]
        %v4209 = vld [vmem:[%s2 + $0x3c] sm:$0xf]
        %v4210 = vld [vmem:[#allocation2 + $0x1] sm:$0xff]
        %v4211 = vld [vmem:[#allocation2 + $0x11] sm:$0xff]
        %v4212 = vld [vmem:[#allocation2 + $0x21] sm:$0xff]
        %v4213 = vld [vmem:[#allocation2 + $0x31] sm:$0xff]
        %v4214 = vld [vmem:[#allocation2 + $0x61] sm:$0xff]
        %v4215 = vld [vmem:[#allocation2 + $0x71] sm:$0xff]
        %v4216 = vld [vmem:[#allocation2 + $0x81] sm:$0xff]
        %v4217 = vld [vmem:[#allocation2 + $0x91] sm:$0xff]
        %v4218 = vld [vmem:[#allocation2 + $0xc1] sm:$0xff]
        %v4219 = vld [vmem:[#allocation2 + $0xd1] sm:$0xff]
        %v4220 = vld [vmem:[#allocation2 + $0xe1] sm:$0xff]
        %v4221 = vld [vmem:[#allocation2 + $0xf1] sm:$0xff]
        %v4222 = vld [vmem:[#allocation2 + $0x121] sm:$0xff]
        %v4223 = vld [vmem:[#allocation2 + $0x131] sm:$0xff]
        %v4224 = vld [vmem:[#allocation2 + $0x141] sm:$0xff]
        %v4225 = vld [vmem:[#allocation2 + $0x151] sm:$0xff]
        %v4226 = vld [vmem:[#allocation2 + $0x181] sm:$0xff]
        %v4227 = vld [vmem:[#allocation2 + $0x191] sm:$0xff]
        %v4228 = vld [vmem:[#allocation2 + $0x1a1] sm:$0xff]
        %v4229 = vld [vmem:[#allocation2 + $0x1b1] sm:$0xff]
        %v4230 = vld [vmem:[#allocation2 + $0x1e1] sm:$0xff]
        %v4231 = vld [vmem:[#allocation2 + $0x1f1] sm:$0xff]
        %v4232 = vld [vmem:[#allocation2 + $0x201] sm:$0xff]
        %v4233 = vld [vmem:[#allocation2 + $0x211] sm:$0xff]
        %v4234 = vld [vmem:[#allocation2 + $0x241] sm:$0xff]
        %v4235 = vld [vmem:[#allocation2 + $0x251] sm:$0xff]
        %v4236 = vld [vmem:[#allocation2 + $0x261] sm:$0xff]
        %v4237 = vld [vmem:[#allocation2 + $0x271] sm:$0xff]
        %v4238 = vld [vmem:[#allocation2 + $0x2a1] sm:$0xff]
        %v4239 = vld [vmem:[#allocation2 + $0x2b1] sm:$0xff]
        %v4240 = vld [vmem:[#allocation2 + $0x2c1] sm:$0xff]
        %v4241 = vld [vmem:[#allocation2 + $0x2d1] sm:$0xff]
        %v4242 = vpack.c.bf16 %v4210, %v4210
        %v4243 = vpack.c.bf16 %v4211, %v4211
        %v4244 = vpack.c.bf16 %v4212, %v4212
        %v4245 = vpack.c.bf16 %v4213, %v4213
        %v4246 = vpack.c.bf16 %v4214, %v4214
        %v4247 = vpack.c.bf16 %v4215, %v4215
        %v4248 = vpack.c.bf16 %v4216, %v4216
        %v4249 = vpack.c.bf16 %v4217, %v4217
        %v4250 = vpack.c.bf16 %v4218, %v4218
        %v4251 = vpack.c.bf16 %v4219, %v4219
        %v4252 = vpack.c.bf16 %v4220, %v4220
        %v4253 = vpack.c.bf16 %v4221, %v4221
        %v4254 = vpack.c.bf16 %v4222, %v4222
        %v4255 = vpack.c.bf16 %v4223, %v4223
        %v4256 = vpack.c.bf16 %v4224, %v4224
        %v4257 = vpack.c.bf16 %v4225, %v4225
        %v4258 = vpack.c.bf16 %v4226, %v4226
        %v4259 = vpack.c.bf16 %v4227, %v4227
        %v4260 = vpack.c.bf16 %v4228, %v4228
        %v4261 = vpack.c.bf16 %v4229, %v4229
        %v4262 = vpack.c.bf16 %v4230, %v4230
        %v4263 = vpack.c.bf16 %v4231, %v4231
        %v4264 = vpack.c.bf16 %v4232, %v4232
        %v4265 = vpack.c.bf16 %v4233, %v4233
        %v4266 = vpack.c.bf16 %v4234, %v4234
        %v4267 = vpack.c.bf16 %v4235, %v4235
        %v4268 = vpack.c.bf16 %v4236, %v4236
        %v4269 = vpack.c.bf16 %v4237, %v4237
        %v4270 = vpack.c.bf16 %v4238, %v4238
        %v4271 = vpack.c.bf16 %v4239, %v4239
        %v4272 = vpack.c.bf16 %v4240, %v4240
        %v4273 = vpack.c.bf16 %v4241, %v4241
        %s4274 = scalar_lea.vmem %s2, 64
        %v4275 = vld [vmem:[%s4274] sm:$0xf]
        %v4276 = vld [vmem:[%s4274 + $0x4] sm:$0xf]
        %v4277 = vld [vmem:[%s4274 + $0x8] sm:$0xf]
        %v4278 = vld [vmem:[%s4274 + $0xc] sm:$0xf]
        %v4279 = vld [vmem:[%s4274 + $0x10] sm:$0xf]
        %v4280 = vld [vmem:[%s4274 + $0x14] sm:$0xf]
        %v4281 = vld [vmem:[%s4274 + $0x18] sm:$0xf]
        %v4282 = vld [vmem:[%s4274 + $0x1c] sm:$0xf]
        %v4283 = vld [vmem:[%s4274 + $0x20] sm:$0xf]
        %v4284 = vld [vmem:[%s4274 + $0x24] sm:$0xf]
        %v4285 = vld [vmem:[%s4274 + $0x28] sm:$0xf]
        %v4286 = vld [vmem:[%s4274 + $0x2c] sm:$0xf]
        %v4287 = vld [vmem:[%s4274 + $0x30] sm:$0xf]
        %v4288 = vld [vmem:[%s4274 + $0x34] sm:$0xf]
        %v4289 = vld [vmem:[%s4274 + $0x38] sm:$0xf]
        %v4290 = vld [vmem:[%s4274 + $0x3c] sm:$0xf]
        %v4323 = vunpack.c.l.b16 %v4242
        %v4324 = vunpack.c.l.b16 %v4243
        %v4325 = vunpack.c.l.b16 %v4244
        %v4326 = vunpack.c.l.b16 %v4245
        %v4327 = vunpack.c.l.b16 %v4246
        %v4328 = vunpack.c.l.b16 %v4247
        %v4329 = vunpack.c.l.b16 %v4248
        %v4330 = vunpack.c.l.b16 %v4249
        %v4331 = vunpack.c.l.b16 %v4250
        %v4332 = vunpack.c.l.b16 %v4251
        %v4333 = vunpack.c.l.b16 %v4252
        %v4334 = vunpack.c.l.b16 %v4253
        %v4335 = vunpack.c.l.b16 %v4254
        %v4336 = vunpack.c.l.b16 %v4255
        %v4337 = vunpack.c.l.b16 %v4256
        %v4338 = vunpack.c.l.b16 %v4257
        %v4339 = vunpack.c.l.b16 %v4258
        %v4340 = vunpack.c.l.b16 %v4259
        %v4341 = vunpack.c.l.b16 %v4260
        %v4342 = vunpack.c.l.b16 %v4261
        %v4343 = vunpack.c.l.b16 %v4262
        %v4344 = vunpack.c.l.b16 %v4263
        %v4345 = vunpack.c.l.b16 %v4264
        %v4346 = vunpack.c.l.b16 %v4265
        %v4347 = vunpack.c.l.b16 %v4266
        %v4348 = vunpack.c.l.b16 %v4267
        %v4349 = vunpack.c.l.b16 %v4268
        %v4350 = vunpack.c.l.b16 %v4269
        %v4351 = vunpack.c.l.b16 %v4270
        %v4352 = vunpack.c.l.b16 %v4271
        %v4353 = vunpack.c.l.b16 %v4272
        %v4354 = vunpack.c.l.b16 %v4273
        %v4355 = vpack.c.b16 %v4324, %v4323
        %v4356 = vpack.c.b16 %v4326, %v4325
        %v4357 = vpack.c.b16 %v4328, %v4327
        %v4358 = vpack.c.b16 %v4330, %v4329
        %v4359 = vpack.c.b16 %v4332, %v4331
        %v4360 = vpack.c.b16 %v4334, %v4333
        %v4361 = vpack.c.b16 %v4336, %v4335
        %v4362 = vpack.c.b16 %v4338, %v4337
        %v4363 = vpack.c.b16 %v4340, %v4339
        %v4364 = vpack.c.b16 %v4342, %v4341
        %v4365 = vpack.c.b16 %v4344, %v4343
        %v4366 = vpack.c.b16 %v4346, %v4345
        %v4367 = vpack.c.b16 %v4348, %v4347
        %v4368 = vpack.c.b16 %v4350, %v4349
        %v4369 = vpack.c.b16 %v4352, %v4351
        %v4370 = vpack.c.b16 %v4354, %v4353
        %v4403 = vunpack.c.l.b16 %v4275
        %v4404 = vunpack.c.l.b16 %v4276
        %v4405 = vunpack.c.l.b16 %v4277
        %v4406 = vunpack.c.l.b16 %v4278
        %v4407 = vunpack.c.l.b16 %v4279
        %v4408 = vunpack.c.l.b16 %v4280
        %v4409 = vunpack.c.l.b16 %v4281
        %v4410 = vunpack.c.l.b16 %v4282
        %v4411 = vunpack.c.l.b16 %v4283
        %v4412 = vunpack.c.l.b16 %v4284
        %v4413 = vunpack.c.l.b16 %v4285
        %v4414 = vunpack.c.l.b16 %v4286
        %v4415 = vunpack.c.l.b16 %v4287
        %v4416 = vunpack.c.l.b16 %v4288
        %v4417 = vunpack.c.l.b16 %v4289
        %v4418 = vunpack.c.l.b16 %v4290
        %v4419 = vpack.c.b16 %v4404, %v4403
        %v4420 = vpack.c.b16 %v4406, %v4405
        %v4421 = vpack.c.b16 %v4408, %v4407
        %v4422 = vpack.c.b16 %v4410, %v4409
        %v4423 = vpack.c.b16 %v4412, %v4411
        %v4424 = vpack.c.b16 %v4414, %v4413
        %v4425 = vpack.c.b16 %v4416, %v4415
        %v4426 = vpack.c.b16 %v4418, %v4417
        %4435 = vmatprep.subr.bf16.mxu0 0
        %4436 = vmatpush1.bf16.msra.mxu0 %v4419
        %4437 = vmatprep.subr.bf16.mxu0 0
        %4438 = vmatpush1.bf16.msra.mxu0 %v4420
        %4439 = vmatprep.subr.bf16.mxu0 0
        %4440 = vmatpush1.bf16.msra.mxu0 %v4421
        %4441 = vmatprep.subr.bf16.mxu0 0
        %4442 = vmatpush1.bf16.msra.mxu0 %v4422
        %4443 = vmatprep.subr.bf16.mxu0 0
        %4444 = vmatpush1.bf16.msra.mxu0 %v4423
        %4445 = vmatprep.subr.bf16.mxu0 0
        %4446 = vmatpush1.bf16.msra.mxu0 %v4424
        %4447 = vmatprep.subr.bf16.mxu0 0
        %4448 = vmatpush1.bf16.msra.mxu0 %v4425
        %4449 = vmatprep.subr.bf16.mxu0 0
        %4450 = vmatpush1.bf16.msra.mxu0 %v4426
        %4451 = vmatprep.subr.bf16.mxu0 0
        %4452 = vmatpush1.bf16.msra.mxu0 0
        %4453 = vmatprep.subr.bf16.mxu0 0
        %4454 = vmatpush1.bf16.msra.mxu0 0
        %4455 = vmatprep.subr.bf16.mxu0 0
        %4456 = vmatpush1.bf16.msra.mxu0 0
        %4457 = vmatprep.subr.bf16.mxu0 0
        %4458 = vmatpush1.bf16.msra.mxu0 0
        %4459 = vmatprep.subr.bf16.mxu0 0
        %4460 = vmatpush1.bf16.msra.mxu0 0
        %4461 = vmatprep.subr.bf16.mxu0 0
        %4462 = vmatpush1.bf16.msra.mxu0 0
        %4463 = vmatprep.subr.bf16.mxu0 0
        %4464 = vmatpush1.bf16.msra.mxu0 0
        %4465 = vmatprep.subr.bf16.mxu0 0
        %4466 = vmatpush1.bf16.msra.mxu0 0
        %4467 = vmatprep.mubr.bf16.mxu0 0
        %4468 = vmatmul.mubr.bf16.gmra.mrb[0].mxu0 %v4355
        %v4469 = vpop.f32.mrb[0].mxu0
        %v4470 = vadd.f32 0.0, %v4469
        %v4471 = vpop.f32.mrb[0].mxu0
        %v4472 = vpop.f32.mrb[0].mxu0
        %v4473 = vadd.f32 0.0, %v4472
        %v4474 = vpop.f32.mrb[0].mxu0
        %4475 = vmatprep.mubr.bf16.mxu0 0
        %4476 = vmatmul.mubr.bf16.gmra.mrb[0].mxu0 %v4356
        %v4477 = vpop.f32.mrb[0].mxu0
        %v4478 = vadd.f32 0.0, %v4477
        %v4479 = vpop.f32.mrb[0].mxu0
        %v4480 = vpop.f32.mrb[0].mxu0
        %v4481 = vadd.f32 0.0, %v4480
        %v4482 = vpop.f32.mrb[0].mxu0
        %4483 = vmatprep.mubr.bf16.mxu0 0
        %4484 = vmatmul.mubr.bf16.gmra.mrb[0].mxu0 %v4357
        %v4485 = vpop.f32.mrb[0].mxu0
        %v4486 = vadd.f32 0.0, %v4485
        %v4487 = vpop.f32.mrb[0].mxu0
        %v4488 = vpop.f32.mrb[0].mxu0
        %v4489 = vadd.f32 0.0, %v4488
        %v4490 = vpop.f32.mrb[0].mxu0
        %4491 = vmatprep.mubr.bf16.mxu0 0
        %4492 = vmatmul.mubr.bf16.gmra.mrb[0].mxu0 %v4358
        %v4493 = vpop.f32.mrb[0].mxu0
        %v4494 = vadd.f32 0.0, %v4493
        %v4495 = vpop.f32.mrb[0].mxu0
        %v4496 = vpop.f32.mrb[0].mxu0
        %v4497 = vadd.f32 0.0, %v4496
        %v4498 = vpop.f32.mrb[0].mxu0
        %4499 = vmatprep.mubr.bf16.mxu0 0
        %4500 = vmatmul.mubr.bf16.gmra.mrb[0].mxu0 %v4359
        %v4501 = vpop.f32.mrb[0].mxu0
        %v4502 = vadd.f32 0.0, %v4501
        %v4503 = vpop.f32.mrb[0].mxu0
        %v4504 = vpop.f32.mrb[0].mxu0
        %v4505 = vadd.f32 0.0, %v4504
        %v4506 = vpop.f32.mrb[0].mxu0
        %4507 = vmatprep.mubr.bf16.mxu0 0
        %4508 = vmatmul.mubr.bf16.gmra.mrb[0].mxu0 %v4360
        %v4509 = vpop.f32.mrb[0].mxu0
        %v4510 = vadd.f32 0.0, %v4509
        %v4511 = vpop.f32.mrb[0].mxu0
        %v4512 = vpop.f32.mrb[0].mxu0
        %v4513 = vadd.f32 0.0, %v4512
        %v4514 = vpop.f32.mrb[0].mxu0
        %4515 = vmatprep.mubr.bf16.mxu0 0
        %4516 = vmatmul.mubr.bf16.gmra.mrb[0].mxu0 %v4361
        %v4517 = vpop.f32.mrb[0].mxu0
        %v4518 = vadd.f32 0.0, %v4517
        %v4519 = vpop.f32.mrb[0].mxu0
        %v4520 = vpop.f32.mrb[0].mxu0
        %v4521 = vadd.f32 0.0, %v4520
        %v4522 = vpop.f32.mrb[0].mxu0
        %4523 = vmatprep.mubr.bf16.mxu0 0
        %4524 = vmatmul.mubr.bf16.gmra.mrb[0].mxu0 %v4362
        %v4525 = vpop.f32.mrb[0].mxu0
        %v4526 = vadd.f32 0.0, %v4525
        %v4527 = vpop.f32.mrb[0].mxu0
        %v4528 = vpop.f32.mrb[0].mxu0
        %v4529 = vadd.f32 0.0, %v4528
        %v4530 = vpop.f32.mrb[0].mxu0
        %4531 = vmatprep.mubr.bf16.mxu0 0
        %4532 = vmatmul.mubr.bf16.gmra.mrb[0].mxu0 %v4363
        %v4533 = vpop.f32.mrb[0].mxu0
        %v4534 = vadd.f32 0.0, %v4533
        %v4535 = vpop.f32.mrb[0].mxu0
        %v4536 = vpop.f32.mrb[0].mxu0
        %v4537 = vadd.f32 0.0, %v4536
        %v4538 = vpop.f32.mrb[0].mxu0
        %4539 = vmatprep.mubr.bf16.mxu0 0
        %4540 = vmatmul.mubr.bf16.gmra.mrb[0].mxu0 %v4364
        %v4541 = vpop.f32.mrb[0].mxu0
        %v4542 = vadd.f32 0.0, %v4541
        %v4543 = vpop.f32.mrb[0].mxu0
        %v4544 = vpop.f32.mrb[0].mxu0
        %v4545 = vadd.f32 0.0, %v4544
        %v4546 = vpop.f32.mrb[0].mxu0
        %4547 = vmatprep.mubr.bf16.mxu0 0
        %4548 = vmatmul.mubr.bf16.gmra.mrb[0].mxu0 %v4365
        %v4549 = vpop.f32.mrb[0].mxu0
        %v4550 = vadd.f32 0.0, %v4549
        %v4551 = vpop.f32.mrb[0].mxu0
        %v4552 = vpop.f32.mrb[0].mxu0
        %v4553 = vadd.f32 0.0, %v4552
        %v4554 = vpop.f32.mrb[0].mxu0
        %4555 = vmatprep.mubr.bf16.mxu0 0
        %4556 = vmatmul.mubr.bf16.gmra.mrb[0].mxu0 %v4366
        %v4557 = vpop.f32.mrb[0].mxu0
        %v4558 = vadd.f32 0.0, %v4557
        %v4559 = vpop.f32.mrb[0].mxu0
        %v4560 = vpop.f32.mrb[0].mxu0
        %v4561 = vadd.f32 0.0, %v4560
        %v4562 = vpop.f32.mrb[0].mxu0
        %4563 = vmatprep.mubr.bf16.mxu0 0
        %4564 = vmatmul.mubr.bf16.gmra.mrb[0].mxu0 %v4367
        %v4565 = vpop.f32.mrb[0].mxu0
        %v4566 = vadd.f32 0.0, %v4565
        %v4567 = vpop.f32.mrb[0].mxu0
        %v4568 = vpop.f32.mrb[0].mxu0
        %v4569 = vadd.f32 0.0, %v4568
        %v4570 = vpop.f32.mrb[0].mxu0
        %4571 = vmatprep.mubr.bf16.mxu0 0
        %4572 = vmatmul.mubr.bf16.gmra.mrb[0].mxu0 %v4368
        %v4573 = vpop.f32.mrb[0].mxu0
        %v4574 = vadd.f32 0.0, %v4573
        %v4575 = vpop.f32.mrb[0].mxu0
        %v4576 = vpop.f32.mrb[0].mxu0
        %v4577 = vadd.f32 0.0, %v4576
        %v4578 = vpop.f32.mrb[0].mxu0
        %4579 = vmatprep.mubr.bf16.mxu0 0
        %4580 = vmatmul.mubr.bf16.gmra.mrb[0].mxu0 %v4369
        %v4581 = vpop.f32.mrb[0].mxu0
        %v4582 = vadd.f32 0.0, %v4581
        %v4583 = vpop.f32.mrb[0].mxu0
        %v4584 = vpop.f32.mrb[0].mxu0
        %v4585 = vadd.f32 0.0, %v4584
        %v4586 = vpop.f32.mrb[0].mxu0
        %4587 = vmatprep.mubr.bf16.mxu0 0
        %4588 = vmatmul.mubr.bf16.gmra.mrb[0].mxu0 %v4370
        %v4589 = vpop.f32.mrb[0].mxu0
        %v4590 = vadd.f32 0.0, %v4589
        %v4591 = vpop.f32.mrb[0].mxu0
        %v4592 = vpop.f32.mrb[0].mxu0
        %v4593 = vadd.f32 0.0, %v4592
        %v4594 = vpop.f32.mrb[0].mxu0
        %4595 = vdwg.mxu0
        %v4628 = vunpack.c.l.b16 %v4162
        %v4629 = vunpack.c.l.b16 %v4163
        %v4630 = vunpack.c.l.b16 %v4164
        %v4631 = vunpack.c.l.b16 %v4165
        %v4632 = vunpack.c.l.b16 %v4166
        %v4633 = vunpack.c.l.b16 %v4167
        %v4634 = vunpack.c.l.b16 %v4168
        %v4635 = vunpack.c.l.b16 %v4169
        %v4636 = vunpack.c.l.b16 %v4170
        %v4637 = vunpack.c.l.b16 %v4171
        %v4638 = vunpack.c.l.b16 %v4172
        %v4639 = vunpack.c.l.b16 %v4173
        %v4640 = vunpack.c.l.b16 %v4174
        %v4641 = vunpack.c.l.b16 %v4175
        %v4642 = vunpack.c.l.b16 %v4176
        %v4643 = vunpack.c.l.b16 %v4177
        %v4644 = vunpack.c.l.b16 %v4178
        %v4645 = vunpack.c.l.b16 %v4179
        %v4646 = vunpack.c.l.b16 %v4180
        %v4647 = vunpack.c.l.b16 %v4181
        %v4648 = vunpack.c.l.b16 %v4182
        %v4649 = vunpack.c.l.b16 %v4183
        %v4650 = vunpack.c.l.b16 %v4184
        %v4651 = vunpack.c.l.b16 %v4185
        %v4652 = vunpack.c.l.b16 %v4186
        %v4653 = vunpack.c.l.b16 %v4187
        %v4654 = vunpack.c.l.b16 %v4188
        %v4655 = vunpack.c.l.b16 %v4189
        %v4656 = vunpack.c.l.b16 %v4190
        %v4657 = vunpack.c.l.b16 %v4191
        %v4658 = vunpack.c.l.b16 %v4192
        %v4659 = vunpack.c.l.b16 %v4193
        %v4660 = vpack.c.b16 %v4629, %v4628
        %v4661 = vpack.c.b16 %v4631, %v4630
        %v4662 = vpack.c.b16 %v4633, %v4632
        %v4663 = vpack.c.b16 %v4635, %v4634
        %v4664 = vpack.c.b16 %v4637, %v4636
        %v4665 = vpack.c.b16 %v4639, %v4638
        %v4666 = vpack.c.b16 %v4641, %v4640
        %v4667 = vpack.c.b16 %v4643, %v4642
        %v4668 = vpack.c.b16 %v4645, %v4644
        %v4669 = vpack.c.b16 %v4647, %v4646
        %v4670 = vpack.c.b16 %v4649, %v4648
        %v4671 = vpack.c.b16 %v4651, %v4650
        %v4672 = vpack.c.b16 %v4653, %v4652
        %v4673 = vpack.c.b16 %v4655, %v4654
        %v4674 = vpack.c.b16 %v4657, %v4656
        %v4675 = vpack.c.b16 %v4659, %v4658
        %v4708 = vunpack.c.l.b16 %v4194
        %v4709 = vunpack.c.l.b16 %v4195
        %v4710 = vunpack.c.l.b16 %v4196
        %v4711 = vunpack.c.l.b16 %v4197
        %v4712 = vunpack.c.l.b16 %v4198
        %v4713 = vunpack.c.l.b16 %v4199
        %v4714 = vunpack.c.l.b16 %v4200
        %v4715 = vunpack.c.l.b16 %v4201
        %v4716 = vunpack.c.l.b16 %v4202
        %v4717 = vunpack.c.l.b16 %v4203
        %v4718 = vunpack.c.l.b16 %v4204
        %v4719 = vunpack.c.l.b16 %v4205
        %v4720 = vunpack.c.l.b16 %v4206
        %v4721 = vunpack.c.l.b16 %v4207
        %v4722 = vunpack.c.l.b16 %v4208
        %v4723 = vunpack.c.l.b16 %v4209
        %v4724 = vpack.c.b16 %v4709, %v4708
        %v4725 = vpack.c.b16 %v4711, %v4710
        %v4726 = vpack.c.b16 %v4713, %v4712
        %v4727 = vpack.c.b16 %v4715, %v4714
        %v4728 = vpack.c.b16 %v4717, %v4716
        %v4729 = vpack.c.b16 %v4719, %v4718
        %v4730 = vpack.c.b16 %v4721, %v4720
        %v4731 = vpack.c.b16 %v4723, %v4722
        %4740 = vmatprep.subr.bf16.mxu0 0
        %4741 = vmatpush1.bf16.msra.mxu0 %v4724
        %4742 = vmatprep.subr.bf16.mxu0 0
        %4743 = vmatpush1.bf16.msra.mxu0 %v4725
        %4744 = vmatprep.subr.bf16.mxu0 0
        %4745 = vmatpush1.bf16.msra.mxu0 %v4726
        %4746 = vmatprep.subr.bf16.mxu0 0
        %4747 = vmatpush1.bf16.msra.mxu0 %v4727
        %4748 = vmatprep.subr.bf16.mxu0 0
        %4749 = vmatpush1.bf16.msra.mxu0 %v4728
        %4750 = vmatprep.subr.bf16.mxu0 0
        %4751 = vmatpush1.bf16.msra.mxu0 %v4729
        %4752 = vmatprep.subr.bf16.mxu0 0
        %4753 = vmatpush1.bf16.msra.mxu0 %v4730
        %4754 = vmatprep.subr.bf16.mxu0 0
        %4755 = vmatpush1.bf16.msra.mxu0 %v4731
        %4756 = vmatprep.subr.bf16.mxu0 0
        %4757 = vmatpush1.bf16.msra.mxu0 0
        %4758 = vmatprep.subr.bf16.mxu0 0
        %4759 = vmatpush1.bf16.msra.mxu0 0
        %4760 = vmatprep.subr.bf16.mxu0 0
        %4761 = vmatpush1.bf16.msra.mxu0 0
        %4762 = vmatprep.subr.bf16.mxu0 0
        %4763 = vmatpush1.bf16.msra.mxu0 0
        %4764 = vmatprep.subr.bf16.mxu0 0
        %4765 = vmatpush1.bf16.msra.mxu0 0
        %4766 = vmatprep.subr.bf16.mxu0 0
        %4767 = vmatpush1.bf16.msra.mxu0 0
        %4768 = vmatprep.subr.bf16.mxu0 0
        %4769 = vmatpush1.bf16.msra.mxu0 0
        %4770 = vmatprep.subr.bf16.mxu0 0
        %4771 = vmatpush1.bf16.msra.mxu0 0
        %4772 = vmatprep.mubr.bf16.mxu0 0
        %4773 = vmatmul.mubr.bf16.gmra.mrb[0].mxu0 %v4660
        %v4774 = vpop.f32.mrb[0].mxu0
        %v4775 = vadd.f32 %v4470, %v4774
        %v4776 = vpop.f32.mrb[0].mxu0
        %v4777 = vpop.f32.mrb[0].mxu0
        %v4778 = vadd.f32 %v4473, %v4777
        %v4779 = vpop.f32.mrb[0].mxu0
        %4780 = vmatprep.mubr.bf16.mxu0 0
        %4781 = vmatmul.mubr.bf16.gmra.mrb[0].mxu0 %v4661
        %v4782 = vpop.f32.mrb[0].mxu0
        %v4783 = vadd.f32 %v4478, %v4782
        %v4784 = vpop.f32.mrb[0].mxu0
        %v4785 = vpop.f32.mrb[0].mxu0
        %v4786 = vadd.f32 %v4481, %v4785
        %v4787 = vpop.f32.mrb[0].mxu0
        %4788 = vmatprep.mubr.bf16.mxu0 0
        %4789 = vmatmul.mubr.bf16.gmra.mrb[0].mxu0 %v4662
        %v4790 = vpop.f32.mrb[0].mxu0
        %v4791 = vadd.f32 %v4486, %v4790
        %v4792 = vpop.f32.mrb[0].mxu0
        %v4793 = vpop.f32.mrb[0].mxu0
        %v4794 = vadd.f32 %v4489, %v4793
        %v4795 = vpop.f32.mrb[0].mxu0
        %4796 = vmatprep.mubr.bf16.mxu0 0
        %4797 = vmatmul.mubr.bf16.gmra.mrb[0].mxu0 %v4663
        %v4798 = vpop.f32.mrb[0].mxu0
        %v4799 = vadd.f32 %v4494, %v4798
        %v4800 = vpop.f32.mrb[0].mxu0
        %v4801 = vpop.f32.mrb[0].mxu0
        %v4802 = vadd.f32 %v4497, %v4801
        %v4803 = vpop.f32.mrb[0].mxu0
        %4804 = vmatprep.mubr.bf16.mxu0 0
        %4805 = vmatmul.mubr.bf16.gmra.mrb[0].mxu0 %v4664
        %v4806 = vpop.f32.mrb[0].mxu0
        %v4807 = vadd.f32 %v4502, %v4806
        %v4808 = vpop.f32.mrb[0].mxu0
        %v4809 = vpop.f32.mrb[0].mxu0
        %v4810 = vadd.f32 %v4505, %v4809
        %v4811 = vpop.f32.mrb[0].mxu0
        %4812 = vmatprep.mubr.bf16.mxu0 0
        %4813 = vmatmul.mubr.bf16.gmra.mrb[0].mxu0 %v4665
        %v4814 = vpop.f32.mrb[0].mxu0
        %v4815 = vadd.f32 %v4510, %v4814
        %v4816 = vpop.f32.mrb[0].mxu0
        %v4817 = vpop.f32.mrb[0].mxu0
        %v4818 = vadd.f32 %v4513, %v4817
        %v4819 = vpop.f32.mrb[0].mxu0
        %4820 = vmatprep.mubr.bf16.mxu0 0
        %4821 = vmatmul.mubr.bf16.gmra.mrb[0].mxu0 %v4666
        %v4822 = vpop.f32.mrb[0].mxu0
        %v4823 = vadd.f32 %v4518, %v4822
        %v4824 = vpop.f32.mrb[0].mxu0
        %v4825 = vpop.f32.mrb[0].mxu0
        %v4826 = vadd.f32 %v4521, %v4825
        %v4827 = vpop.f32.mrb[0].mxu0
        %4828 = vmatprep.mubr.bf16.mxu0 0
        %4829 = vmatmul.mubr.bf16.gmra.mrb[0].mxu0 %v4667
        %v4830 = vpop.f32.mrb[0].mxu0
        %v4831 = vadd.f32 %v4526, %v4830
        %v4832 = vpop.f32.mrb[0].mxu0
        %v4833 = vpop.f32.mrb[0].mxu0
        %v4834 = vadd.f32 %v4529, %v4833
        %v4835 = vpop.f32.mrb[0].mxu0
        %4836 = vmatprep.mubr.bf16.mxu0 0
        %4837 = vmatmul.mubr.bf16.gmra.mrb[0].mxu0 %v4668
        %v4838 = vpop.f32.mrb[0].mxu0
        %v4839 = vadd.f32 %v4534, %v4838
        %v4840 = vpop.f32.mrb[0].mxu0
        %v4841 = vpop.f32.mrb[0].mxu0
        %v4842 = vadd.f32 %v4537, %v4841
        %v4843 = vpop.f32.mrb[0].mxu0
        %4844 = vmatprep.mubr.bf16.mxu0 0
        %4845 = vmatmul.mubr.bf16.gmra.mrb[0].mxu0 %v4669
        %v4846 = vpop.f32.mrb[0].mxu0
        %v4847 = vadd.f32 %v4542, %v4846
        %v4848 = vpop.f32.mrb[0].mxu0
        %v4849 = vpop.f32.mrb[0].mxu0
        %v4850 = vadd.f32 %v4545, %v4849
        %v4851 = vpop.f32.mrb[0].mxu0
        %4852 = vmatprep.mubr.bf16.mxu0 0
        %4853 = vmatmul.mubr.bf16.gmra.mrb[0].mxu0 %v4670
        %v4854 = vpop.f32.mrb[0].mxu0
        %v4855 = vadd.f32 %v4550, %v4854
        %v4856 = vpop.f32.mrb[0].mxu0
        %v4857 = vpop.f32.mrb[0].mxu0
        %v4858 = vadd.f32 %v4553, %v4857
        %v4859 = vpop.f32.mrb[0].mxu0
        %4860 = vmatprep.mubr.bf16.mxu0 0
        %4861 = vmatmul.mubr.bf16.gmra.mrb[0].mxu0 %v4671
        %v4862 = vpop.f32.mrb[0].mxu0
        %v4863 = vadd.f32 %v4558, %v4862
        %v4864 = vpop.f32.mrb[0].mxu0
        %v4865 = vpop.f32.mrb[0].mxu0
        %v4866 = vadd.f32 %v4561, %v4865
        %v4867 = vpop.f32.mrb[0].mxu0
        %4868 = vmatprep.mubr.bf16.mxu0 0
        %4869 = vmatmul.mubr.bf16.gmra.mrb[0].mxu0 %v4672
        %v4870 = vpop.f32.mrb[0].mxu0
        %v4871 = vadd.f32 %v4566, %v4870
        %v4872 = vpop.f32.mrb[0].mxu0
        %v4873 = vpop.f32.mrb[0].mxu0
        %v4874 = vadd.f32 %v4569, %v4873
        %v4875 = vpop.f32.mrb[0].mxu0
        %4876 = vmatprep.mubr.bf16.mxu0 0
        %4877 = vmatmul.mubr.bf16.gmra.mrb[0].mxu0 %v4673
        %v4878 = vpop.f32.mrb[0].mxu0
        %v4879 = vadd.f32 %v4574, %v4878
        %v4880 = vpop.f32.mrb[0].mxu0
        %v4881 = vpop.f32.mrb[0].mxu0
        %v4882 = vadd.f32 %v4577, %v4881
        %v4883 = vpop.f32.mrb[0].mxu0
        %4884 = vmatprep.mubr.bf16.mxu0 0
        %4885 = vmatmul.mubr.bf16.gmra.mrb[0].mxu0 %v4674
        %v4886 = vpop.f32.mrb[0].mxu0
        %v4887 = vadd.f32 %v4582, %v4886
        %v4888 = vpop.f32.mrb[0].mxu0
        %v4889 = vpop.f32.mrb[0].mxu0
        %v4890 = vadd.f32 %v4585, %v4889
        %v4891 = vpop.f32.mrb[0].mxu0
        %4892 = vmatprep.mubr.bf16.mxu0 0
        %4893 = vmatmul.mubr.bf16.gmra.mrb[0].mxu0 %v4675
        %v4894 = vpop.f32.mrb[0].mxu0
        %v4895 = vadd.f32 %v4590, %v4894
        %v4896 = vpop.f32.mrb[0].mxu0
        %v4897 = vpop.f32.mrb[0].mxu0
        %v4898 = vadd.f32 %v4593, %v4897
        %v4899 = vpop.f32.mrb[0].mxu0
        %4900 = vdwg.mxu0
        %v4901 = vld [vmem:[#allocation2 + $0x2] sm:$0xff]
        %v4902 = vld [vmem:[#allocation2 + $0x12] sm:$0xff]
        %v4903 = vld [vmem:[#allocation2 + $0x22] sm:$0xff]
        %v4904 = vld [vmem:[#allocation2 + $0x32] sm:$0xff]
        %v4905 = vld [vmem:[#allocation2 + $0x62] sm:$0xff]
        %v4906 = vld [vmem:[#allocation2 + $0x72] sm:$0xff]
        %v4907 = vld [vmem:[#allocation2 + $0x82] sm:$0xff]
        %v4908 = vld [vmem:[#allocation2 + $0x92] sm:$0xff]
        %v4909 = vld [vmem:[#allocation2 + $0xc2] sm:$0xff]
        %v4910 = vld [vmem:[#allocation2 + $0xd2] sm:$0xff]
        %v4911 = vld [vmem:[#allocation2 + $0xe2] sm:$0xff]
        %v4912 = vld [vmem:[#allocation2 + $0xf2] sm:$0xff]
        %v4913 = vld [vmem:[#allocation2 + $0x122] sm:$0xff]
        %v4914 = vld [vmem:[#allocation2 + $0x132] sm:$0xff]
        %v4915 = vld [vmem:[#allocation2 + $0x142] sm:$0xff]
        %v4916 = vld [vmem:[#allocation2 + $0x152] sm:$0xff]
        %v4917 = vld [vmem:[#allocation2 + $0x182] sm:$0xff]
        %v4918 = vld [vmem:[#allocation2 + $0x192] sm:$0xff]
        %v4919 = vld [vmem:[#allocation2 + $0x1a2] sm:$0xff]
        %v4920 = vld [vmem:[#allocation2 + $0x1b2] sm:$0xff]
        %v4921 = vld [vmem:[#allocation2 + $0x1e2] sm:$0xff]
        %v4922 = vld [vmem:[#allocation2 + $0x1f2] sm:$0xff]
        %v4923 = vld [vmem:[#allocation2 + $0x202] sm:$0xff]
        %v4924 = vld [vmem:[#allocation2 + $0x212] sm:$0xff]
        %v4925 = vld [vmem:[#allocation2 + $0x242] sm:$0xff]
        %v4926 = vld [vmem:[#allocation2 + $0x252] sm:$0xff]
        %v4927 = vld [vmem:[#allocation2 + $0x262] sm:$0xff]
        %v4928 = vld [vmem:[#allocation2 + $0x272] sm:$0xff]
        %v4929 = vld [vmem:[#allocation2 + $0x2a2] sm:$0xff]
        %v4930 = vld [vmem:[#allocation2 + $0x2b2] sm:$0xff]
        %v4931 = vld [vmem:[#allocation2 + $0x2c2] sm:$0xff]
        %v4932 = vld [vmem:[#allocation2 + $0x2d2] sm:$0xff]
        %v4933 = vpack.c.bf16 %v4901, %v4901
        %v4934 = vpack.c.bf16 %v4902, %v4902
        %v4935 = vpack.c.bf16 %v4903, %v4903
        %v4936 = vpack.c.bf16 %v4904, %v4904
        %v4937 = vpack.c.bf16 %v4905, %v4905
        %v4938 = vpack.c.bf16 %v4906, %v4906
        %v4939 = vpack.c.bf16 %v4907, %v4907
        %v4940 = vpack.c.bf16 %v4908, %v4908
        %v4941 = vpack.c.bf16 %v4909, %v4909
        %v4942 = vpack.c.bf16 %v4910, %v4910
        %v4943 = vpack.c.bf16 %v4911, %v4911
        %v4944 = vpack.c.bf16 %v4912, %v4912
        %v4945 = vpack.c.bf16 %v4913, %v4913
        %v4946 = vpack.c.bf16 %v4914, %v4914
        %v4947 = vpack.c.bf16 %v4915, %v4915
        %v4948 = vpack.c.bf16 %v4916, %v4916
        %v4949 = vpack.c.bf16 %v4917, %v4917
        %v4950 = vpack.c.bf16 %v4918, %v4918
        %v4951 = vpack.c.bf16 %v4919, %v4919
        %v4952 = vpack.c.bf16 %v4920, %v4920
        %v4953 = vpack.c.bf16 %v4921, %v4921
        %v4954 = vpack.c.bf16 %v4922, %v4922
        %v4955 = vpack.c.bf16 %v4923, %v4923
        %v4956 = vpack.c.bf16 %v4924, %v4924
        %v4957 = vpack.c.bf16 %v4925, %v4925
        %v4958 = vpack.c.bf16 %v4926, %v4926
        %v4959 = vpack.c.bf16 %v4927, %v4927
        %v4960 = vpack.c.bf16 %v4928, %v4928
        %v4961 = vpack.c.bf16 %v4929, %v4929
        %v4962 = vpack.c.bf16 %v4930, %v4930
        %v4963 = vpack.c.bf16 %v4931, %v4931
        %v4964 = vpack.c.bf16 %v4932, %v4932
        %s4965 = scalar_lea.vmem %s2, 128
        %v4966 = vld [vmem:[%s4965] sm:$0xf]
        %v4967 = vld [vmem:[%s4965 + $0x4] sm:$0xf]
        %v4968 = vld [vmem:[%s4965 + $0x8] sm:$0xf]
        %v4969 = vld [vmem:[%s4965 + $0xc] sm:$0xf]
        %v4970 = vld [vmem:[%s4965 + $0x10] sm:$0xf]
        %v4971 = vld [vmem:[%s4965 + $0x14] sm:$0xf]
        %v4972 = vld [vmem:[%s4965 + $0x18] sm:$0xf]
        %v4973 = vld [vmem:[%s4965 + $0x1c] sm:$0xf]
        %v4974 = vld [vmem:[%s4965 + $0x20] sm:$0xf]
        %v4975 = vld [vmem:[%s4965 + $0x24] sm:$0xf]
        %v4976 = vld [vmem:[%s4965 + $0x28] sm:$0xf]
        %v4977 = vld [vmem:[%s4965 + $0x2c] sm:$0xf]
        %v4978 = vld [vmem:[%s4965 + $0x30] sm:$0xf]
        %v4979 = vld [vmem:[%s4965 + $0x34] sm:$0xf]
        %v4980 = vld [vmem:[%s4965 + $0x38] sm:$0xf]
        %v4981 = vld [vmem:[%s4965 + $0x3c] sm:$0xf]
        %v5014 = vunpack.c.l.b16 %v4933
        %v5015 = vunpack.c.l.b16 %v4934
        %v5016 = vunpack.c.l.b16 %v4935
        %v5017 = vunpack.c.l.b16 %v4936
        %v5018 = vunpack.c.l.b16 %v4937
        %v5019 = vunpack.c.l.b16 %v4938
        %v5020 = vunpack.c.l.b16 %v4939
        %v5021 = vunpack.c.l.b16 %v4940
        %v5022 = vunpack.c.l.b16 %v4941
        %v5023 = vunpack.c.l.b16 %v4942
        %v5024 = vunpack.c.l.b16 %v4943
        %v5025 = vunpack.c.l.b16 %v4944
        %v5026 = vunpack.c.l.b16 %v4945
        %v5027 = vunpack.c.l.b16 %v4946
        %v5028 = vunpack.c.l.b16 %v4947
        %v5029 = vunpack.c.l.b16 %v4948
        %v5030 = vunpack.c.l.b16 %v4949
        %v5031 = vunpack.c.l.b16 %v4950
        %v5032 = vunpack.c.l.b16 %v4951
        %v5033 = vunpack.c.l.b16 %v4952
        %v5034 = vunpack.c.l.b16 %v4953
        %v5035 = vunpack.c.l.b16 %v4954
        %v5036 = vunpack.c.l.b16 %v4955
        %v5037 = vunpack.c.l.b16 %v4956
        %v5038 = vunpack.c.l.b16 %v4957
        %v5039 = vunpack.c.l.b16 %v4958
        %v5040 = vunpack.c.l.b16 %v4959
        %v5041 = vunpack.c.l.b16 %v4960
        %v5042 = vunpack.c.l.b16 %v4961
        %v5043 = vunpack.c.l.b16 %v4962
        %v5044 = vunpack.c.l.b16 %v4963
        %v5045 = vunpack.c.l.b16 %v4964
        %v5046 = vpack.c.b16 %v5015, %v5014
        %v5047 = vpack.c.b16 %v5017, %v5016
        %v5048 = vpack.c.b16 %v5019, %v5018
        %v5049 = vpack.c.b16 %v5021, %v5020
        %v5050 = vpack.c.b16 %v5023, %v5022
        %v5051 = vpack.c.b16 %v5025, %v5024
        %v5052 = vpack.c.b16 %v5027, %v5026
        %v5053 = vpack.c.b16 %v5029, %v5028
        %v5054 = vpack.c.b16 %v5031, %v5030
        %v5055 = vpack.c.b16 %v5033, %v5032
        %v5056 = vpack.c.b16 %v5035, %v5034
        %v5057 = vpack.c.b16 %v5037, %v5036
        %v5058 = vpack.c.b16 %v5039, %v5038
        %v5059 = vpack.c.b16 %v5041, %v5040
        %v5060 = vpack.c.b16 %v5043, %v5042
        %v5061 = vpack.c.b16 %v5045, %v5044
        %v5094 = vunpack.c.l.b16 %v4966
        %v5095 = vunpack.c.l.b16 %v4967
        %v5096 = vunpack.c.l.b16 %v4968
        %v5097 = vunpack.c.l.b16 %v4969
        %v5098 = vunpack.c.l.b16 %v4970
        %v5099 = vunpack.c.l.b16 %v4971
        %v5100 = vunpack.c.l.b16 %v4972
        %v5101 = vunpack.c.l.b16 %v4973
        %v5102 = vunpack.c.l.b16 %v4974
        %v5103 = vunpack.c.l.b16 %v4975
        %v5104 = vunpack.c.l.b16 %v4976
        %v5105 = vunpack.c.l.b16 %v4977
        %v5106 = vunpack.c.l.b16 %v4978
        %v5107 = vunpack.c.l.b16 %v4979
        %v5108 = vunpack.c.l.b16 %v4980
        %v5109 = vunpack.c.l.b16 %v4981
        %v5110 = vpack.c.b16 %v5095, %v5094
        %v5111 = vpack.c.b16 %v5097, %v5096
        %v5112 = vpack.c.b16 %v5099, %v5098
        %v5113 = vpack.c.b16 %v5101, %v5100
        %v5114 = vpack.c.b16 %v5103, %v5102
        %v5115 = vpack.c.b16 %v5105, %v5104
        %v5116 = vpack.c.b16 %v5107, %v5106
        %v5117 = vpack.c.b16 %v5109, %v5108
        %5126 = vmatprep.subr.bf16.mxu0 0
        %5127 = vmatpush1.bf16.msra.mxu0 %v5110
        %5128 = vmatprep.subr.bf16.mxu0 0
        %5129 = vmatpush1.bf16.msra.mxu0 %v5111
        %5130 = vmatprep.subr.bf16.mxu0 0
        %5131 = vmatpush1.bf16.msra.mxu0 %v5112
        %5132 = vmatprep.subr.bf16.mxu0 0
        %5133 = vmatpush1.bf16.msra.mxu0 %v5113
        %5134 = vmatprep.subr.bf16.mxu0 0
        %5135 = vmatpush1.bf16.msra.mxu0 %v5114
        %5136 = vmatprep.subr.bf16.mxu0 0
        %5137 = vmatpush1.bf16.msra.mxu0 %v5115
        %5138 = vmatprep.subr.bf16.mxu0 0
        %5139 = vmatpush1.bf16.msra.mxu0 %v5116
        %5140 = vmatprep.subr.bf16.mxu0 0
        %5141 = vmatpush1.bf16.msra.mxu0 %v5117
        %5142 = vmatprep.subr.bf16.mxu0 0
        %5143 = vmatpush1.bf16.msra.mxu0 0
        %5144 = vmatprep.subr.bf16.mxu0 0
        %5145 = vmatpush1.bf16.msra.mxu0 0
        %5146 = vmatprep.subr.bf16.mxu0 0
        %5147 = vmatpush1.bf16.msra.mxu0 0
        %5148 = vmatprep.subr.bf16.mxu0 0
        %5149 = vmatpush1.bf16.msra.mxu0 0
        %5150 = vmatprep.subr.bf16.mxu0 0
        %5151 = vmatpush1.bf16.msra.mxu0 0
        %5152 = vmatprep.subr.bf16.mxu0 0
        %5153 = vmatpush1.bf16.msra.mxu0 0
        %5154 = vmatprep.subr.bf16.mxu0 0
        %5155 = vmatpush1.bf16.msra.mxu0 0
        %5156 = vmatprep.subr.bf16.mxu0 0
        %5157 = vmatpush1.bf16.msra.mxu0 0
        %5158 = vmatprep.mubr.bf16.mxu0 0
        %5159 = vmatmul.mubr.bf16.gmra.mrb[0].mxu0 %v5046
        %v5160 = vpop.f32.mrb[0].mxu0
        %v5161 = vadd.f32 0.0, %v5160
        %v5162 = vpop.f32.mrb[0].mxu0
        %v5163 = vpop.f32.mrb[0].mxu0
        %v5164 = vadd.f32 0.0, %v5163
        %v5165 = vpop.f32.mrb[0].mxu0
        %5166 = vmatprep.mubr.bf16.mxu0 0
        %5167 = vmatmul.mubr.bf16.gmra.mrb[0].mxu0 %v5047
        %v5168 = vpop.f32.mrb[0].mxu0
        %v5169 = vadd.f32 0.0, %v5168
        %v5170 = vpop.f32.mrb[0].mxu0
        %v5171 = vpop.f32.mrb[0].mxu0
        %v5172 = vadd.f32 0.0, %v5171
        %v5173 = vpop.f32.mrb[0].mxu0
        %5174 = vmatprep.mubr.bf16.mxu0 0
        %5175 = vmatmul.mubr.bf16.gmra.mrb[0].mxu0 %v5048
        %v5176 = vpop.f32.mrb[0].mxu0
        %v5177 = vadd.f32 0.0, %v5176
        %v5178 = vpop.f32.mrb[0].mxu0
        %v5179 = vpop.f32.mrb[0].mxu0
        %v5180 = vadd.f32 0.0, %v5179
        %v5181 = vpop.f32.mrb[0].mxu0
        %5182 = vmatprep.mubr.bf16.mxu0 0
        %5183 = vmatmul.mubr.bf16.gmra.mrb[0].mxu0 %v5049
        %v5184 = vpop.f32.mrb[0].mxu0
        %v5185 = vadd.f32 0.0, %v5184
        %v5186 = vpop.f32.mrb[0].mxu0
        %v5187 = vpop.f32.mrb[0].mxu0
        %v5188 = vadd.f32 0.0, %v5187
        %v5189 = vpop.f32.mrb[0].mxu0
        %5190 = vmatprep.mubr.bf16.mxu0 0
        %5191 = vmatmul.mubr.bf16.gmra.mrb[0].mxu0 %v5050
        %v5192 = vpop.f32.mrb[0].mxu0
        %v5193 = vadd.f32 0.0, %v5192
        %v5194 = vpop.f32.mrb[0].mxu0
        %v5195 = vpop.f32.mrb[0].mxu0
        %v5196 = vadd.f32 0.0, %v5195
        %v5197 = vpop.f32.mrb[0].mxu0
        %5198 = vmatprep.mubr.bf16.mxu0 0
        %5199 = vmatmul.mubr.bf16.gmra.mrb[0].mxu0 %v5051
        %v5200 = vpop.f32.mrb[0].mxu0
        %v5201 = vadd.f32 0.0, %v5200
        %v5202 = vpop.f32.mrb[0].mxu0
        %v5203 = vpop.f32.mrb[0].mxu0
        %v5204 = vadd.f32 0.0, %v5203
        %v5205 = vpop.f32.mrb[0].mxu0
        %5206 = vmatprep.mubr.bf16.mxu0 0
        %5207 = vmatmul.mubr.bf16.gmra.mrb[0].mxu0 %v5052
        %v5208 = vpop.f32.mrb[0].mxu0
        %v5209 = vadd.f32 0.0, %v5208
        %v5210 = vpop.f32.mrb[0].mxu0
        %v5211 = vpop.f32.mrb[0].mxu0
        %v5212 = vadd.f32 0.0, %v5211
        %v5213 = vpop.f32.mrb[0].mxu0
        %5214 = vmatprep.mubr.bf16.mxu0 0
        %5215 = vmatmul.mubr.bf16.gmra.mrb[0].mxu0 %v5053
        %v5216 = vpop.f32.mrb[0].mxu0
        %v5217 = vadd.f32 0.0, %v5216
        %v5218 = vpop.f32.mrb[0].mxu0
        %v5219 = vpop.f32.mrb[0].mxu0
        %v5220 = vadd.f32 0.0, %v5219
        %v5221 = vpop.f32.mrb[0].mxu0
        %5222 = vmatprep.mubr.bf16.mxu0 0
        %5223 = vmatmul.mubr.bf16.gmra.mrb[0].mxu0 %v5054
        %v5224 = vpop.f32.mrb[0].mxu0
        %v5225 = vadd.f32 0.0, %v5224
        %v5226 = vpop.f32.mrb[0].mxu0
        %v5227 = vpop.f32.mrb[0].mxu0
        %v5228 = vadd.f32 0.0, %v5227
        %v5229 = vpop.f32.mrb[0].mxu0
        %5230 = vmatprep.mubr.bf16.mxu0 0
        %5231 = vmatmul.mubr.bf16.gmra.mrb[0].mxu0 %v5055
        %v5232 = vpop.f32.mrb[0].mxu0
        %v5233 = vadd.f32 0.0, %v5232
        %v5234 = vpop.f32.mrb[0].mxu0
        %v5235 = vpop.f32.mrb[0].mxu0
        %v5236 = vadd.f32 0.0, %v5235
        %v5237 = vpop.f32.mrb[0].mxu0
        %5238 = vmatprep.mubr.bf16.mxu0 0
        %5239 = vmatmul.mubr.bf16.gmra.mrb[0].mxu0 %v5056
        %v5240 = vpop.f32.mrb[0].mxu0
        %v5241 = vadd.f32 0.0, %v5240
        %v5242 = vpop.f32.mrb[0].mxu0
        %v5243 = vpop.f32.mrb[0].mxu0
        %v5244 = vadd.f32 0.0, %v5243
        %v5245 = vpop.f32.mrb[0].mxu0
        %5246 = vmatprep.mubr.bf16.mxu0 0
        %5247 = vmatmul.mubr.bf16.gmra.mrb[0].mxu0 %v5057
        %v5248 = vpop.f32.mrb[0].mxu0
        %v5249 = vadd.f32 0.0, %v5248
        %v5250 = vpop.f32.mrb[0].mxu0
        %v5251 = vpop.f32.mrb[0].mxu0
        %v5252 = vadd.f32 0.0, %v5251
        %v5253 = vpop.f32.mrb[0].mxu0
        %5254 = vmatprep.mubr.bf16.mxu0 0
        %5255 = vmatmul.mubr.bf16.gmra.mrb[0].mxu0 %v5058
        %v5256 = vpop.f32.mrb[0].mxu0
        %v5257 = vadd.f32 0.0, %v5256
        %v5258 = vpop.f32.mrb[0].mxu0
        %v5259 = vpop.f32.mrb[0].mxu0
        %v5260 = vadd.f32 0.0, %v5259
        %v5261 = vpop.f32.mrb[0].mxu0
        %5262 = vmatprep.mubr.bf16.mxu0 0
        %5263 = vmatmul.mubr.bf16.gmra.mrb[0].mxu0 %v5059
        %v5264 = vpop.f32.mrb[0].mxu0
        %v5265 = vadd.f32 0.0, %v5264
        %v5266 = vpop.f32.mrb[0].mxu0
        %v5267 = vpop.f32.mrb[0].mxu0
        %v5268 = vadd.f32 0.0, %v5267
        %v5269 = vpop.f32.mrb[0].mxu0
        %5270 = vmatprep.mubr.bf16.mxu0 0
        %5271 = vmatmul.mubr.bf16.gmra.mrb[0].mxu0 %v5060
        %v5272 = vpop.f32.mrb[0].mxu0
        %v5273 = vadd.f32 0.0, %v5272
        %v5274 = vpop.f32.mrb[0].mxu0
        %v5275 = vpop.f32.mrb[0].mxu0
        %v5276 = vadd.f32 0.0, %v5275
        %v5277 = vpop.f32.mrb[0].mxu0
        %5278 = vmatprep.mubr.bf16.mxu0 0
        %5279 = vmatmul.mubr.bf16.gmra.mrb[0].mxu0 %v5061
        %v5280 = vpop.f32.mrb[0].mxu0
        %v5281 = vadd.f32 0.0, %v5280
        %v5282 = vpop.f32.mrb[0].mxu0
        %v5283 = vpop.f32.mrb[0].mxu0
        %v5284 = vadd.f32 0.0, %v5283
        %v5285 = vpop.f32.mrb[0].mxu0
        %5286 = vdwg.mxu0
        %v5287 = vadd.f32 %v4775, %v5161
        %v5288 = vadd.f32 %v4778, %v5164
        %v5289 = vadd.f32 %v4783, %v5169
        %v5290 = vadd.f32 %v4786, %v5172
        %v5291 = vadd.f32 %v4791, %v5177
        %v5292 = vadd.f32 %v4794, %v5180
        %v5293 = vadd.f32 %v4799, %v5185
        %v5294 = vadd.f32 %v4802, %v5188
        %v5295 = vadd.f32 %v4807, %v5193
        %v5296 = vadd.f32 %v4810, %v5196
        %v5297 = vadd.f32 %v4815, %v5201
        %v5298 = vadd.f32 %v4818, %v5204
        %v5299 = vadd.f32 %v4823, %v5209
        %v5300 = vadd.f32 %v4826, %v5212
        %v5301 = vadd.f32 %v4831, %v5217
        %v5302 = vadd.f32 %v4834, %v5220
        %v5303 = vadd.f32 %v4839, %v5225
        %v5304 = vadd.f32 %v4842, %v5228
        %v5305 = vadd.f32 %v4847, %v5233
        %v5306 = vadd.f32 %v4850, %v5236
        %v5307 = vadd.f32 %v4855, %v5241
        %v5308 = vadd.f32 %v4858, %v5244
        %v5309 = vadd.f32 %v4863, %v5249
        %v5310 = vadd.f32 %v4866, %v5252
        %v5311 = vadd.f32 %v4871, %v5257
        %v5312 = vadd.f32 %v4874, %v5260
        %v5313 = vadd.f32 %v4879, %v5265
        %v5314 = vadd.f32 %v4882, %v5268
        %v5315 = vadd.f32 %v4887, %v5273
        %v5316 = vadd.f32 %v4890, %v5276
        %v5317 = vadd.f32 %v4895, %v5281
        %v5318 = vadd.f32 %v4898, %v5284
        %v5319 = vld [vmem:[%s4033] sm:$0xff]
        %v5320 = vld [vmem:[%s4033 + $0x10] sm:$0xff]
        %v5321 = vld [vmem:[%s4033 + $0x20] sm:$0xff]
        %v5322 = vld [vmem:[%s4033 + $0x30] sm:$0xff]
        %v5323 = vld [vmem:[%s4033 + $0x60] sm:$0xff]
        %v5324 = vld [vmem:[%s4033 + $0x70] sm:$0xff]
        %v5325 = vld [vmem:[%s4033 + $0x80] sm:$0xff]
        %v5326 = vld [vmem:[%s4033 + $0x90] sm:$0xff]
        %v5327 = vld [vmem:[%s4033 + $0xc0] sm:$0xff]
        %v5328 = vld [vmem:[%s4033 + $0xd0] sm:$0xff]
        %v5329 = vld [vmem:[%s4033 + $0xe0] sm:$0xff]
        %v5330 = vld [vmem:[%s4033 + $0xf0] sm:$0xff]
        %v5331 = vld [vmem:[%s4033 + $0x120] sm:$0xff]
        %v5332 = vld [vmem:[%s4033 + $0x130] sm:$0xff]
        %v5333 = vld [vmem:[%s4033 + $0x140] sm:$0xff]
        %v5334 = vld [vmem:[%s4033 + $0x150] sm:$0xff]
        %v5335 = vld [vmem:[%s4033 + $0x180] sm:$0xff]
        %v5336 = vld [vmem:[%s4033 + $0x190] sm:$0xff]
        %v5337 = vld [vmem:[%s4033 + $0x1a0] sm:$0xff]
        %v5338 = vld [vmem:[%s4033 + $0x1b0] sm:$0xff]
        %v5339 = vld [vmem:[%s4033 + $0x1e0] sm:$0xff]
        %v5340 = vld [vmem:[%s4033 + $0x1f0] sm:$0xff]
        %v5341 = vld [vmem:[%s4033 + $0x200] sm:$0xff]
        %v5342 = vld [vmem:[%s4033 + $0x210] sm:$0xff]
        %v5343 = vld [vmem:[%s4033 + $0x240] sm:$0xff]
        %v5344 = vld [vmem:[%s4033 + $0x250] sm:$0xff]
        %v5345 = vld [vmem:[%s4033 + $0x260] sm:$0xff]
        %v5346 = vld [vmem:[%s4033 + $0x270] sm:$0xff]
        %v5347 = vld [vmem:[%s4033 + $0x2a0] sm:$0xff]
        %v5348 = vld [vmem:[%s4033 + $0x2b0] sm:$0xff]
        %v5349 = vld [vmem:[%s4033 + $0x2c0] sm:$0xff]
        %v5350 = vld [vmem:[%s4033 + $0x2d0] sm:$0xff]
        %v5351 = vpack.c.bf16 %v5319, %v5319
        %v5352 = vpack.c.bf16 %v5320, %v5320
        %v5353 = vpack.c.bf16 %v5321, %v5321
        %v5354 = vpack.c.bf16 %v5322, %v5322
        %v5355 = vpack.c.bf16 %v5323, %v5323
        %v5356 = vpack.c.bf16 %v5324, %v5324
        %v5357 = vpack.c.bf16 %v5325, %v5325
        %v5358 = vpack.c.bf16 %v5326, %v5326
        %v5359 = vpack.c.bf16 %v5327, %v5327
        %v5360 = vpack.c.bf16 %v5328, %v5328
        %v5361 = vpack.c.bf16 %v5329, %v5329
        %v5362 = vpack.c.bf16 %v5330, %v5330
        %v5363 = vpack.c.bf16 %v5331, %v5331
        %v5364 = vpack.c.bf16 %v5332, %v5332
        %v5365 = vpack.c.bf16 %v5333, %v5333
        %v5366 = vpack.c.bf16 %v5334, %v5334
        %v5367 = vpack.c.bf16 %v5335, %v5335
        %v5368 = vpack.c.bf16 %v5336, %v5336
        %v5369 = vpack.c.bf16 %v5337, %v5337
        %v5370 = vpack.c.bf16 %v5338, %v5338
        %v5371 = vpack.c.bf16 %v5339, %v5339
        %v5372 = vpack.c.bf16 %v5340, %v5340
        %v5373 = vpack.c.bf16 %v5341, %v5341
        %v5374 = vpack.c.bf16 %v5342, %v5342
        %v5375 = vpack.c.bf16 %v5343, %v5343
        %v5376 = vpack.c.bf16 %v5344, %v5344
        %v5377 = vpack.c.bf16 %v5345, %v5345
        %v5378 = vpack.c.bf16 %v5346, %v5346
        %v5379 = vpack.c.bf16 %v5347, %v5347
        %v5380 = vpack.c.bf16 %v5348, %v5348
        %v5381 = vpack.c.bf16 %v5349, %v5349
        %v5382 = vpack.c.bf16 %v5350, %v5350
        %s5383 = scalar_lea.vmem %s2, 192
        %v5384 = vld [vmem:[%s5383] sm:$0xf]
        %v5385 = vld [vmem:[%s5383 + $0x4] sm:$0xf]
        %v5386 = vld [vmem:[%s5383 + $0x8] sm:$0xf]
        %v5387 = vld [vmem:[%s5383 + $0xc] sm:$0xf]
        %v5388 = vld [vmem:[%s5383 + $0x10] sm:$0xf]
        %v5389 = vld [vmem:[%s5383 + $0x14] sm:$0xf]
        %v5390 = vld [vmem:[%s5383 + $0x18] sm:$0xf]
        %v5391 = vld [vmem:[%s5383 + $0x1c] sm:$0xf]
        %v5392 = vld [vmem:[%s5383 + $0x20] sm:$0xf]
        %v5393 = vld [vmem:[%s5383 + $0x24] sm:$0xf]
        %v5394 = vld [vmem:[%s5383 + $0x28] sm:$0xf]
        %v5395 = vld [vmem:[%s5383 + $0x2c] sm:$0xf]
        %v5396 = vld [vmem:[%s5383 + $0x30] sm:$0xf]
        %v5397 = vld [vmem:[%s5383 + $0x34] sm:$0xf]
        %v5398 = vld [vmem:[%s5383 + $0x38] sm:$0xf]
        %v5399 = vld [vmem:[%s5383 + $0x3c] sm:$0xf]
        %v5432 = vunpack.c.l.b16 %v5351
        %v5433 = vunpack.c.l.b16 %v5352
        %v5434 = vunpack.c.l.b16 %v5353
        %v5435 = vunpack.c.l.b16 %v5354
        %v5436 = vunpack.c.l.b16 %v5355
        %v5437 = vunpack.c.l.b16 %v5356
        %v5438 = vunpack.c.l.b16 %v5357
        %v5439 = vunpack.c.l.b16 %v5358
        %v5440 = vunpack.c.l.b16 %v5359
        %v5441 = vunpack.c.l.b16 %v5360
        %v5442 = vunpack.c.l.b16 %v5361
        %v5443 = vunpack.c.l.b16 %v5362
        %v5444 = vunpack.c.l.b16 %v5363
        %v5445 = vunpack.c.l.b16 %v5364
        %v5446 = vunpack.c.l.b16 %v5365
        %v5447 = vunpack.c.l.b16 %v5366
        %v5448 = vunpack.c.l.b16 %v5367
        %v5449 = vunpack.c.l.b16 %v5368
        %v5450 = vunpack.c.l.b16 %v5369
        %v5451 = vunpack.c.l.b16 %v5370
        %v5452 = vunpack.c.l.b16 %v5371
        %v5453 = vunpack.c.l.b16 %v5372
        %v5454 = vunpack.c.l.b16 %v5373
        %v5455 = vunpack.c.l.b16 %v5374
        %v5456 = vunpack.c.l.b16 %v5375
        %v5457 = vunpack.c.l.b16 %v5376
        %v5458 = vunpack.c.l.b16 %v5377
        %v5459 = vunpack.c.l.b16 %v5378
        %v5460 = vunpack.c.l.b16 %v5379
        %v5461 = vunpack.c.l.b16 %v5380
        %v5462 = vunpack.c.l.b16 %v5381
        %v5463 = vunpack.c.l.b16 %v5382
        %v5464 = vpack.c.b16 %v5433, %v5432
        %v5465 = vpack.c.b16 %v5435, %v5434
        %v5466 = vpack.c.b16 %v5437, %v5436
        %v5467 = vpack.c.b16 %v5439, %v5438
        %v5468 = vpack.c.b16 %v5441, %v5440
        %v5469 = vpack.c.b16 %v5443, %v5442
        %v5470 = vpack.c.b16 %v5445, %v5444
        %v5471 = vpack.c.b16 %v5447, %v5446
        %v5472 = vpack.c.b16 %v5449, %v5448
        %v5473 = vpack.c.b16 %v5451, %v5450
        %v5474 = vpack.c.b16 %v5453, %v5452
        %v5475 = vpack.c.b16 %v5455, %v5454
        %v5476 = vpack.c.b16 %v5457, %v5456
        %v5477 = vpack.c.b16 %v5459, %v5458
        %v5478 = vpack.c.b16 %v5461, %v5460
        %v5479 = vpack.c.b16 %v5463, %v5462
        %v5512 = vunpack.c.l.b16 %v5384
        %v5513 = vunpack.c.l.b16 %v5385
        %v5514 = vunpack.c.l.b16 %v5386
        %v5515 = vunpack.c.l.b16 %v5387
        %v5516 = vunpack.c.l.b16 %v5388
        %v5517 = vunpack.c.l.b16 %v5389
        %v5518 = vunpack.c.l.b16 %v5390
        %v5519 = vunpack.c.l.b16 %v5391
        %v5520 = vunpack.c.l.b16 %v5392
        %v5521 = vunpack.c.l.b16 %v5393
        %v5522 = vunpack.c.l.b16 %v5394
        %v5523 = vunpack.c.l.b16 %v5395
        %v5524 = vunpack.c.l.b16 %v5396
        %v5525 = vunpack.c.l.b16 %v5397
        %v5526 = vunpack.c.l.b16 %v5398
        %v5527 = vunpack.c.l.b16 %v5399
        %v5528 = vpack.c.b16 %v5513, %v5512
        %v5529 = vpack.c.b16 %v5515, %v5514
        %v5530 = vpack.c.b16 %v5517, %v5516
        %v5531 = vpack.c.b16 %v5519, %v5518
        %v5532 = vpack.c.b16 %v5521, %v5520
        %v5533 = vpack.c.b16 %v5523, %v5522
        %v5534 = vpack.c.b16 %v5525, %v5524
        %v5535 = vpack.c.b16 %v5527, %v5526
        %5544 = vmatprep.subr.bf16.mxu0 0
        %5545 = vmatpush1.bf16.msra.mxu0 %v5528
        %5546 = vmatprep.subr.bf16.mxu0 0
        %5547 = vmatpush1.bf16.msra.mxu0 %v5529
        %5548 = vmatprep.subr.bf16.mxu0 0
        %5549 = vmatpush1.bf16.msra.mxu0 %v5530
        %5550 = vmatprep.subr.bf16.mxu0 0
        %5551 = vmatpush1.bf16.msra.mxu0 %v5531
        %5552 = vmatprep.subr.bf16.mxu0 0
        %5553 = vmatpush1.bf16.msra.mxu0 %v5532
        %5554 = vmatprep.subr.bf16.mxu0 0
        %5555 = vmatpush1.bf16.msra.mxu0 %v5533
        %5556 = vmatprep.subr.bf16.mxu0 0
        %5557 = vmatpush1.bf16.msra.mxu0 %v5534
        %5558 = vmatprep.subr.bf16.mxu0 0
        %5559 = vmatpush1.bf16.msra.mxu0 %v5535
        %5560 = vmatprep.subr.bf16.mxu0 0
        %5561 = vmatpush1.bf16.msra.mxu0 0
        %5562 = vmatprep.subr.bf16.mxu0 0
        %5563 = vmatpush1.bf16.msra.mxu0 0
        %5564 = vmatprep.subr.bf16.mxu0 0
        %5565 = vmatpush1.bf16.msra.mxu0 0
        %5566 = vmatprep.subr.bf16.mxu0 0
        %5567 = vmatpush1.bf16.msra.mxu0 0
        %5568 = vmatprep.subr.bf16.mxu0 0
        %5569 = vmatpush1.bf16.msra.mxu0 0
        %5570 = vmatprep.subr.bf16.mxu0 0
        %5571 = vmatpush1.bf16.msra.mxu0 0
        %5572 = vmatprep.subr.bf16.mxu0 0
        %5573 = vmatpush1.bf16.msra.mxu0 0
        %5574 = vmatprep.subr.bf16.mxu0 0
        %5575 = vmatpush1.bf16.msra.mxu0 0
        %5576 = vmatprep.mubr.bf16.mxu0 0
        %5577 = vmatmul.mubr.bf16.gmra.mrb[0].mxu0 %v5464
        %v5578 = vpop.f32.mrb[0].mxu0
        %v5579 = vadd.f32 0.0, %v5578
        %v5580 = vpop.f32.mrb[0].mxu0
        %v5581 = vpop.f32.mrb[0].mxu0
        %v5582 = vadd.f32 0.0, %v5581
        %v5583 = vpop.f32.mrb[0].mxu0
        %5584 = vmatprep.mubr.bf16.mxu0 0
        %5585 = vmatmul.mubr.bf16.gmra.mrb[0].mxu0 %v5465
        %v5586 = vpop.f32.mrb[0].mxu0
        %v5587 = vadd.f32 0.0, %v5586
        %v5588 = vpop.f32.mrb[0].mxu0
        %v5589 = vpop.f32.mrb[0].mxu0
        %v5590 = vadd.f32 0.0, %v5589
        %v5591 = vpop.f32.mrb[0].mxu0
        %5592 = vmatprep.mubr.bf16.mxu0 0
        %5593 = vmatmul.mubr.bf16.gmra.mrb[0].mxu0 %v5466
        %v5594 = vpop.f32.mrb[0].mxu0
        %v5595 = vadd.f32 0.0, %v5594
        %v5596 = vpop.f32.mrb[0].mxu0
        %v5597 = vpop.f32.mrb[0].mxu0
        %v5598 = vadd.f32 0.0, %v5597
        %v5599 = vpop.f32.mrb[0].mxu0
        %5600 = vmatprep.mubr.bf16.mxu0 0
        %5601 = vmatmul.mubr.bf16.gmra.mrb[0].mxu0 %v5467
        %v5602 = vpop.f32.mrb[0].mxu0
        %v5603 = vadd.f32 0.0, %v5602
        %v5604 = vpop.f32.mrb[0].mxu0
        %v5605 = vpop.f32.mrb[0].mxu0
        %v5606 = vadd.f32 0.0, %v5605
        %v5607 = vpop.f32.mrb[0].mxu0
        %5608 = vmatprep.mubr.bf16.mxu0 0
        %5609 = vmatmul.mubr.bf16.gmra.mrb[0].mxu0 %v5468
        %v5610 = vpop.f32.mrb[0].mxu0
        %v5611 = vadd.f32 0.0, %v5610
        %v5612 = vpop.f32.mrb[0].mxu0
        %v5613 = vpop.f32.mrb[0].mxu0
        %v5614 = vadd.f32 0.0, %v5613
        %v5615 = vpop.f32.mrb[0].mxu0
        %5616 = vmatprep.mubr.bf16.mxu0 0
        %5617 = vmatmul.mubr.bf16.gmra.mrb[0].mxu0 %v5469
        %v5618 = vpop.f32.mrb[0].mxu0
        %v5619 = vadd.f32 0.0, %v5618
        %v5620 = vpop.f32.mrb[0].mxu0
        %v5621 = vpop.f32.mrb[0].mxu0
        %v5622 = vadd.f32 0.0, %v5621
        %v5623 = vpop.f32.mrb[0].mxu0
        %5624 = vmatprep.mubr.bf16.mxu0 0
        %5625 = vmatmul.mubr.bf16.gmra.mrb[0].mxu0 %v5470
        %v5626 = vpop.f32.mrb[0].mxu0
        %v5627 = vadd.f32 0.0, %v5626
        %v5628 = vpop.f32.mrb[0].mxu0
        %v5629 = vpop.f32.mrb[0].mxu0
        %v5630 = vadd.f32 0.0, %v5629
        %v5631 = vpop.f32.mrb[0].mxu0
        %5632 = vmatprep.mubr.bf16.mxu0 0
        %5633 = vmatmul.mubr.bf16.gmra.mrb[0].mxu0 %v5471
        %v5634 = vpop.f32.mrb[0].mxu0
        %v5635 = vadd.f32 0.0, %v5634
        %v5636 = vpop.f32.mrb[0].mxu0
        %v5637 = vpop.f32.mrb[0].mxu0
        %v5638 = vadd.f32 0.0, %v5637
        %v5639 = vpop.f32.mrb[0].mxu0
        %5640 = vmatprep.mubr.bf16.mxu0 0
        %5641 = vmatmul.mubr.bf16.gmra.mrb[0].mxu0 %v5472
        %v5642 = vpop.f32.mrb[0].mxu0
        %v5643 = vadd.f32 0.0, %v5642
        %v5644 = vpop.f32.mrb[0].mxu0
        %v5645 = vpop.f32.mrb[0].mxu0
        %v5646 = vadd.f32 0.0, %v5645
        %v5647 = vpop.f32.mrb[0].mxu0
        %5648 = vmatprep.mubr.bf16.mxu0 0
        %5649 = vmatmul.mubr.bf16.gmra.mrb[0].mxu0 %v5473
        %v5650 = vpop.f32.mrb[0].mxu0
        %v5651 = vadd.f32 0.0, %v5650
        %v5652 = vpop.f32.mrb[0].mxu0
        %v5653 = vpop.f32.mrb[0].mxu0
        %v5654 = vadd.f32 0.0, %v5653
        %v5655 = vpop.f32.mrb[0].mxu0
        %5656 = vmatprep.mubr.bf16.mxu0 0
        %5657 = vmatmul.mubr.bf16.gmra.mrb[0].mxu0 %v5474
        %v5658 = vpop.f32.mrb[0].mxu0
        %v5659 = vadd.f32 0.0, %v5658
        %v5660 = vpop.f32.mrb[0].mxu0
        %v5661 = vpop.f32.mrb[0].mxu0
        %v5662 = vadd.f32 0.0, %v5661
        %v5663 = vpop.f32.mrb[0].mxu0
        %5664 = vmatprep.mubr.bf16.mxu0 0
        %5665 = vmatmul.mubr.bf16.gmra.mrb[0].mxu0 %v5475
        %v5666 = vpop.f32.mrb[0].mxu0
        %v5667 = vadd.f32 0.0, %v5666
        %v5668 = vpop.f32.mrb[0].mxu0
        %v5669 = vpop.f32.mrb[0].mxu0
        %v5670 = vadd.f32 0.0, %v5669
        %v5671 = vpop.f32.mrb[0].mxu0
        %5672 = vmatprep.mubr.bf16.mxu0 0
        %5673 = vmatmul.mubr.bf16.gmra.mrb[0].mxu0 %v5476
        %v5674 = vpop.f32.mrb[0].mxu0
        %v5675 = vadd.f32 0.0, %v5674
        %v5676 = vpop.f32.mrb[0].mxu0
        %v5677 = vpop.f32.mrb[0].mxu0
        %v5678 = vadd.f32 0.0, %v5677
        %v5679 = vpop.f32.mrb[0].mxu0
        %5680 = vmatprep.mubr.bf16.mxu0 0
        %5681 = vmatmul.mubr.bf16.gmra.mrb[0].mxu0 %v5477
        %v5682 = vpop.f32.mrb[0].mxu0
        %v5683 = vadd.f32 0.0, %v5682
        %v5684 = vpop.f32.mrb[0].mxu0
        %v5685 = vpop.f32.mrb[0].mxu0
        %v5686 = vadd.f32 0.0, %v5685
        %v5687 = vpop.f32.mrb[0].mxu0
        %5688 = vmatprep.mubr.bf16.mxu0 0
        %5689 = vmatmul.mubr.bf16.gmra.mrb[0].mxu0 %v5478
        %v5690 = vpop.f32.mrb[0].mxu0
        %v5691 = vadd.f32 0.0, %v5690
        %v5692 = vpop.f32.mrb[0].mxu0
        %v5693 = vpop.f32.mrb[0].mxu0
        %v5694 = vadd.f32 0.0, %v5693
        %v5695 = vpop.f32.mrb[0].mxu0
        %5696 = vmatprep.mubr.bf16.mxu0 0
        %5697 = vmatmul.mubr.bf16.gmra.mrb[0].mxu0 %v5479
        %v5698 = vpop.f32.mrb[0].mxu0
        %v5699 = vadd.f32 0.0, %v5698
        %v5700 = vpop.f32.mrb[0].mxu0
        %v5701 = vpop.f32.mrb[0].mxu0
        %v5702 = vadd.f32 0.0, %v5701
        %v5703 = vpop.f32.mrb[0].mxu0
        %5704 = vdwg.mxu0
        %v5705 = vadd.f32 %v5287, %v5579
        %v5706 = vadd.f32 %v5288, %v5582
        %v5707 = vadd.f32 %v5289, %v5587
        %v5708 = vadd.f32 %v5290, %v5590
        %v5709 = vadd.f32 %v5291, %v5595
        %v5710 = vadd.f32 %v5292, %v5598
        %v5711 = vadd.f32 %v5293, %v5603
        %v5712 = vadd.f32 %v5294, %v5606
        %v5713 = vadd.f32 %v5295, %v5611
        %v5714 = vadd.f32 %v5296, %v5614
        %v5715 = vadd.f32 %v5297, %v5619
        %v5716 = vadd.f32 %v5298, %v5622
        %v5717 = vadd.f32 %v5299, %v5627
        %v5718 = vadd.f32 %v5300, %v5630
        %v5719 = vadd.f32 %v5301, %v5635
        %v5720 = vadd.f32 %v5302, %v5638
        %v5721 = vadd.f32 %v5303, %v5643
        %v5722 = vadd.f32 %v5304, %v5646
        %v5723 = vadd.f32 %v5305, %v5651
        %v5724 = vadd.f32 %v5306, %v5654
        %v5725 = vadd.f32 %v5307, %v5659
        %v5726 = vadd.f32 %v5308, %v5662
        %v5727 = vadd.f32 %v5309, %v5667
        %v5728 = vadd.f32 %v5310, %v5670
        %v5729 = vadd.f32 %v5311, %v5675
        %v5730 = vadd.f32 %v5312, %v5678
        %v5731 = vadd.f32 %v5313, %v5683
        %v5732 = vadd.f32 %v5314, %v5686
        %v5733 = vadd.f32 %v5315, %v5691
        %v5734 = vadd.f32 %v5316, %v5694
        %v5735 = vadd.f32 %v5317, %v5699
        %v5736 = vadd.f32 %v5318, %v5702
        %v5737 = vld [vmem:[%s4033 + $0x1] sm:$0xff]
        %v5738 = vld [vmem:[%s4033 + $0x11] sm:$0xff]
        %v5739 = vld [vmem:[%s4033 + $0x21] sm:$0xff]
        %v5740 = vld [vmem:[%s4033 + $0x31] sm:$0xff]
        %v5741 = vld [vmem:[%s4033 + $0x61] sm:$0xff]
        %v5742 = vld [vmem:[%s4033 + $0x71] sm:$0xff]
        %v5743 = vld [vmem:[%s4033 + $0x81] sm:$0xff]
        %v5744 = vld [vmem:[%s4033 + $0x91] sm:$0xff]
        %v5745 = vld [vmem:[%s4033 + $0xc1] sm:$0xff]
        %v5746 = vld [vmem:[%s4033 + $0xd1] sm:$0xff]
        %v5747 = vld [vmem:[%s4033 + $0xe1] sm:$0xff]
        %v5748 = vld [vmem:[%s4033 + $0xf1] sm:$0xff]
        %v5749 = vld [vmem:[%s4033 + $0x121] sm:$0xff]
        %v5750 = vld [vmem:[%s4033 + $0x131] sm:$0xff]
        %v5751 = vld [vmem:[%s4033 + $0x141] sm:$0xff]
        %v5752 = vld [vmem:[%s4033 + $0x151] sm:$0xff]
        %v5753 = vld [vmem:[%s4033 + $0x181] sm:$0xff]
        %v5754 = vld [vmem:[%s4033 + $0x191] sm:$0xff]
        %v5755 = vld [vmem:[%s4033 + $0x1a1] sm:$0xff]
        %v5756 = vld [vmem:[%s4033 + $0x1b1] sm:$0xff]
        %v5757 = vld [vmem:[%s4033 + $0x1e1] sm:$0xff]
        %v5758 = vld [vmem:[%s4033 + $0x1f1] sm:$0xff]
        %v5759 = vld [vmem:[%s4033 + $0x201] sm:$0xff]
        %v5760 = vld [vmem:[%s4033 + $0x211] sm:$0xff]
        %v5761 = vld [vmem:[%s4033 + $0x241] sm:$0xff]
        %v5762 = vld [vmem:[%s4033 + $0x251] sm:$0xff]
        %v5763 = vld [vmem:[%s4033 + $0x261] sm:$0xff]
        %v5764 = vld [vmem:[%s4033 + $0x271] sm:$0xff]
        %v5765 = vld [vmem:[%s4033 + $0x2a1] sm:$0xff]
        %v5766 = vld [vmem:[%s4033 + $0x2b1] sm:$0xff]
        %v5767 = vld [vmem:[%s4033 + $0x2c1] sm:$0xff]
        %v5768 = vld [vmem:[%s4033 + $0x2d1] sm:$0xff]
        %v5769 = vpack.c.bf16 %v5737, %v5737
        %v5770 = vpack.c.bf16 %v5738, %v5738
        %v5771 = vpack.c.bf16 %v5739, %v5739
        %v5772 = vpack.c.bf16 %v5740, %v5740
        %v5773 = vpack.c.bf16 %v5741, %v5741
        %v5774 = vpack.c.bf16 %v5742, %v5742
        %v5775 = vpack.c.bf16 %v5743, %v5743
        %v5776 = vpack.c.bf16 %v5744, %v5744
        %v5777 = vpack.c.bf16 %v5745, %v5745
        %v5778 = vpack.c.bf16 %v5746, %v5746
        %v5779 = vpack.c.bf16 %v5747, %v5747
        %v5780 = vpack.c.bf16 %v5748, %v5748
        %v5781 = vpack.c.bf16 %v5749, %v5749
        %v5782 = vpack.c.bf16 %v5750, %v5750
        %v5783 = vpack.c.bf16 %v5751, %v5751
        %v5784 = vpack.c.bf16 %v5752, %v5752
        %v5785 = vpack.c.bf16 %v5753, %v5753
        %v5786 = vpack.c.bf16 %v5754, %v5754
        %v5787 = vpack.c.bf16 %v5755, %v5755
        %v5788 = vpack.c.bf16 %v5756, %v5756
        %v5789 = vpack.c.bf16 %v5757, %v5757
        %v5790 = vpack.c.bf16 %v5758, %v5758
        %v5791 = vpack.c.bf16 %v5759, %v5759
        %v5792 = vpack.c.bf16 %v5760, %v5760
        %v5793 = vpack.c.bf16 %v5761, %v5761
        %v5794 = vpack.c.bf16 %v5762, %v5762
        %v5795 = vpack.c.bf16 %v5763, %v5763
        %v5796 = vpack.c.bf16 %v5764, %v5764
        %v5797 = vpack.c.bf16 %v5765, %v5765
        %v5798 = vpack.c.bf16 %v5766, %v5766
        %v5799 = vpack.c.bf16 %v5767, %v5767
        %v5800 = vpack.c.bf16 %v5768, %v5768
        %s5801 = scalar_lea.vmem %s2, 256
        %v5802 = vld [vmem:[%s5801] sm:$0xf]
        %v5803 = vld [vmem:[%s5801 + $0x4] sm:$0xf]
        %v5804 = vld [vmem:[%s5801 + $0x8] sm:$0xf]
        %v5805 = vld [vmem:[%s5801 + $0xc] sm:$0xf]
        %v5806 = vld [vmem:[%s5801 + $0x10] sm:$0xf]
        %v5807 = vld [vmem:[%s5801 + $0x14] sm:$0xf]
        %v5808 = vld [vmem:[%s5801 + $0x18] sm:$0xf]
        %v5809 = vld [vmem:[%s5801 + $0x1c] sm:$0xf]
        %v5810 = vld [vmem:[%s5801 + $0x20] sm:$0xf]
        %v5811 = vld [vmem:[%s5801 + $0x24] sm:$0xf]
        %v5812 = vld [vmem:[%s5801 + $0x28] sm:$0xf]
        %v5813 = vld [vmem:[%s5801 + $0x2c] sm:$0xf]
        %v5814 = vld [vmem:[%s5801 + $0x30] sm:$0xf]
        %v5815 = vld [vmem:[%s5801 + $0x34] sm:$0xf]
        %v5816 = vld [vmem:[%s5801 + $0x38] sm:$0xf]
        %v5817 = vld [vmem:[%s5801 + $0x3c] sm:$0xf]
        %v5850 = vunpack.c.l.b16 %v5769
        %v5851 = vunpack.c.l.b16 %v5770
        %v5852 = vunpack.c.l.b16 %v5771
        %v5853 = vunpack.c.l.b16 %v5772
        %v5854 = vunpack.c.l.b16 %v5773
        %v5855 = vunpack.c.l.b16 %v5774
        %v5856 = vunpack.c.l.b16 %v5775
        %v5857 = vunpack.c.l.b16 %v5776
        %v5858 = vunpack.c.l.b16 %v5777
        %v5859 = vunpack.c.l.b16 %v5778
        %v5860 = vunpack.c.l.b16 %v5779
        %v5861 = vunpack.c.l.b16 %v5780
        %v5862 = vunpack.c.l.b16 %v5781
        %v5863 = vunpack.c.l.b16 %v5782
        %v5864 = vunpack.c.l.b16 %v5783
        %v5865 = vunpack.c.l.b16 %v5784
        %v5866 = vunpack.c.l.b16 %v5785
        %v5867 = vunpack.c.l.b16 %v5786
        %v5868 = vunpack.c.l.b16 %v5787
        %v5869 = vunpack.c.l.b16 %v5788
        %v5870 = vunpack.c.l.b16 %v5789
        %v5871 = vunpack.c.l.b16 %v5790
        %v5872 = vunpack.c.l.b16 %v5791
        %v5873 = vunpack.c.l.b16 %v5792
        %v5874 = vunpack.c.l.b16 %v5793
        %v5875 = vunpack.c.l.b16 %v5794
        %v5876 = vunpack.c.l.b16 %v5795
        %v5877 = vunpack.c.l.b16 %v5796
        %v5878 = vunpack.c.l.b16 %v5797
        %v5879 = vunpack.c.l.b16 %v5798
        %v5880 = vunpack.c.l.b16 %v5799
        %v5881 = vunpack.c.l.b16 %v5800
        %v5882 = vpack.c.b16 %v5851, %v5850
        %v5883 = vpack.c.b16 %v5853, %v5852
        %v5884 = vpack.c.b16 %v5855, %v5854
        %v5885 = vpack.c.b16 %v5857, %v5856
        %v5886 = vpack.c.b16 %v5859, %v5858
        %v5887 = vpack.c.b16 %v5861, %v5860
        %v5888 = vpack.c.b16 %v5863, %v5862
        %v5889 = vpack.c.b16 %v5865, %v5864
        %v5890 = vpack.c.b16 %v5867, %v5866
        %v5891 = vpack.c.b16 %v5869, %v5868
        %v5892 = vpack.c.b16 %v5871, %v5870
        %v5893 = vpack.c.b16 %v5873, %v5872
        %v5894 = vpack.c.b16 %v5875, %v5874
        %v5895 = vpack.c.b16 %v5877, %v5876
        %v5896 = vpack.c.b16 %v5879, %v5878
        %v5897 = vpack.c.b16 %v5881, %v5880
        %v5930 = vunpack.c.l.b16 %v5802
        %v5931 = vunpack.c.l.b16 %v5803
        %v5932 = vunpack.c.l.b16 %v5804
        %v5933 = vunpack.c.l.b16 %v5805
        %v5934 = vunpack.c.l.b16 %v5806
        %v5935 = vunpack.c.l.b16 %v5807
        %v5936 = vunpack.c.l.b16 %v5808
        %v5937 = vunpack.c.l.b16 %v5809
        %v5938 = vunpack.c.l.b16 %v5810
        %v5939 = vunpack.c.l.b16 %v5811
        %v5940 = vunpack.c.l.b16 %v5812
        %v5941 = vunpack.c.l.b16 %v5813
        %v5942 = vunpack.c.l.b16 %v5814
        %v5943 = vunpack.c.l.b16 %v5815
        %v5944 = vunpack.c.l.b16 %v5816
        %v5945 = vunpack.c.l.b16 %v5817
        %v5946 = vpack.c.b16 %v5931, %v5930
        %v5947 = vpack.c.b16 %v5933, %v5932
        %v5948 = vpack.c.b16 %v5935, %v5934
        %v5949 = vpack.c.b16 %v5937, %v5936
        %v5950 = vpack.c.b16 %v5939, %v5938
        %v5951 = vpack.c.b16 %v5941, %v5940
        %v5952 = vpack.c.b16 %v5943, %v5942
        %v5953 = vpack.c.b16 %v5945, %v5944
        %5962 = vmatprep.subr.bf16.mxu0 0
        %5963 = vmatpush1.bf16.msra.mxu0 %v5946
        %5964 = vmatprep.subr.bf16.mxu0 0
        %5965 = vmatpush1.bf16.msra.mxu0 %v5947
        %5966 = vmatprep.subr.bf16.mxu0 0
        %5967 = vmatpush1.bf16.msra.mxu0 %v5948
        %5968 = vmatprep.subr.bf16.mxu0 0
        %5969 = vmatpush1.bf16.msra.mxu0 %v5949
        %5970 = vmatprep.subr.bf16.mxu0 0
        %5971 = vmatpush1.bf16.msra.mxu0 %v5950
        %5972 = vmatprep.subr.bf16.mxu0 0
        %5973 = vmatpush1.bf16.msra.mxu0 %v5951
        %5974 = vmatprep.subr.bf16.mxu0 0
        %5975 = vmatpush1.bf16.msra.mxu0 %v5952
        %5976 = vmatprep.subr.bf16.mxu0 0
        %5977 = vmatpush1.bf16.msra.mxu0 %v5953
        %5978 = vmatprep.subr.bf16.mxu0 0
        %5979 = vmatpush1.bf16.msra.mxu0 0
        %5980 = vmatprep.subr.bf16.mxu0 0
        %5981 = vmatpush1.bf16.msra.mxu0 0
        %5982 = vmatprep.subr.bf16.mxu0 0
        %5983 = vmatpush1.bf16.msra.mxu0 0
        %5984 = vmatprep.subr.bf16.mxu0 0
        %5985 = vmatpush1.bf16.msra.mxu0 0
        %5986 = vmatprep.subr.bf16.mxu0 0
        %5987 = vmatpush1.bf16.msra.mxu0 0
        %5988 = vmatprep.subr.bf16.mxu0 0
        %5989 = vmatpush1.bf16.msra.mxu0 0
        %5990 = vmatprep.subr.bf16.mxu0 0
        %5991 = vmatpush1.bf16.msra.mxu0 0
        %5992 = vmatprep.subr.bf16.mxu0 0
        %5993 = vmatpush1.bf16.msra.mxu0 0
        %5994 = vmatprep.mubr.bf16.mxu0 0
        %5995 = vmatmul.mubr.bf16.gmra.mrb[0].mxu0 %v5882
        %v5996 = vpop.f32.mrb[0].mxu0
        %v5997 = vadd.f32 0.0, %v5996
        %v5998 = vpop.f32.mrb[0].mxu0
        %v5999 = vpop.f32.mrb[0].mxu0
        %v6000 = vadd.f32 0.0, %v5999
        %v6001 = vpop.f32.mrb[0].mxu0
        %6002 = vmatprep.mubr.bf16.mxu0 0
        %6003 = vmatmul.mubr.bf16.gmra.mrb[0].mxu0 %v5883
        %v6004 = vpop.f32.mrb[0].mxu0
        %v6005 = vadd.f32 0.0, %v6004
        %v6006 = vpop.f32.mrb[0].mxu0
        %v6007 = vpop.f32.mrb[0].mxu0
        %v6008 = vadd.f32 0.0, %v6007
        %v6009 = vpop.f32.mrb[0].mxu0
        %6010 = vmatprep.mubr.bf16.mxu0 0
        %6011 = vmatmul.mubr.bf16.gmra.mrb[0].mxu0 %v5884
        %v6012 = vpop.f32.mrb[0].mxu0
        %v6013 = vadd.f32 0.0, %v6012
        %v6014 = vpop.f32.mrb[0].mxu0
        %v6015 = vpop.f32.mrb[0].mxu0
        %v6016 = vadd.f32 0.0, %v6015
        %v6017 = vpop.f32.mrb[0].mxu0
        %6018 = vmatprep.mubr.bf16.mxu0 0
        %6019 = vmatmul.mubr.bf16.gmra.mrb[0].mxu0 %v5885
        %v6020 = vpop.f32.mrb[0].mxu0
        %v6021 = vadd.f32 0.0, %v6020
        %v6022 = vpop.f32.mrb[0].mxu0
        %v6023 = vpop.f32.mrb[0].mxu0
        %v6024 = vadd.f32 0.0, %v6023
        %v6025 = vpop.f32.mrb[0].mxu0
        %6026 = vmatprep.mubr.bf16.mxu0 0
        %6027 = vmatmul.mubr.bf16.gmra.mrb[0].mxu0 %v5886
        %v6028 = vpop.f32.mrb[0].mxu0
        %v6029 = vadd.f32 0.0, %v6028
        %v6030 = vpop.f32.mrb[0].mxu0
        %v6031 = vpop.f32.mrb[0].mxu0
        %v6032 = vadd.f32 0.0, %v6031
        %v6033 = vpop.f32.mrb[0].mxu0
        %6034 = vmatprep.mubr.bf16.mxu0 0
        %6035 = vmatmul.mubr.bf16.gmra.mrb[0].mxu0 %v5887
        %v6036 = vpop.f32.mrb[0].mxu0
        %v6037 = vadd.f32 0.0, %v6036
        %v6038 = vpop.f32.mrb[0].mxu0
        %v6039 = vpop.f32.mrb[0].mxu0
        %v6040 = vadd.f32 0.0, %v6039
        %v6041 = vpop.f32.mrb[0].mxu0
        %6042 = vmatprep.mubr.bf16.mxu0 0
        %6043 = vmatmul.mubr.bf16.gmra.mrb[0].mxu0 %v5888
        %v6044 = vpop.f32.mrb[0].mxu0
        %v6045 = vadd.f32 0.0, %v6044
        %v6046 = vpop.f32.mrb[0].mxu0
        %v6047 = vpop.f32.mrb[0].mxu0
        %v6048 = vadd.f32 0.0, %v6047
        %v6049 = vpop.f32.mrb[0].mxu0
        %6050 = vmatprep.mubr.bf16.mxu0 0
        %6051 = vmatmul.mubr.bf16.gmra.mrb[0].mxu0 %v5889
        %v6052 = vpop.f32.mrb[0].mxu0
        %v6053 = vadd.f32 0.0, %v6052
        %v6054 = vpop.f32.mrb[0].mxu0
        %v6055 = vpop.f32.mrb[0].mxu0
        %v6056 = vadd.f32 0.0, %v6055
        %v6057 = vpop.f32.mrb[0].mxu0
        %6058 = vmatprep.mubr.bf16.mxu0 0
        %6059 = vmatmul.mubr.bf16.gmra.mrb[0].mxu0 %v5890
        %v6060 = vpop.f32.mrb[0].mxu0
        %v6061 = vadd.f32 0.0, %v6060
        %v6062 = vpop.f32.mrb[0].mxu0
        %v6063 = vpop.f32.mrb[0].mxu0
        %v6064 = vadd.f32 0.0, %v6063
        %v6065 = vpop.f32.mrb[0].mxu0
        %6066 = vmatprep.mubr.bf16.mxu0 0
        %6067 = vmatmul.mubr.bf16.gmra.mrb[0].mxu0 %v5891
        %v6068 = vpop.f32.mrb[0].mxu0
        %v6069 = vadd.f32 0.0, %v6068
        %v6070 = vpop.f32.mrb[0].mxu0
        %v6071 = vpop.f32.mrb[0].mxu0
        %v6072 = vadd.f32 0.0, %v6071
        %v6073 = vpop.f32.mrb[0].mxu0
        %6074 = vmatprep.mubr.bf16.mxu0 0
        %6075 = vmatmul.mubr.bf16.gmra.mrb[0].mxu0 %v5892
        %v6076 = vpop.f32.mrb[0].mxu0
        %v6077 = vadd.f32 0.0, %v6076
        %v6078 = vpop.f32.mrb[0].mxu0
        %v6079 = vpop.f32.mrb[0].mxu0
        %v6080 = vadd.f32 0.0, %v6079
        %v6081 = vpop.f32.mrb[0].mxu0
        %6082 = vmatprep.mubr.bf16.mxu0 0
        %6083 = vmatmul.mubr.bf16.gmra.mrb[0].mxu0 %v5893
        %v6084 = vpop.f32.mrb[0].mxu0
        %v6085 = vadd.f32 0.0, %v6084
        %v6086 = vpop.f32.mrb[0].mxu0
        %v6087 = vpop.f32.mrb[0].mxu0
        %v6088 = vadd.f32 0.0, %v6087
        %v6089 = vpop.f32.mrb[0].mxu0
        %6090 = vmatprep.mubr.bf16.mxu0 0
        %6091 = vmatmul.mubr.bf16.gmra.mrb[0].mxu0 %v5894
        %v6092 = vpop.f32.mrb[0].mxu0
        %v6093 = vadd.f32 0.0, %v6092
        %v6094 = vpop.f32.mrb[0].mxu0
        %v6095 = vpop.f32.mrb[0].mxu0
        %v6096 = vadd.f32 0.0, %v6095
        %v6097 = vpop.f32.mrb[0].mxu0
        %6098 = vmatprep.mubr.bf16.mxu0 0
        %6099 = vmatmul.mubr.bf16.gmra.mrb[0].mxu0 %v5895
        %v6100 = vpop.f32.mrb[0].mxu0
        %v6101 = vadd.f32 0.0, %v6100
        %v6102 = vpop.f32.mrb[0].mxu0
        %v6103 = vpop.f32.mrb[0].mxu0
        %v6104 = vadd.f32 0.0, %v6103
        %v6105 = vpop.f32.mrb[0].mxu0
        %6106 = vmatprep.mubr.bf16.mxu0 0
        %6107 = vmatmul.mubr.bf16.gmra.mrb[0].mxu0 %v5896
        %v6108 = vpop.f32.mrb[0].mxu0
        %v6109 = vadd.f32 0.0, %v6108
        %v6110 = vpop.f32.mrb[0].mxu0
        %v6111 = vpop.f32.mrb[0].mxu0
        %v6112 = vadd.f32 0.0, %v6111
        %v6113 = vpop.f32.mrb[0].mxu0
        %6114 = vmatprep.mubr.bf16.mxu0 0
        %6115 = vmatmul.mubr.bf16.gmra.mrb[0].mxu0 %v5897
        %v6116 = vpop.f32.mrb[0].mxu0
        %v6117 = vadd.f32 0.0, %v6116
        %v6118 = vpop.f32.mrb[0].mxu0
        %v6119 = vpop.f32.mrb[0].mxu0
        %v6120 = vadd.f32 0.0, %v6119
        %v6121 = vpop.f32.mrb[0].mxu0
        %6122 = vdwg.mxu0
        %v6123 = vadd.f32 %v5705, %v5997
        %v6124 = vadd.f32 %v5706, %v6000
        %v6125 = vadd.f32 %v5707, %v6005
        %v6126 = vadd.f32 %v5708, %v6008
        %v6127 = vadd.f32 %v5709, %v6013
        %v6128 = vadd.f32 %v5710, %v6016
        %v6129 = vadd.f32 %v5711, %v6021
        %v6130 = vadd.f32 %v5712, %v6024
        %v6131 = vadd.f32 %v5713, %v6029
        %v6132 = vadd.f32 %v5714, %v6032
        %v6133 = vadd.f32 %v5715, %v6037
        %v6134 = vadd.f32 %v5716, %v6040
        %v6135 = vadd.f32 %v5717, %v6045
        %v6136 = vadd.f32 %v5718, %v6048
        %v6137 = vadd.f32 %v5719, %v6053
        %v6138 = vadd.f32 %v5720, %v6056
        %v6139 = vadd.f32 %v5721, %v6061
        %v6140 = vadd.f32 %v5722, %v6064
        %v6141 = vadd.f32 %v5723, %v6069
        %v6142 = vadd.f32 %v5724, %v6072
        %v6143 = vadd.f32 %v5725, %v6077
        %v6144 = vadd.f32 %v5726, %v6080
        %v6145 = vadd.f32 %v5727, %v6085
        %v6146 = vadd.f32 %v5728, %v6088
        %v6147 = vadd.f32 %v5729, %v6093
        %v6148 = vadd.f32 %v5730, %v6096
        %v6149 = vadd.f32 %v5731, %v6101
        %v6150 = vadd.f32 %v5732, %v6104
        %v6151 = vadd.f32 %v5733, %v6109
        %v6152 = vadd.f32 %v5734, %v6112
        %v6153 = vadd.f32 %v5735, %v6117
        %v6154 = vadd.f32 %v5736, %v6120
        %v6155 = vld [vmem:[%s4033 + $0x2] sm:$0xff]
        %v6156 = vld [vmem:[%s4033 + $0x12] sm:$0xff]
        %v6157 = vld [vmem:[%s4033 + $0x22] sm:$0xff]
        %v6158 = vld [vmem:[%s4033 + $0x32] sm:$0xff]
        %v6159 = vld [vmem:[%s4033 + $0x62] sm:$0xff]
        %v6160 = vld [vmem:[%s4033 + $0x72] sm:$0xff]
        %v6161 = vld [vmem:[%s4033 + $0x82] sm:$0xff]
        %v6162 = vld [vmem:[%s4033 + $0x92] sm:$0xff]
        %v6163 = vld [vmem:[%s4033 + $0xc2] sm:$0xff]
        %v6164 = vld [vmem:[%s4033 + $0xd2] sm:$0xff]
        %v6165 = vld [vmem:[%s4033 + $0xe2] sm:$0xff]
        %v6166 = vld [vmem:[%s4033 + $0xf2] sm:$0xff]
        %v6167 = vld [vmem:[%s4033 + $0x122] sm:$0xff]
        %v6168 = vld [vmem:[%s4033 + $0x132] sm:$0xff]
        %v6169 = vld [vmem:[%s4033 + $0x142] sm:$0xff]
        %v6170 = vld [vmem:[%s4033 + $0x152] sm:$0xff]
        %v6171 = vld [vmem:[%s4033 + $0x182] sm:$0xff]
        %v6172 = vld [vmem:[%s4033 + $0x192] sm:$0xff]
        %v6173 = vld [vmem:[%s4033 + $0x1a2] sm:$0xff]
        %v6174 = vld [vmem:[%s4033 + $0x1b2] sm:$0xff]
        %v6175 = vld [vmem:[%s4033 + $0x1e2] sm:$0xff]
        %v6176 = vld [vmem:[%s4033 + $0x1f2] sm:$0xff]
        %v6177 = vld [vmem:[%s4033 + $0x202] sm:$0xff]
        %v6178 = vld [vmem:[%s4033 + $0x212] sm:$0xff]
        %v6179 = vld [vmem:[%s4033 + $0x242] sm:$0xff]
        %v6180 = vld [vmem:[%s4033 + $0x252] sm:$0xff]
        %v6181 = vld [vmem:[%s4033 + $0x262] sm:$0xff]
        %v6182 = vld [vmem:[%s4033 + $0x272] sm:$0xff]
        %v6183 = vld [vmem:[%s4033 + $0x2a2] sm:$0xff]
        %v6184 = vld [vmem:[%s4033 + $0x2b2] sm:$0xff]
        %v6185 = vld [vmem:[%s4033 + $0x2c2] sm:$0xff]
        %v6186 = vld [vmem:[%s4033 + $0x2d2] sm:$0xff]
        %v6187 = vpack.c.bf16 %v6155, %v6155
        %v6188 = vpack.c.bf16 %v6156, %v6156
        %v6189 = vpack.c.bf16 %v6157, %v6157
        %v6190 = vpack.c.bf16 %v6158, %v6158
        %v6191 = vpack.c.bf16 %v6159, %v6159
        %v6192 = vpack.c.bf16 %v6160, %v6160
        %v6193 = vpack.c.bf16 %v6161, %v6161
        %v6194 = vpack.c.bf16 %v6162, %v6162
        %v6195 = vpack.c.bf16 %v6163, %v6163
        %v6196 = vpack.c.bf16 %v6164, %v6164
        %v6197 = vpack.c.bf16 %v6165, %v6165
        %v6198 = vpack.c.bf16 %v6166, %v6166
        %v6199 = vpack.c.bf16 %v6167, %v6167
        %v6200 = vpack.c.bf16 %v6168, %v6168
        %v6201 = vpack.c.bf16 %v6169, %v6169
        %v6202 = vpack.c.bf16 %v6170, %v6170
        %v6203 = vpack.c.bf16 %v6171, %v6171
        %v6204 = vpack.c.bf16 %v6172, %v6172
        %v6205 = vpack.c.bf16 %v6173, %v6173
        %v6206 = vpack.c.bf16 %v6174, %v6174
        %v6207 = vpack.c.bf16 %v6175, %v6175
        %v6208 = vpack.c.bf16 %v6176, %v6176
        %v6209 = vpack.c.bf16 %v6177, %v6177
        %v6210 = vpack.c.bf16 %v6178, %v6178
        %v6211 = vpack.c.bf16 %v6179, %v6179
        %v6212 = vpack.c.bf16 %v6180, %v6180
        %v6213 = vpack.c.bf16 %v6181, %v6181
        %v6214 = vpack.c.bf16 %v6182, %v6182
        %v6215 = vpack.c.bf16 %v6183, %v6183
        %v6216 = vpack.c.bf16 %v6184, %v6184
        %v6217 = vpack.c.bf16 %v6185, %v6185
        %v6218 = vpack.c.bf16 %v6186, %v6186
        %s6219 = scalar_lea.vmem %s2, 320
        %v6220 = vld [vmem:[%s6219] sm:$0xf]
        %v6221 = vld [vmem:[%s6219 + $0x4] sm:$0xf]
        %v6222 = vld [vmem:[%s6219 + $0x8] sm:$0xf]
        %v6223 = vld [vmem:[%s6219 + $0xc] sm:$0xf]
        %v6224 = vld [vmem:[%s6219 + $0x10] sm:$0xf]
        %v6225 = vld [vmem:[%s6219 + $0x14] sm:$0xf]
        %v6226 = vld [vmem:[%s6219 + $0x18] sm:$0xf]
        %v6227 = vld [vmem:[%s6219 + $0x1c] sm:$0xf]
        %v6228 = vld [vmem:[%s6219 + $0x20] sm:$0xf]
        %v6229 = vld [vmem:[%s6219 + $0x24] sm:$0xf]
        %v6230 = vld [vmem:[%s6219 + $0x28] sm:$0xf]
        %v6231 = vld [vmem:[%s6219 + $0x2c] sm:$0xf]
        %v6232 = vld [vmem:[%s6219 + $0x30] sm:$0xf]
        %v6233 = vld [vmem:[%s6219 + $0x34] sm:$0xf]
        %v6234 = vld [vmem:[%s6219 + $0x38] sm:$0xf]
        %v6235 = vld [vmem:[%s6219 + $0x3c] sm:$0xf]
        %v6268 = vunpack.c.l.b16 %v6187
        %v6269 = vunpack.c.l.b16 %v6188
        %v6270 = vunpack.c.l.b16 %v6189
        %v6271 = vunpack.c.l.b16 %v6190
        %v6272 = vunpack.c.l.b16 %v6191
        %v6273 = vunpack.c.l.b16 %v6192
        %v6274 = vunpack.c.l.b16 %v6193
        %v6275 = vunpack.c.l.b16 %v6194
        %v6276 = vunpack.c.l.b16 %v6195
        %v6277 = vunpack.c.l.b16 %v6196
        %v6278 = vunpack.c.l.b16 %v6197
        %v6279 = vunpack.c.l.b16 %v6198
        %v6280 = vunpack.c.l.b16 %v6199
        %v6281 = vunpack.c.l.b16 %v6200
        %v6282 = vunpack.c.l.b16 %v6201
        %v6283 = vunpack.c.l.b16 %v6202
        %v6284 = vunpack.c.l.b16 %v6203
        %v6285 = vunpack.c.l.b16 %v6204
        %v6286 = vunpack.c.l.b16 %v6205
        %v6287 = vunpack.c.l.b16 %v6206
        %v6288 = vunpack.c.l.b16 %v6207
        %v6289 = vunpack.c.l.b16 %v6208
        %v6290 = vunpack.c.l.b16 %v6209
        %v6291 = vunpack.c.l.b16 %v6210
        %v6292 = vunpack.c.l.b16 %v6211
        %v6293 = vunpack.c.l.b16 %v6212
        %v6294 = vunpack.c.l.b16 %v6213
        %v6295 = vunpack.c.l.b16 %v6214
        %v6296 = vunpack.c.l.b16 %v6215
        %v6297 = vunpack.c.l.b16 %v6216
        %v6298 = vunpack.c.l.b16 %v6217
        %v6299 = vunpack.c.l.b16 %v6218
        %v6300 = vpack.c.b16 %v6269, %v6268
        %v6301 = vpack.c.b16 %v6271, %v6270
        %v6302 = vpack.c.b16 %v6273, %v6272
        %v6303 = vpack.c.b16 %v6275, %v6274
        %v6304 = vpack.c.b16 %v6277, %v6276
        %v6305 = vpack.c.b16 %v6279, %v6278
        %v6306 = vpack.c.b16 %v6281, %v6280
        %v6307 = vpack.c.b16 %v6283, %v6282
        %v6308 = vpack.c.b16 %v6285, %v6284
        %v6309 = vpack.c.b16 %v6287, %v6286
        %v6310 = vpack.c.b16 %v6289, %v6288
        %v6311 = vpack.c.b16 %v6291, %v6290
        %v6312 = vpack.c.b16 %v6293, %v6292
        %v6313 = vpack.c.b16 %v6295, %v6294
        %v6314 = vpack.c.b16 %v6297, %v6296
        %v6315 = vpack.c.b16 %v6299, %v6298
        %v6348 = vunpack.c.l.b16 %v6220
        %v6349 = vunpack.c.l.b16 %v6221
        %v6350 = vunpack.c.l.b16 %v6222
        %v6351 = vunpack.c.l.b16 %v6223
        %v6352 = vunpack.c.l.b16 %v6224
        %v6353 = vunpack.c.l.b16 %v6225
        %v6354 = vunpack.c.l.b16 %v6226
        %v6355 = vunpack.c.l.b16 %v6227
        %v6356 = vunpack.c.l.b16 %v6228
        %v6357 = vunpack.c.l.b16 %v6229
        %v6358 = vunpack.c.l.b16 %v6230
        %v6359 = vunpack.c.l.b16 %v6231
        %v6360 = vunpack.c.l.b16 %v6232
        %v6361 = vunpack.c.l.b16 %v6233
        %v6362 = vunpack.c.l.b16 %v6234
        %v6363 = vunpack.c.l.b16 %v6235
        %v6364 = vpack.c.b16 %v6349, %v6348
        %v6365 = vpack.c.b16 %v6351, %v6350
        %v6366 = vpack.c.b16 %v6353, %v6352
        %v6367 = vpack.c.b16 %v6355, %v6354
        %v6368 = vpack.c.b16 %v6357, %v6356
        %v6369 = vpack.c.b16 %v6359, %v6358
        %v6370 = vpack.c.b16 %v6361, %v6360
        %v6371 = vpack.c.b16 %v6363, %v6362
        %6380 = vmatprep.subr.bf16.mxu0 0
        %6381 = vmatpush1.bf16.msra.mxu0 %v6364
        %6382 = vmatprep.subr.bf16.mxu0 0
        %6383 = vmatpush1.bf16.msra.mxu0 %v6365
        %6384 = vmatprep.subr.bf16.mxu0 0
        %6385 = vmatpush1.bf16.msra.mxu0 %v6366
        %6386 = vmatprep.subr.bf16.mxu0 0
        %6387 = vmatpush1.bf16.msra.mxu0 %v6367
        %6388 = vmatprep.subr.bf16.mxu0 0
        %6389 = vmatpush1.bf16.msra.mxu0 %v6368
        %6390 = vmatprep.subr.bf16.mxu0 0
        %6391 = vmatpush1.bf16.msra.mxu0 %v6369
        %6392 = vmatprep.subr.bf16.mxu0 0
        %6393 = vmatpush1.bf16.msra.mxu0 %v6370
        %6394 = vmatprep.subr.bf16.mxu0 0
        %6395 = vmatpush1.bf16.msra.mxu0 %v6371
        %6396 = vmatprep.subr.bf16.mxu0 0
        %6397 = vmatpush1.bf16.msra.mxu0 0
        %6398 = vmatprep.subr.bf16.mxu0 0
        %6399 = vmatpush1.bf16.msra.mxu0 0
        %6400 = vmatprep.subr.bf16.mxu0 0
        %6401 = vmatpush1.bf16.msra.mxu0 0
        %6402 = vmatprep.subr.bf16.mxu0 0
        %6403 = vmatpush1.bf16.msra.mxu0 0
        %6404 = vmatprep.subr.bf16.mxu0 0
        %6405 = vmatpush1.bf16.msra.mxu0 0
        %6406 = vmatprep.subr.bf16.mxu0 0
        %6407 = vmatpush1.bf16.msra.mxu0 0
        %6408 = vmatprep.subr.bf16.mxu0 0
        %6409 = vmatpush1.bf16.msra.mxu0 0
        %6410 = vmatprep.subr.bf16.mxu0 0
        %6411 = vmatpush1.bf16.msra.mxu0 0
        %6412 = vmatprep.mubr.bf16.mxu0 0
        %6413 = vmatmul.mubr.bf16.gmra.mrb[0].mxu0 %v6300
        %v6414 = vpop.f32.mrb[0].mxu0
        %v6415 = vadd.f32 0.0, %v6414
        %v6416 = vpop.f32.mrb[0].mxu0
        %v6417 = vpop.f32.mrb[0].mxu0
        %v6418 = vadd.f32 0.0, %v6417
        %v6419 = vpop.f32.mrb[0].mxu0
        %6420 = vmatprep.mubr.bf16.mxu0 0
        %6421 = vmatmul.mubr.bf16.gmra.mrb[0].mxu0 %v6301
        %v6422 = vpop.f32.mrb[0].mxu0
        %v6423 = vadd.f32 0.0, %v6422
        %v6424 = vpop.f32.mrb[0].mxu0
        %v6425 = vpop.f32.mrb[0].mxu0
        %v6426 = vadd.f32 0.0, %v6425
        %v6427 = vpop.f32.mrb[0].mxu0
        %6428 = vmatprep.mubr.bf16.mxu0 0
        %6429 = vmatmul.mubr.bf16.gmra.mrb[0].mxu0 %v6302
        %v6430 = vpop.f32.mrb[0].mxu0
        %v6431 = vadd.f32 0.0, %v6430
        %v6432 = vpop.f32.mrb[0].mxu0
        %v6433 = vpop.f32.mrb[0].mxu0
        %v6434 = vadd.f32 0.0, %v6433
        %v6435 = vpop.f32.mrb[0].mxu0
        %6436 = vmatprep.mubr.bf16.mxu0 0
        %6437 = vmatmul.mubr.bf16.gmra.mrb[0].mxu0 %v6303
        %v6438 = vpop.f32.mrb[0].mxu0
        %v6439 = vadd.f32 0.0, %v6438
        %v6440 = vpop.f32.mrb[0].mxu0
        %v6441 = vpop.f32.mrb[0].mxu0
        %v6442 = vadd.f32 0.0, %v6441
        %v6443 = vpop.f32.mrb[0].mxu0
        %6444 = vmatprep.mubr.bf16.mxu0 0
        %6445 = vmatmul.mubr.bf16.gmra.mrb[0].mxu0 %v6304
        %v6446 = vpop.f32.mrb[0].mxu0
        %v6447 = vadd.f32 0.0, %v6446
        %v6448 = vpop.f32.mrb[0].mxu0
        %v6449 = vpop.f32.mrb[0].mxu0
        %v6450 = vadd.f32 0.0, %v6449
        %v6451 = vpop.f32.mrb[0].mxu0
        %6452 = vmatprep.mubr.bf16.mxu0 0
        %6453 = vmatmul.mubr.bf16.gmra.mrb[0].mxu0 %v6305
        %v6454 = vpop.f32.mrb[0].mxu0
        %v6455 = vadd.f32 0.0, %v6454
        %v6456 = vpop.f32.mrb[0].mxu0
        %v6457 = vpop.f32.mrb[0].mxu0
        %v6458 = vadd.f32 0.0, %v6457
        %v6459 = vpop.f32.mrb[0].mxu0
        %6460 = vmatprep.mubr.bf16.mxu0 0
        %6461 = vmatmul.mubr.bf16.gmra.mrb[0].mxu0 %v6306
        %v6462 = vpop.f32.mrb[0].mxu0
        %v6463 = vadd.f32 0.0, %v6462
        %v6464 = vpop.f32.mrb[0].mxu0
        %v6465 = vpop.f32.mrb[0].mxu0
        %v6466 = vadd.f32 0.0, %v6465
        %v6467 = vpop.f32.mrb[0].mxu0
        %6468 = vmatprep.mubr.bf16.mxu0 0
        %6469 = vmatmul.mubr.bf16.gmra.mrb[0].mxu0 %v6307
        %v6470 = vpop.f32.mrb[0].mxu0
        %v6471 = vadd.f32 0.0, %v6470
        %v6472 = vpop.f32.mrb[0].mxu0
        %v6473 = vpop.f32.mrb[0].mxu0
        %v6474 = vadd.f32 0.0, %v6473
        %v6475 = vpop.f32.mrb[0].mxu0
        %6476 = vmatprep.mubr.bf16.mxu0 0
        %6477 = vmatmul.mubr.bf16.gmra.mrb[0].mxu0 %v6308
        %v6478 = vpop.f32.mrb[0].mxu0
        %v6479 = vadd.f32 0.0, %v6478
        %v6480 = vpop.f32.mrb[0].mxu0
        %v6481 = vpop.f32.mrb[0].mxu0
        %v6482 = vadd.f32 0.0, %v6481
        %v6483 = vpop.f32.mrb[0].mxu0
        %6484 = vmatprep.mubr.bf16.mxu0 0
        %6485 = vmatmul.mubr.bf16.gmra.mrb[0].mxu0 %v6309
        %v6486 = vpop.f32.mrb[0].mxu0
        %v6487 = vadd.f32 0.0, %v6486
        %v6488 = vpop.f32.mrb[0].mxu0
        %v6489 = vpop.f32.mrb[0].mxu0
        %v6490 = vadd.f32 0.0, %v6489
        %v6491 = vpop.f32.mrb[0].mxu0
        %6492 = vmatprep.mubr.bf16.mxu0 0
        %6493 = vmatmul.mubr.bf16.gmra.mrb[0].mxu0 %v6310
        %v6494 = vpop.f32.mrb[0].mxu0
        %v6495 = vadd.f32 0.0, %v6494
        %v6496 = vpop.f32.mrb[0].mxu0
        %v6497 = vpop.f32.mrb[0].mxu0
        %v6498 = vadd.f32 0.0, %v6497
        %v6499 = vpop.f32.mrb[0].mxu0
        %6500 = vmatprep.mubr.bf16.mxu0 0
        %6501 = vmatmul.mubr.bf16.gmra.mrb[0].mxu0 %v6311
        %v6502 = vpop.f32.mrb[0].mxu0
        %v6503 = vadd.f32 0.0, %v6502
        %v6504 = vpop.f32.mrb[0].mxu0
        %v6505 = vpop.f32.mrb[0].mxu0
        %v6506 = vadd.f32 0.0, %v6505
        %v6507 = vpop.f32.mrb[0].mxu0
        %6508 = vmatprep.mubr.bf16.mxu0 0
        %6509 = vmatmul.mubr.bf16.gmra.mrb[0].mxu0 %v6312
        %v6510 = vpop.f32.mrb[0].mxu0
        %v6511 = vadd.f32 0.0, %v6510
        %v6512 = vpop.f32.mrb[0].mxu0
        %v6513 = vpop.f32.mrb[0].mxu0
        %v6514 = vadd.f32 0.0, %v6513
        %v6515 = vpop.f32.mrb[0].mxu0
        %6516 = vmatprep.mubr.bf16.mxu0 0
        %6517 = vmatmul.mubr.bf16.gmra.mrb[0].mxu0 %v6313
        %v6518 = vpop.f32.mrb[0].mxu0
        %v6519 = vadd.f32 0.0, %v6518
        %v6520 = vpop.f32.mrb[0].mxu0
        %v6521 = vpop.f32.mrb[0].mxu0
        %v6522 = vadd.f32 0.0, %v6521
        %v6523 = vpop.f32.mrb[0].mxu0
        %6524 = vmatprep.mubr.bf16.mxu0 0
        %6525 = vmatmul.mubr.bf16.gmra.mrb[0].mxu0 %v6314
        %v6526 = vpop.f32.mrb[0].mxu0
        %v6527 = vadd.f32 0.0, %v6526
        %v6528 = vpop.f32.mrb[0].mxu0
        %v6529 = vpop.f32.mrb[0].mxu0
        %v6530 = vadd.f32 0.0, %v6529
        %v6531 = vpop.f32.mrb[0].mxu0
        %6532 = vmatprep.mubr.bf16.mxu0 0
        %6533 = vmatmul.mubr.bf16.gmra.mrb[0].mxu0 %v6315
        %v6534 = vpop.f32.mrb[0].mxu0
        %v6535 = vadd.f32 0.0, %v6534
        %v6536 = vpop.f32.mrb[0].mxu0
        %v6537 = vpop.f32.mrb[0].mxu0
        %v6538 = vadd.f32 0.0, %v6537
        %v6539 = vpop.f32.mrb[0].mxu0
        %6540 = vdwg.mxu0
        %v6541 = vadd.f32 %v6123, %v6415
        %v6542 = vadd.f32 %v6124, %v6418
        %v6543 = vadd.f32 %v6125, %v6423
        %v6544 = vadd.f32 %v6126, %v6426
        %v6545 = vadd.f32 %v6127, %v6431
        %v6546 = vadd.f32 %v6128, %v6434
        %v6547 = vadd.f32 %v6129, %v6439
        %v6548 = vadd.f32 %v6130, %v6442
        %v6549 = vadd.f32 %v6131, %v6447
        %v6550 = vadd.f32 %v6132, %v6450
        %v6551 = vadd.f32 %v6133, %v6455
        %v6552 = vadd.f32 %v6134, %v6458
        %v6553 = vadd.f32 %v6135, %v6463
        %v6554 = vadd.f32 %v6136, %v6466
        %v6555 = vadd.f32 %v6137, %v6471
        %v6556 = vadd.f32 %v6138, %v6474
        %v6557 = vadd.f32 %v6139, %v6479
        %v6558 = vadd.f32 %v6140, %v6482
        %v6559 = vadd.f32 %v6141, %v6487
        %v6560 = vadd.f32 %v6142, %v6490
        %v6561 = vadd.f32 %v6143, %v6495
        %v6562 = vadd.f32 %v6144, %v6498
        %v6563 = vadd.f32 %v6145, %v6503
        %v6564 = vadd.f32 %v6146, %v6506
        %v6565 = vadd.f32 %v6147, %v6511
        %v6566 = vadd.f32 %v6148, %v6514
        %v6567 = vadd.f32 %v6149, %v6519
        %v6568 = vadd.f32 %v6150, %v6522
        %v6569 = vadd.f32 %v6151, %v6527
        %v6570 = vadd.f32 %v6152, %v6530
        %v6571 = vadd.f32 %v6153, %v6535
        %v6572 = vadd.f32 %v6154, %v6538
        %s6573 = scalar_lea.vmem [#allocation2], 32
        %v6574 = vld [vmem:[%s6573] sm:$0xff]
        %v6575 = vld [vmem:[%s6573 + $0x10] sm:$0xff]
        %v6576 = vld [vmem:[%s6573 + $0x20] sm:$0xff]
        %v6577 = vld [vmem:[%s6573 + $0x30] sm:$0xff]
        %v6578 = vld [vmem:[%s6573 + $0x60] sm:$0xff]
        %v6579 = vld [vmem:[%s6573 + $0x70] sm:$0xff]
        %v6580 = vld [vmem:[%s6573 + $0x80] sm:$0xff]
        %v6581 = vld [vmem:[%s6573 + $0x90] sm:$0xff]
        %v6582 = vld [vmem:[%s6573 + $0xc0] sm:$0xff]
        %v6583 = vld [vmem:[%s6573 + $0xd0] sm:$0xff]
        %v6584 = vld [vmem:[%s6573 + $0xe0] sm:$0xff]
        %v6585 = vld [vmem:[%s6573 + $0xf0] sm:$0xff]
        %v6586 = vld [vmem:[%s6573 + $0x120] sm:$0xff]
        %v6587 = vld [vmem:[%s6573 + $0x130] sm:$0xff]
        %v6588 = vld [vmem:[%s6573 + $0x140] sm:$0xff]
        %v6589 = vld [vmem:[%s6573 + $0x150] sm:$0xff]
        %v6590 = vld [vmem:[%s6573 + $0x180] sm:$0xff]
        %v6591 = vld [vmem:[%s6573 + $0x190] sm:$0xff]
        %v6592 = vld [vmem:[%s6573 + $0x1a0] sm:$0xff]
        %v6593 = vld [vmem:[%s6573 + $0x1b0] sm:$0xff]
        %v6594 = vld [vmem:[%s6573 + $0x1e0] sm:$0xff]
        %v6595 = vld [vmem:[%s6573 + $0x1f0] sm:$0xff]
        %v6596 = vld [vmem:[%s6573 + $0x200] sm:$0xff]
        %v6597 = vld [vmem:[%s6573 + $0x210] sm:$0xff]
        %v6598 = vld [vmem:[%s6573 + $0x240] sm:$0xff]
        %v6599 = vld [vmem:[%s6573 + $0x250] sm:$0xff]
        %v6600 = vld [vmem:[%s6573 + $0x260] sm:$0xff]
        %v6601 = vld [vmem:[%s6573 + $0x270] sm:$0xff]
        %v6602 = vld [vmem:[%s6573 + $0x2a0] sm:$0xff]
        %v6603 = vld [vmem:[%s6573 + $0x2b0] sm:$0xff]
        %v6604 = vld [vmem:[%s6573 + $0x2c0] sm:$0xff]
        %v6605 = vld [vmem:[%s6573 + $0x2d0] sm:$0xff]
        %v6606 = vpack.c.bf16 %v6574, %v6574
        %v6607 = vpack.c.bf16 %v6575, %v6575
        %v6608 = vpack.c.bf16 %v6576, %v6576
        %v6609 = vpack.c.bf16 %v6577, %v6577
        %v6610 = vpack.c.bf16 %v6578, %v6578
        %v6611 = vpack.c.bf16 %v6579, %v6579
        %v6612 = vpack.c.bf16 %v6580, %v6580
        %v6613 = vpack.c.bf16 %v6581, %v6581
        %v6614 = vpack.c.bf16 %v6582, %v6582
        %v6615 = vpack.c.bf16 %v6583, %v6583
        %v6616 = vpack.c.bf16 %v6584, %v6584
        %v6617 = vpack.c.bf16 %v6585, %v6585
        %v6618 = vpack.c.bf16 %v6586, %v6586
        %v6619 = vpack.c.bf16 %v6587, %v6587
        %v6620 = vpack.c.bf16 %v6588, %v6588
        %v6621 = vpack.c.bf16 %v6589, %v6589
        %v6622 = vpack.c.bf16 %v6590, %v6590
        %v6623 = vpack.c.bf16 %v6591, %v6591
        %v6624 = vpack.c.bf16 %v6592, %v6592
        %v6625 = vpack.c.bf16 %v6593, %v6593
        %v6626 = vpack.c.bf16 %v6594, %v6594
        %v6627 = vpack.c.bf16 %v6595, %v6595
        %v6628 = vpack.c.bf16 %v6596, %v6596
        %v6629 = vpack.c.bf16 %v6597, %v6597
        %v6630 = vpack.c.bf16 %v6598, %v6598
        %v6631 = vpack.c.bf16 %v6599, %v6599
        %v6632 = vpack.c.bf16 %v6600, %v6600
        %v6633 = vpack.c.bf16 %v6601, %v6601
        %v6634 = vpack.c.bf16 %v6602, %v6602
        %v6635 = vpack.c.bf16 %v6603, %v6603
        %v6636 = vpack.c.bf16 %v6604, %v6604
        %v6637 = vpack.c.bf16 %v6605, %v6605
        %s6638 = scalar_lea.vmem %s2, 384
        %v6639 = vld [vmem:[%s6638] sm:$0xf]
        %v6640 = vld [vmem:[%s6638 + $0x4] sm:$0xf]
        %v6641 = vld [vmem:[%s6638 + $0x8] sm:$0xf]
        %v6642 = vld [vmem:[%s6638 + $0xc] sm:$0xf]
        %v6643 = vld [vmem:[%s6638 + $0x10] sm:$0xf]
        %v6644 = vld [vmem:[%s6638 + $0x14] sm:$0xf]
        %v6645 = vld [vmem:[%s6638 + $0x18] sm:$0xf]
        %v6646 = vld [vmem:[%s6638 + $0x1c] sm:$0xf]
        %v6647 = vld [vmem:[%s6638 + $0x20] sm:$0xf]
        %v6648 = vld [vmem:[%s6638 + $0x24] sm:$0xf]
        %v6649 = vld [vmem:[%s6638 + $0x28] sm:$0xf]
        %v6650 = vld [vmem:[%s6638 + $0x2c] sm:$0xf]
        %v6651 = vld [vmem:[%s6638 + $0x30] sm:$0xf]
        %v6652 = vld [vmem:[%s6638 + $0x34] sm:$0xf]
        %v6653 = vld [vmem:[%s6638 + $0x38] sm:$0xf]
        %v6654 = vld [vmem:[%s6638 + $0x3c] sm:$0xf]
        %v6687 = vunpack.c.l.b16 %v6606
        %v6688 = vunpack.c.l.b16 %v6607
        %v6689 = vunpack.c.l.b16 %v6608
        %v6690 = vunpack.c.l.b16 %v6609
        %v6691 = vunpack.c.l.b16 %v6610
        %v6692 = vunpack.c.l.b16 %v6611
        %v6693 = vunpack.c.l.b16 %v6612
        %v6694 = vunpack.c.l.b16 %v6613
        %v6695 = vunpack.c.l.b16 %v6614
        %v6696 = vunpack.c.l.b16 %v6615
        %v6697 = vunpack.c.l.b16 %v6616
        %v6698 = vunpack.c.l.b16 %v6617
        %v6699 = vunpack.c.l.b16 %v6618
        %v6700 = vunpack.c.l.b16 %v6619
        %v6701 = vunpack.c.l.b16 %v6620
        %v6702 = vunpack.c.l.b16 %v6621
        %v6703 = vunpack.c.l.b16 %v6622
        %v6704 = vunpack.c.l.b16 %v6623
        %v6705 = vunpack.c.l.b16 %v6624
        %v6706 = vunpack.c.l.b16 %v6625
        %v6707 = vunpack.c.l.b16 %v6626
        %v6708 = vunpack.c.l.b16 %v6627
        %v6709 = vunpack.c.l.b16 %v6628
        %v6710 = vunpack.c.l.b16 %v6629
        %v6711 = vunpack.c.l.b16 %v6630
        %v6712 = vunpack.c.l.b16 %v6631
        %v6713 = vunpack.c.l.b16 %v6632
        %v6714 = vunpack.c.l.b16 %v6633
        %v6715 = vunpack.c.l.b16 %v6634
        %v6716 = vunpack.c.l.b16 %v6635
        %v6717 = vunpack.c.l.b16 %v6636
        %v6718 = vunpack.c.l.b16 %v6637
        %v6719 = vpack.c.b16 %v6688, %v6687
        %v6720 = vpack.c.b16 %v6690, %v6689
        %v6721 = vpack.c.b16 %v6692, %v6691
        %v6722 = vpack.c.b16 %v6694, %v6693
        %v6723 = vpack.c.b16 %v6696, %v6695
        %v6724 = vpack.c.b16 %v6698, %v6697
        %v6725 = vpack.c.b16 %v6700, %v6699
        %v6726 = vpack.c.b16 %v6702, %v6701
        %v6727 = vpack.c.b16 %v6704, %v6703
        %v6728 = vpack.c.b16 %v6706, %v6705
        %v6729 = vpack.c.b16 %v6708, %v6707
        %v6730 = vpack.c.b16 %v6710, %v6709
        %v6731 = vpack.c.b16 %v6712, %v6711
        %v6732 = vpack.c.b16 %v6714, %v6713
        %v6733 = vpack.c.b16 %v6716, %v6715
        %v6734 = vpack.c.b16 %v6718, %v6717
        %v6767 = vunpack.c.l.b16 %v6639
        %v6768 = vunpack.c.l.b16 %v6640
        %v6769 = vunpack.c.l.b16 %v6641
        %v6770 = vunpack.c.l.b16 %v6642
        %v6771 = vunpack.c.l.b16 %v6643
        %v6772 = vunpack.c.l.b16 %v6644
        %v6773 = vunpack.c.l.b16 %v6645
        %v6774 = vunpack.c.l.b16 %v6646
        %v6775 = vunpack.c.l.b16 %v6647
        %v6776 = vunpack.c.l.b16 %v6648
        %v6777 = vunpack.c.l.b16 %v6649
        %v6778 = vunpack.c.l.b16 %v6650
        %v6779 = vunpack.c.l.b16 %v6651
        %v6780 = vunpack.c.l.b16 %v6652
        %v6781 = vunpack.c.l.b16 %v6653
        %v6782 = vunpack.c.l.b16 %v6654
        %v6783 = vpack.c.b16 %v6768, %v6767
        %v6784 = vpack.c.b16 %v6770, %v6769
        %v6785 = vpack.c.b16 %v6772, %v6771
        %v6786 = vpack.c.b16 %v6774, %v6773
        %v6787 = vpack.c.b16 %v6776, %v6775
        %v6788 = vpack.c.b16 %v6778, %v6777
        %v6789 = vpack.c.b16 %v6780, %v6779
        %v6790 = vpack.c.b16 %v6782, %v6781
        %6799 = vmatprep.subr.bf16.mxu0 0
        %6800 = vmatpush1.bf16.msra.mxu0 %v6783
        %6801 = vmatprep.subr.bf16.mxu0 0
        %6802 = vmatpush1.bf16.msra.mxu0 %v6784
        %6803 = vmatprep.subr.bf16.mxu0 0
        %6804 = vmatpush1.bf16.msra.mxu0 %v6785
        %6805 = vmatprep.subr.bf16.mxu0 0
        %6806 = vmatpush1.bf16.msra.mxu0 %v6786
        %6807 = vmatprep.subr.bf16.mxu0 0
        %6808 = vmatpush1.bf16.msra.mxu0 %v6787
        %6809 = vmatprep.subr.bf16.mxu0 0
        %6810 = vmatpush1.bf16.msra.mxu0 %v6788
        %6811 = vmatprep.subr.bf16.mxu0 0
        %6812 = vmatpush1.bf16.msra.mxu0 %v6789
        %6813 = vmatprep.subr.bf16.mxu0 0
        %6814 = vmatpush1.bf16.msra.mxu0 %v6790
        %6815 = vmatprep.subr.bf16.mxu0 0
        %6816 = vmatpush1.bf16.msra.mxu0 0
        %6817 = vmatprep.subr.bf16.mxu0 0
        %6818 = vmatpush1.bf16.msra.mxu0 0
        %6819 = vmatprep.subr.bf16.mxu0 0
        %6820 = vmatpush1.bf16.msra.mxu0 0
        %6821 = vmatprep.subr.bf16.mxu0 0
        %6822 = vmatpush1.bf16.msra.mxu0 0
        %6823 = vmatprep.subr.bf16.mxu0 0
        %6824 = vmatpush1.bf16.msra.mxu0 0
        %6825 = vmatprep.subr.bf16.mxu0 0
        %6826 = vmatpush1.bf16.msra.mxu0 0
        %6827 = vmatprep.subr.bf16.mxu0 0
        %6828 = vmatpush1.bf16.msra.mxu0 0
        %6829 = vmatprep.subr.bf16.mxu0 0
        %6830 = vmatpush1.bf16.msra.mxu0 0
        %6831 = vmatprep.mubr.bf16.mxu0 0
        %6832 = vmatmul.mubr.bf16.gmra.mrb[0].mxu0 %v6719
        %v6833 = vpop.f32.mrb[0].mxu0
        %v6834 = vadd.f32 0.0, %v6833
        %v6835 = vpop.f32.mrb[0].mxu0
        %v6836 = vpop.f32.mrb[0].mxu0
        %v6837 = vadd.f32 0.0, %v6836
        %v6838 = vpop.f32.mrb[0].mxu0
        %6839 = vmatprep.mubr.bf16.mxu0 0
        %6840 = vmatmul.mubr.bf16.gmra.mrb[0].mxu0 %v6720
        %v6841 = vpop.f32.mrb[0].mxu0
        %v6842 = vadd.f32 0.0, %v6841
        %v6843 = vpop.f32.mrb[0].mxu0
        %v6844 = vpop.f32.mrb[0].mxu0
        %v6845 = vadd.f32 0.0, %v6844
        %v6846 = vpop.f32.mrb[0].mxu0
        %6847 = vmatprep.mubr.bf16.mxu0 0
        %6848 = vmatmul.mubr.bf16.gmra.mrb[0].mxu0 %v6721
        %v6849 = vpop.f32.mrb[0].mxu0
        %v6850 = vadd.f32 0.0, %v6849
        %v6851 = vpop.f32.mrb[0].mxu0
        %v6852 = vpop.f32.mrb[0].mxu0
        %v6853 = vadd.f32 0.0, %v6852
        %v6854 = vpop.f32.mrb[0].mxu0
        %6855 = vmatprep.mubr.bf16.mxu0 0
        %6856 = vmatmul.mubr.bf16.gmra.mrb[0].mxu0 %v6722
        %v6857 = vpop.f32.mrb[0].mxu0
        %v6858 = vadd.f32 0.0, %v6857
        %v6859 = vpop.f32.mrb[0].mxu0
        %v6860 = vpop.f32.mrb[0].mxu0
        %v6861 = vadd.f32 0.0, %v6860
        %v6862 = vpop.f32.mrb[0].mxu0
        %6863 = vmatprep.mubr.bf16.mxu0 0
        %6864 = vmatmul.mubr.bf16.gmra.mrb[0].mxu0 %v6723
        %v6865 = vpop.f32.mrb[0].mxu0
        %v6866 = vadd.f32 0.0, %v6865
        %v6867 = vpop.f32.mrb[0].mxu0
        %v6868 = vpop.f32.mrb[0].mxu0
        %v6869 = vadd.f32 0.0, %v6868
        %v6870 = vpop.f32.mrb[0].mxu0
        %6871 = vmatprep.mubr.bf16.mxu0 0
        %6872 = vmatmul.mubr.bf16.gmra.mrb[0].mxu0 %v6724
        %v6873 = vpop.f32.mrb[0].mxu0
        %v6874 = vadd.f32 0.0, %v6873
        %v6875 = vpop.f32.mrb[0].mxu0
        %v6876 = vpop.f32.mrb[0].mxu0
        %v6877 = vadd.f32 0.0, %v6876
        %v6878 = vpop.f32.mrb[0].mxu0
        %6879 = vmatprep.mubr.bf16.mxu0 0
        %6880 = vmatmul.mubr.bf16.gmra.mrb[0].mxu0 %v6725
        %v6881 = vpop.f32.mrb[0].mxu0
        %v6882 = vadd.f32 0.0, %v6881
        %v6883 = vpop.f32.mrb[0].mxu0
        %v6884 = vpop.f32.mrb[0].mxu0
        %v6885 = vadd.f32 0.0, %v6884
        %v6886 = vpop.f32.mrb[0].mxu0
        %6887 = vmatprep.mubr.bf16.mxu0 0
        %6888 = vmatmul.mubr.bf16.gmra.mrb[0].mxu0 %v6726
        %v6889 = vpop.f32.mrb[0].mxu0
        %v6890 = vadd.f32 0.0, %v6889
        %v6891 = vpop.f32.mrb[0].mxu0
        %v6892 = vpop.f32.mrb[0].mxu0
        %v6893 = vadd.f32 0.0, %v6892
        %v6894 = vpop.f32.mrb[0].mxu0
        %6895 = vmatprep.mubr.bf16.mxu0 0
        %6896 = vmatmul.mubr.bf16.gmra.mrb[0].mxu0 %v6727
        %v6897 = vpop.f32.mrb[0].mxu0
        %v6898 = vadd.f32 0.0, %v6897
        %v6899 = vpop.f32.mrb[0].mxu0
        %v6900 = vpop.f32.mrb[0].mxu0
        %v6901 = vadd.f32 0.0, %v6900
        %v6902 = vpop.f32.mrb[0].mxu0
        %6903 = vmatprep.mubr.bf16.mxu0 0
        %6904 = vmatmul.mubr.bf16.gmra.mrb[0].mxu0 %v6728
        %v6905 = vpop.f32.mrb[0].mxu0
        %v6906 = vadd.f32 0.0, %v6905
        %v6907 = vpop.f32.mrb[0].mxu0
        %v6908 = vpop.f32.mrb[0].mxu0
        %v6909 = vadd.f32 0.0, %v6908
        %v6910 = vpop.f32.mrb[0].mxu0
        %6911 = vmatprep.mubr.bf16.mxu0 0
        %6912 = vmatmul.mubr.bf16.gmra.mrb[0].mxu0 %v6729
        %v6913 = vpop.f32.mrb[0].mxu0
        %v6914 = vadd.f32 0.0, %v6913
        %v6915 = vpop.f32.mrb[0].mxu0
        %v6916 = vpop.f32.mrb[0].mxu0
        %v6917 = vadd.f32 0.0, %v6916
        %v6918 = vpop.f32.mrb[0].mxu0
        %6919 = vmatprep.mubr.bf16.mxu0 0
        %6920 = vmatmul.mubr.bf16.gmra.mrb[0].mxu0 %v6730
        %v6921 = vpop.f32.mrb[0].mxu0
        %v6922 = vadd.f32 0.0, %v6921
        %v6923 = vpop.f32.mrb[0].mxu0
        %v6924 = vpop.f32.mrb[0].mxu0
        %v6925 = vadd.f32 0.0, %v6924
        %v6926 = vpop.f32.mrb[0].mxu0
        %6927 = vmatprep.mubr.bf16.mxu0 0
        %6928 = vmatmul.mubr.bf16.gmra.mrb[0].mxu0 %v6731
        %v6929 = vpop.f32.mrb[0].mxu0
        %v6930 = vadd.f32 0.0, %v6929
        %v6931 = vpop.f32.mrb[0].mxu0
        %v6932 = vpop.f32.mrb[0].mxu0
        %v6933 = vadd.f32 0.0, %v6932
        %v6934 = vpop.f32.mrb[0].mxu0
        %6935 = vmatprep.mubr.bf16.mxu0 0
        %6936 = vmatmul.mubr.bf16.gmra.mrb[0].mxu0 %v6732
        %v6937 = vpop.f32.mrb[0].mxu0
        %v6938 = vadd.f32 0.0, %v6937
        %v6939 = vpop.f32.mrb[0].mxu0
        %v6940 = vpop.f32.mrb[0].mxu0
        %v6941 = vadd.f32 0.0, %v6940
        %v6942 = vpop.f32.mrb[0].mxu0
        %6943 = vmatprep.mubr.bf16.mxu0 0
        %6944 = vmatmul.mubr.bf16.gmra.mrb[0].mxu0 %v6733
        %v6945 = vpop.f32.mrb[0].mxu0
        %v6946 = vadd.f32 0.0, %v6945
        %v6947 = vpop.f32.mrb[0].mxu0
        %v6948 = vpop.f32.mrb[0].mxu0
        %v6949 = vadd.f32 0.0, %v6948
        %v6950 = vpop.f32.mrb[0].mxu0
        %6951 = vmatprep.mubr.bf16.mxu0 0
        %6952 = vmatmul.mubr.bf16.gmra.mrb[0].mxu0 %v6734
        %v6953 = vpop.f32.mrb[0].mxu0
        %v6954 = vadd.f32 0.0, %v6953
        %v6955 = vpop.f32.mrb[0].mxu0
        %v6956 = vpop.f32.mrb[0].mxu0
        %v6957 = vadd.f32 0.0, %v6956
        %v6958 = vpop.f32.mrb[0].mxu0
        %6959 = vdwg.mxu0
        %v6960 = vadd.f32 %v6541, %v6834
        %v6961 = vadd.f32 %v6542, %v6837
        %v6962 = vadd.f32 %v6543, %v6842
        %v6963 = vadd.f32 %v6544, %v6845
        %v6964 = vadd.f32 %v6545, %v6850
        %v6965 = vadd.f32 %v6546, %v6853
        %v6966 = vadd.f32 %v6547, %v6858
        %v6967 = vadd.f32 %v6548, %v6861
        %v6968 = vadd.f32 %v6549, %v6866
        %v6969 = vadd.f32 %v6550, %v6869
        %v6970 = vadd.f32 %v6551, %v6874
        %v6971 = vadd.f32 %v6552, %v6877
        %v6972 = vadd.f32 %v6553, %v6882
        %v6973 = vadd.f32 %v6554, %v6885
        %v6974 = vadd.f32 %v6555, %v6890
        %v6975 = vadd.f32 %v6556, %v6893
        %v6976 = vadd.f32 %v6557, %v6898
        %v6977 = vadd.f32 %v6558, %v6901
        %v6978 = vadd.f32 %v6559, %v6906
        %v6979 = vadd.f32 %v6560, %v6909
        %v6980 = vadd.f32 %v6561, %v6914
        %v6981 = vadd.f32 %v6562, %v6917
        %v6982 = vadd.f32 %v6563, %v6922
        %v6983 = vadd.f32 %v6564, %v6925
        %v6984 = vadd.f32 %v6565, %v6930
        %v6985 = vadd.f32 %v6566, %v6933
        %v6986 = vadd.f32 %v6567, %v6938
        %v6987 = vadd.f32 %v6568, %v6941
        %v6988 = vadd.f32 %v6569, %v6946
        %v6989 = vadd.f32 %v6570, %v6949
        %v6990 = vadd.f32 %v6571, %v6954
        %v6991 = vadd.f32 %v6572, %v6957
        %v6992 = vld [vmem:[%s6573 + $0x1] sm:$0xff]
        %v6993 = vld [vmem:[%s6573 + $0x11] sm:$0xff]
        %v6994 = vld [vmem:[%s6573 + $0x21] sm:$0xff]
        %v6995 = vld [vmem:[%s6573 + $0x31] sm:$0xff]
        %v6996 = vld [vmem:[%s6573 + $0x61] sm:$0xff]
        %v6997 = vld [vmem:[%s6573 + $0x71] sm:$0xff]
        %v6998 = vld [vmem:[%s6573 + $0x81] sm:$0xff]
        %v6999 = vld [vmem:[%s6573 + $0x91] sm:$0xff]
        %v7000 = vld [vmem:[%s6573 + $0xc1] sm:$0xff]
        %v7001 = vld [vmem:[%s6573 + $0xd1] sm:$0xff]
        %v7002 = vld [vmem:[%s6573 + $0xe1] sm:$0xff]
        %v7003 = vld [vmem:[%s6573 + $0xf1] sm:$0xff]
        %v7004 = vld [vmem:[%s6573 + $0x121] sm:$0xff]
        %v7005 = vld [vmem:[%s6573 + $0x131] sm:$0xff]
        %v7006 = vld [vmem:[%s6573 + $0x141] sm:$0xff]
        %v7007 = vld [vmem:[%s6573 + $0x151] sm:$0xff]
        %v7008 = vld [vmem:[%s6573 + $0x181] sm:$0xff]
        %v7009 = vld [vmem:[%s6573 + $0x191] sm:$0xff]
        %v7010 = vld [vmem:[%s6573 + $0x1a1] sm:$0xff]
        %v7011 = vld [vmem:[%s6573 + $0x1b1] sm:$0xff]
        %v7012 = vld [vmem:[%s6573 + $0x1e1] sm:$0xff]
        %v7013 = vld [vmem:[%s6573 + $0x1f1] sm:$0xff]
        %v7014 = vld [vmem:[%s6573 + $0x201] sm:$0xff]
        %v7015 = vld [vmem:[%s6573 + $0x211] sm:$0xff]
        %v7016 = vld [vmem:[%s6573 + $0x241] sm:$0xff]
        %v7017 = vld [vmem:[%s6573 + $0x251] sm:$0xff]
        %v7018 = vld [vmem:[%s6573 + $0x261] sm:$0xff]
        %v7019 = vld [vmem:[%s6573 + $0x271] sm:$0xff]
        %v7020 = vld [vmem:[%s6573 + $0x2a1] sm:$0xff]
        %v7021 = vld [vmem:[%s6573 + $0x2b1] sm:$0xff]
        %v7022 = vld [vmem:[%s6573 + $0x2c1] sm:$0xff]
        %v7023 = vld [vmem:[%s6573 + $0x2d1] sm:$0xff]
        %v7024 = vpack.c.bf16 %v6992, %v6992
        %v7025 = vpack.c.bf16 %v6993, %v6993
        %v7026 = vpack.c.bf16 %v6994, %v6994
        %v7027 = vpack.c.bf16 %v6995, %v6995
        %v7028 = vpack.c.bf16 %v6996, %v6996
        %v7029 = vpack.c.bf16 %v6997, %v6997
        %v7030 = vpack.c.bf16 %v6998, %v6998
        %v7031 = vpack.c.bf16 %v6999, %v6999
        %v7032 = vpack.c.bf16 %v7000, %v7000
        %v7033 = vpack.c.bf16 %v7001, %v7001
        %v7034 = vpack.c.bf16 %v7002, %v7002
        %v7035 = vpack.c.bf16 %v7003, %v7003
        %v7036 = vpack.c.bf16 %v7004, %v7004
        %v7037 = vpack.c.bf16 %v7005, %v7005
        %v7038 = vpack.c.bf16 %v7006, %v7006
        %v7039 = vpack.c.bf16 %v7007, %v7007
        %v7040 = vpack.c.bf16 %v7008, %v7008
        %v7041 = vpack.c.bf16 %v7009, %v7009
        %v7042 = vpack.c.bf16 %v7010, %v7010
        %v7043 = vpack.c.bf16 %v7011, %v7011
        %v7044 = vpack.c.bf16 %v7012, %v7012
        %v7045 = vpack.c.bf16 %v7013, %v7013
        %v7046 = vpack.c.bf16 %v7014, %v7014
        %v7047 = vpack.c.bf16 %v7015, %v7015
        %v7048 = vpack.c.bf16 %v7016, %v7016
        %v7049 = vpack.c.bf16 %v7017, %v7017
        %v7050 = vpack.c.bf16 %v7018, %v7018
        %v7051 = vpack.c.bf16 %v7019, %v7019
        %v7052 = vpack.c.bf16 %v7020, %v7020
        %v7053 = vpack.c.bf16 %v7021, %v7021
        %v7054 = vpack.c.bf16 %v7022, %v7022
        %v7055 = vpack.c.bf16 %v7023, %v7023
        %s7056 = scalar_lea.vmem %s2, 448
        %v7057 = vld [vmem:[%s7056] sm:$0xf]
        %v7058 = vld [vmem:[%s7056 + $0x4] sm:$0xf]
        %v7059 = vld [vmem:[%s7056 + $0x8] sm:$0xf]
        %v7060 = vld [vmem:[%s7056 + $0xc] sm:$0xf]
        %v7061 = vld [vmem:[%s7056 + $0x10] sm:$0xf]
        %v7062 = vld [vmem:[%s7056 + $0x14] sm:$0xf]
        %v7063 = vld [vmem:[%s7056 + $0x18] sm:$0xf]
        %v7064 = vld [vmem:[%s7056 + $0x1c] sm:$0xf]
        %v7065 = vld [vmem:[%s7056 + $0x20] sm:$0xf]
        %v7066 = vld [vmem:[%s7056 + $0x24] sm:$0xf]
        %v7067 = vld [vmem:[%s7056 + $0x28] sm:$0xf]
        %v7068 = vld [vmem:[%s7056 + $0x2c] sm:$0xf]
        %v7069 = vld [vmem:[%s7056 + $0x30] sm:$0xf]
        %v7070 = vld [vmem:[%s7056 + $0x34] sm:$0xf]
        %v7071 = vld [vmem:[%s7056 + $0x38] sm:$0xf]
        %v7072 = vld [vmem:[%s7056 + $0x3c] sm:$0xf]
        %v7105 = vunpack.c.l.b16 %v7024
        %v7106 = vunpack.c.l.b16 %v7025
        %v7107 = vunpack.c.l.b16 %v7026
        %v7108 = vunpack.c.l.b16 %v7027
        %v7109 = vunpack.c.l.b16 %v7028
        %v7110 = vunpack.c.l.b16 %v7029
        %v7111 = vunpack.c.l.b16 %v7030
        %v7112 = vunpack.c.l.b16 %v7031
        %v7113 = vunpack.c.l.b16 %v7032
        %v7114 = vunpack.c.l.b16 %v7033
        %v7115 = vunpack.c.l.b16 %v7034
        %v7116 = vunpack.c.l.b16 %v7035
        %v7117 = vunpack.c.l.b16 %v7036
        %v7118 = vunpack.c.l.b16 %v7037
        %v7119 = vunpack.c.l.b16 %v7038
        %v7120 = vunpack.c.l.b16 %v7039
        %v7121 = vunpack.c.l.b16 %v7040
        %v7122 = vunpack.c.l.b16 %v7041
        %v7123 = vunpack.c.l.b16 %v7042
        %v7124 = vunpack.c.l.b16 %v7043
        %v7125 = vunpack.c.l.b16 %v7044
        %v7126 = vunpack.c.l.b16 %v7045
        %v7127 = vunpack.c.l.b16 %v7046
        %v7128 = vunpack.c.l.b16 %v7047
        %v7129 = vunpack.c.l.b16 %v7048
        %v7130 = vunpack.c.l.b16 %v7049
        %v7131 = vunpack.c.l.b16 %v7050
        %v7132 = vunpack.c.l.b16 %v7051
        %v7133 = vunpack.c.l.b16 %v7052
        %v7134 = vunpack.c.l.b16 %v7053
        %v7135 = vunpack.c.l.b16 %v7054
        %v7136 = vunpack.c.l.b16 %v7055
        %v7137 = vpack.c.b16 %v7106, %v7105
        %v7138 = vpack.c.b16 %v7108, %v7107
        %v7139 = vpack.c.b16 %v7110, %v7109
        %v7140 = vpack.c.b16 %v7112, %v7111
        %v7141 = vpack.c.b16 %v7114, %v7113
        %v7142 = vpack.c.b16 %v7116, %v7115
        %v7143 = vpack.c.b16 %v7118, %v7117
        %v7144 = vpack.c.b16 %v7120, %v7119
        %v7145 = vpack.c.b16 %v7122, %v7121
        %v7146 = vpack.c.b16 %v7124, %v7123
        %v7147 = vpack.c.b16 %v7126, %v7125
        %v7148 = vpack.c.b16 %v7128, %v7127
        %v7149 = vpack.c.b16 %v7130, %v7129
        %v7150 = vpack.c.b16 %v7132, %v7131
        %v7151 = vpack.c.b16 %v7134, %v7133
        %v7152 = vpack.c.b16 %v7136, %v7135
        %v7185 = vunpack.c.l.b16 %v7057
        %v7186 = vunpack.c.l.b16 %v7058
        %v7187 = vunpack.c.l.b16 %v7059
        %v7188 = vunpack.c.l.b16 %v7060
        %v7189 = vunpack.c.l.b16 %v7061
        %v7190 = vunpack.c.l.b16 %v7062
        %v7191 = vunpack.c.l.b16 %v7063
        %v7192 = vunpack.c.l.b16 %v7064
        %v7193 = vunpack.c.l.b16 %v7065
        %v7194 = vunpack.c.l.b16 %v7066
        %v7195 = vunpack.c.l.b16 %v7067
        %v7196 = vunpack.c.l.b16 %v7068
        %v7197 = vunpack.c.l.b16 %v7069
        %v7198 = vunpack.c.l.b16 %v7070
        %v7199 = vunpack.c.l.b16 %v7071
        %v7200 = vunpack.c.l.b16 %v7072
        %v7201 = vpack.c.b16 %v7186, %v7185
        %v7202 = vpack.c.b16 %v7188, %v7187
        %v7203 = vpack.c.b16 %v7190, %v7189
        %v7204 = vpack.c.b16 %v7192, %v7191
        %v7205 = vpack.c.b16 %v7194, %v7193
        %v7206 = vpack.c.b16 %v7196, %v7195
        %v7207 = vpack.c.b16 %v7198, %v7197
        %v7208 = vpack.c.b16 %v7200, %v7199
        %7217 = vmatprep.subr.bf16.mxu0 0
        %7218 = vmatpush1.bf16.msra.mxu0 %v7201
        %7219 = vmatprep.subr.bf16.mxu0 0
        %7220 = vmatpush1.bf16.msra.mxu0 %v7202
        %7221 = vmatprep.subr.bf16.mxu0 0
        %7222 = vmatpush1.bf16.msra.mxu0 %v7203
        %7223 = vmatprep.subr.bf16.mxu0 0
        %7224 = vmatpush1.bf16.msra.mxu0 %v7204
        %7225 = vmatprep.subr.bf16.mxu0 0
        %7226 = vmatpush1.bf16.msra.mxu0 %v7205
        %7227 = vmatprep.subr.bf16.mxu0 0
        %7228 = vmatpush1.bf16.msra.mxu0 %v7206
        %7229 = vmatprep.subr.bf16.mxu0 0
        %7230 = vmatpush1.bf16.msra.mxu0 %v7207
        %7231 = vmatprep.subr.bf16.mxu0 0
        %7232 = vmatpush1.bf16.msra.mxu0 %v7208
        %7233 = vmatprep.subr.bf16.mxu0 0
        %7234 = vmatpush1.bf16.msra.mxu0 0
        %7235 = vmatprep.subr.bf16.mxu0 0
        %7236 = vmatpush1.bf16.msra.mxu0 0
        %7237 = vmatprep.subr.bf16.mxu0 0
        %7238 = vmatpush1.bf16.msra.mxu0 0
        %7239 = vmatprep.subr.bf16.mxu0 0
        %7240 = vmatpush1.bf16.msra.mxu0 0
        %7241 = vmatprep.subr.bf16.mxu0 0
        %7242 = vmatpush1.bf16.msra.mxu0 0
        %7243 = vmatprep.subr.bf16.mxu0 0
        %7244 = vmatpush1.bf16.msra.mxu0 0
        %7245 = vmatprep.subr.bf16.mxu0 0
        %7246 = vmatpush1.bf16.msra.mxu0 0
        %7247 = vmatprep.subr.bf16.mxu0 0
        %7248 = vmatpush1.bf16.msra.mxu0 0
        %7249 = vmatprep.mubr.bf16.mxu0 0
        %7250 = vmatmul.mubr.bf16.gmra.mrb[0].mxu0 %v7137
        %v7251 = vpop.f32.mrb[0].mxu0
        %v7252 = vadd.f32 0.0, %v7251
        %v7253 = vpop.f32.mrb[0].mxu0
        %v7254 = vpop.f32.mrb[0].mxu0
        %v7255 = vadd.f32 0.0, %v7254
        %v7256 = vpop.f32.mrb[0].mxu0
        %7257 = vmatprep.mubr.bf16.mxu0 0
        %7258 = vmatmul.mubr.bf16.gmra.mrb[0].mxu0 %v7138
        %v7259 = vpop.f32.mrb[0].mxu0
        %v7260 = vadd.f32 0.0, %v7259
        %v7261 = vpop.f32.mrb[0].mxu0
        %v7262 = vpop.f32.mrb[0].mxu0
        %v7263 = vadd.f32 0.0, %v7262
        %v7264 = vpop.f32.mrb[0].mxu0
        %7265 = vmatprep.mubr.bf16.mxu0 0
        %7266 = vmatmul.mubr.bf16.gmra.mrb[0].mxu0 %v7139
        %v7267 = vpop.f32.mrb[0].mxu0
        %v7268 = vadd.f32 0.0, %v7267
        %v7269 = vpop.f32.mrb[0].mxu0
        %v7270 = vpop.f32.mrb[0].mxu0
        %v7271 = vadd.f32 0.0, %v7270
        %v7272 = vpop.f32.mrb[0].mxu0
        %7273 = vmatprep.mubr.bf16.mxu0 0
        %7274 = vmatmul.mubr.bf16.gmra.mrb[0].mxu0 %v7140
        %v7275 = vpop.f32.mrb[0].mxu0
        %v7276 = vadd.f32 0.0, %v7275
        %v7277 = vpop.f32.mrb[0].mxu0
        %v7278 = vpop.f32.mrb[0].mxu0
        %v7279 = vadd.f32 0.0, %v7278
        %v7280 = vpop.f32.mrb[0].mxu0
        %7281 = vmatprep.mubr.bf16.mxu0 0
        %7282 = vmatmul.mubr.bf16.gmra.mrb[0].mxu0 %v7141
        %v7283 = vpop.f32.mrb[0].mxu0
        %v7284 = vadd.f32 0.0, %v7283
        %v7285 = vpop.f32.mrb[0].mxu0
        %v7286 = vpop.f32.mrb[0].mxu0
        %v7287 = vadd.f32 0.0, %v7286
        %v7288 = vpop.f32.mrb[0].mxu0
        %7289 = vmatprep.mubr.bf16.mxu0 0
        %7290 = vmatmul.mubr.bf16.gmra.mrb[0].mxu0 %v7142
        %v7291 = vpop.f32.mrb[0].mxu0
        %v7292 = vadd.f32 0.0, %v7291
        %v7293 = vpop.f32.mrb[0].mxu0
        %v7294 = vpop.f32.mrb[0].mxu0
        %v7295 = vadd.f32 0.0, %v7294
        %v7296 = vpop.f32.mrb[0].mxu0
        %7297 = vmatprep.mubr.bf16.mxu0 0
        %7298 = vmatmul.mubr.bf16.gmra.mrb[0].mxu0 %v7143
        %v7299 = vpop.f32.mrb[0].mxu0
        %v7300 = vadd.f32 0.0, %v7299
        %v7301 = vpop.f32.mrb[0].mxu0
        %v7302 = vpop.f32.mrb[0].mxu0
        %v7303 = vadd.f32 0.0, %v7302
        %v7304 = vpop.f32.mrb[0].mxu0
        %7305 = vmatprep.mubr.bf16.mxu0 0
        %7306 = vmatmul.mubr.bf16.gmra.mrb[0].mxu0 %v7144
        %v7307 = vpop.f32.mrb[0].mxu0
        %v7308 = vadd.f32 0.0, %v7307
        %v7309 = vpop.f32.mrb[0].mxu0
        %v7310 = vpop.f32.mrb[0].mxu0
        %v7311 = vadd.f32 0.0, %v7310
        %v7312 = vpop.f32.mrb[0].mxu0
        %7313 = vmatprep.mubr.bf16.mxu0 0
        %7314 = vmatmul.mubr.bf16.gmra.mrb[0].mxu0 %v7145
        %v7315 = vpop.f32.mrb[0].mxu0
        %v7316 = vadd.f32 0.0, %v7315
        %v7317 = vpop.f32.mrb[0].mxu0
        %v7318 = vpop.f32.mrb[0].mxu0
        %v7319 = vadd.f32 0.0, %v7318
        %v7320 = vpop.f32.mrb[0].mxu0
        %7321 = vmatprep.mubr.bf16.mxu0 0
        %7322 = vmatmul.mubr.bf16.gmra.mrb[0].mxu0 %v7146
        %v7323 = vpop.f32.mrb[0].mxu0
        %v7324 = vadd.f32 0.0, %v7323
        %v7325 = vpop.f32.mrb[0].mxu0
        %v7326 = vpop.f32.mrb[0].mxu0
        %v7327 = vadd.f32 0.0, %v7326
        %v7328 = vpop.f32.mrb[0].mxu0
        %7329 = vmatprep.mubr.bf16.mxu0 0
        %7330 = vmatmul.mubr.bf16.gmra.mrb[0].mxu0 %v7147
        %v7331 = vpop.f32.mrb[0].mxu0
        %v7332 = vadd.f32 0.0, %v7331
        %v7333 = vpop.f32.mrb[0].mxu0
        %v7334 = vpop.f32.mrb[0].mxu0
        %v7335 = vadd.f32 0.0, %v7334
        %v7336 = vpop.f32.mrb[0].mxu0
        %7337 = vmatprep.mubr.bf16.mxu0 0
        %7338 = vmatmul.mubr.bf16.gmra.mrb[0].mxu0 %v7148
        %v7339 = vpop.f32.mrb[0].mxu0
        %v7340 = vadd.f32 0.0, %v7339
        %v7341 = vpop.f32.mrb[0].mxu0
        %v7342 = vpop.f32.mrb[0].mxu0
        %v7343 = vadd.f32 0.0, %v7342
        %v7344 = vpop.f32.mrb[0].mxu0
        %7345 = vmatprep.mubr.bf16.mxu0 0
        %7346 = vmatmul.mubr.bf16.gmra.mrb[0].mxu0 %v7149
        %v7347 = vpop.f32.mrb[0].mxu0
        %v7348 = vadd.f32 0.0, %v7347
        %v7349 = vpop.f32.mrb[0].mxu0
        %v7350 = vpop.f32.mrb[0].mxu0
        %v7351 = vadd.f32 0.0, %v7350
        %v7352 = vpop.f32.mrb[0].mxu0
        %7353 = vmatprep.mubr.bf16.mxu0 0
        %7354 = vmatmul.mubr.bf16.gmra.mrb[0].mxu0 %v7150
        %v7355 = vpop.f32.mrb[0].mxu0
        %v7356 = vadd.f32 0.0, %v7355
        %v7357 = vpop.f32.mrb[0].mxu0
        %v7358 = vpop.f32.mrb[0].mxu0
        %v7359 = vadd.f32 0.0, %v7358
        %v7360 = vpop.f32.mrb[0].mxu0
        %7361 = vmatprep.mubr.bf16.mxu0 0
        %7362 = vmatmul.mubr.bf16.gmra.mrb[0].mxu0 %v7151
        %v7363 = vpop.f32.mrb[0].mxu0
        %v7364 = vadd.f32 0.0, %v7363
        %v7365 = vpop.f32.mrb[0].mxu0
        %v7366 = vpop.f32.mrb[0].mxu0
        %v7367 = vadd.f32 0.0, %v7366
        %v7368 = vpop.f32.mrb[0].mxu0
        %7369 = vmatprep.mubr.bf16.mxu0 0
        %7370 = vmatmul.mubr.bf16.gmra.mrb[0].mxu0 %v7152
        %v7371 = vpop.f32.mrb[0].mxu0
        %v7372 = vadd.f32 0.0, %v7371
        %v7373 = vpop.f32.mrb[0].mxu0
        %v7374 = vpop.f32.mrb[0].mxu0
        %v7375 = vadd.f32 0.0, %v7374
        %v7376 = vpop.f32.mrb[0].mxu0
        %7377 = vdwg.mxu0
        %v7378 = vadd.f32 %v6960, %v7252
        %v7379 = vadd.f32 %v6961, %v7255
        %v7380 = vadd.f32 %v6962, %v7260
        %v7381 = vadd.f32 %v6963, %v7263
        %v7382 = vadd.f32 %v6964, %v7268
        %v7383 = vadd.f32 %v6965, %v7271
        %v7384 = vadd.f32 %v6966, %v7276
        %v7385 = vadd.f32 %v6967, %v7279
        %v7386 = vadd.f32 %v6968, %v7284
        %v7387 = vadd.f32 %v6969, %v7287
        %v7388 = vadd.f32 %v6970, %v7292
        %v7389 = vadd.f32 %v6971, %v7295
        %v7390 = vadd.f32 %v6972, %v7300
        %v7391 = vadd.f32 %v6973, %v7303
        %v7392 = vadd.f32 %v6974, %v7308
        %v7393 = vadd.f32 %v6975, %v7311
        %v7394 = vadd.f32 %v6976, %v7316
        %v7395 = vadd.f32 %v6977, %v7319
        %v7396 = vadd.f32 %v6978, %v7324
        %v7397 = vadd.f32 %v6979, %v7327
        %v7398 = vadd.f32 %v6980, %v7332
        %v7399 = vadd.f32 %v6981, %v7335
        %v7400 = vadd.f32 %v6982, %v7340
        %v7401 = vadd.f32 %v6983, %v7343
        %v7402 = vadd.f32 %v6984, %v7348
        %v7403 = vadd.f32 %v6985, %v7351
        %v7404 = vadd.f32 %v6986, %v7356
        %v7405 = vadd.f32 %v6987, %v7359
        %v7406 = vadd.f32 %v6988, %v7364
        %v7407 = vadd.f32 %v6989, %v7367
        %v7408 = vadd.f32 %v6990, %v7372
        %v7409 = vadd.f32 %v6991, %v7375
        %v7410 = vld [vmem:[%s6573 + $0x2] sm:$0xff]
        %v7411 = vld [vmem:[%s6573 + $0x12] sm:$0xff]
        %v7412 = vld [vmem:[%s6573 + $0x22] sm:$0xff]
        %v7413 = vld [vmem:[%s6573 + $0x32] sm:$0xff]
        %v7414 = vld [vmem:[%s6573 + $0x62] sm:$0xff]
        %v7415 = vld [vmem:[%s6573 + $0x72] sm:$0xff]
        %v7416 = vld [vmem:[%s6573 + $0x82] sm:$0xff]
        %v7417 = vld [vmem:[%s6573 + $0x92] sm:$0xff]
        %v7418 = vld [vmem:[%s6573 + $0xc2] sm:$0xff]
        %v7419 = vld [vmem:[%s6573 + $0xd2] sm:$0xff]
        %v7420 = vld [vmem:[%s6573 + $0xe2] sm:$0xff]
        %v7421 = vld [vmem:[%s6573 + $0xf2] sm:$0xff]
        %v7422 = vld [vmem:[%s6573 + $0x122] sm:$0xff]
        %v7423 = vld [vmem:[%s6573 + $0x132] sm:$0xff]
        %v7424 = vld [vmem:[%s6573 + $0x142] sm:$0xff]
        %v7425 = vld [vmem:[%s6573 + $0x152] sm:$0xff]
        %v7426 = vld [vmem:[%s6573 + $0x182] sm:$0xff]
        %v7427 = vld [vmem:[%s6573 + $0x192] sm:$0xff]
        %v7428 = vld [vmem:[%s6573 + $0x1a2] sm:$0xff]
        %v7429 = vld [vmem:[%s6573 + $0x1b2] sm:$0xff]
        %v7430 = vld [vmem:[%s6573 + $0x1e2] sm:$0xff]
        %v7431 = vld [vmem:[%s6573 + $0x1f2] sm:$0xff]
        %v7432 = vld [vmem:[%s6573 + $0x202] sm:$0xff]
        %v7433 = vld [vmem:[%s6573 + $0x212] sm:$0xff]
        %v7434 = vld [vmem:[%s6573 + $0x242] sm:$0xff]
        %v7435 = vld [vmem:[%s6573 + $0x252] sm:$0xff]
        %v7436 = vld [vmem:[%s6573 + $0x262] sm:$0xff]
        %v7437 = vld [vmem:[%s6573 + $0x272] sm:$0xff]
        %v7438 = vld [vmem:[%s6573 + $0x2a2] sm:$0xff]
        %v7439 = vld [vmem:[%s6573 + $0x2b2] sm:$0xff]
        %v7440 = vld [vmem:[%s6573 + $0x2c2] sm:$0xff]
        %v7441 = vld [vmem:[%s6573 + $0x2d2] sm:$0xff]
        %v7442 = vpack.c.bf16 %v7410, %v7410
        %v7443 = vpack.c.bf16 %v7411, %v7411
        %v7444 = vpack.c.bf16 %v7412, %v7412
        %v7445 = vpack.c.bf16 %v7413, %v7413
        %v7446 = vpack.c.bf16 %v7414, %v7414
        %v7447 = vpack.c.bf16 %v7415, %v7415
        %v7448 = vpack.c.bf16 %v7416, %v7416
        %v7449 = vpack.c.bf16 %v7417, %v7417
        %v7450 = vpack.c.bf16 %v7418, %v7418
        %v7451 = vpack.c.bf16 %v7419, %v7419
        %v7452 = vpack.c.bf16 %v7420, %v7420
        %v7453 = vpack.c.bf16 %v7421, %v7421
        %v7454 = vpack.c.bf16 %v7422, %v7422
        %v7455 = vpack.c.bf16 %v7423, %v7423
        %v7456 = vpack.c.bf16 %v7424, %v7424
        %v7457 = vpack.c.bf16 %v7425, %v7425
        %v7458 = vpack.c.bf16 %v7426, %v7426
        %v7459 = vpack.c.bf16 %v7427, %v7427
        %v7460 = vpack.c.bf16 %v7428, %v7428
        %v7461 = vpack.c.bf16 %v7429, %v7429
        %v7462 = vpack.c.bf16 %v7430, %v7430
        %v7463 = vpack.c.bf16 %v7431, %v7431
        %v7464 = vpack.c.bf16 %v7432, %v7432
        %v7465 = vpack.c.bf16 %v7433, %v7433
        %v7466 = vpack.c.bf16 %v7434, %v7434
        %v7467 = vpack.c.bf16 %v7435, %v7435
        %v7468 = vpack.c.bf16 %v7436, %v7436
        %v7469 = vpack.c.bf16 %v7437, %v7437
        %v7470 = vpack.c.bf16 %v7438, %v7438
        %v7471 = vpack.c.bf16 %v7439, %v7439
        %v7472 = vpack.c.bf16 %v7440, %v7440
        %v7473 = vpack.c.bf16 %v7441, %v7441
        %s7474 = scalar_lea.vmem %s2, 512
        %v7475 = vld [vmem:[%s7474] sm:$0xf]
        %v7476 = vld [vmem:[%s7474 + $0x4] sm:$0xf]
        %v7477 = vld [vmem:[%s7474 + $0x8] sm:$0xf]
        %v7478 = vld [vmem:[%s7474 + $0xc] sm:$0xf]
        %v7479 = vld [vmem:[%s7474 + $0x10] sm:$0xf]
        %v7480 = vld [vmem:[%s7474 + $0x14] sm:$0xf]
        %v7481 = vld [vmem:[%s7474 + $0x18] sm:$0xf]
        %v7482 = vld [vmem:[%s7474 + $0x1c] sm:$0xf]
        %v7483 = vld [vmem:[%s7474 + $0x20] sm:$0xf]
        %v7484 = vld [vmem:[%s7474 + $0x24] sm:$0xf]
        %v7485 = vld [vmem:[%s7474 + $0x28] sm:$0xf]
        %v7486 = vld [vmem:[%s7474 + $0x2c] sm:$0xf]
        %v7487 = vld [vmem:[%s7474 + $0x30] sm:$0xf]
        %v7488 = vld [vmem:[%s7474 + $0x34] sm:$0xf]
        %v7489 = vld [vmem:[%s7474 + $0x38] sm:$0xf]
        %v7490 = vld [vmem:[%s7474 + $0x3c] sm:$0xf]
        %v7523 = vunpack.c.l.b16 %v7442
        %v7524 = vunpack.c.l.b16 %v7443
        %v7525 = vunpack.c.l.b16 %v7444
        %v7526 = vunpack.c.l.b16 %v7445
        %v7527 = vunpack.c.l.b16 %v7446
        %v7528 = vunpack.c.l.b16 %v7447
        %v7529 = vunpack.c.l.b16 %v7448
        %v7530 = vunpack.c.l.b16 %v7449
        %v7531 = vunpack.c.l.b16 %v7450
        %v7532 = vunpack.c.l.b16 %v7451
        %v7533 = vunpack.c.l.b16 %v7452
        %v7534 = vunpack.c.l.b16 %v7453
        %v7535 = vunpack.c.l.b16 %v7454
        %v7536 = vunpack.c.l.b16 %v7455
        %v7537 = vunpack.c.l.b16 %v7456
        %v7538 = vunpack.c.l.b16 %v7457
        %v7539 = vunpack.c.l.b16 %v7458
        %v7540 = vunpack.c.l.b16 %v7459
        %v7541 = vunpack.c.l.b16 %v7460
        %v7542 = vunpack.c.l.b16 %v7461
        %v7543 = vunpack.c.l.b16 %v7462
        %v7544 = vunpack.c.l.b16 %v7463
        %v7545 = vunpack.c.l.b16 %v7464
        %v7546 = vunpack.c.l.b16 %v7465
        %v7547 = vunpack.c.l.b16 %v7466
        %v7548 = vunpack.c.l.b16 %v7467
        %v7549 = vunpack.c.l.b16 %v7468
        %v7550 = vunpack.c.l.b16 %v7469
        %v7551 = vunpack.c.l.b16 %v7470
        %v7552 = vunpack.c.l.b16 %v7471
        %v7553 = vunpack.c.l.b16 %v7472
        %v7554 = vunpack.c.l.b16 %v7473
        %v7555 = vpack.c.b16 %v7524, %v7523
        %v7556 = vpack.c.b16 %v7526, %v7525
        %v7557 = vpack.c.b16 %v7528, %v7527
        %v7558 = vpack.c.b16 %v7530, %v7529
        %v7559 = vpack.c.b16 %v7532, %v7531
        %v7560 = vpack.c.b16 %v7534, %v7533
        %v7561 = vpack.c.b16 %v7536, %v7535
        %v7562 = vpack.c.b16 %v7538, %v7537
        %v7563 = vpack.c.b16 %v7540, %v7539
        %v7564 = vpack.c.b16 %v7542, %v7541
        %v7565 = vpack.c.b16 %v7544, %v7543
        %v7566 = vpack.c.b16 %v7546, %v7545
        %v7567 = vpack.c.b16 %v7548, %v7547
        %v7568 = vpack.c.b16 %v7550, %v7549
        %v7569 = vpack.c.b16 %v7552, %v7551
        %v7570 = vpack.c.b16 %v7554, %v7553
        %v7603 = vunpack.c.l.b16 %v7475
        %v7604 = vunpack.c.l.b16 %v7476
        %v7605 = vunpack.c.l.b16 %v7477
        %v7606 = vunpack.c.l.b16 %v7478
        %v7607 = vunpack.c.l.b16 %v7479
        %v7608 = vunpack.c.l.b16 %v7480
        %v7609 = vunpack.c.l.b16 %v7481
        %v7610 = vunpack.c.l.b16 %v7482
        %v7611 = vunpack.c.l.b16 %v7483
        %v7612 = vunpack.c.l.b16 %v7484
        %v7613 = vunpack.c.l.b16 %v7485
        %v7614 = vunpack.c.l.b16 %v7486
        %v7615 = vunpack.c.l.b16 %v7487
        %v7616 = vunpack.c.l.b16 %v7488
        %v7617 = vunpack.c.l.b16 %v7489
        %v7618 = vunpack.c.l.b16 %v7490
        %v7619 = vpack.c.b16 %v7604, %v7603
        %v7620 = vpack.c.b16 %v7606, %v7605
        %v7621 = vpack.c.b16 %v7608, %v7607
        %v7622 = vpack.c.b16 %v7610, %v7609
        %v7623 = vpack.c.b16 %v7612, %v7611
        %v7624 = vpack.c.b16 %v7614, %v7613
        %v7625 = vpack.c.b16 %v7616, %v7615
        %v7626 = vpack.c.b16 %v7618, %v7617
        %7635 = vmatprep.subr.bf16.mxu0 0
        %7636 = vmatpush1.bf16.msra.mxu0 %v7619
        %7637 = vmatprep.subr.bf16.mxu0 0
        %7638 = vmatpush1.bf16.msra.mxu0 %v7620
        %7639 = vmatprep.subr.bf16.mxu0 0
        %7640 = vmatpush1.bf16.msra.mxu0 %v7621
        %7641 = vmatprep.subr.bf16.mxu0 0
        %7642 = vmatpush1.bf16.msra.mxu0 %v7622
        %7643 = vmatprep.subr.bf16.mxu0 0
        %7644 = vmatpush1.bf16.msra.mxu0 %v7623
        %7645 = vmatprep.subr.bf16.mxu0 0
        %7646 = vmatpush1.bf16.msra.mxu0 %v7624
        %7647 = vmatprep.subr.bf16.mxu0 0
        %7648 = vmatpush1.bf16.msra.mxu0 %v7625
        %7649 = vmatprep.subr.bf16.mxu0 0
        %7650 = vmatpush1.bf16.msra.mxu0 %v7626
        %7651 = vmatprep.subr.bf16.mxu0 0
        %7652 = vmatpush1.bf16.msra.mxu0 0
        %7653 = vmatprep.subr.bf16.mxu0 0
        %7654 = vmatpush1.bf16.msra.mxu0 0
        %7655 = vmatprep.subr.bf16.mxu0 0
        %7656 = vmatpush1.bf16.msra.mxu0 0
        %7657 = vmatprep.subr.bf16.mxu0 0
        %7658 = vmatpush1.bf16.msra.mxu0 0
        %7659 = vmatprep.subr.bf16.mxu0 0
        %7660 = vmatpush1.bf16.msra.mxu0 0
        %7661 = vmatprep.subr.bf16.mxu0 0
        %7662 = vmatpush1.bf16.msra.mxu0 0
        %7663 = vmatprep.subr.bf16.mxu0 0
        %7664 = vmatpush1.bf16.msra.mxu0 0
        %7665 = vmatprep.subr.bf16.mxu0 0
        %7666 = vmatpush1.bf16.msra.mxu0 0
        %7667 = vmatprep.mubr.bf16.mxu0 0
        %7668 = vmatmul.mubr.bf16.gmra.mrb[0].mxu0 %v7555
        %v7669 = vpop.f32.mrb[0].mxu0
        %v7670 = vadd.f32 0.0, %v7669
        %v7671 = vpop.f32.mrb[0].mxu0
        %v7672 = vpop.f32.mrb[0].mxu0
        %v7673 = vadd.f32 0.0, %v7672
        %v7674 = vpop.f32.mrb[0].mxu0
        %7675 = vmatprep.mubr.bf16.mxu0 0
        %7676 = vmatmul.mubr.bf16.gmra.mrb[0].mxu0 %v7556
        %v7677 = vpop.f32.mrb[0].mxu0
        %v7678 = vadd.f32 0.0, %v7677
        %v7679 = vpop.f32.mrb[0].mxu0
        %v7680 = vpop.f32.mrb[0].mxu0
        %v7681 = vadd.f32 0.0, %v7680
        %v7682 = vpop.f32.mrb[0].mxu0
        %7683 = vmatprep.mubr.bf16.mxu0 0
        %7684 = vmatmul.mubr.bf16.gmra.mrb[0].mxu0 %v7557
        %v7685 = vpop.f32.mrb[0].mxu0
        %v7686 = vadd.f32 0.0, %v7685
        %v7687 = vpop.f32.mrb[0].mxu0
        %v7688 = vpop.f32.mrb[0].mxu0
        %v7689 = vadd.f32 0.0, %v7688
        %v7690 = vpop.f32.mrb[0].mxu0
        %7691 = vmatprep.mubr.bf16.mxu0 0
        %7692 = vmatmul.mubr.bf16.gmra.mrb[0].mxu0 %v7558
        %v7693 = vpop.f32.mrb[0].mxu0
        %v7694 = vadd.f32 0.0, %v7693
        %v7695 = vpop.f32.mrb[0].mxu0
        %v7696 = vpop.f32.mrb[0].mxu0
        %v7697 = vadd.f32 0.0, %v7696
        %v7698 = vpop.f32.mrb[0].mxu0
        %7699 = vmatprep.mubr.bf16.mxu0 0
        %7700 = vmatmul.mubr.bf16.gmra.mrb[0].mxu0 %v7559
        %v7701 = vpop.f32.mrb[0].mxu0
        %v7702 = vadd.f32 0.0, %v7701
        %v7703 = vpop.f32.mrb[0].mxu0
        %v7704 = vpop.f32.mrb[0].mxu0
        %v7705 = vadd.f32 0.0, %v7704
        %v7706 = vpop.f32.mrb[0].mxu0
        %7707 = vmatprep.mubr.bf16.mxu0 0
        %7708 = vmatmul.mubr.bf16.gmra.mrb[0].mxu0 %v7560
        %v7709 = vpop.f32.mrb[0].mxu0
        %v7710 = vadd.f32 0.0, %v7709
        %v7711 = vpop.f32.mrb[0].mxu0
        %v7712 = vpop.f32.mrb[0].mxu0
        %v7713 = vadd.f32 0.0, %v7712
        %v7714 = vpop.f32.mrb[0].mxu0
        %7715 = vmatprep.mubr.bf16.mxu0 0
        %7716 = vmatmul.mubr.bf16.gmra.mrb[0].mxu0 %v7561
        %v7717 = vpop.f32.mrb[0].mxu0
        %v7718 = vadd.f32 0.0, %v7717
        %v7719 = vpop.f32.mrb[0].mxu0
        %v7720 = vpop.f32.mrb[0].mxu0
        %v7721 = vadd.f32 0.0, %v7720
        %v7722 = vpop.f32.mrb[0].mxu0
        %7723 = vmatprep.mubr.bf16.mxu0 0
        %7724 = vmatmul.mubr.bf16.gmra.mrb[0].mxu0 %v7562
        %v7725 = vpop.f32.mrb[0].mxu0
        %v7726 = vadd.f32 0.0, %v7725
        %v7727 = vpop.f32.mrb[0].mxu0
        %v7728 = vpop.f32.mrb[0].mxu0
        %v7729 = vadd.f32 0.0, %v7728
        %v7730 = vpop.f32.mrb[0].mxu0
        %7731 = vmatprep.mubr.bf16.mxu0 0
        %7732 = vmatmul.mubr.bf16.gmra.mrb[0].mxu0 %v7563
        %v7733 = vpop.f32.mrb[0].mxu0
        %v7734 = vadd.f32 0.0, %v7733
        %v7735 = vpop.f32.mrb[0].mxu0
        %v7736 = vpop.f32.mrb[0].mxu0
        %v7737 = vadd.f32 0.0, %v7736
        %v7738 = vpop.f32.mrb[0].mxu0
        %7739 = vmatprep.mubr.bf16.mxu0 0
        %7740 = vmatmul.mubr.bf16.gmra.mrb[0].mxu0 %v7564
        %v7741 = vpop.f32.mrb[0].mxu0
        %v7742 = vadd.f32 0.0, %v7741
        %v7743 = vpop.f32.mrb[0].mxu0
        %v7744 = vpop.f32.mrb[0].mxu0
        %v7745 = vadd.f32 0.0, %v7744
        %v7746 = vpop.f32.mrb[0].mxu0
        %7747 = vmatprep.mubr.bf16.mxu0 0
        %7748 = vmatmul.mubr.bf16.gmra.mrb[0].mxu0 %v7565
        %v7749 = vpop.f32.mrb[0].mxu0
        %v7750 = vadd.f32 0.0, %v7749
        %v7751 = vpop.f32.mrb[0].mxu0
        %v7752 = vpop.f32.mrb[0].mxu0
        %v7753 = vadd.f32 0.0, %v7752
        %v7754 = vpop.f32.mrb[0].mxu0
        %7755 = vmatprep.mubr.bf16.mxu0 0
        %7756 = vmatmul.mubr.bf16.gmra.mrb[0].mxu0 %v7566
        %v7757 = vpop.f32.mrb[0].mxu0
        %v7758 = vadd.f32 0.0, %v7757
        %v7759 = vpop.f32.mrb[0].mxu0
        %v7760 = vpop.f32.mrb[0].mxu0
        %v7761 = vadd.f32 0.0, %v7760
        %v7762 = vpop.f32.mrb[0].mxu0
        %7763 = vmatprep.mubr.bf16.mxu0 0
        %7764 = vmatmul.mubr.bf16.gmra.mrb[0].mxu0 %v7567
        %v7765 = vpop.f32.mrb[0].mxu0
        %v7766 = vadd.f32 0.0, %v7765
        %v7767 = vpop.f32.mrb[0].mxu0
        %v7768 = vpop.f32.mrb[0].mxu0
        %v7769 = vadd.f32 0.0, %v7768
        %v7770 = vpop.f32.mrb[0].mxu0
        %7771 = vmatprep.mubr.bf16.mxu0 0
        %7772 = vmatmul.mubr.bf16.gmra.mrb[0].mxu0 %v7568
        %v7773 = vpop.f32.mrb[0].mxu0
        %v7774 = vadd.f32 0.0, %v7773
        %v7775 = vpop.f32.mrb[0].mxu0
        %v7776 = vpop.f32.mrb[0].mxu0
        %v7777 = vadd.f32 0.0, %v7776
        %v7778 = vpop.f32.mrb[0].mxu0
        %7779 = vmatprep.mubr.bf16.mxu0 0
        %7780 = vmatmul.mubr.bf16.gmra.mrb[0].mxu0 %v7569
        %v7781 = vpop.f32.mrb[0].mxu0
        %v7782 = vadd.f32 0.0, %v7781
        %v7783 = vpop.f32.mrb[0].mxu0
        %v7784 = vpop.f32.mrb[0].mxu0
        %v7785 = vadd.f32 0.0, %v7784
        %v7786 = vpop.f32.mrb[0].mxu0
        %7787 = vmatprep.mubr.bf16.mxu0 0
        %7788 = vmatmul.mubr.bf16.gmra.mrb[0].mxu0 %v7570
        %v7789 = vpop.f32.mrb[0].mxu0
        %v7790 = vadd.f32 0.0, %v7789
        %v7791 = vpop.f32.mrb[0].mxu0
        %v7792 = vpop.f32.mrb[0].mxu0
        %v7793 = vadd.f32 0.0, %v7792
        %v7794 = vpop.f32.mrb[0].mxu0
        %7795 = vdwg.mxu0
        %v7796 = vadd.f32 %v7378, %v7670
        %v7797 = vadd.f32 %v7379, %v7673
        %v7798 = vadd.f32 %v7380, %v7678
        %v7799 = vadd.f32 %v7381, %v7681
        %v7800 = vadd.f32 %v7382, %v7686
        %v7801 = vadd.f32 %v7383, %v7689
        %v7802 = vadd.f32 %v7384, %v7694
        %v7803 = vadd.f32 %v7385, %v7697
        %v7804 = vadd.f32 %v7386, %v7702
        %v7805 = vadd.f32 %v7387, %v7705
        %v7806 = vadd.f32 %v7388, %v7710
        %v7807 = vadd.f32 %v7389, %v7713
        %v7808 = vadd.f32 %v7390, %v7718
        %v7809 = vadd.f32 %v7391, %v7721
        %v7810 = vadd.f32 %v7392, %v7726
        %v7811 = vadd.f32 %v7393, %v7729
        %v7812 = vadd.f32 %v7394, %v7734
        %v7813 = vadd.f32 %v7395, %v7737
        %v7814 = vadd.f32 %v7396, %v7742
        %v7815 = vadd.f32 %v7397, %v7745
        %v7816 = vadd.f32 %v7398, %v7750
        %v7817 = vadd.f32 %v7399, %v7753
        %v7818 = vadd.f32 %v7400, %v7758
        %v7819 = vadd.f32 %v7401, %v7761
        %v7820 = vadd.f32 %v7402, %v7766
        %v7821 = vadd.f32 %v7403, %v7769
        %v7822 = vadd.f32 %v7404, %v7774
        %v7823 = vadd.f32 %v7405, %v7777
        %v7824 = vadd.f32 %v7406, %v7782
        %v7825 = vadd.f32 %v7407, %v7785
        %v7826 = vadd.f32 %v7408, %v7790
        %v7827 = vadd.f32 %v7409, %v7793
        %v7828 = vld [vmem:[%s4] sm:$0x1]
        %v7830 = vlaneseq
        %v7831 = vshrl.u32 %v7830, 7
        %v7832 = vsub.s32 0, %v7831
        %v7833 = vrot.slane %v7828, %v7832
        %v7835 = vadd.f32 %v7796, %v7833
        %v7836 = vadd.f32 %v7797, %v7833
        %v7837 = vadd.f32 %v7798, %v7833
        %v7838 = vadd.f32 %v7799, %v7833
        %v7839 = vadd.f32 %v7800, %v7833
        %v7840 = vadd.f32 %v7801, %v7833
        %v7841 = vadd.f32 %v7802, %v7833
        %v7842 = vadd.f32 %v7803, %v7833
        %v7843 = vadd.f32 %v7804, %v7833
        %v7844 = vadd.f32 %v7805, %v7833
        %v7845 = vadd.f32 %v7806, %v7833
        %v7846 = vadd.f32 %v7807, %v7833
        %v7847 = vadd.f32 %v7808, %v7833
        %v7848 = vadd.f32 %v7809, %v7833
        %v7849 = vadd.f32 %v7810, %v7833
        %v7850 = vadd.f32 %v7811, %v7833
        %v7851 = vadd.f32 %v7812, %v7833
        %v7852 = vadd.f32 %v7813, %v7833
        %v7853 = vadd.f32 %v7814, %v7833
        %v7854 = vadd.f32 %v7815, %v7833
        %v7855 = vadd.f32 %v7816, %v7833
        %v7856 = vadd.f32 %v7817, %v7833
        %v7857 = vadd.f32 %v7818, %v7833
        %v7858 = vadd.f32 %v7819, %v7833
        %v7859 = vadd.f32 %v7820, %v7833
        %v7860 = vadd.f32 %v7821, %v7833
        %v7861 = vadd.f32 %v7822, %v7833
        %v7862 = vadd.f32 %v7823, %v7833
        %v7863 = vadd.f32 %v7824, %v7833
        %v7864 = vadd.f32 %v7825, %v7833
        %v7865 = vadd.f32 %v7826, %v7833
        %v7866 = vadd.f32 %v7827, %v7833
        %v7867 = vld [vmem:[%s1419 + $0x1] sm:$0xff]
        %v7868 = vld [vmem:[%s1419 + $0x11] sm:$0xff]
        %v7869 = vld [vmem:[%s1419 + $0x21] sm:$0xff]
        %v7870 = vld [vmem:[%s1419 + $0x31] sm:$0xff]
        %v7871 = vld [vmem:[%s1419 + $0x61] sm:$0xff]
        %v7872 = vld [vmem:[%s1419 + $0x71] sm:$0xff]
        %v7873 = vld [vmem:[%s1419 + $0x81] sm:$0xff]
        %v7874 = vld [vmem:[%s1419 + $0x91] sm:$0xff]
        %v7875 = vld [vmem:[%s1419 + $0xc1] sm:$0xff]
        %v7876 = vld [vmem:[%s1419 + $0xd1] sm:$0xff]
        %v7877 = vld [vmem:[%s1419 + $0xe1] sm:$0xff]
        %v7878 = vld [vmem:[%s1419 + $0xf1] sm:$0xff]
        %v7879 = vld [vmem:[%s1419 + $0x121] sm:$0xff]
        %v7880 = vld [vmem:[%s1419 + $0x131] sm:$0xff]
        %v7881 = vld [vmem:[%s1419 + $0x141] sm:$0xff]
        %v7882 = vld [vmem:[%s1419 + $0x151] sm:$0xff]
        %v7883 = vld [vmem:[%s1419 + $0x181] sm:$0xff]
        %v7884 = vld [vmem:[%s1419 + $0x191] sm:$0xff]
        %v7885 = vld [vmem:[%s1419 + $0x1a1] sm:$0xff]
        %v7886 = vld [vmem:[%s1419 + $0x1b1] sm:$0xff]
        %v7887 = vld [vmem:[%s1419 + $0x1e1] sm:$0xff]
        %v7888 = vld [vmem:[%s1419 + $0x1f1] sm:$0xff]
        %v7889 = vld [vmem:[%s1419 + $0x201] sm:$0xff]
        %v7890 = vld [vmem:[%s1419 + $0x211] sm:$0xff]
        %v7891 = vld [vmem:[%s1419 + $0x241] sm:$0xff]
        %v7892 = vld [vmem:[%s1419 + $0x251] sm:$0xff]
        %v7893 = vld [vmem:[%s1419 + $0x261] sm:$0xff]
        %v7894 = vld [vmem:[%s1419 + $0x271] sm:$0xff]
        %v7895 = vld [vmem:[%s1419 + $0x2a1] sm:$0xff]
        %v7896 = vld [vmem:[%s1419 + $0x2b1] sm:$0xff]
        %v7897 = vld [vmem:[%s1419 + $0x2c1] sm:$0xff]
        %v7898 = vld [vmem:[%s1419 + $0x2d1] sm:$0xff]
        %v7899 = vadd.f32 %v7835, %v7867
        %v7900 = vadd.f32 %v7836, %v7868
        %v7901 = vadd.f32 %v7837, %v7869
        %v7902 = vadd.f32 %v7838, %v7870
        %v7903 = vadd.f32 %v7839, %v7871
        %v7904 = vadd.f32 %v7840, %v7872
        %v7905 = vadd.f32 %v7841, %v7873
        %v7906 = vadd.f32 %v7842, %v7874
        %v7907 = vadd.f32 %v7843, %v7875
        %v7908 = vadd.f32 %v7844, %v7876
        %v7909 = vadd.f32 %v7845, %v7877
        %v7910 = vadd.f32 %v7846, %v7878
        %v7911 = vadd.f32 %v7847, %v7879
        %v7912 = vadd.f32 %v7848, %v7880
        %v7913 = vadd.f32 %v7849, %v7881
        %v7914 = vadd.f32 %v7850, %v7882
        %v7915 = vadd.f32 %v7851, %v7883
        %v7916 = vadd.f32 %v7852, %v7884
        %v7917 = vadd.f32 %v7853, %v7885
        %v7918 = vadd.f32 %v7854, %v7886
        %v7919 = vadd.f32 %v7855, %v7887
        %v7920 = vadd.f32 %v7856, %v7888
        %v7921 = vadd.f32 %v7857, %v7889
        %v7922 = vadd.f32 %v7858, %v7890
        %v7923 = vadd.f32 %v7859, %v7891
        %v7924 = vadd.f32 %v7860, %v7892
        %v7925 = vadd.f32 %v7861, %v7893
        %v7926 = vadd.f32 %v7862, %v7894
        %v7927 = vadd.f32 %v7863, %v7895
        %v7928 = vadd.f32 %v7864, %v7896
        %v7929 = vadd.f32 %v7865, %v7897
        %v7930 = vadd.f32 %v7866, %v7898
        %7931 = vst [vmem:[%s220] sm:$0xff] %v7899
        %7932 = vst [vmem:[%s220 + $0x8] sm:$0xff] %v7900
        %7933 = vst [vmem:[%s220 + $0x10] sm:$0xff] %v7901
        %7934 = vst [vmem:[%s220 + $0x18] sm:$0xff] %v7902
        %7935 = vst [vmem:[%s220 + $0x20] sm:$0xff] %v7903
        %7936 = vst [vmem:[%s220 + $0x28] sm:$0xff] %v7904
        %7937 = vst [vmem:[%s220 + $0x30] sm:$0xff] %v7905
        %7938 = vst [vmem:[%s220 + $0x38] sm:$0xff] %v7906
        %7939 = vst [vmem:[%s220 + $0x40] sm:$0xff] %v7907
        %7940 = vst [vmem:[%s220 + $0x48] sm:$0xff] %v7908
        %7941 = vst [vmem:[%s220 + $0x50] sm:$0xff] %v7909
        %7942 = vst [vmem:[%s220 + $0x58] sm:$0xff] %v7910
        %7943 = vst [vmem:[%s220 + $0x60] sm:$0xff] %v7911
        %7944 = vst [vmem:[%s220 + $0x68] sm:$0xff] %v7912
        %7945 = vst [vmem:[%s220 + $0x70] sm:$0xff] %v7913
        %7946 = vst [vmem:[%s220 + $0x78] sm:$0xff] %v7914
        %7947 = vst [vmem:[%s220 + $0x80] sm:$0xff] %v7915
        %7948 = vst [vmem:[%s220 + $0x88] sm:$0xff] %v7916
        %7949 = vst [vmem:[%s220 + $0x90] sm:$0xff] %v7917
        %7950 = vst [vmem:[%s220 + $0x98] sm:$0xff] %v7918
        %7951 = vst [vmem:[%s220 + $0xa0] sm:$0xff] %v7919
        %7952 = vst [vmem:[%s220 + $0xa8] sm:$0xff] %v7920
        %7953 = vst [vmem:[%s220 + $0xb0] sm:$0xff] %v7921
        %7954 = vst [vmem:[%s220 + $0xb8] sm:$0xff] %v7922
        %7955 = vst [vmem:[%s220 + $0xc0] sm:$0xff] %v7923
        %7956 = vst [vmem:[%s220 + $0xc8] sm:$0xff] %v7924
        %7957 = vst [vmem:[%s220 + $0xd0] sm:$0xff] %v7925
        %7958 = vst [vmem:[%s220 + $0xd8] sm:$0xff] %v7926
        %7959 = vst [vmem:[%s220 + $0xe0] sm:$0xff] %v7927
        %7960 = vst [vmem:[%s220 + $0xe8] sm:$0xff] %v7928
        %7961 = vst [vmem:[%s220 + $0xf0] sm:$0xff] %v7929
        %7962 = vst [vmem:[%s220 + $0xf8] sm:$0xff] %v7930
        %s7963 = sand.u32 %s137, 1
        %s7964 = scalar_lea.sflag [#allocation4], %s7963
        %s7965 = sand.u32 %s137, 1
        %s7966 = smul.addr %s7965, 256
        %s7967 = scalar_lea.vmem [#allocation3], %s7966
        // Predicated region
        $region41: #{tpu_custom_call.1} parent=39 // pred_check
          %p7968 = pneg %p147
        $region42: #{tpu_custom_call.1} parent=39 // pred_check_branch
          %7970 = sbr.rel (%p7968) target = $region44
        $region43: #{tpu_custom_call.1} parent=39 // pred_region
          %s7971 = smul.u32 8, %s19
          %s7973 = ssub.s32 4096, 4096
          %7974 = vsyncadd %s7964, %s7973
          %s7975 = smul.addr %s7971, 4
          %s7976 = smul.addr %s7975, 128
          %s7977 = scalar_lea.hbm %s5, %s7976
          %s7978 = sshll.u32 %s7967, 4
          %s7979 = int_to_ptr.vmem [resolvable:$true] %s7978
          %7984 = dma.vmem_to_hbm [thread:$0]  %s7979, 4096, %s7977, %s7964, 128, 128, 8
        $region44: #{tpu_custom_call.1} parent=39 // pred_fallthru
          _
      $region40: #{tpu_custom_call.1} parent=5 // pred_fallthru
        _
      %p7985 = scmp.le.s32.totalorder 2, %s14
      // Predicated region
      $region45: #{tpu_custom_call.1} parent=5 // pred_check
        %p7986 = pneg %p7985
      $region46: #{tpu_custom_call.1} parent=5 // pred_check_branch
        %7988 = sbr.rel (%p7986) target = $region48
      $region47: #{tpu_custom_call.1} parent=5 // pred_region
        %s7989 = ssub.s32 %s14, 2
        // Predicated region
        $region49: #{tpu_custom_call.1} parent=47 // pred_check
          %p7990 = pneg %p153
        $region50: #{tpu_custom_call.1} parent=47 // pred_check_branch
          %7992 = sbr.rel (%p7990) target = $region52
        $region51: #{tpu_custom_call.1} parent=47 // pred_region
          %s7993 = sand.u32 %s138, 1
          %s7994 = scalar_lea.sflag [#allocation4], %s7993
          %s7995 = sand.u32 %s138, 1
          %s7996 = smul.addr %s7995, 256
          %s7997 = scalar_lea.vmem [#allocation3], %s7996
          %7998 = dma.done %s7994, 4096
        $region52: #{tpu_custom_call.1} parent=47 // pred_fallthru
          _
      $region48: #{tpu_custom_call.1} parent=5 // pred_fallthru
        _
    $region6: #{tpu_custom_call.1} parent=1 // loop_footer
      %s18 = sadd.s32 1, %s14
    $region7: #{tpu_custom_call.1} parent=1 // loop_footer_branch
      %13 = sbr.rel target = $region3
    $region8: #{tpu_custom_call.1} parent=1 // loop_exit
      _
    %7999 = vsyncpa [#allocation4], 1
    %s8000 = scalar_lea.sflag [#allocation4], 1
    %8001 = vsyncpa %s8000, 1

</llo_original>
